<compile_context>
chip_gen: v7x
topology: tpu7x:2x2x1
jax: 0.10.0
libtpu: 0.0.40
codegen_flags: <defaults>
</compile_context>

<pallas_src>
import functools

import jax
import jax.numpy as jnp
from jax import lax
from jax.experimental import pallas as pl
from jax.experimental.pallas import tpu as pltpu

# --- scaled-down hyperparameters consistent with the module ---
BLOCK_SIZE = 16               # seq len (100 in the original; small for the demo)
N_EMBD = 50
N_HEAD = 2
HEAD_SIZE = N_EMBD // N_HEAD  # 25
N_LAYERS = 4
SRC_VOCAB = 64                # synthetic tokenizer vocab sizes
TGT_VOCAB = 72
FF = 4 * N_EMBD
OUT_PAD = 128                 # lm_head output padded to a lane-dense width
HP = 128                      # per-(matrix, head) padded segment width in fused QKV


def _layernorm(h, g, b, eps=1e-5):
    mu = jnp.mean(h, axis=-1, keepdims=True)
    var = jnp.mean(jnp.square(h - mu), axis=-1, keepdims=True)
    return (h - mu) * lax.rsqrt(var + eps) * g + b


def gpt_encoder_kernel(x_ref, bias_ref,
                       wqkv_ref, wo_ref, bo_ref,
                       ln1g_ref, ln1b_ref, ln2g_ref, ln2b_ref,
                       w1_ref, b1_ref, w2_ref, b2_ref,
                       lnfg_ref, lnfb_ref, lmw_ref, lmb_ref,
                       out_ref):
    """Forward for one batch block (grid axis 0 = batch blocks).

    x_ref:    (BB*T, E)  f32, token+pos embeddings, rows flattened
    bias_ref: (BB, 1, T) f32 additive key-padding bias (0 or -1e30)
    out_ref:  (BB*T, OUT_PAD) f32 logits (lane padded)
    """
    BB, _, T = bias_ref.shape
    bf16 = jnp.bfloat16

    x = x_ref[...]                      # (BB*T, E) f32
    mask_bias = bias_ref[...]           # (BB, 1, T) f32

    for layer in range(N_LAYERS):
        # --- EncoderBlock: x = x + MultiHeadAtt(ln1(x), mask) ---
        h = _layernorm(x, ln1g_ref[layer], ln1b_ref[layer])
        # single fused QKV projection; each (matrix, head) segment occupies a
        # 128-lane-aligned block of columns (zero padded past HEAD_SIZE);
        # the 1/sqrt(head_size) softmax scale is folded into the Q columns.
        qkv = jnp.dot(h.astype(bf16), wqkv_ref[layer],
                      preferred_element_type=jnp.float32).astype(bf16)   # (BB*T, 3*NH*HP)

        sa = None
        for hd in range(N_HEAD):
            q0 = (0 * N_HEAD + hd) * HP
            k0 = (1 * N_HEAD + hd) * HP
            v0 = (2 * N_HEAD + hd) * HP
            ctx_rows = []
            for b in range(BB):
                r0 = b * T
                q = qkv[r0:r0 + T, q0:q0 + HP]          # (T, HP), lane-tile aligned
                k = qkv[r0:r0 + T, k0:k0 + HP]
                v = qkv[r0:r0 + T, v0:v0 + HP]
                # scores: contract on the (padded) head dim; padded cols are zero
                att = lax.dot_general(q, k, (((1,), (1,)), ((), ())),
                                      preferred_element_type=jnp.float32)  # (T, T)
                att = att + mask_bias[b]                 # (1,T) broadcast
                att = att - jnp.max(att, axis=-1, keepdims=True)
                p = jnp.exp(att)
                p = p * pl.reciprocal(jnp.sum(p, axis=-1, keepdims=True),
                                      approx=True)
                # dropout(p=0.2) is identity in eval mode
                ctx_rows.append(jnp.dot(p.astype(bf16), v,
                                        preferred_element_type=jnp.float32))
            ctx = ctx_rows[0] if BB == 1 else jnp.concatenate(ctx_rows, axis=0)
            # fold this head's slice of the output projection (no lane concat);
            # wo rows past HEAD_SIZE are zero so the padded ctx lanes contribute 0.
            contrib = jnp.dot(ctx.astype(bf16), wo_ref[layer, hd],
                              preferred_element_type=jnp.float32)
            sa = contrib if sa is None else sa + contrib
        x = x + sa + bo_ref[layer]

        # --- EncoderBlock: x = x + FeedForward(ln2(x)) ---
        h2 = _layernorm(x, ln2g_ref[layer], ln2b_ref[layer])
        f = jnp.dot(h2.astype(bf16), w1_ref[layer],
                    preferred_element_type=jnp.float32) + b1_ref[layer]
        f = jnp.maximum(f, 0.0)
        f = jnp.dot(f.astype(bf16), w2_ref[layer],
                    preferred_element_type=jnp.float32) + b2_ref[layer]
        x = x + f

    # --- final layernorm + lm_head (padded to 128 lane-dense output cols) ---
    x = _layernorm(x, lnfg_ref[...], lnfb_ref[...])
    logits = jnp.dot(x.astype(bf16), lmw_ref[...],
                     preferred_element_type=jnp.float32) + lmb_ref[...]
    out_ref[...] = logits


def init_params(key):
    std = 0.02
    ks = jax.random.split(key, 9)
    bf16 = jnp.bfloat16

    def nrm(k, shape):
        return (std * jax.random.normal(k, shape)).astype(jnp.float32)

    p = {}
    # embeddings (normal(0, 0.02), matching _init_weights)
    p["emb_e"] = nrm(ks[0], (SRC_VOCAB, N_EMBD))
    p["pos_e"] = nrm(ks[1], (BLOCK_SIZE, N_EMBD))

    # fused QKV projection per layer, stored (in, out); columns laid out as
    # [Q_h0 | Q_h1 | K_h0 | K_h1 | V_h0 | V_h1], each segment padded to HP=128
    # lanes (zeros past HEAD_SIZE).  Softmax scale folded into Q columns.
    wq = nrm(ks[2], (N_LAYERS, N_EMBD, N_EMBD)) * (HEAD_SIZE ** -0.5)
    wk = nrm(ks[3], (N_LAYERS, N_EMBD, N_EMBD))
    wv = nrm(ks[4], (N_LAYERS, N_EMBD, N_EMBD))
    wqkv = jnp.zeros((N_LAYERS, N_EMBD, 3 * N_HEAD * HP), jnp.float32)
    for m, w in enumerate((wq, wk, wv)):
        for hd in range(N_HEAD):
            col = (m * N_HEAD + hd) * HP
            wqkv = wqkv.at[:, :, col:col + HEAD_SIZE].set(
                w[:, :, hd * HEAD_SIZE:(hd + 1) * HEAD_SIZE])
    p["wqkv"] = wqkv.astype(bf16)

    # output projection split per head: (layers, heads, HP, n_embd), rows past
    # HEAD_SIZE are zero (they multiply the padded ctx lanes).
    wo_full = nrm(ks[5], (N_LAYERS, N_EMBD, N_EMBD)).reshape(
        N_LAYERS, N_HEAD, HEAD_SIZE, N_EMBD)
    wo = jnp.zeros((N_LAYERS, N_HEAD, HP, N_EMBD), jnp.float32)
    wo = wo.at[:, :, :HEAD_SIZE, :].set(wo_full)
    p["wo"] = wo.astype(bf16)
    p["bo"] = jnp.zeros((N_LAYERS, 1, N_EMBD), jnp.float32)

    # layernorms
    p["ln1g"] = jnp.ones((N_LAYERS, 1, N_EMBD), jnp.float32)
    p["ln1b"] = jnp.zeros((N_LAYERS, 1, N_EMBD), jnp.float32)
    p["ln2g"] = jnp.ones((N_LAYERS, 1, N_EMBD), jnp.float32)
    p["ln2b"] = jnp.zeros((N_LAYERS, 1, N_EMBD), jnp.float32)

    # feed-forward
    p["w1"] = nrm(ks[6], (N_LAYERS, N_EMBD, FF)).astype(bf16)
    p["b1"] = jnp.zeros((N_LAYERS, 1, FF), jnp.float32)
    p["w2"] = nrm(ks[7], (N_LAYERS, FF, N_EMBD)).astype(bf16)
    p["b2"] = jnp.zeros((N_LAYERS, 1, N_EMBD), jnp.float32)

    # final LN + lm_head_d (padded to OUT_PAD columns; extras are zero)
    p["lnfg"] = jnp.ones((1, N_EMBD), jnp.float32)
    p["lnfb"] = jnp.zeros((1, N_EMBD), jnp.float32)
    lmw = jnp.zeros((N_EMBD, OUT_PAD), jnp.float32)
    lmw = lmw.at[:, :TGT_VOCAB].set(nrm(ks[8], (N_EMBD, TGT_VOCAB)))
    p["lmw"] = lmw.astype(bf16)
    p["lmb"] = jnp.zeros((1, OUT_PAD), jnp.float32)
    return p


@functools.partial(jax.jit, static_argnames=("batch_block",))
def gpt_forward(idx, mask, params, batch_block=None):
    """idx: (B, T) int32 token ids; mask: (B, 1, T) int32 key mask.

    batch_block: sequences per grid step. Default = B (single fused step;
    best on single-TC v5e/v6e). On v7x pass B//2 so both TensorCores get work.
    """
    B, T = idx.shape
    BB = B if batch_block is None else batch_block
    assert B % BB == 0

    # embedding gathers + row flattening are glue (outside the kernel)
    tok = params["emb_e"][idx]                         # (B, T, E)
    pos = params["pos_e"][jnp.arange(T)]               # (T, E)
    x = (tok + pos[None, :, :]).astype(jnp.float32).reshape(B * T, N_EMBD)

    # additive key-padding bias, computed once in the wrapper (Python literals
    # only — avoids capturing a jnp scalar constant inside the kernel), and
    # -1e30 instead of -inf avoids the inf-inf NaN hazard in softmax.
    mask_bias = jnp.where(mask == 0, -1e30, 0.0).astype(jnp.float32)  # (B,1,T)

    names = ("wqkv", "wo", "bo",
             "ln1g", "ln1b", "ln2g", "ln2b",
             "w1", "b1", "w2", "b2",
             "lnfg", "lnfb", "lmw", "lmb")
    plist = [params[k] for k in names]

    def full_spec(arr):
        nd = arr.ndim
        return pl.BlockSpec(arr.shape, lambda g, _nd=nd: (0,) * _nd)

    out = pl.pallas_call(
        gpt_encoder_kernel,
        out_shape=jax.ShapeDtypeStruct((B * T, OUT_PAD), jnp.float32),
        grid=(B // BB,),
        in_specs=[pl.BlockSpec((BB * T, N_EMBD), lambda g: (g, 0)),
                  pl.BlockSpec((BB, 1, T), lambda g: (g, 0, 0))]
                 + [full_spec(p) for p in plist],
        out_specs=pl.BlockSpec((BB * T, OUT_PAD), lambda g: (g, 0)),
        compiler_params=pltpu.CompilerParams(
            dimension_semantics=("parallel",)),
    )(x, mask_bias, *plist)
    # slice the lane-padded lm_head back to the real vocab size
    return out[:, :TGT_VOCAB].reshape(B, T, TGT_VOCAB)


if __name__ == "__main__":
    key = jax.random.PRNGKey(0)
    params = init_params(key)

    B, T = 2, BLOCK_SIZE
    k_idx, _ = jax.random.split(jax.random.PRNGKey(0))
    idx = jax.random.randint(k_idx, (B, T), 0, SRC_VOCAB, dtype=jnp.int32)

    # padding mask: sequence 0 is full length, sequence 1 has 5 pad tokens
    lengths = jnp.array([T, T - 5], dtype=jnp.int32)
    mask = (jnp.arange(T)[None, :] < lengths[:, None]).astype(jnp.int32)
    mask = mask[:, None, :]                            # (B, 1, T)

    logits = gpt_forward(idx, mask, params, batch_block=B)
    jax.block_until_ready(logits)
    assert logits.shape == (B, T, TGT_VOCAB)
    assert bool(jnp.all(jnp.isfinite(logits)))
    print("KERNEL_OK")
</pallas_src>

<mosaic_0001>
module attributes {stable_mosaic.version = 11 : i64} {
  func.func @gpt_encoder_kernel(%arg0: i32, %arg1: memref<32x50xf32, #tpu.memory_space<vmem>>, %arg2: memref<2x1x16xf32, #tpu.memory_space<vmem>>, %arg3: memref<4x50x768xbf16, #tpu.memory_space<vmem>>, %arg4: memref<4x2x128x50xbf16, #tpu.memory_space<vmem>>, %arg5: memref<4x1x50xf32, #tpu.memory_space<vmem>>, %arg6: memref<4x1x50xf32, #tpu.memory_space<vmem>>, %arg7: memref<4x1x50xf32, #tpu.memory_space<vmem>>, %arg8: memref<4x1x50xf32, #tpu.memory_space<vmem>>, %arg9: memref<4x1x50xf32, #tpu.memory_space<vmem>>, %arg10: memref<4x50x200xbf16, #tpu.memory_space<vmem>>, %arg11: memref<4x1x200xf32, #tpu.memory_space<vmem>>, %arg12: memref<4x200x50xbf16, #tpu.memory_space<vmem>>, %arg13: memref<4x1x50xf32, #tpu.memory_space<vmem>>, %arg14: memref<1x50xf32, #tpu.memory_space<vmem>>, %arg15: memref<1x50xf32, #tpu.memory_space<vmem>>, %arg16: memref<50x128xbf16, #tpu.memory_space<vmem>>, %arg17: memref<1x128xf32, #tpu.memory_space<vmem>>, %arg18: memref<32x128xf32, #tpu.memory_space<vmem>>) attributes {dimension_semantics = [#tpu.dimension_semantics<parallel>], iteration_bounds = array<i64: 1>, scalar_prefetch = 0 : i64, scratch_operands = 0 : i64, tpu.core_type = #tpu.core_type<tc>, window_params = [{transform_indices = @transform_0, window_bounds = array<i64: 32, 50>}, {transform_indices = @transform_1, window_bounds = array<i64: 2, 1, 16>}, {pipeline_mode = #tpu.pipeline_mode<synchronous>, transform_indices = @transform_2, window_bounds = array<i64: 4, 50, 768>}, {pipeline_mode = #tpu.pipeline_mode<synchronous>, transform_indices = @transform_3, window_bounds = array<i64: 4, 2, 128, 50>}, {pipeline_mode = #tpu.pipeline_mode<synchronous>, transform_indices = @transform_4, window_bounds = array<i64: 4, 1, 50>}, {pipeline_mode = #tpu.pipeline_mode<synchronous>, transform_indices = @transform_5, window_bounds = array<i64: 4, 1, 50>}, {pipeline_mode = #tpu.pipeline_mode<synchronous>, transform_indices = @transform_6, window_bounds = array<i64: 4, 1, 50>}, {pipeline_mode = #tpu.pipeline_mode<synchronous>, transform_indices = @transform_7, window_bounds = array<i64: 4, 1, 50>}, {pipeline_mode = #tpu.pipeline_mode<synchronous>, transform_indices = @transform_8, window_bounds = array<i64: 4, 1, 50>}, {pipeline_mode = #tpu.pipeline_mode<synchronous>, transform_indices = @transform_9, window_bounds = array<i64: 4, 50, 200>}, {pipeline_mode = #tpu.pipeline_mode<synchronous>, transform_indices = @transform_10, window_bounds = array<i64: 4, 1, 200>}, {pipeline_mode = #tpu.pipeline_mode<synchronous>, transform_indices = @transform_11, window_bounds = array<i64: 4, 200, 50>}, {pipeline_mode = #tpu.pipeline_mode<synchronous>, transform_indices = @transform_12, window_bounds = array<i64: 4, 1, 50>}, {pipeline_mode = #tpu.pipeline_mode<synchronous>, transform_indices = @transform_13, window_bounds = array<i64: 1, 50>}, {pipeline_mode = #tpu.pipeline_mode<synchronous>, transform_indices = @transform_14, window_bounds = array<i64: 1, 50>}, {pipeline_mode = #tpu.pipeline_mode<synchronous>, transform_indices = @transform_15, window_bounds = array<i64: 50, 128>}, {pipeline_mode = #tpu.pipeline_mode<synchronous>, transform_indices = @transform_16, window_bounds = array<i64: 1, 128>}, {transform_indices = @transform_17, window_bounds = array<i64: 32, 128>}]} {
    %c0 = arith.constant 0 : index
    %c0_0 = arith.constant 0 : index
    %0 = vector.load %arg1[%c0, %c0_0] : memref<32x50xf32, #tpu.memory_space<vmem>>, vector<32x50xf32>
    %c0_1 = arith.constant 0 : index
    %c0_2 = arith.constant 0 : index
    %c0_3 = arith.constant 0 : index
    %1 = vector.load %arg2[%c0_1, %c0_2, %c0_3] : memref<2x1x16xf32, #tpu.memory_space<vmem>>, vector<2x1x16xf32>
    %c0_4 = arith.constant 0 : index
    %c0_5 = arith.constant 0 : index
    %c0_6 = arith.constant 0 : index
    %2 = vector.load %arg6[%c0_4, %c0_5, %c0_6] : memref<4x1x50xf32, #tpu.memory_space<vmem>>, vector<1x1x50xf32>
    %3 = vector.shape_cast %2 : vector<1x1x50xf32> to vector<1x50xf32>
    %c0_7 = arith.constant 0 : index
    %c0_8 = arith.constant 0 : index
    %c0_9 = arith.constant 0 : index
    %4 = vector.load %arg7[%c0_7, %c0_8, %c0_9] : memref<4x1x50xf32, #tpu.memory_space<vmem>>, vector<1x1x50xf32>
    %5 = vector.shape_cast %4 : vector<1x1x50xf32> to vector<1x50xf32>
    %cst = arith.constant dense<0.000000e+00> : vector<32xf32>
    %6 = vector.multi_reduction <add>, %0, %cst [1] : vector<32x50xf32> to vector<32xf32>
    %7 = vector.shape_cast %6 : vector<32xf32> to vector<32x1xf32>
    %cst_10 = arith.constant 5.000000e+01 : f32
    %8 = vector.broadcast %cst_10 : f32 to vector<32x1xf32>
    %9 = arith.divf %7, %8 : vector<32x1xf32>
    %10 = vector.broadcast %9 : vector<32x1xf32> to vector<32x50xf32>
    %11 = arith.subf %0, %10 : vector<32x50xf32>
    %12 = arith.mulf %11, %11 : vector<32x50xf32>
    %cst_11 = arith.constant dense<0.000000e+00> : vector<32xf32>
    %13 = vector.multi_reduction <add>, %12, %cst_11 [1] : vector<32x50xf32> to vector<32xf32>
    %14 = vector.shape_cast %13 : vector<32xf32> to vector<32x1xf32>
    %cst_12 = arith.constant 5.000000e+01 : f32
    %15 = vector.broadcast %cst_12 : f32 to vector<32x1xf32>
    %16 = arith.divf %14, %15 : vector<32x1xf32>
    %17 = vector.broadcast %9 : vector<32x1xf32> to vector<32x50xf32>
    %18 = arith.subf %0, %17 : vector<32x50xf32>
    %cst_13 = arith.constant 9.99999974E-6 : f32
    %19 = vector.broadcast %cst_13 : f32 to vector<32x1xf32>
    %20 = arith.addf %16, %19 : vector<32x1xf32>
    %21 = math.rsqrt %20 : vector<32x1xf32>
    %22 = vector.broadcast %21 : vector<32x1xf32> to vector<32x50xf32>
    %23 = arith.mulf %18, %22 : vector<32x50xf32>
    %24 = vector.broadcast %3 : vector<1x50xf32> to vector<32x50xf32>
    %25 = arith.mulf %23, %24 : vector<32x50xf32>
    %26 = vector.broadcast %5 : vector<1x50xf32> to vector<32x50xf32>
    %27 = arith.addf %25, %26 : vector<32x50xf32>
    %28 = arith.truncf %27 : vector<32x50xf32> to vector<32x50xbf16>
    %c0_14 = arith.constant 0 : index
    %c0_15 = arith.constant 0 : index
    %c0_16 = arith.constant 0 : index
    %29 = vector.load %arg3[%c0_14, %c0_15, %c0_16] : memref<4x50x768xbf16, #tpu.memory_space<vmem>>, vector<1x50x768xbf16>
    %30 = vector.shape_cast %29 : vector<1x50x768xbf16> to vector<50x768xbf16>
    %cst_17 = arith.constant dense<0.000000e+00> : vector<32x768xf32>
    %31 = tpu.matmul %28, %30, %cst_17 {dimension_numbers = #tpu.dot_dimension_numbers<[1], [0], [0], [1], [0, 0, 1, 1], [], []>} : vector<32x50xbf16>, vector<50x768xbf16>, vector<32x768xf32> -> vector<32x768xf32>
    %32 = arith.truncf %31 : vector<32x768xf32> to vector<32x768xbf16>
    %33 = vector.extract_strided_slice %32 {offsets = [0, 0], sizes = [16, 128], strides = [1, 1]} : vector<32x768xbf16> to vector<16x128xbf16>
    %34 = vector.extract_strided_slice %32 {offsets = [0, 256], sizes = [16, 128], strides = [1, 1]} : vector<32x768xbf16> to vector<16x128xbf16>
    %35 = vector.extract_strided_slice %32 {offsets = [0, 512], sizes = [16, 128], strides = [1, 1]} : vector<32x768xbf16> to vector<16x128xbf16>
    %cst_18 = arith.constant dense<0.000000e+00> : vector<16x16xf32>
    %36 = tpu.matmul %33, %34, %cst_18 {dimension_numbers = #tpu.dot_dimension_numbers<[1], [1], [0], [0], [0, 0, 1, 0], [], []>} : vector<16x128xbf16>, vector<16x128xbf16>, vector<16x16xf32> -> vector<16x16xf32>
    %37 = vector.extract_strided_slice %1 {offsets = [0, 0, 0], sizes = [1, 1, 16], strides = [1, 1, 1]} : vector<2x1x16xf32> to vector<1x1x16xf32>
    %38 = vector.shape_cast %37 : vector<1x1x16xf32> to vector<1x16xf32>
    %39 = vector.broadcast %38 : vector<1x16xf32> to vector<16x16xf32>
    %40 = arith.addf %36, %39 : vector<16x16xf32>
    %cst_19 = arith.constant dense<0xFF800000> : vector<16xf32>
    %41 = vector.multi_reduction <maximumf>, %40, %cst_19 [1] : vector<16x16xf32> to vector<16xf32>
    %42 = vector.shape_cast %41 : vector<16xf32> to vector<16x1xf32>
    %43 = vector.broadcast %42 : vector<16x1xf32> to vector<16x16xf32>
    %44 = arith.subf %40, %43 : vector<16x16xf32>
    %45 = math.exp %44 : vector<16x16xf32>
    %cst_20 = arith.constant dense<0.000000e+00> : vector<16xf32>
    %46 = vector.multi_reduction <add>, %45, %cst_20 [1] : vector<16x16xf32> to vector<16xf32>
    %47 = vector.shape_cast %46 : vector<16xf32> to vector<16x1xf32>
    %48 = tpu.reciprocal %47 {approx = true} : vector<16x1xf32> -> vector<16x1xf32>
    %49 = vector.broadcast %48 : vector<16x1xf32> to vector<16x16xf32>
    %50 = arith.mulf %45, %49 : vector<16x16xf32>
    %51 = arith.truncf %50 : vector<16x16xf32> to vector<16x16xbf16>
    %cst_21 = arith.constant dense<0.000000e+00> : vector<16x128xf32>
    %52 = tpu.matmul %51, %35, %cst_21 {dimension_numbers = #tpu.dot_dimension_numbers<[1], [0], [0], [1], [0, 0, 1, 1], [], []>} : vector<16x16xbf16>, vector<16x128xbf16>, vector<16x128xf32> -> vector<16x128xf32>
    %53 = vector.extract_strided_slice %32 {offsets = [16, 0], sizes = [16, 128], strides = [1, 1]} : vector<32x768xbf16> to vector<16x128xbf16>
    %54 = vector.extract_strided_slice %32 {offsets = [16, 256], sizes = [16, 128], strides = [1, 1]} : vector<32x768xbf16> to vector<16x128xbf16>
    %55 = vector.extract_strided_slice %32 {offsets = [16, 512], sizes = [16, 128], strides = [1, 1]} : vector<32x768xbf16> to vector<16x128xbf16>
    %cst_22 = arith.constant dense<0.000000e+00> : vector<16x16xf32>
    %56 = tpu.matmul %53, %54, %cst_22 {dimension_numbers = #tpu.dot_dimension_numbers<[1], [1], [0], [0], [0, 0, 1, 0], [], []>} : vector<16x128xbf16>, vector<16x128xbf16>, vector<16x16xf32> -> vector<16x16xf32>
    %57 = vector.extract_strided_slice %1 {offsets = [1, 0, 0], sizes = [1, 1, 16], strides = [1, 1, 1]} : vector<2x1x16xf32> to vector<1x1x16xf32>
    %58 = vector.shape_cast %57 : vector<1x1x16xf32> to vector<1x16xf32>
    %59 = vector.broadcast %58 : vector<1x16xf32> to vector<16x16xf32>
    %60 = arith.addf %56, %59 : vector<16x16xf32>
    %cst_23 = arith.constant dense<0xFF800000> : vector<16xf32>
    %61 = vector.multi_reduction <maximumf>, %60, %cst_23 [1] : vector<16x16xf32> to vector<16xf32>
    %62 = vector.shape_cast %61 : vector<16xf32> to vector<16x1xf32>
    %63 = vector.broadcast %62 : vector<16x1xf32> to vector<16x16xf32>
    %64 = arith.subf %60, %63 : vector<16x16xf32>
    %65 = math.exp %64 : vector<16x16xf32>
    %cst_24 = arith.constant dense<0.000000e+00> : vector<16xf32>
    %66 = vector.multi_reduction <add>, %65, %cst_24 [1] : vector<16x16xf32> to vector<16xf32>
    %67 = vector.shape_cast %66 : vector<16xf32> to vector<16x1xf32>
    %68 = tpu.reciprocal %67 {approx = true} : vector<16x1xf32> -> vector<16x1xf32>
    %69 = vector.broadcast %68 : vector<16x1xf32> to vector<16x16xf32>
    %70 = arith.mulf %65, %69 : vector<16x16xf32>
    %71 = arith.truncf %70 : vector<16x16xf32> to vector<16x16xbf16>
    %cst_25 = arith.constant dense<0.000000e+00> : vector<16x128xf32>
    %72 = tpu.matmul %71, %55, %cst_25 {dimension_numbers = #tpu.dot_dimension_numbers<[1], [0], [0], [1], [0, 0, 1, 1], [], []>} : vector<16x16xbf16>, vector<16x128xbf16>, vector<16x128xf32> -> vector<16x128xf32>
    %73 = tpu.concatenate %52, %72 in 0 : vector<16x128xf32>, vector<16x128xf32> -> vector<32x128xf32>
    %74 = arith.truncf %73 : vector<32x128xf32> to vector<32x128xbf16>
    %c0_26 = arith.constant 0 : index
    %c0_27 = arith.constant 0 : index
    %c0_28 = arith.constant 0 : index
    %c0_29 = arith.constant 0 : index
    %75 = vector.load %arg4[%c0_26, %c0_27, %c0_28, %c0_29] : memref<4x2x128x50xbf16, #tpu.memory_space<vmem>>, vector<1x1x128x50xbf16>
    %76 = vector.shape_cast %75 : vector<1x1x128x50xbf16> to vector<128x50xbf16>
    %cst_30 = arith.constant dense<0.000000e+00> : vector<32x50xf32>
    %77 = tpu.matmul %74, %76, %cst_30 {dimension_numbers = #tpu.dot_dimension_numbers<[1], [0], [0], [1], [0, 0, 1, 1], [], []>} : vector<32x128xbf16>, vector<128x50xbf16>, vector<32x50xf32> -> vector<32x50xf32>
    %78 = vector.extract_strided_slice %32 {offsets = [0, 128], sizes = [16, 128], strides = [1, 1]} : vector<32x768xbf16> to vector<16x128xbf16>
    %79 = vector.extract_strided_slice %32 {offsets = [0, 384], sizes = [16, 128], strides = [1, 1]} : vector<32x768xbf16> to vector<16x128xbf16>
    %80 = vector.extract_strided_slice %32 {offsets = [0, 640], sizes = [16, 128], strides = [1, 1]} : vector<32x768xbf16> to vector<16x128xbf16>
    %cst_31 = arith.constant dense<0.000000e+00> : vector<16x16xf32>
    %81 = tpu.matmul %78, %79, %cst_31 {dimension_numbers = #tpu.dot_dimension_numbers<[1], [1], [0], [0], [0, 0, 1, 0], [], []>} : vector<16x128xbf16>, vector<16x128xbf16>, vector<16x16xf32> -> vector<16x16xf32>
    %82 = vector.extract_strided_slice %1 {offsets = [0, 0, 0], sizes = [1, 1, 16], strides = [1, 1, 1]} : vector<2x1x16xf32> to vector<1x1x16xf32>
    %83 = vector.shape_cast %82 : vector<1x1x16xf32> to vector<1x16xf32>
    %84 = vector.broadcast %83 : vector<1x16xf32> to vector<16x16xf32>
    %85 = arith.addf %81, %84 : vector<16x16xf32>
    %cst_32 = arith.constant dense<0xFF800000> : vector<16xf32>
    %86 = vector.multi_reduction <maximumf>, %85, %cst_32 [1] : vector<16x16xf32> to vector<16xf32>
    %87 = vector.shape_cast %86 : vector<16xf32> to vector<16x1xf32>
    %88 = vector.broadcast %87 : vector<16x1xf32> to vector<16x16xf32>
    %89 = arith.subf %85, %88 : vector<16x16xf32>
    %90 = math.exp %89 : vector<16x16xf32>
    %cst_33 = arith.constant dense<0.000000e+00> : vector<16xf32>
    %91 = vector.multi_reduction <add>, %90, %cst_33 [1] : vector<16x16xf32> to vector<16xf32>
    %92 = vector.shape_cast %91 : vector<16xf32> to vector<16x1xf32>
    %93 = tpu.reciprocal %92 {approx = true} : vector<16x1xf32> -> vector<16x1xf32>
    %94 = vector.broadcast %93 : vector<16x1xf32> to vector<16x16xf32>
    %95 = arith.mulf %90, %94 : vector<16x16xf32>
    %96 = arith.truncf %95 : vector<16x16xf32> to vector<16x16xbf16>
    %cst_34 = arith.constant dense<0.000000e+00> : vector<16x128xf32>
    %97 = tpu.matmul %96, %80, %cst_34 {dimension_numbers = #tpu.dot_dimension_numbers<[1], [0], [0], [1], [0, 0, 1, 1], [], []>} : vector<16x16xbf16>, vector<16x128xbf16>, vector<16x128xf32> -> vector<16x128xf32>
    %98 = vector.extract_strided_slice %32 {offsets = [16, 128], sizes = [16, 128], strides = [1, 1]} : vector<32x768xbf16> to vector<16x128xbf16>
    %99 = vector.extract_strided_slice %32 {offsets = [16, 384], sizes = [16, 128], strides = [1, 1]} : vector<32x768xbf16> to vector<16x128xbf16>
    %100 = vector.extract_strided_slice %32 {offsets = [16, 640], sizes = [16, 128], strides = [1, 1]} : vector<32x768xbf16> to vector<16x128xbf16>
    %cst_35 = arith.constant dense<0.000000e+00> : vector<16x16xf32>
    %101 = tpu.matmul %98, %99, %cst_35 {dimension_numbers = #tpu.dot_dimension_numbers<[1], [1], [0], [0], [0, 0, 1, 0], [], []>} : vector<16x128xbf16>, vector<16x128xbf16>, vector<16x16xf32> -> vector<16x16xf32>
    %102 = vector.extract_strided_slice %1 {offsets = [1, 0, 0], sizes = [1, 1, 16], strides = [1, 1, 1]} : vector<2x1x16xf32> to vector<1x1x16xf32>
    %103 = vector.shape_cast %102 : vector<1x1x16xf32> to vector<1x16xf32>
    %104 = vector.broadcast %103 : vector<1x16xf32> to vector<16x16xf32>
    %105 = arith.addf %101, %104 : vector<16x16xf32>
    %cst_36 = arith.constant dense<0xFF800000> : vector<16xf32>
    %106 = vector.multi_reduction <maximumf>, %105, %cst_36 [1] : vector<16x16xf32> to vector<16xf32>
    %107 = vector.shape_cast %106 : vector<16xf32> to vector<16x1xf32>
    %108 = vector.broadcast %107 : vector<16x1xf32> to vector<16x16xf32>
    %109 = arith.subf %105, %108 : vector<16x16xf32>
    %110 = math.exp %109 : vector<16x16xf32>
    %cst_37 = arith.constant dense<0.000000e+00> : vector<16xf32>
    %111 = vector.multi_reduction <add>, %110, %cst_37 [1] : vector<16x16xf32> to vector<16xf32>
    %112 = vector.shape_cast %111 : vector<16xf32> to vector<16x1xf32>
    %113 = tpu.reciprocal %112 {approx = true} : vector<16x1xf32> -> vector<16x1xf32>
    %114 = vector.broadcast %113 : vector<16x1xf32> to vector<16x16xf32>
    %115 = arith.mulf %110, %114 : vector<16x16xf32>
    %116 = arith.truncf %115 : vector<16x16xf32> to vector<16x16xbf16>
    %cst_38 = arith.constant dense<0.000000e+00> : vector<16x128xf32>
    %117 = tpu.matmul %116, %100, %cst_38 {dimension_numbers = #tpu.dot_dimension_numbers<[1], [0], [0], [1], [0, 0, 1, 1], [], []>} : vector<16x16xbf16>, vector<16x128xbf16>, vector<16x128xf32> -> vector<16x128xf32>
    %118 = tpu.concatenate %97, %117 in 0 : vector<16x128xf32>, vector<16x128xf32> -> vector<32x128xf32>
    %119 = arith.truncf %118 : vector<32x128xf32> to vector<32x128xbf16>
    %c0_39 = arith.constant 0 : index
    %c1 = arith.constant 1 : index
    %c0_40 = arith.constant 0 : index
    %c0_41 = arith.constant 0 : index
    %120 = vector.load %arg4[%c0_39, %c1, %c0_40, %c0_41] : memref<4x2x128x50xbf16, #tpu.memory_space<vmem>>, vector<1x1x128x50xbf16>
    %121 = vector.shape_cast %120 : vector<1x1x128x50xbf16> to vector<128x50xbf16>
    %cst_42 = arith.constant dense<0.000000e+00> : vector<32x50xf32>
    %122 = tpu.matmul %119, %121, %cst_42 {dimension_numbers = #tpu.dot_dimension_numbers<[1], [0], [0], [1], [0, 0, 1, 1], [], []>} : vector<32x128xbf16>, vector<128x50xbf16>, vector<32x50xf32> -> vector<32x50xf32>
    %123 = arith.addf %77, %122 : vector<32x50xf32>
    %124 = arith.addf %0, %123 : vector<32x50xf32>
    %c0_43 = arith.constant 0 : index
    %c0_44 = arith.constant 0 : index
    %c0_45 = arith.constant 0 : index
    %125 = vector.load %arg5[%c0_43, %c0_44, %c0_45] : memref<4x1x50xf32, #tpu.memory_space<vmem>>, vector<1x1x50xf32>
    %126 = vector.shape_cast %125 : vector<1x1x50xf32> to vector<1x50xf32>
    %127 = vector.broadcast %126 : vector<1x50xf32> to vector<32x50xf32>
    %128 = arith.addf %124, %127 : vector<32x50xf32>
    %c0_46 = arith.constant 0 : index
    %c0_47 = arith.constant 0 : index
    %c0_48 = arith.constant 0 : index
    %129 = vector.load %arg8[%c0_46, %c0_47, %c0_48] : memref<4x1x50xf32, #tpu.memory_space<vmem>>, vector<1x1x50xf32>
    %130 = vector.shape_cast %129 : vector<1x1x50xf32> to vector<1x50xf32>
    %c0_49 = arith.constant 0 : index
    %c0_50 = arith.constant 0 : index
    %c0_51 = arith.constant 0 : index
    %131 = vector.load %arg9[%c0_49, %c0_50, %c0_51] : memref<4x1x50xf32, #tpu.memory_space<vmem>>, vector<1x1x50xf32>
    %132 = vector.shape_cast %131 : vector<1x1x50xf32> to vector<1x50xf32>
    %cst_52 = arith.constant dense<0.000000e+00> : vector<32xf32>
    %133 = vector.multi_reduction <add>, %128, %cst_52 [1] : vector<32x50xf32> to vector<32xf32>
    %134 = vector.shape_cast %133 : vector<32xf32> to vector<32x1xf32>
    %cst_53 = arith.constant 5.000000e+01 : f32
    %135 = vector.broadcast %cst_53 : f32 to vector<32x1xf32>
    %136 = arith.divf %134, %135 : vector<32x1xf32>
    %137 = vector.broadcast %136 : vector<32x1xf32> to vector<32x50xf32>
    %138 = arith.subf %128, %137 : vector<32x50xf32>
    %139 = arith.mulf %138, %138 : vector<32x50xf32>
    %cst_54 = arith.constant dense<0.000000e+00> : vector<32xf32>
    %140 = vector.multi_reduction <add>, %139, %cst_54 [1] : vector<32x50xf32> to vector<32xf32>
    %141 = vector.shape_cast %140 : vector<32xf32> to vector<32x1xf32>
    %cst_55 = arith.constant 5.000000e+01 : f32
    %142 = vector.broadcast %cst_55 : f32 to vector<32x1xf32>
    %143 = arith.divf %141, %142 : vector<32x1xf32>
    %144 = vector.broadcast %136 : vector<32x1xf32> to vector<32x50xf32>
    %145 = arith.subf %128, %144 : vector<32x50xf32>
    %cst_56 = arith.constant 9.99999974E-6 : f32
    %146 = vector.broadcast %cst_56 : f32 to vector<32x1xf32>
    %147 = arith.addf %143, %146 : vector<32x1xf32>
    %148 = math.rsqrt %147 : vector<32x1xf32>
    %149 = vector.broadcast %148 : vector<32x1xf32> to vector<32x50xf32>
    %150 = arith.mulf %145, %149 : vector<32x50xf32>
    %151 = vector.broadcast %130 : vector<1x50xf32> to vector<32x50xf32>
    %152 = arith.mulf %150, %151 : vector<32x50xf32>
    %153 = vector.broadcast %132 : vector<1x50xf32> to vector<32x50xf32>
    %154 = arith.addf %152, %153 : vector<32x50xf32>
    %155 = arith.truncf %154 : vector<32x50xf32> to vector<32x50xbf16>
    %c0_57 = arith.constant 0 : index
    %c0_58 = arith.constant 0 : index
    %c0_59 = arith.constant 0 : index
    %156 = vector.load %arg10[%c0_57, %c0_58, %c0_59] : memref<4x50x200xbf16, #tpu.memory_space<vmem>>, vector<1x50x200xbf16>
    %157 = vector.shape_cast %156 : vector<1x50x200xbf16> to vector<50x200xbf16>
    %cst_60 = arith.constant dense<0.000000e+00> : vector<32x200xf32>
    %158 = tpu.matmul %155, %157, %cst_60 {dimension_numbers = #tpu.dot_dimension_numbers<[1], [0], [0], [1], [0, 0, 1, 1], [], []>} : vector<32x50xbf16>, vector<50x200xbf16>, vector<32x200xf32> -> vector<32x200xf32>
    %c0_61 = arith.constant 0 : index
    %c0_62 = arith.constant 0 : index
    %c0_63 = arith.constant 0 : index
    %159 = vector.load %arg11[%c0_61, %c0_62, %c0_63] : memref<4x1x200xf32, #tpu.memory_space<vmem>>, vector<1x1x200xf32>
    %160 = vector.shape_cast %159 : vector<1x1x200xf32> to vector<1x200xf32>
    %161 = vector.broadcast %160 : vector<1x200xf32> to vector<32x200xf32>
    %162 = arith.addf %158, %161 : vector<32x200xf32>
    %cst_64 = arith.constant 0.000000e+00 : f32
    %163 = vector.broadcast %cst_64 : f32 to vector<32x200xf32>
    %164 = arith.maximumf %162, %163 : vector<32x200xf32>
    %165 = arith.truncf %164 : vector<32x200xf32> to vector<32x200xbf16>
    %c0_65 = arith.constant 0 : index
    %c0_66 = arith.constant 0 : index
    %c0_67 = arith.constant 0 : index
    %166 = vector.load %arg12[%c0_65, %c0_66, %c0_67] : memref<4x200x50xbf16, #tpu.memory_space<vmem>>, vector<1x200x50xbf16>
    %167 = vector.shape_cast %166 : vector<1x200x50xbf16> to vector<200x50xbf16>
    %cst_68 = arith.constant dense<0.000000e+00> : vector<32x50xf32>
    %168 = tpu.matmul %165, %167, %cst_68 {dimension_numbers = #tpu.dot_dimension_numbers<[1], [0], [0], [1], [0, 0, 1, 1], [], []>} : vector<32x200xbf16>, vector<200x50xbf16>, vector<32x50xf32> -> vector<32x50xf32>
    %c0_69 = arith.constant 0 : index
    %c0_70 = arith.constant 0 : index
    %c0_71 = arith.constant 0 : index
    %169 = vector.load %arg13[%c0_69, %c0_70, %c0_71] : memref<4x1x50xf32, #tpu.memory_space<vmem>>, vector<1x1x50xf32>
    %170 = vector.shape_cast %169 : vector<1x1x50xf32> to vector<1x50xf32>
    %171 = vector.broadcast %170 : vector<1x50xf32> to vector<32x50xf32>
    %172 = arith.addf %168, %171 : vector<32x50xf32>
    %173 = arith.addf %128, %172 : vector<32x50xf32>
    %c1_72 = arith.constant 1 : index
    %c0_73 = arith.constant 0 : index
    %c0_74 = arith.constant 0 : index
    %174 = vector.load %arg6[%c1_72, %c0_73, %c0_74] : memref<4x1x50xf32, #tpu.memory_space<vmem>>, vector<1x1x50xf32>
    %175 = vector.shape_cast %174 : vector<1x1x50xf32> to vector<1x50xf32>
    %c1_75 = arith.constant 1 : index
    %c0_76 = arith.constant 0 : index
    %c0_77 = arith.constant 0 : index
    %176 = vector.load %arg7[%c1_75, %c0_76, %c0_77] : memref<4x1x50xf32, #tpu.memory_space<vmem>>, vector<1x1x50xf32>
    %177 = vector.shape_cast %176 : vector<1x1x50xf32> to vector<1x50xf32>
    %cst_78 = arith.constant dense<0.000000e+00> : vector<32xf32>
    %178 = vector.multi_reduction <add>, %173, %cst_78 [1] : vector<32x50xf32> to vector<32xf32>
    %179 = vector.shape_cast %178 : vector<32xf32> to vector<32x1xf32>
    %cst_79 = arith.constant 5.000000e+01 : f32
    %180 = vector.broadcast %cst_79 : f32 to vector<32x1xf32>
    %181 = arith.divf %179, %180 : vector<32x1xf32>
    %182 = vector.broadcast %181 : vector<32x1xf32> to vector<32x50xf32>
    %183 = arith.subf %173, %182 : vector<32x50xf32>
    %184 = arith.mulf %183, %183 : vector<32x50xf32>
    %cst_80 = arith.constant dense<0.000000e+00> : vector<32xf32>
    %185 = vector.multi_reduction <add>, %184, %cst_80 [1] : vector<32x50xf32> to vector<32xf32>
    %186 = vector.shape_cast %185 : vector<32xf32> to vector<32x1xf32>
    %cst_81 = arith.constant 5.000000e+01 : f32
    %187 = vector.broadcast %cst_81 : f32 to vector<32x1xf32>
    %188 = arith.divf %186, %187 : vector<32x1xf32>
    %189 = vector.broadcast %181 : vector<32x1xf32> to vector<32x50xf32>
    %190 = arith.subf %173, %189 : vector<32x50xf32>
    %cst_82 = arith.constant 9.99999974E-6 : f32
    %191 = vector.broadcast %cst_82 : f32 to vector<32x1xf32>
    %192 = arith.addf %188, %191 : vector<32x1xf32>
    %193 = math.rsqrt %192 : vector<32x1xf32>
    %194 = vector.broadcast %193 : vector<32x1xf32> to vector<32x50xf32>
    %195 = arith.mulf %190, %194 : vector<32x50xf32>
    %196 = vector.broadcast %175 : vector<1x50xf32> to vector<32x50xf32>
    %197 = arith.mulf %195, %196 : vector<32x50xf32>
    %198 = vector.broadcast %177 : vector<1x50xf32> to vector<32x50xf32>
    %199 = arith.addf %197, %198 : vector<32x50xf32>
    %200 = arith.truncf %199 : vector<32x50xf32> to vector<32x50xbf16>
    %c1_83 = arith.constant 1 : index
    %c0_84 = arith.constant 0 : index
    %c0_85 = arith.constant 0 : index
    %201 = vector.load %arg3[%c1_83, %c0_84, %c0_85] : memref<4x50x768xbf16, #tpu.memory_space<vmem>>, vector<1x50x768xbf16>
    %202 = vector.shape_cast %201 : vector<1x50x768xbf16> to vector<50x768xbf16>
    %cst_86 = arith.constant dense<0.000000e+00> : vector<32x768xf32>
    %203 = tpu.matmul %200, %202, %cst_86 {dimension_numbers = #tpu.dot_dimension_numbers<[1], [0], [0], [1], [0, 0, 1, 1], [], []>} : vector<32x50xbf16>, vector<50x768xbf16>, vector<32x768xf32> -> vector<32x768xf32>
    %204 = arith.truncf %203 : vector<32x768xf32> to vector<32x768xbf16>
    %205 = vector.extract_strided_slice %204 {offsets = [0, 0], sizes = [16, 128], strides = [1, 1]} : vector<32x768xbf16> to vector<16x128xbf16>
    %206 = vector.extract_strided_slice %204 {offsets = [0, 256], sizes = [16, 128], strides = [1, 1]} : vector<32x768xbf16> to vector<16x128xbf16>
    %207 = vector.extract_strided_slice %204 {offsets = [0, 512], sizes = [16, 128], strides = [1, 1]} : vector<32x768xbf16> to vector<16x128xbf16>
    %cst_87 = arith.constant dense<0.000000e+00> : vector<16x16xf32>
    %208 = tpu.matmul %205, %206, %cst_87 {dimension_numbers = #tpu.dot_dimension_numbers<[1], [1], [0], [0], [0, 0, 1, 0], [], []>} : vector<16x128xbf16>, vector<16x128xbf16>, vector<16x16xf32> -> vector<16x16xf32>
    %209 = vector.extract_strided_slice %1 {offsets = [0, 0, 0], sizes = [1, 1, 16], strides = [1, 1, 1]} : vector<2x1x16xf32> to vector<1x1x16xf32>
    %210 = vector.shape_cast %209 : vector<1x1x16xf32> to vector<1x16xf32>
    %211 = vector.broadcast %210 : vector<1x16xf32> to vector<16x16xf32>
    %212 = arith.addf %208, %211 : vector<16x16xf32>
    %cst_88 = arith.constant dense<0xFF800000> : vector<16xf32>
    %213 = vector.multi_reduction <maximumf>, %212, %cst_88 [1] : vector<16x16xf32> to vector<16xf32>
    %214 = vector.shape_cast %213 : vector<16xf32> to vector<16x1xf32>
    %215 = vector.broadcast %214 : vector<16x1xf32> to vector<16x16xf32>
    %216 = arith.subf %212, %215 : vector<16x16xf32>
    %217 = math.exp %216 : vector<16x16xf32>
    %cst_89 = arith.constant dense<0.000000e+00> : vector<16xf32>
    %218 = vector.multi_reduction <add>, %217, %cst_89 [1] : vector<16x16xf32> to vector<16xf32>
    %219 = vector.shape_cast %218 : vector<16xf32> to vector<16x1xf32>
    %220 = tpu.reciprocal %219 {approx = true} : vector<16x1xf32> -> vector<16x1xf32>
    %221 = vector.broadcast %220 : vector<16x1xf32> to vector<16x16xf32>
    %222 = arith.mulf %217, %221 : vector<16x16xf32>
    %223 = arith.truncf %222 : vector<16x16xf32> to vector<16x16xbf16>
    %cst_90 = arith.constant dense<0.000000e+00> : vector<16x128xf32>
    %224 = tpu.matmul %223, %207, %cst_90 {dimension_numbers = #tpu.dot_dimension_numbers<[1], [0], [0], [1], [0, 0, 1, 1], [], []>} : vector<16x16xbf16>, vector<16x128xbf16>, vector<16x128xf32> -> vector<16x128xf32>
    %225 = vector.extract_strided_slice %204 {offsets = [16, 0], sizes = [16, 128], strides = [1, 1]} : vector<32x768xbf16> to vector<16x128xbf16>
    %226 = vector.extract_strided_slice %204 {offsets = [16, 256], sizes = [16, 128], strides = [1, 1]} : vector<32x768xbf16> to vector<16x128xbf16>
    %227 = vector.extract_strided_slice %204 {offsets = [16, 512], sizes = [16, 128], strides = [1, 1]} : vector<32x768xbf16> to vector<16x128xbf16>
    %cst_91 = arith.constant dense<0.000000e+00> : vector<16x16xf32>
    %228 = tpu.matmul %225, %226, %cst_91 {dimension_numbers = #tpu.dot_dimension_numbers<[1], [1], [0], [0], [0, 0, 1, 0], [], []>} : vector<16x128xbf16>, vector<16x128xbf16>, vector<16x16xf32> -> vector<16x16xf32>
    %229 = vector.extract_strided_slice %1 {offsets = [1, 0, 0], sizes = [1, 1, 16], strides = [1, 1, 1]} : vector<2x1x16xf32> to vector<1x1x16xf32>
    %230 = vector.shape_cast %229 : vector<1x1x16xf32> to vector<1x16xf32>
    %231 = vector.broadcast %230 : vector<1x16xf32> to vector<16x16xf32>
    %232 = arith.addf %228, %231 : vector<16x16xf32>
    %cst_92 = arith.constant dense<0xFF800000> : vector<16xf32>
    %233 = vector.multi_reduction <maximumf>, %232, %cst_92 [1] : vector<16x16xf32> to vector<16xf32>
    %234 = vector.shape_cast %233 : vector<16xf32> to vector<16x1xf32>
    %235 = vector.broadcast %234 : vector<16x1xf32> to vector<16x16xf32>
    %236 = arith.subf %232, %235 : vector<16x16xf32>
    %237 = math.exp %236 : vector<16x16xf32>
    %cst_93 = arith.constant dense<0.000000e+00> : vector<16xf32>
    %238 = vector.multi_reduction <add>, %237, %cst_93 [1] : vector<16x16xf32> to vector<16xf32>
    %239 = vector.shape_cast %238 : vector<16xf32> to vector<16x1xf32>
    %240 = tpu.reciprocal %239 {approx = true} : vector<16x1xf32> -> vector<16x1xf32>
    %241 = vector.broadcast %240 : vector<16x1xf32> to vector<16x16xf32>
    %242 = arith.mulf %237, %241 : vector<16x16xf32>
    %243 = arith.truncf %242 : vector<16x16xf32> to vector<16x16xbf16>
    %cst_94 = arith.constant dense<0.000000e+00> : vector<16x128xf32>
    %244 = tpu.matmul %243, %227, %cst_94 {dimension_numbers = #tpu.dot_dimension_numbers<[1], [0], [0], [1], [0, 0, 1, 1], [], []>} : vector<16x16xbf16>, vector<16x128xbf16>, vector<16x128xf32> -> vector<16x128xf32>
    %245 = tpu.concatenate %224, %244 in 0 : vector<16x128xf32>, vector<16x128xf32> -> vector<32x128xf32>
    %246 = arith.truncf %245 : vector<32x128xf32> to vector<32x128xbf16>
    %c1_95 = arith.constant 1 : index
    %c0_96 = arith.constant 0 : index
    %c0_97 = arith.constant 0 : index
    %c0_98 = arith.constant 0 : index
    %247 = vector.load %arg4[%c1_95, %c0_96, %c0_97, %c0_98] : memref<4x2x128x50xbf16, #tpu.memory_space<vmem>>, vector<1x1x128x50xbf16>
    %248 = vector.shape_cast %247 : vector<1x1x128x50xbf16> to vector<128x50xbf16>
    %cst_99 = arith.constant dense<0.000000e+00> : vector<32x50xf32>
    %249 = tpu.matmul %246, %248, %cst_99 {dimension_numbers = #tpu.dot_dimension_numbers<[1], [0], [0], [1], [0, 0, 1, 1], [], []>} : vector<32x128xbf16>, vector<128x50xbf16>, vector<32x50xf32> -> vector<32x50xf32>
    %250 = vector.extract_strided_slice %204 {offsets = [0, 128], sizes = [16, 128], strides = [1, 1]} : vector<32x768xbf16> to vector<16x128xbf16>
    %251 = vector.extract_strided_slice %204 {offsets = [0, 384], sizes = [16, 128], strides = [1, 1]} : vector<32x768xbf16> to vector<16x128xbf16>
    %252 = vector.extract_strided_slice %204 {offsets = [0, 640], sizes = [16, 128], strides = [1, 1]} : vector<32x768xbf16> to vector<16x128xbf16>
    %cst_100 = arith.constant dense<0.000000e+00> : vector<16x16xf32>
    %253 = tpu.matmul %250, %251, %cst_100 {dimension_numbers = #tpu.dot_dimension_numbers<[1], [1], [0], [0], [0, 0, 1, 0], [], []>} : vector<16x128xbf16>, vector<16x128xbf16>, vector<16x16xf32> -> vector<16x16xf32>
    %254 = vector.extract_strided_slice %1 {offsets = [0, 0, 0], sizes = [1, 1, 16], strides = [1, 1, 1]} : vector<2x1x16xf32> to vector<1x1x16xf32>
    %255 = vector.shape_cast %254 : vector<1x1x16xf32> to vector<1x16xf32>
    %256 = vector.broadcast %255 : vector<1x16xf32> to vector<16x16xf32>
    %257 = arith.addf %253, %256 : vector<16x16xf32>
    %cst_101 = arith.constant dense<0xFF800000> : vector<16xf32>
    %258 = vector.multi_reduction <maximumf>, %257, %cst_101 [1] : vector<16x16xf32> to vector<16xf32>
    %259 = vector.shape_cast %258 : vector<16xf32> to vector<16x1xf32>
    %260 = vector.broadcast %259 : vector<16x1xf32> to vector<16x16xf32>
    %261 = arith.subf %257, %260 : vector<16x16xf32>
    %262 = math.exp %261 : vector<16x16xf32>
    %cst_102 = arith.constant dense<0.000000e+00> : vector<16xf32>
    %263 = vector.multi_reduction <add>, %262, %cst_102 [1] : vector<16x16xf32> to vector<16xf32>
    %264 = vector.shape_cast %263 : vector<16xf32> to vector<16x1xf32>
    %265 = tpu.reciprocal %264 {approx = true} : vector<16x1xf32> -> vector<16x1xf32>
    %266 = vector.broadcast %265 : vector<16x1xf32> to vector<16x16xf32>
    %267 = arith.mulf %262, %266 : vector<16x16xf32>
    %268 = arith.truncf %267 : vector<16x16xf32> to vector<16x16xbf16>
    %cst_103 = arith.constant dense<0.000000e+00> : vector<16x128xf32>
    %269 = tpu.matmul %268, %252, %cst_103 {dimension_numbers = #tpu.dot_dimension_numbers<[1], [0], [0], [1], [0, 0, 1, 1], [], []>} : vector<16x16xbf16>, vector<16x128xbf16>, vector<16x128xf32> -> vector<16x128xf32>
    %270 = vector.extract_strided_slice %204 {offsets = [16, 128], sizes = [16, 128], strides = [1, 1]} : vector<32x768xbf16> to vector<16x128xbf16>
    %271 = vector.extract_strided_slice %204 {offsets = [16, 384], sizes = [16, 128], strides = [1, 1]} : vector<32x768xbf16> to vector<16x128xbf16>
    %272 = vector.extract_strided_slice %204 {offsets = [16, 640], sizes = [16, 128], strides = [1, 1]} : vector<32x768xbf16> to vector<16x128xbf16>
    %cst_104 = arith.constant dense<0.000000e+00> : vector<16x16xf32>
    %273 = tpu.matmul %270, %271, %cst_104 {dimension_numbers = #tpu.dot_dimension_numbers<[1], [1], [0], [0], [0, 0, 1, 0], [], []>} : vector<16x128xbf16>, vector<16x128xbf16>, vector<16x16xf32> -> vector<16x16xf32>
    %274 = vector.extract_strided_slice %1 {offsets = [1, 0, 0], sizes = [1, 1, 16], strides = [1, 1, 1]} : vector<2x1x16xf32> to vector<1x1x16xf32>
    %275 = vector.shape_cast %274 : vector<1x1x16xf32> to vector<1x16xf32>
    %276 = vector.broadcast %275 : vector<1x16xf32> to vector<16x16xf32>
    %277 = arith.addf %273, %276 : vector<16x16xf32>
    %cst_105 = arith.constant dense<0xFF800000> : vector<16xf32>
    %278 = vector.multi_reduction <maximumf>, %277, %cst_105 [1] : vector<16x16xf32> to vector<16xf32>
    %279 = vector.shape_cast %278 : vector<16xf32> to vector<16x1xf32>
    %280 = vector.broadcast %279 : vector<16x1xf32> to vector<16x16xf32>
    %281 = arith.subf %277, %280 : vector<16x16xf32>
    %282 = math.exp %281 : vector<16x16xf32>
    %cst_106 = arith.constant dense<0.000000e+00> : vector<16xf32>
    %283 = vector.multi_reduction <add>, %282, %cst_106 [1] : vector<16x16xf32> to vector<16xf32>
    %284 = vector.shape_cast %283 : vector<16xf32> to vector<16x1xf32>
    %285 = tpu.reciprocal %284 {approx = true} : vector<16x1xf32> -> vector<16x1xf32>
    %286 = vector.broadcast %285 : vector<16x1xf32> to vector<16x16xf32>
    %287 = arith.mulf %282, %286 : vector<16x16xf32>
    %288 = arith.truncf %287 : vector<16x16xf32> to vector<16x16xbf16>
    %cst_107 = arith.constant dense<0.000000e+00> : vector<16x128xf32>
    %289 = tpu.matmul %288, %272, %cst_107 {dimension_numbers = #tpu.dot_dimension_numbers<[1], [0], [0], [1], [0, 0, 1, 1], [], []>} : vector<16x16xbf16>, vector<16x128xbf16>, vector<16x128xf32> -> vector<16x128xf32>
    %290 = tpu.concatenate %269, %289 in 0 : vector<16x128xf32>, vector<16x128xf32> -> vector<32x128xf32>
    %291 = arith.truncf %290 : vector<32x128xf32> to vector<32x128xbf16>
    %c1_108 = arith.constant 1 : index
    %c1_109 = arith.constant 1 : index
    %c0_110 = arith.constant 0 : index
    %c0_111 = arith.constant 0 : index
    %292 = vector.load %arg4[%c1_108, %c1_109, %c0_110, %c0_111] : memref<4x2x128x50xbf16, #tpu.memory_space<vmem>>, vector<1x1x128x50xbf16>
    %293 = vector.shape_cast %292 : vector<1x1x128x50xbf16> to vector<128x50xbf16>
    %cst_112 = arith.constant dense<0.000000e+00> : vector<32x50xf32>
    %294 = tpu.matmul %291, %293, %cst_112 {dimension_numbers = #tpu.dot_dimension_numbers<[1], [0], [0], [1], [0, 0, 1, 1], [], []>} : vector<32x128xbf16>, vector<128x50xbf16>, vector<32x50xf32> -> vector<32x50xf32>
    %295 = arith.addf %249, %294 : vector<32x50xf32>
    %296 = arith.addf %173, %295 : vector<32x50xf32>
    %c1_113 = arith.constant 1 : index
    %c0_114 = arith.constant 0 : index
    %c0_115 = arith.constant 0 : index
    %297 = vector.load %arg5[%c1_113, %c0_114, %c0_115] : memref<4x1x50xf32, #tpu.memory_space<vmem>>, vector<1x1x50xf32>
    %298 = vector.shape_cast %297 : vector<1x1x50xf32> to vector<1x50xf32>
    %299 = vector.broadcast %298 : vector<1x50xf32> to vector<32x50xf32>
    %300 = arith.addf %296, %299 : vector<32x50xf32>
    %c1_116 = arith.constant 1 : index
    %c0_117 = arith.constant 0 : index
    %c0_118 = arith.constant 0 : index
    %301 = vector.load %arg8[%c1_116, %c0_117, %c0_118] : memref<4x1x50xf32, #tpu.memory_space<vmem>>, vector<1x1x50xf32>
    %302 = vector.shape_cast %301 : vector<1x1x50xf32> to vector<1x50xf32>
    %c1_119 = arith.constant 1 : index
    %c0_120 = arith.constant 0 : index
    %c0_121 = arith.constant 0 : index
    %303 = vector.load %arg9[%c1_119, %c0_120, %c0_121] : memref<4x1x50xf32, #tpu.memory_space<vmem>>, vector<1x1x50xf32>
    %304 = vector.shape_cast %303 : vector<1x1x50xf32> to vector<1x50xf32>
    %cst_122 = arith.constant dense<0.000000e+00> : vector<32xf32>
    %305 = vector.multi_reduction <add>, %300, %cst_122 [1] : vector<32x50xf32> to vector<32xf32>
    %306 = vector.shape_cast %305 : vector<32xf32> to vector<32x1xf32>
    %cst_123 = arith.constant 5.000000e+01 : f32
    %307 = vector.broadcast %cst_123 : f32 to vector<32x1xf32>
    %308 = arith.divf %306, %307 : vector<32x1xf32>
    %309 = vector.broadcast %308 : vector<32x1xf32> to vector<32x50xf32>
    %310 = arith.subf %300, %309 : vector<32x50xf32>
    %311 = arith.mulf %310, %310 : vector<32x50xf32>
    %cst_124 = arith.constant dense<0.000000e+00> : vector<32xf32>
    %312 = vector.multi_reduction <add>, %311, %cst_124 [1] : vector<32x50xf32> to vector<32xf32>
    %313 = vector.shape_cast %312 : vector<32xf32> to vector<32x1xf32>
    %cst_125 = arith.constant 5.000000e+01 : f32
    %314 = vector.broadcast %cst_125 : f32 to vector<32x1xf32>
    %315 = arith.divf %313, %314 : vector<32x1xf32>
    %316 = vector.broadcast %308 : vector<32x1xf32> to vector<32x50xf32>
    %317 = arith.subf %300, %316 : vector<32x50xf32>
    %cst_126 = arith.constant 9.99999974E-6 : f32
    %318 = vector.broadcast %cst_126 : f32 to vector<32x1xf32>
    %319 = arith.addf %315, %318 : vector<32x1xf32>
    %320 = math.rsqrt %319 : vector<32x1xf32>
    %321 = vector.broadcast %320 : vector<32x1xf32> to vector<32x50xf32>
    %322 = arith.mulf %317, %321 : vector<32x50xf32>
    %323 = vector.broadcast %302 : vector<1x50xf32> to vector<32x50xf32>
    %324 = arith.mulf %322, %323 : vector<32x50xf32>
    %325 = vector.broadcast %304 : vector<1x50xf32> to vector<32x50xf32>
    %326 = arith.addf %324, %325 : vector<32x50xf32>
    %327 = arith.truncf %326 : vector<32x50xf32> to vector<32x50xbf16>
    %c1_127 = arith.constant 1 : index
    %c0_128 = arith.constant 0 : index
    %c0_129 = arith.constant 0 : index
    %328 = vector.load %arg10[%c1_127, %c0_128, %c0_129] : memref<4x50x200xbf16, #tpu.memory_space<vmem>>, vector<1x50x200xbf16>
    %329 = vector.shape_cast %328 : vector<1x50x200xbf16> to vector<50x200xbf16>
    %cst_130 = arith.constant dense<0.000000e+00> : vector<32x200xf32>
    %330 = tpu.matmul %327, %329, %cst_130 {dimension_numbers = #tpu.dot_dimension_numbers<[1], [0], [0], [1], [0, 0, 1, 1], [], []>} : vector<32x50xbf16>, vector<50x200xbf16>, vector<32x200xf32> -> vector<32x200xf32>
    %c1_131 = arith.constant 1 : index
    %c0_132 = arith.constant 0 : index
    %c0_133 = arith.constant 0 : index
    %331 = vector.load %arg11[%c1_131, %c0_132, %c0_133] : memref<4x1x200xf32, #tpu.memory_space<vmem>>, vector<1x1x200xf32>
    %332 = vector.shape_cast %331 : vector<1x1x200xf32> to vector<1x200xf32>
    %333 = vector.broadcast %332 : vector<1x200xf32> to vector<32x200xf32>
    %334 = arith.addf %330, %333 : vector<32x200xf32>
    %cst_134 = arith.constant 0.000000e+00 : f32
    %335 = vector.broadcast %cst_134 : f32 to vector<32x200xf32>
    %336 = arith.maximumf %334, %335 : vector<32x200xf32>
    %337 = arith.truncf %336 : vector<32x200xf32> to vector<32x200xbf16>
    %c1_135 = arith.constant 1 : index
    %c0_136 = arith.constant 0 : index
    %c0_137 = arith.constant 0 : index
    %338 = vector.load %arg12[%c1_135, %c0_136, %c0_137] : memref<4x200x50xbf16, #tpu.memory_space<vmem>>, vector<1x200x50xbf16>
    %339 = vector.shape_cast %338 : vector<1x200x50xbf16> to vector<200x50xbf16>
    %cst_138 = arith.constant dense<0.000000e+00> : vector<32x50xf32>
    %340 = tpu.matmul %337, %339, %cst_138 {dimension_numbers = #tpu.dot_dimension_numbers<[1], [0], [0], [1], [0, 0, 1, 1], [], []>} : vector<32x200xbf16>, vector<200x50xbf16>, vector<32x50xf32> -> vector<32x50xf32>
    %c1_139 = arith.constant 1 : index
    %c0_140 = arith.constant 0 : index
    %c0_141 = arith.constant 0 : index
    %341 = vector.load %arg13[%c1_139, %c0_140, %c0_141] : memref<4x1x50xf32, #tpu.memory_space<vmem>>, vector<1x1x50xf32>
    %342 = vector.shape_cast %341 : vector<1x1x50xf32> to vector<1x50xf32>
    %343 = vector.broadcast %342 : vector<1x50xf32> to vector<32x50xf32>
    %344 = arith.addf %340, %343 : vector<32x50xf32>
    %345 = arith.addf %300, %344 : vector<32x50xf32>
    %c2 = arith.constant 2 : index
    %c0_142 = arith.constant 0 : index
    %c0_143 = arith.constant 0 : index
    %346 = vector.load %arg6[%c2, %c0_142, %c0_143] : memref<4x1x50xf32, #tpu.memory_space<vmem>>, vector<1x1x50xf32>
    %347 = vector.shape_cast %346 : vector<1x1x50xf32> to vector<1x50xf32>
    %c2_144 = arith.constant 2 : index
    %c0_145 = arith.constant 0 : index
    %c0_146 = arith.constant 0 : index
    %348 = vector.load %arg7[%c2_144, %c0_145, %c0_146] : memref<4x1x50xf32, #tpu.memory_space<vmem>>, vector<1x1x50xf32>
    %349 = vector.shape_cast %348 : vector<1x1x50xf32> to vector<1x50xf32>
    %cst_147 = arith.constant dense<0.000000e+00> : vector<32xf32>
    %350 = vector.multi_reduction <add>, %345, %cst_147 [1] : vector<32x50xf32> to vector<32xf32>
    %351 = vector.shape_cast %350 : vector<32xf32> to vector<32x1xf32>
    %cst_148 = arith.constant 5.000000e+01 : f32
    %352 = vector.broadcast %cst_148 : f32 to vector<32x1xf32>
    %353 = arith.divf %351, %352 : vector<32x1xf32>
    %354 = vector.broadcast %353 : vector<32x1xf32> to vector<32x50xf32>
    %355 = arith.subf %345, %354 : vector<32x50xf32>
    %356 = arith.mulf %355, %355 : vector<32x50xf32>
    %cst_149 = arith.constant dense<0.000000e+00> : vector<32xf32>
    %357 = vector.multi_reduction <add>, %356, %cst_149 [1] : vector<32x50xf32> to vector<32xf32>
    %358 = vector.shape_cast %357 : vector<32xf32> to vector<32x1xf32>
    %cst_150 = arith.constant 5.000000e+01 : f32
    %359 = vector.broadcast %cst_150 : f32 to vector<32x1xf32>
    %360 = arith.divf %358, %359 : vector<32x1xf32>
    %361 = vector.broadcast %353 : vector<32x1xf32> to vector<32x50xf32>
    %362 = arith.subf %345, %361 : vector<32x50xf32>
    %cst_151 = arith.constant 9.99999974E-6 : f32
    %363 = vector.broadcast %cst_151 : f32 to vector<32x1xf32>
    %364 = arith.addf %360, %363 : vector<32x1xf32>
    %365 = math.rsqrt %364 : vector<32x1xf32>
    %366 = vector.broadcast %365 : vector<32x1xf32> to vector<32x50xf32>
    %367 = arith.mulf %362, %366 : vector<32x50xf32>
    %368 = vector.broadcast %347 : vector<1x50xf32> to vector<32x50xf32>
    %369 = arith.mulf %367, %368 : vector<32x50xf32>
    %370 = vector.broadcast %349 : vector<1x50xf32> to vector<32x50xf32>
    %371 = arith.addf %369, %370 : vector<32x50xf32>
    %372 = arith.truncf %371 : vector<32x50xf32> to vector<32x50xbf16>
    %c2_152 = arith.constant 2 : index
    %c0_153 = arith.constant 0 : index
    %c0_154 = arith.constant 0 : index
    %373 = vector.load %arg3[%c2_152, %c0_153, %c0_154] : memref<4x50x768xbf16, #tpu.memory_space<vmem>>, vector<1x50x768xbf16>
    %374 = vector.shape_cast %373 : vector<1x50x768xbf16> to vector<50x768xbf16>
    %cst_155 = arith.constant dense<0.000000e+00> : vector<32x768xf32>
    %375 = tpu.matmul %372, %374, %cst_155 {dimension_numbers = #tpu.dot_dimension_numbers<[1], [0], [0], [1], [0, 0, 1, 1], [], []>} : vector<32x50xbf16>, vector<50x768xbf16>, vector<32x768xf32> -> vector<32x768xf32>
    %376 = arith.truncf %375 : vector<32x768xf32> to vector<32x768xbf16>
    %377 = vector.extract_strided_slice %376 {offsets = [0, 0], sizes = [16, 128], strides = [1, 1]} : vector<32x768xbf16> to vector<16x128xbf16>
    %378 = vector.extract_strided_slice %376 {offsets = [0, 256], sizes = [16, 128], strides = [1, 1]} : vector<32x768xbf16> to vector<16x128xbf16>
    %379 = vector.extract_strided_slice %376 {offsets = [0, 512], sizes = [16, 128], strides = [1, 1]} : vector<32x768xbf16> to vector<16x128xbf16>
    %cst_156 = arith.constant dense<0.000000e+00> : vector<16x16xf32>
    %380 = tpu.matmul %377, %378, %cst_156 {dimension_numbers = #tpu.dot_dimension_numbers<[1], [1], [0], [0], [0, 0, 1, 0], [], []>} : vector<16x128xbf16>, vector<16x128xbf16>, vector<16x16xf32> -> vector<16x16xf32>
    %381 = vector.extract_strided_slice %1 {offsets = [0, 0, 0], sizes = [1, 1, 16], strides = [1, 1, 1]} : vector<2x1x16xf32> to vector<1x1x16xf32>
    %382 = vector.shape_cast %381 : vector<1x1x16xf32> to vector<1x16xf32>
    %383 = vector.broadcast %382 : vector<1x16xf32> to vector<16x16xf32>
    %384 = arith.addf %380, %383 : vector<16x16xf32>
    %cst_157 = arith.constant dense<0xFF800000> : vector<16xf32>
    %385 = vector.multi_reduction <maximumf>, %384, %cst_157 [1] : vector<16x16xf32> to vector<16xf32>
    %386 = vector.shape_cast %385 : vector<16xf32> to vector<16x1xf32>
    %387 = vector.broadcast %386 : vector<16x1xf32> to vector<16x16xf32>
    %388 = arith.subf %384, %387 : vector<16x16xf32>
    %389 = math.exp %388 : vector<16x16xf32>
    %cst_158 = arith.constant dense<0.000000e+00> : vector<16xf32>
    %390 = vector.multi_reduction <add>, %389, %cst_158 [1] : vector<16x16xf32> to vector<16xf32>
    %391 = vector.shape_cast %390 : vector<16xf32> to vector<16x1xf32>
    %392 = tpu.reciprocal %391 {approx = true} : vector<16x1xf32> -> vector<16x1xf32>
    %393 = vector.broadcast %392 : vector<16x1xf32> to vector<16x16xf32>
    %394 = arith.mulf %389, %393 : vector<16x16xf32>
    %395 = arith.truncf %394 : vector<16x16xf32> to vector<16x16xbf16>
    %cst_159 = arith.constant dense<0.000000e+00> : vector<16x128xf32>
    %396 = tpu.matmul %395, %379, %cst_159 {dimension_numbers = #tpu.dot_dimension_numbers<[1], [0], [0], [1], [0, 0, 1, 1], [], []>} : vector<16x16xbf16>, vector<16x128xbf16>, vector<16x128xf32> -> vector<16x128xf32>
    %397 = vector.extract_strided_slice %376 {offsets = [16, 0], sizes = [16, 128], strides = [1, 1]} : vector<32x768xbf16> to vector<16x128xbf16>
    %398 = vector.extract_strided_slice %376 {offsets = [16, 256], sizes = [16, 128], strides = [1, 1]} : vector<32x768xbf16> to vector<16x128xbf16>
    %399 = vector.extract_strided_slice %376 {offsets = [16, 512], sizes = [16, 128], strides = [1, 1]} : vector<32x768xbf16> to vector<16x128xbf16>
    %cst_160 = arith.constant dense<0.000000e+00> : vector<16x16xf32>
    %400 = tpu.matmul %397, %398, %cst_160 {dimension_numbers = #tpu.dot_dimension_numbers<[1], [1], [0], [0], [0, 0, 1, 0], [], []>} : vector<16x128xbf16>, vector<16x128xbf16>, vector<16x16xf32> -> vector<16x16xf32>
    %401 = vector.extract_strided_slice %1 {offsets = [1, 0, 0], sizes = [1, 1, 16], strides = [1, 1, 1]} : vector<2x1x16xf32> to vector<1x1x16xf32>
    %402 = vector.shape_cast %401 : vector<1x1x16xf32> to vector<1x16xf32>
    %403 = vector.broadcast %402 : vector<1x16xf32> to vector<16x16xf32>
    %404 = arith.addf %400, %403 : vector<16x16xf32>
    %cst_161 = arith.constant dense<0xFF800000> : vector<16xf32>
    %405 = vector.multi_reduction <maximumf>, %404, %cst_161 [1] : vector<16x16xf32> to vector<16xf32>
    %406 = vector.shape_cast %405 : vector<16xf32> to vector<16x1xf32>
    %407 = vector.broadcast %406 : vector<16x1xf32> to vector<16x16xf32>
    %408 = arith.subf %404, %407 : vector<16x16xf32>
    %409 = math.exp %408 : vector<16x16xf32>
    %cst_162 = arith.constant dense<0.000000e+00> : vector<16xf32>
    %410 = vector.multi_reduction <add>, %409, %cst_162 [1] : vector<16x16xf32> to vector<16xf32>
    %411 = vector.shape_cast %410 : vector<16xf32> to vector<16x1xf32>
    %412 = tpu.reciprocal %411 {approx = true} : vector<16x1xf32> -> vector<16x1xf32>
    %413 = vector.broadcast %412 : vector<16x1xf32> to vector<16x16xf32>
    %414 = arith.mulf %409, %413 : vector<16x16xf32>
    %415 = arith.truncf %414 : vector<16x16xf32> to vector<16x16xbf16>
    %cst_163 = arith.constant dense<0.000000e+00> : vector<16x128xf32>
    %416 = tpu.matmul %415, %399, %cst_163 {dimension_numbers = #tpu.dot_dimension_numbers<[1], [0], [0], [1], [0, 0, 1, 1], [], []>} : vector<16x16xbf16>, vector<16x128xbf16>, vector<16x128xf32> -> vector<16x128xf32>
    %417 = tpu.concatenate %396, %416 in 0 : vector<16x128xf32>, vector<16x128xf32> -> vector<32x128xf32>
    %418 = arith.truncf %417 : vector<32x128xf32> to vector<32x128xbf16>
    %c2_164 = arith.constant 2 : index
    %c0_165 = arith.constant 0 : index
    %c0_166 = arith.constant 0 : index
    %c0_167 = arith.constant 0 : index
    %419 = vector.load %arg4[%c2_164, %c0_165, %c0_166, %c0_167] : memref<4x2x128x50xbf16, #tpu.memory_space<vmem>>, vector<1x1x128x50xbf16>
    %420 = vector.shape_cast %419 : vector<1x1x128x50xbf16> to vector<128x50xbf16>
    %cst_168 = arith.constant dense<0.000000e+00> : vector<32x50xf32>
    %421 = tpu.matmul %418, %420, %cst_168 {dimension_numbers = #tpu.dot_dimension_numbers<[1], [0], [0], [1], [0, 0, 1, 1], [], []>} : vector<32x128xbf16>, vector<128x50xbf16>, vector<32x50xf32> -> vector<32x50xf32>
    %422 = vector.extract_strided_slice %376 {offsets = [0, 128], sizes = [16, 128], strides = [1, 1]} : vector<32x768xbf16> to vector<16x128xbf16>
    %423 = vector.extract_strided_slice %376 {offsets = [0, 384], sizes = [16, 128], strides = [1, 1]} : vector<32x768xbf16> to vector<16x128xbf16>
    %424 = vector.extract_strided_slice %376 {offsets = [0, 640], sizes = [16, 128], strides = [1, 1]} : vector<32x768xbf16> to vector<16x128xbf16>
    %cst_169 = arith.constant dense<0.000000e+00> : vector<16x16xf32>
    %425 = tpu.matmul %422, %423, %cst_169 {dimension_numbers = #tpu.dot_dimension_numbers<[1], [1], [0], [0], [0, 0, 1, 0], [], []>} : vector<16x128xbf16>, vector<16x128xbf16>, vector<16x16xf32> -> vector<16x16xf32>
    %426 = vector.extract_strided_slice %1 {offsets = [0, 0, 0], sizes = [1, 1, 16], strides = [1, 1, 1]} : vector<2x1x16xf32> to vector<1x1x16xf32>
    %427 = vector.shape_cast %426 : vector<1x1x16xf32> to vector<1x16xf32>
    %428 = vector.broadcast %427 : vector<1x16xf32> to vector<16x16xf32>
    %429 = arith.addf %425, %428 : vector<16x16xf32>
    %cst_170 = arith.constant dense<0xFF800000> : vector<16xf32>
    %430 = vector.multi_reduction <maximumf>, %429, %cst_170 [1] : vector<16x16xf32> to vector<16xf32>
    %431 = vector.shape_cast %430 : vector<16xf32> to vector<16x1xf32>
    %432 = vector.broadcast %431 : vector<16x1xf32> to vector<16x16xf32>
    %433 = arith.subf %429, %432 : vector<16x16xf32>
    %434 = math.exp %433 : vector<16x16xf32>
    %cst_171 = arith.constant dense<0.000000e+00> : vector<16xf32>
    %435 = vector.multi_reduction <add>, %434, %cst_171 [1] : vector<16x16xf32> to vector<16xf32>
    %436 = vector.shape_cast %435 : vector<16xf32> to vector<16x1xf32>
    %437 = tpu.reciprocal %436 {approx = true} : vector<16x1xf32> -> vector<16x1xf32>
    %438 = vector.broadcast %437 : vector<16x1xf32> to vector<16x16xf32>
    %439 = arith.mulf %434, %438 : vector<16x16xf32>
    %440 = arith.truncf %439 : vector<16x16xf32> to vector<16x16xbf16>
    %cst_172 = arith.constant dense<0.000000e+00> : vector<16x128xf32>
    %441 = tpu.matmul %440, %424, %cst_172 {dimension_numbers = #tpu.dot_dimension_numbers<[1], [0], [0], [1], [0, 0, 1, 1], [], []>} : vector<16x16xbf16>, vector<16x128xbf16>, vector<16x128xf32> -> vector<16x128xf32>
    %442 = vector.extract_strided_slice %376 {offsets = [16, 128], sizes = [16, 128], strides = [1, 1]} : vector<32x768xbf16> to vector<16x128xbf16>
    %443 = vector.extract_strided_slice %376 {offsets = [16, 384], sizes = [16, 128], strides = [1, 1]} : vector<32x768xbf16> to vector<16x128xbf16>
    %444 = vector.extract_strided_slice %376 {offsets = [16, 640], sizes = [16, 128], strides = [1, 1]} : vector<32x768xbf16> to vector<16x128xbf16>
    %cst_173 = arith.constant dense<0.000000e+00> : vector<16x16xf32>
    %445 = tpu.matmul %442, %443, %cst_173 {dimension_numbers = #tpu.dot_dimension_numbers<[1], [1], [0], [0], [0, 0, 1, 0], [], []>} : vector<16x128xbf16>, vector<16x128xbf16>, vector<16x16xf32> -> vector<16x16xf32>
    %446 = vector.extract_strided_slice %1 {offsets = [1, 0, 0], sizes = [1, 1, 16], strides = [1, 1, 1]} : vector<2x1x16xf32> to vector<1x1x16xf32>
    %447 = vector.shape_cast %446 : vector<1x1x16xf32> to vector<1x16xf32>
    %448 = vector.broadcast %447 : vector<1x16xf32> to vector<16x16xf32>
    %449 = arith.addf %445, %448 : vector<16x16xf32>
    %cst_174 = arith.constant dense<0xFF800000> : vector<16xf32>
    %450 = vector.multi_reduction <maximumf>, %449, %cst_174 [1] : vector<16x16xf32> to vector<16xf32>
    %451 = vector.shape_cast %450 : vector<16xf32> to vector<16x1xf32>
    %452 = vector.broadcast %451 : vector<16x1xf32> to vector<16x16xf32>
    %453 = arith.subf %449, %452 : vector<16x16xf32>
    %454 = math.exp %453 : vector<16x16xf32>
    %cst_175 = arith.constant dense<0.000000e+00> : vector<16xf32>
    %455 = vector.multi_reduction <add>, %454, %cst_175 [1] : vector<16x16xf32> to vector<16xf32>
    %456 = vector.shape_cast %455 : vector<16xf32> to vector<16x1xf32>
    %457 = tpu.reciprocal %456 {approx = true} : vector<16x1xf32> -> vector<16x1xf32>
    %458 = vector.broadcast %457 : vector<16x1xf32> to vector<16x16xf32>
    %459 = arith.mulf %454, %458 : vector<16x16xf32>
    %460 = arith.truncf %459 : vector<16x16xf32> to vector<16x16xbf16>
    %cst_176 = arith.constant dense<0.000000e+00> : vector<16x128xf32>
    %461 = tpu.matmul %460, %444, %cst_176 {dimension_numbers = #tpu.dot_dimension_numbers<[1], [0], [0], [1], [0, 0, 1, 1], [], []>} : vector<16x16xbf16>, vector<16x128xbf16>, vector<16x128xf32> -> vector<16x128xf32>
    %462 = tpu.concatenate %441, %461 in 0 : vector<16x128xf32>, vector<16x128xf32> -> vector<32x128xf32>
    %463 = arith.truncf %462 : vector<32x128xf32> to vector<32x128xbf16>
    %c2_177 = arith.constant 2 : index
    %c1_178 = arith.constant 1 : index
    %c0_179 = arith.constant 0 : index
    %c0_180 = arith.constant 0 : index
    %464 = vector.load %arg4[%c2_177, %c1_178, %c0_179, %c0_180] : memref<4x2x128x50xbf16, #tpu.memory_space<vmem>>, vector<1x1x128x50xbf16>
    %465 = vector.shape_cast %464 : vector<1x1x128x50xbf16> to vector<128x50xbf16>
    %cst_181 = arith.constant dense<0.000000e+00> : vector<32x50xf32>
    %466 = tpu.matmul %463, %465, %cst_181 {dimension_numbers = #tpu.dot_dimension_numbers<[1], [0], [0], [1], [0, 0, 1, 1], [], []>} : vector<32x128xbf16>, vector<128x50xbf16>, vector<32x50xf32> -> vector<32x50xf32>
    %467 = arith.addf %421, %466 : vector<32x50xf32>
    %468 = arith.addf %345, %467 : vector<32x50xf32>
    %c2_182 = arith.constant 2 : index
    %c0_183 = arith.constant 0 : index
    %c0_184 = arith.constant 0 : index
    %469 = vector.load %arg5[%c2_182, %c0_183, %c0_184] : memref<4x1x50xf32, #tpu.memory_space<vmem>>, vector<1x1x50xf32>
    %470 = vector.shape_cast %469 : vector<1x1x50xf32> to vector<1x50xf32>
    %471 = vector.broadcast %470 : vector<1x50xf32> to vector<32x50xf32>
    %472 = arith.addf %468, %471 : vector<32x50xf32>
    %c2_185 = arith.constant 2 : index
    %c0_186 = arith.constant 0 : index
    %c0_187 = arith.constant 0 : index
    %473 = vector.load %arg8[%c2_185, %c0_186, %c0_187] : memref<4x1x50xf32, #tpu.memory_space<vmem>>, vector<1x1x50xf32>
    %474 = vector.shape_cast %473 : vector<1x1x50xf32> to vector<1x50xf32>
    %c2_188 = arith.constant 2 : index
    %c0_189 = arith.constant 0 : index
    %c0_190 = arith.constant 0 : index
    %475 = vector.load %arg9[%c2_188, %c0_189, %c0_190] : memref<4x1x50xf32, #tpu.memory_space<vmem>>, vector<1x1x50xf32>
    %476 = vector.shape_cast %475 : vector<1x1x50xf32> to vector<1x50xf32>
    %cst_191 = arith.constant dense<0.000000e+00> : vector<32xf32>
    %477 = vector.multi_reduction <add>, %472, %cst_191 [1] : vector<32x50xf32> to vector<32xf32>
    %478 = vector.shape_cast %477 : vector<32xf32> to vector<32x1xf32>
    %cst_192 = arith.constant 5.000000e+01 : f32
    %479 = vector.broadcast %cst_192 : f32 to vector<32x1xf32>
    %480 = arith.divf %478, %479 : vector<32x1xf32>
    %481 = vector.broadcast %480 : vector<32x1xf32> to vector<32x50xf32>
    %482 = arith.subf %472, %481 : vector<32x50xf32>
    %483 = arith.mulf %482, %482 : vector<32x50xf32>
    %cst_193 = arith.constant dense<0.000000e+00> : vector<32xf32>
    %484 = vector.multi_reduction <add>, %483, %cst_193 [1] : vector<32x50xf32> to vector<32xf32>
    %485 = vector.shape_cast %484 : vector<32xf32> to vector<32x1xf32>
    %cst_194 = arith.constant 5.000000e+01 : f32
    %486 = vector.broadcast %cst_194 : f32 to vector<32x1xf32>
    %487 = arith.divf %485, %486 : vector<32x1xf32>
    %488 = vector.broadcast %480 : vector<32x1xf32> to vector<32x50xf32>
    %489 = arith.subf %472, %488 : vector<32x50xf32>
    %cst_195 = arith.constant 9.99999974E-6 : f32
    %490 = vector.broadcast %cst_195 : f32 to vector<32x1xf32>
    %491 = arith.addf %487, %490 : vector<32x1xf32>
    %492 = math.rsqrt %491 : vector<32x1xf32>
    %493 = vector.broadcast %492 : vector<32x1xf32> to vector<32x50xf32>
    %494 = arith.mulf %489, %493 : vector<32x50xf32>
    %495 = vector.broadcast %474 : vector<1x50xf32> to vector<32x50xf32>
    %496 = arith.mulf %494, %495 : vector<32x50xf32>
    %497 = vector.broadcast %476 : vector<1x50xf32> to vector<32x50xf32>
    %498 = arith.addf %496, %497 : vector<32x50xf32>
    %499 = arith.truncf %498 : vector<32x50xf32> to vector<32x50xbf16>
    %c2_196 = arith.constant 2 : index
    %c0_197 = arith.constant 0 : index
    %c0_198 = arith.constant 0 : index
    %500 = vector.load %arg10[%c2_196, %c0_197, %c0_198] : memref<4x50x200xbf16, #tpu.memory_space<vmem>>, vector<1x50x200xbf16>
    %501 = vector.shape_cast %500 : vector<1x50x200xbf16> to vector<50x200xbf16>
    %cst_199 = arith.constant dense<0.000000e+00> : vector<32x200xf32>
    %502 = tpu.matmul %499, %501, %cst_199 {dimension_numbers = #tpu.dot_dimension_numbers<[1], [0], [0], [1], [0, 0, 1, 1], [], []>} : vector<32x50xbf16>, vector<50x200xbf16>, vector<32x200xf32> -> vector<32x200xf32>
    %c2_200 = arith.constant 2 : index
    %c0_201 = arith.constant 0 : index
    %c0_202 = arith.constant 0 : index
    %503 = vector.load %arg11[%c2_200, %c0_201, %c0_202] : memref<4x1x200xf32, #tpu.memory_space<vmem>>, vector<1x1x200xf32>
    %504 = vector.shape_cast %503 : vector<1x1x200xf32> to vector<1x200xf32>
    %505 = vector.broadcast %504 : vector<1x200xf32> to vector<32x200xf32>
    %506 = arith.addf %502, %505 : vector<32x200xf32>
    %cst_203 = arith.constant 0.000000e+00 : f32
    %507 = vector.broadcast %cst_203 : f32 to vector<32x200xf32>
    %508 = arith.maximumf %506, %507 : vector<32x200xf32>
    %509 = arith.truncf %508 : vector<32x200xf32> to vector<32x200xbf16>
    %c2_204 = arith.constant 2 : index
    %c0_205 = arith.constant 0 : index
    %c0_206 = arith.constant 0 : index
    %510 = vector.load %arg12[%c2_204, %c0_205, %c0_206] : memref<4x200x50xbf16, #tpu.memory_space<vmem>>, vector<1x200x50xbf16>
    %511 = vector.shape_cast %510 : vector<1x200x50xbf16> to vector<200x50xbf16>
    %cst_207 = arith.constant dense<0.000000e+00> : vector<32x50xf32>
    %512 = tpu.matmul %509, %511, %cst_207 {dimension_numbers = #tpu.dot_dimension_numbers<[1], [0], [0], [1], [0, 0, 1, 1], [], []>} : vector<32x200xbf16>, vector<200x50xbf16>, vector<32x50xf32> -> vector<32x50xf32>
    %c2_208 = arith.constant 2 : index
    %c0_209 = arith.constant 0 : index
    %c0_210 = arith.constant 0 : index
    %513 = vector.load %arg13[%c2_208, %c0_209, %c0_210] : memref<4x1x50xf32, #tpu.memory_space<vmem>>, vector<1x1x50xf32>
    %514 = vector.shape_cast %513 : vector<1x1x50xf32> to vector<1x50xf32>
    %515 = vector.broadcast %514 : vector<1x50xf32> to vector<32x50xf32>
    %516 = arith.addf %512, %515 : vector<32x50xf32>
    %517 = arith.addf %472, %516 : vector<32x50xf32>
    %c3 = arith.constant 3 : index
    %c0_211 = arith.constant 0 : index
    %c0_212 = arith.constant 0 : index
    %518 = vector.load %arg6[%c3, %c0_211, %c0_212] : memref<4x1x50xf32, #tpu.memory_space<vmem>>, vector<1x1x50xf32>
    %519 = vector.shape_cast %518 : vector<1x1x50xf32> to vector<1x50xf32>
    %c3_213 = arith.constant 3 : index
    %c0_214 = arith.constant 0 : index
    %c0_215 = arith.constant 0 : index
    %520 = vector.load %arg7[%c3_213, %c0_214, %c0_215] : memref<4x1x50xf32, #tpu.memory_space<vmem>>, vector<1x1x50xf32>
    %521 = vector.shape_cast %520 : vector<1x1x50xf32> to vector<1x50xf32>
    %cst_216 = arith.constant dense<0.000000e+00> : vector<32xf32>
    %522 = vector.multi_reduction <add>, %517, %cst_216 [1] : vector<32x50xf32> to vector<32xf32>
    %523 = vector.shape_cast %522 : vector<32xf32> to vector<32x1xf32>
    %cst_217 = arith.constant 5.000000e+01 : f32
    %524 = vector.broadcast %cst_217 : f32 to vector<32x1xf32>
    %525 = arith.divf %523, %524 : vector<32x1xf32>
    %526 = vector.broadcast %525 : vector<32x1xf32> to vector<32x50xf32>
    %527 = arith.subf %517, %526 : vector<32x50xf32>
    %528 = arith.mulf %527, %527 : vector<32x50xf32>
    %cst_218 = arith.constant dense<0.000000e+00> : vector<32xf32>
    %529 = vector.multi_reduction <add>, %528, %cst_218 [1] : vector<32x50xf32> to vector<32xf32>
    %530 = vector.shape_cast %529 : vector<32xf32> to vector<32x1xf32>
    %cst_219 = arith.constant 5.000000e+01 : f32
    %531 = vector.broadcast %cst_219 : f32 to vector<32x1xf32>
    %532 = arith.divf %530, %531 : vector<32x1xf32>
    %533 = vector.broadcast %525 : vector<32x1xf32> to vector<32x50xf32>
    %534 = arith.subf %517, %533 : vector<32x50xf32>
    %cst_220 = arith.constant 9.99999974E-6 : f32
    %535 = vector.broadcast %cst_220 : f32 to vector<32x1xf32>
    %536 = arith.addf %532, %535 : vector<32x1xf32>
    %537 = math.rsqrt %536 : vector<32x1xf32>
    %538 = vector.broadcast %537 : vector<32x1xf32> to vector<32x50xf32>
    %539 = arith.mulf %534, %538 : vector<32x50xf32>
    %540 = vector.broadcast %519 : vector<1x50xf32> to vector<32x50xf32>
    %541 = arith.mulf %539, %540 : vector<32x50xf32>
    %542 = vector.broadcast %521 : vector<1x50xf32> to vector<32x50xf32>
    %543 = arith.addf %541, %542 : vector<32x50xf32>
    %544 = arith.truncf %543 : vector<32x50xf32> to vector<32x50xbf16>
    %c3_221 = arith.constant 3 : index
    %c0_222 = arith.constant 0 : index
    %c0_223 = arith.constant 0 : index
    %545 = vector.load %arg3[%c3_221, %c0_222, %c0_223] : memref<4x50x768xbf16, #tpu.memory_space<vmem>>, vector<1x50x768xbf16>
    %546 = vector.shape_cast %545 : vector<1x50x768xbf16> to vector<50x768xbf16>
    %cst_224 = arith.constant dense<0.000000e+00> : vector<32x768xf32>
    %547 = tpu.matmul %544, %546, %cst_224 {dimension_numbers = #tpu.dot_dimension_numbers<[1], [0], [0], [1], [0, 0, 1, 1], [], []>} : vector<32x50xbf16>, vector<50x768xbf16>, vector<32x768xf32> -> vector<32x768xf32>
    %548 = arith.truncf %547 : vector<32x768xf32> to vector<32x768xbf16>
    %549 = vector.extract_strided_slice %548 {offsets = [0, 0], sizes = [16, 128], strides = [1, 1]} : vector<32x768xbf16> to vector<16x128xbf16>
    %550 = vector.extract_strided_slice %548 {offsets = [0, 256], sizes = [16, 128], strides = [1, 1]} : vector<32x768xbf16> to vector<16x128xbf16>
    %551 = vector.extract_strided_slice %548 {offsets = [0, 512], sizes = [16, 128], strides = [1, 1]} : vector<32x768xbf16> to vector<16x128xbf16>
    %cst_225 = arith.constant dense<0.000000e+00> : vector<16x16xf32>
    %552 = tpu.matmul %549, %550, %cst_225 {dimension_numbers = #tpu.dot_dimension_numbers<[1], [1], [0], [0], [0, 0, 1, 0], [], []>} : vector<16x128xbf16>, vector<16x128xbf16>, vector<16x16xf32> -> vector<16x16xf32>
    %553 = vector.extract_strided_slice %1 {offsets = [0, 0, 0], sizes = [1, 1, 16], strides = [1, 1, 1]} : vector<2x1x16xf32> to vector<1x1x16xf32>
    %554 = vector.shape_cast %553 : vector<1x1x16xf32> to vector<1x16xf32>
    %555 = vector.broadcast %554 : vector<1x16xf32> to vector<16x16xf32>
    %556 = arith.addf %552, %555 : vector<16x16xf32>
    %cst_226 = arith.constant dense<0xFF800000> : vector<16xf32>
    %557 = vector.multi_reduction <maximumf>, %556, %cst_226 [1] : vector<16x16xf32> to vector<16xf32>
    %558 = vector.shape_cast %557 : vector<16xf32> to vector<16x1xf32>
    %559 = vector.broadcast %558 : vector<16x1xf32> to vector<16x16xf32>
    %560 = arith.subf %556, %559 : vector<16x16xf32>
    %561 = math.exp %560 : vector<16x16xf32>
    %cst_227 = arith.constant dense<0.000000e+00> : vector<16xf32>
    %562 = vector.multi_reduction <add>, %561, %cst_227 [1] : vector<16x16xf32> to vector<16xf32>
    %563 = vector.shape_cast %562 : vector<16xf32> to vector<16x1xf32>
    %564 = tpu.reciprocal %563 {approx = true} : vector<16x1xf32> -> vector<16x1xf32>
    %565 = vector.broadcast %564 : vector<16x1xf32> to vector<16x16xf32>
    %566 = arith.mulf %561, %565 : vector<16x16xf32>
    %567 = arith.truncf %566 : vector<16x16xf32> to vector<16x16xbf16>
    %cst_228 = arith.constant dense<0.000000e+00> : vector<16x128xf32>
    %568 = tpu.matmul %567, %551, %cst_228 {dimension_numbers = #tpu.dot_dimension_numbers<[1], [0], [0], [1], [0, 0, 1, 1], [], []>} : vector<16x16xbf16>, vector<16x128xbf16>, vector<16x128xf32> -> vector<16x128xf32>
    %569 = vector.extract_strided_slice %548 {offsets = [16, 0], sizes = [16, 128], strides = [1, 1]} : vector<32x768xbf16> to vector<16x128xbf16>
    %570 = vector.extract_strided_slice %548 {offsets = [16, 256], sizes = [16, 128], strides = [1, 1]} : vector<32x768xbf16> to vector<16x128xbf16>
    %571 = vector.extract_strided_slice %548 {offsets = [16, 512], sizes = [16, 128], strides = [1, 1]} : vector<32x768xbf16> to vector<16x128xbf16>
    %cst_229 = arith.constant dense<0.000000e+00> : vector<16x16xf32>
    %572 = tpu.matmul %569, %570, %cst_229 {dimension_numbers = #tpu.dot_dimension_numbers<[1], [1], [0], [0], [0, 0, 1, 0], [], []>} : vector<16x128xbf16>, vector<16x128xbf16>, vector<16x16xf32> -> vector<16x16xf32>
    %573 = vector.extract_strided_slice %1 {offsets = [1, 0, 0], sizes = [1, 1, 16], strides = [1, 1, 1]} : vector<2x1x16xf32> to vector<1x1x16xf32>
    %574 = vector.shape_cast %573 : vector<1x1x16xf32> to vector<1x16xf32>
    %575 = vector.broadcast %574 : vector<1x16xf32> to vector<16x16xf32>
    %576 = arith.addf %572, %575 : vector<16x16xf32>
    %cst_230 = arith.constant dense<0xFF800000> : vector<16xf32>
    %577 = vector.multi_reduction <maximumf>, %576, %cst_230 [1] : vector<16x16xf32> to vector<16xf32>
    %578 = vector.shape_cast %577 : vector<16xf32> to vector<16x1xf32>
    %579 = vector.broadcast %578 : vector<16x1xf32> to vector<16x16xf32>
    %580 = arith.subf %576, %579 : vector<16x16xf32>
    %581 = math.exp %580 : vector<16x16xf32>
    %cst_231 = arith.constant dense<0.000000e+00> : vector<16xf32>
    %582 = vector.multi_reduction <add>, %581, %cst_231 [1] : vector<16x16xf32> to vector<16xf32>
    %583 = vector.shape_cast %582 : vector<16xf32> to vector<16x1xf32>
    %584 = tpu.reciprocal %583 {approx = true} : vector<16x1xf32> -> vector<16x1xf32>
    %585 = vector.broadcast %584 : vector<16x1xf32> to vector<16x16xf32>
    %586 = arith.mulf %581, %585 : vector<16x16xf32>
    %587 = arith.truncf %586 : vector<16x16xf32> to vector<16x16xbf16>
    %cst_232 = arith.constant dense<0.000000e+00> : vector<16x128xf32>
    %588 = tpu.matmul %587, %571, %cst_232 {dimension_numbers = #tpu.dot_dimension_numbers<[1], [0], [0], [1], [0, 0, 1, 1], [], []>} : vector<16x16xbf16>, vector<16x128xbf16>, vector<16x128xf32> -> vector<16x128xf32>
    %589 = tpu.concatenate %568, %588 in 0 : vector<16x128xf32>, vector<16x128xf32> -> vector<32x128xf32>
    %590 = arith.truncf %589 : vector<32x128xf32> to vector<32x128xbf16>
    %c3_233 = arith.constant 3 : index
    %c0_234 = arith.constant 0 : index
    %c0_235 = arith.constant 0 : index
    %c0_236 = arith.constant 0 : index
    %591 = vector.load %arg4[%c3_233, %c0_234, %c0_235, %c0_236] : memref<4x2x128x50xbf16, #tpu.memory_space<vmem>>, vector<1x1x128x50xbf16>
    %592 = vector.shape_cast %591 : vector<1x1x128x50xbf16> to vector<128x50xbf16>
    %cst_237 = arith.constant dense<0.000000e+00> : vector<32x50xf32>
    %593 = tpu.matmul %590, %592, %cst_237 {dimension_numbers = #tpu.dot_dimension_numbers<[1], [0], [0], [1], [0, 0, 1, 1], [], []>} : vector<32x128xbf16>, vector<128x50xbf16>, vector<32x50xf32> -> vector<32x50xf32>
    %594 = vector.extract_strided_slice %548 {offsets = [0, 128], sizes = [16, 128], strides = [1, 1]} : vector<32x768xbf16> to vector<16x128xbf16>
    %595 = vector.extract_strided_slice %548 {offsets = [0, 384], sizes = [16, 128], strides = [1, 1]} : vector<32x768xbf16> to vector<16x128xbf16>
    %596 = vector.extract_strided_slice %548 {offsets = [0, 640], sizes = [16, 128], strides = [1, 1]} : vector<32x768xbf16> to vector<16x128xbf16>
    %cst_238 = arith.constant dense<0.000000e+00> : vector<16x16xf32>
    %597 = tpu.matmul %594, %595, %cst_238 {dimension_numbers = #tpu.dot_dimension_numbers<[1], [1], [0], [0], [0, 0, 1, 0], [], []>} : vector<16x128xbf16>, vector<16x128xbf16>, vector<16x16xf32> -> vector<16x16xf32>
    %598 = vector.extract_strided_slice %1 {offsets = [0, 0, 0], sizes = [1, 1, 16], strides = [1, 1, 1]} : vector<2x1x16xf32> to vector<1x1x16xf32>
    %599 = vector.shape_cast %598 : vector<1x1x16xf32> to vector<1x16xf32>
    %600 = vector.broadcast %599 : vector<1x16xf32> to vector<16x16xf32>
    %601 = arith.addf %597, %600 : vector<16x16xf32>
    %cst_239 = arith.constant dense<0xFF800000> : vector<16xf32>
    %602 = vector.multi_reduction <maximumf>, %601, %cst_239 [1] : vector<16x16xf32> to vector<16xf32>
    %603 = vector.shape_cast %602 : vector<16xf32> to vector<16x1xf32>
    %604 = vector.broadcast %603 : vector<16x1xf32> to vector<16x16xf32>
    %605 = arith.subf %601, %604 : vector<16x16xf32>
    %606 = math.exp %605 : vector<16x16xf32>
    %cst_240 = arith.constant dense<0.000000e+00> : vector<16xf32>
    %607 = vector.multi_reduction <add>, %606, %cst_240 [1] : vector<16x16xf32> to vector<16xf32>
    %608 = vector.shape_cast %607 : vector<16xf32> to vector<16x1xf32>
    %609 = tpu.reciprocal %608 {approx = true} : vector<16x1xf32> -> vector<16x1xf32>
    %610 = vector.broadcast %609 : vector<16x1xf32> to vector<16x16xf32>
    %611 = arith.mulf %606, %610 : vector<16x16xf32>
    %612 = arith.truncf %611 : vector<16x16xf32> to vector<16x16xbf16>
    %cst_241 = arith.constant dense<0.000000e+00> : vector<16x128xf32>
    %613 = tpu.matmul %612, %596, %cst_241 {dimension_numbers = #tpu.dot_dimension_numbers<[1], [0], [0], [1], [0, 0, 1, 1], [], []>} : vector<16x16xbf16>, vector<16x128xbf16>, vector<16x128xf32> -> vector<16x128xf32>
    %614 = vector.extract_strided_slice %548 {offsets = [16, 128], sizes = [16, 128], strides = [1, 1]} : vector<32x768xbf16> to vector<16x128xbf16>
    %615 = vector.extract_strided_slice %548 {offsets = [16, 384], sizes = [16, 128], strides = [1, 1]} : vector<32x768xbf16> to vector<16x128xbf16>
    %616 = vector.extract_strided_slice %548 {offsets = [16, 640], sizes = [16, 128], strides = [1, 1]} : vector<32x768xbf16> to vector<16x128xbf16>
    %cst_242 = arith.constant dense<0.000000e+00> : vector<16x16xf32>
    %617 = tpu.matmul %614, %615, %cst_242 {dimension_numbers = #tpu.dot_dimension_numbers<[1], [1], [0], [0], [0, 0, 1, 0], [], []>} : vector<16x128xbf16>, vector<16x128xbf16>, vector<16x16xf32> -> vector<16x16xf32>
    %618 = vector.extract_strided_slice %1 {offsets = [1, 0, 0], sizes = [1, 1, 16], strides = [1, 1, 1]} : vector<2x1x16xf32> to vector<1x1x16xf32>
    %619 = vector.shape_cast %618 : vector<1x1x16xf32> to vector<1x16xf32>
    %620 = vector.broadcast %619 : vector<1x16xf32> to vector<16x16xf32>
    %621 = arith.addf %617, %620 : vector<16x16xf32>
    %cst_243 = arith.constant dense<0xFF800000> : vector<16xf32>
    %622 = vector.multi_reduction <maximumf>, %621, %cst_243 [1] : vector<16x16xf32> to vector<16xf32>
    %623 = vector.shape_cast %622 : vector<16xf32> to vector<16x1xf32>
    %624 = vector.broadcast %623 : vector<16x1xf32> to vector<16x16xf32>
    %625 = arith.subf %621, %624 : vector<16x16xf32>
    %626 = math.exp %625 : vector<16x16xf32>
    %cst_244 = arith.constant dense<0.000000e+00> : vector<16xf32>
    %627 = vector.multi_reduction <add>, %626, %cst_244 [1] : vector<16x16xf32> to vector<16xf32>
    %628 = vector.shape_cast %627 : vector<16xf32> to vector<16x1xf32>
    %629 = tpu.reciprocal %628 {approx = true} : vector<16x1xf32> -> vector<16x1xf32>
    %630 = vector.broadcast %629 : vector<16x1xf32> to vector<16x16xf32>
    %631 = arith.mulf %626, %630 : vector<16x16xf32>
    %632 = arith.truncf %631 : vector<16x16xf32> to vector<16x16xbf16>
    %cst_245 = arith.constant dense<0.000000e+00> : vector<16x128xf32>
    %633 = tpu.matmul %632, %616, %cst_245 {dimension_numbers = #tpu.dot_dimension_numbers<[1], [0], [0], [1], [0, 0, 1, 1], [], []>} : vector<16x16xbf16>, vector<16x128xbf16>, vector<16x128xf32> -> vector<16x128xf32>
    %634 = tpu.concatenate %613, %633 in 0 : vector<16x128xf32>, vector<16x128xf32> -> vector<32x128xf32>
    %635 = arith.truncf %634 : vector<32x128xf32> to vector<32x128xbf16>
    %c3_246 = arith.constant 3 : index
    %c1_247 = arith.constant 1 : index
    %c0_248 = arith.constant 0 : index
    %c0_249 = arith.constant 0 : index
    %636 = vector.load %arg4[%c3_246, %c1_247, %c0_248, %c0_249] : memref<4x2x128x50xbf16, #tpu.memory_space<vmem>>, vector<1x1x128x50xbf16>
    %637 = vector.shape_cast %636 : vector<1x1x128x50xbf16> to vector<128x50xbf16>
    %cst_250 = arith.constant dense<0.000000e+00> : vector<32x50xf32>
    %638 = tpu.matmul %635, %637, %cst_250 {dimension_numbers = #tpu.dot_dimension_numbers<[1], [0], [0], [1], [0, 0, 1, 1], [], []>} : vector<32x128xbf16>, vector<128x50xbf16>, vector<32x50xf32> -> vector<32x50xf32>
    %639 = arith.addf %593, %638 : vector<32x50xf32>
    %640 = arith.addf %517, %639 : vector<32x50xf32>
    %c3_251 = arith.constant 3 : index
    %c0_252 = arith.constant 0 : index
    %c0_253 = arith.constant 0 : index
    %641 = vector.load %arg5[%c3_251, %c0_252, %c0_253] : memref<4x1x50xf32, #tpu.memory_space<vmem>>, vector<1x1x50xf32>
    %642 = vector.shape_cast %641 : vector<1x1x50xf32> to vector<1x50xf32>
    %643 = vector.broadcast %642 : vector<1x50xf32> to vector<32x50xf32>
    %644 = arith.addf %640, %643 : vector<32x50xf32>
    %c3_254 = arith.constant 3 : index
    %c0_255 = arith.constant 0 : index
    %c0_256 = arith.constant 0 : index
    %645 = vector.load %arg8[%c3_254, %c0_255, %c0_256] : memref<4x1x50xf32, #tpu.memory_space<vmem>>, vector<1x1x50xf32>
    %646 = vector.shape_cast %645 : vector<1x1x50xf32> to vector<1x50xf32>
    %c3_257 = arith.constant 3 : index
    %c0_258 = arith.constant 0 : index
    %c0_259 = arith.constant 0 : index
    %647 = vector.load %arg9[%c3_257, %c0_258, %c0_259] : memref<4x1x50xf32, #tpu.memory_space<vmem>>, vector<1x1x50xf32>
    %648 = vector.shape_cast %647 : vector<1x1x50xf32> to vector<1x50xf32>
    %cst_260 = arith.constant dense<0.000000e+00> : vector<32xf32>
    %649 = vector.multi_reduction <add>, %644, %cst_260 [1] : vector<32x50xf32> to vector<32xf32>
    %650 = vector.shape_cast %649 : vector<32xf32> to vector<32x1xf32>
    %cst_261 = arith.constant 5.000000e+01 : f32
    %651 = vector.broadcast %cst_261 : f32 to vector<32x1xf32>
    %652 = arith.divf %650, %651 : vector<32x1xf32>
    %653 = vector.broadcast %652 : vector<32x1xf32> to vector<32x50xf32>
    %654 = arith.subf %644, %653 : vector<32x50xf32>
    %655 = arith.mulf %654, %654 : vector<32x50xf32>
    %cst_262 = arith.constant dense<0.000000e+00> : vector<32xf32>
    %656 = vector.multi_reduction <add>, %655, %cst_262 [1] : vector<32x50xf32> to vector<32xf32>
    %657 = vector.shape_cast %656 : vector<32xf32> to vector<32x1xf32>
    %cst_263 = arith.constant 5.000000e+01 : f32
    %658 = vector.broadcast %cst_263 : f32 to vector<32x1xf32>
    %659 = arith.divf %657, %658 : vector<32x1xf32>
    %660 = vector.broadcast %652 : vector<32x1xf32> to vector<32x50xf32>
    %661 = arith.subf %644, %660 : vector<32x50xf32>
    %cst_264 = arith.constant 9.99999974E-6 : f32
    %662 = vector.broadcast %cst_264 : f32 to vector<32x1xf32>
    %663 = arith.addf %659, %662 : vector<32x1xf32>
    %664 = math.rsqrt %663 : vector<32x1xf32>
    %665 = vector.broadcast %664 : vector<32x1xf32> to vector<32x50xf32>
    %666 = arith.mulf %661, %665 : vector<32x50xf32>
    %667 = vector.broadcast %646 : vector<1x50xf32> to vector<32x50xf32>
    %668 = arith.mulf %666, %667 : vector<32x50xf32>
    %669 = vector.broadcast %648 : vector<1x50xf32> to vector<32x50xf32>
    %670 = arith.addf %668, %669 : vector<32x50xf32>
    %671 = arith.truncf %670 : vector<32x50xf32> to vector<32x50xbf16>
    %c3_265 = arith.constant 3 : index
    %c0_266 = arith.constant 0 : index
    %c0_267 = arith.constant 0 : index
    %672 = vector.load %arg10[%c3_265, %c0_266, %c0_267] : memref<4x50x200xbf16, #tpu.memory_space<vmem>>, vector<1x50x200xbf16>
    %673 = vector.shape_cast %672 : vector<1x50x200xbf16> to vector<50x200xbf16>
    %cst_268 = arith.constant dense<0.000000e+00> : vector<32x200xf32>
    %674 = tpu.matmul %671, %673, %cst_268 {dimension_numbers = #tpu.dot_dimension_numbers<[1], [0], [0], [1], [0, 0, 1, 1], [], []>} : vector<32x50xbf16>, vector<50x200xbf16>, vector<32x200xf32> -> vector<32x200xf32>
    %c3_269 = arith.constant 3 : index
    %c0_270 = arith.constant 0 : index
    %c0_271 = arith.constant 0 : index
    %675 = vector.load %arg11[%c3_269, %c0_270, %c0_271] : memref<4x1x200xf32, #tpu.memory_space<vmem>>, vector<1x1x200xf32>
    %676 = vector.shape_cast %675 : vector<1x1x200xf32> to vector<1x200xf32>
    %677 = vector.broadcast %676 : vector<1x200xf32> to vector<32x200xf32>
    %678 = arith.addf %674, %677 : vector<32x200xf32>
    %cst_272 = arith.constant 0.000000e+00 : f32
    %679 = vector.broadcast %cst_272 : f32 to vector<32x200xf32>
    %680 = arith.maximumf %678, %679 : vector<32x200xf32>
    %681 = arith.truncf %680 : vector<32x200xf32> to vector<32x200xbf16>
    %c3_273 = arith.constant 3 : index
    %c0_274 = arith.constant 0 : index
    %c0_275 = arith.constant 0 : index
    %682 = vector.load %arg12[%c3_273, %c0_274, %c0_275] : memref<4x200x50xbf16, #tpu.memory_space<vmem>>, vector<1x200x50xbf16>
    %683 = vector.shape_cast %682 : vector<1x200x50xbf16> to vector<200x50xbf16>
    %cst_276 = arith.constant dense<0.000000e+00> : vector<32x50xf32>
    %684 = tpu.matmul %681, %683, %cst_276 {dimension_numbers = #tpu.dot_dimension_numbers<[1], [0], [0], [1], [0, 0, 1, 1], [], []>} : vector<32x200xbf16>, vector<200x50xbf16>, vector<32x50xf32> -> vector<32x50xf32>
    %c3_277 = arith.constant 3 : index
    %c0_278 = arith.constant 0 : index
    %c0_279 = arith.constant 0 : index
    %685 = vector.load %arg13[%c3_277, %c0_278, %c0_279] : memref<4x1x50xf32, #tpu.memory_space<vmem>>, vector<1x1x50xf32>
    %686 = vector.shape_cast %685 : vector<1x1x50xf32> to vector<1x50xf32>
    %687 = vector.broadcast %686 : vector<1x50xf32> to vector<32x50xf32>
    %688 = arith.addf %684, %687 : vector<32x50xf32>
    %689 = arith.addf %644, %688 : vector<32x50xf32>
    %c0_280 = arith.constant 0 : index
    %c0_281 = arith.constant 0 : index
    %690 = vector.load %arg14[%c0_280, %c0_281] : memref<1x50xf32, #tpu.memory_space<vmem>>, vector<1x50xf32>
    %c0_282 = arith.constant 0 : index
    %c0_283 = arith.constant 0 : index
    %691 = vector.load %arg15[%c0_282, %c0_283] : memref<1x50xf32, #tpu.memory_space<vmem>>, vector<1x50xf32>
    %cst_284 = arith.constant dense<0.000000e+00> : vector<32xf32>
    %692 = vector.multi_reduction <add>, %689, %cst_284 [1] : vector<32x50xf32> to vector<32xf32>
    %693 = vector.shape_cast %692 : vector<32xf32> to vector<32x1xf32>
    %cst_285 = arith.constant 5.000000e+01 : f32
    %694 = vector.broadcast %cst_285 : f32 to vector<32x1xf32>
    %695 = arith.divf %693, %694 : vector<32x1xf32>
    %696 = vector.broadcast %695 : vector<32x1xf32> to vector<32x50xf32>
    %697 = arith.subf %689, %696 : vector<32x50xf32>
    %698 = arith.mulf %697, %697 : vector<32x50xf32>
    %cst_286 = arith.constant dense<0.000000e+00> : vector<32xf32>
    %699 = vector.multi_reduction <add>, %698, %cst_286 [1] : vector<32x50xf32> to vector<32xf32>
    %700 = vector.shape_cast %699 : vector<32xf32> to vector<32x1xf32>
    %cst_287 = arith.constant 5.000000e+01 : f32
    %701 = vector.broadcast %cst_287 : f32 to vector<32x1xf32>
    %702 = arith.divf %700, %701 : vector<32x1xf32>
    %703 = vector.broadcast %695 : vector<32x1xf32> to vector<32x50xf32>
    %704 = arith.subf %689, %703 : vector<32x50xf32>
    %cst_288 = arith.constant 9.99999974E-6 : f32
    %705 = vector.broadcast %cst_288 : f32 to vector<32x1xf32>
    %706 = arith.addf %702, %705 : vector<32x1xf32>
    %707 = math.rsqrt %706 : vector<32x1xf32>
    %708 = vector.broadcast %707 : vector<32x1xf32> to vector<32x50xf32>
    %709 = arith.mulf %704, %708 : vector<32x50xf32>
    %710 = vector.broadcast %690 : vector<1x50xf32> to vector<32x50xf32>
    %711 = arith.mulf %709, %710 : vector<32x50xf32>
    %712 = vector.broadcast %691 : vector<1x50xf32> to vector<32x50xf32>
    %713 = arith.addf %711, %712 : vector<32x50xf32>
    %714 = arith.truncf %713 : vector<32x50xf32> to vector<32x50xbf16>
    %c0_289 = arith.constant 0 : index
    %c0_290 = arith.constant 0 : index
    %715 = vector.load %arg16[%c0_289, %c0_290] : memref<50x128xbf16, #tpu.memory_space<vmem>>, vector<50x128xbf16>
    %cst_291 = arith.constant dense<0.000000e+00> : vector<32x128xf32>
    %716 = tpu.matmul %714, %715, %cst_291 {dimension_numbers = #tpu.dot_dimension_numbers<[1], [0], [0], [1], [0, 0, 1, 1], [], []>} : vector<32x50xbf16>, vector<50x128xbf16>, vector<32x128xf32> -> vector<32x128xf32>
    %c0_292 = arith.constant 0 : index
    %c0_293 = arith.constant 0 : index
    %717 = vector.load %arg17[%c0_292, %c0_293] : memref<1x128xf32, #tpu.memory_space<vmem>>, vector<1x128xf32>
    %718 = vector.broadcast %717 : vector<1x128xf32> to vector<32x128xf32>
    %719 = arith.addf %716, %718 : vector<32x128xf32>
    %c0_294 = arith.constant 0 : index
    %c0_295 = arith.constant 0 : index
    %720 = vector.load %arg18[%c0_294, %c0_295] : memref<32x128xf32, #tpu.memory_space<vmem>>, vector<32x128xf32>
    tpu.vector_store %arg18[%c0_294, %c0_295], %719 {strides = array<i32>} : memref<32x128xf32, #tpu.memory_space<vmem>>, vector<32x128xf32>,
    return
  }
  func.func @transform_0(%arg0: i32) -> (i32, i32) {
    %c0_i32 = arith.constant 0 : i32
    %c0_i32_0 = arith.constant 0 : i32
    return %arg0, %c0_i32 : i32, i32
  }
  func.func @transform_1(%arg0: i32) -> (i32, i32, i32) {
    %c0_i32 = arith.constant 0 : i32
    %c0_i32_0 = arith.constant 0 : i32
    %c0_i32_1 = arith.constant 0 : i32
    return %arg0, %c0_i32, %c0_i32_0 : i32, i32, i32
  }
  func.func @transform_2(%arg0: i32) -> (i32, i32, i32) {
    %c0_i32 = arith.constant 0 : i32
    %c0_i32_0 = arith.constant 0 : i32
    %c0_i32_1 = arith.constant 0 : i32
    %c0_i32_2 = arith.constant 0 : i32
    return %c0_i32, %c0_i32_0, %c0_i32_1 : i32, i32, i32
  }
  func.func @transform_3(%arg0: i32) -> (i32, i32, i32, i32) {
    %c0_i32 = arith.constant 0 : i32
    %c0_i32_0 = arith.constant 0 : i32
    %c0_i32_1 = arith.constant 0 : i32
    %c0_i32_2 = arith.constant 0 : i32
    %c0_i32_3 = arith.constant 0 : i32
    return %c0_i32, %c0_i32_0, %c0_i32_1, %c0_i32_2 : i32, i32, i32, i32
  }
  func.func @transform_4(%arg0: i32) -> (i32, i32, i32) {
    %c0_i32 = arith.constant 0 : i32
    %c0_i32_0 = arith.constant 0 : i32
    %c0_i32_1 = arith.constant 0 : i32
    %c0_i32_2 = arith.constant 0 : i32
    return %c0_i32, %c0_i32_0, %c0_i32_1 : i32, i32, i32
  }
  func.func @transform_5(%arg0: i32) -> (i32, i32, i32) {
    %c0_i32 = arith.constant 0 : i32
    %c0_i32_0 = arith.constant 0 : i32
    %c0_i32_1 = arith.constant 0 : i32
    %c0_i32_2 = arith.constant 0 : i32
    return %c0_i32, %c0_i32_0, %c0_i32_1 : i32, i32, i32
  }
  func.func @transform_6(%arg0: i32) -> (i32, i32, i32) {
    %c0_i32 = arith.constant 0 : i32
    %c0_i32_0 = arith.constant 0 : i32
    %c0_i32_1 = arith.constant 0 : i32
    %c0_i32_2 = arith.constant 0 : i32
    return %c0_i32, %c0_i32_0, %c0_i32_1 : i32, i32, i32
  }
  func.func @transform_7(%arg0: i32) -> (i32, i32, i32) {
    %c0_i32 = arith.constant 0 : i32
    %c0_i32_0 = arith.constant 0 : i32
    %c0_i32_1 = arith.constant 0 : i32
    %c0_i32_2 = arith.constant 0 : i32
    return %c0_i32, %c0_i32_0, %c0_i32_1 : i32, i32, i32
  }
  func.func @transform_8(%arg0: i32) -> (i32, i32, i32) {
    %c0_i32 = arith.constant 0 : i32
    %c0_i32_0 = arith.constant 0 : i32
    %c0_i32_1 = arith.constant 0 : i32
    %c0_i32_2 = arith.constant 0 : i32
    return %c0_i32, %c0_i32_0, %c0_i32_1 : i32, i32, i32
  }
  func.func @transform_9(%arg0: i32) -> (i32, i32, i32) {
    %c0_i32 = arith.constant 0 : i32
    %c0_i32_0 = arith.constant 0 : i32
    %c0_i32_1 = arith.constant 0 : i32
    %c0_i32_2 = arith.constant 0 : i32
    return %c0_i32, %c0_i32_0, %c0_i32_1 : i32, i32, i32
  }
  func.func @transform_10(%arg0: i32) -> (i32, i32, i32) {
    %c0_i32 = arith.constant 0 : i32
    %c0_i32_0 = arith.constant 0 : i32
    %c0_i32_1 = arith.constant 0 : i32
    %c0_i32_2 = arith.constant 0 : i32
    return %c0_i32, %c0_i32_0, %c0_i32_1 : i32, i32, i32
  }
  func.func @transform_11(%arg0: i32) -> (i32, i32, i32) {
    %c0_i32 = arith.constant 0 : i32
    %c0_i32_0 = arith.constant 0 : i32
    %c0_i32_1 = arith.constant 0 : i32
    %c0_i32_2 = arith.constant 0 : i32
    return %c0_i32, %c0_i32_0, %c0_i32_1 : i32, i32, i32
  }
  func.func @transform_12(%arg0: i32) -> (i32, i32, i32) {
    %c0_i32 = arith.constant 0 : i32
    %c0_i32_0 = arith.constant 0 : i32
    %c0_i32_1 = arith.constant 0 : i32
    %c0_i32_2 = arith.constant 0 : i32
    return %c0_i32, %c0_i32_0, %c0_i32_1 : i32, i32, i32
  }
  func.func @transform_13(%arg0: i32) -> (i32, i32) {
    %c0_i32 = arith.constant 0 : i32
    %c0_i32_0 = arith.constant 0 : i32
    %c0_i32_1 = arith.constant 0 : i32
    return %c0_i32, %c0_i32_0 : i32, i32
  }
  func.func @transform_14(%arg0: i32) -> (i32, i32) {
    %c0_i32 = arith.constant 0 : i32
    %c0_i32_0 = arith.constant 0 : i32
    %c0_i32_1 = arith.constant 0 : i32
    return %c0_i32, %c0_i32_0 : i32, i32
  }
  func.func @transform_15(%arg0: i32) -> (i32, i32) {
    %c0_i32 = arith.constant 0 : i32
    %c0_i32_0 = arith.constant 0 : i32
    %c0_i32_1 = arith.constant 0 : i32
    return %c0_i32, %c0_i32_0 : i32, i32
  }
  func.func @transform_16(%arg0: i32) -> (i32, i32) {
    %c0_i32 = arith.constant 0 : i32
    %c0_i32_0 = arith.constant 0 : i32
    %c0_i32_1 = arith.constant 0 : i32
    return %c0_i32, %c0_i32_0 : i32, i32
  }
  func.func @transform_17(%arg0: i32) -> (i32, i32) {
    %c0_i32 = arith.constant 0 : i32
    %c0_i32_0 = arith.constant 0 : i32
    return %arg0, %c0_i32 : i32, i32
  }
}

</mosaic_0001>

<llo_original>
// kernel: gpt_forward.1
$region0: #{gpt_forward.1}
  #allocation0 [shape = 'u32[]', space=smem, size = 0x4, offset = 0x4, fixed_abs, tag = 'smem constant byte address 0x4 - core index']
  #allocation1 [shape = 'u32[144,128]{1,0:T(1,128)}', space=vmem, size = 0x12000, scoped, tag = 'internal scratch']
  %s0 = inlined_call_operand.vmem [shape: f32[32,50], index: 0, kind: input, shape index: {}]
  %s1 = inlined_call_operand.vmem [shape: f32[2,1,16], index: 1, kind: input, shape index: {}]
  %s2 = inlined_call_operand.vmem [shape: bf16[4,50,768], index: 2, kind: input, shape index: {}]
  %s3 = inlined_call_operand.vmem [shape: bf16[4,2,128,50], index: 3, kind: input, shape index: {}]
  %s4 = inlined_call_operand.vmem [shape: f32[4,1,50], index: 4, kind: input, shape index: {}]
  %s5 = inlined_call_operand.vmem [shape: f32[4,1,50], index: 5, kind: input, shape index: {}]
  %s6 = inlined_call_operand.vmem [shape: f32[4,1,50], index: 6, kind: input, shape index: {}]
  %s7 = inlined_call_operand.vmem [shape: f32[4,1,50], index: 7, kind: input, shape index: {}]
  %s8 = inlined_call_operand.vmem [shape: f32[4,1,50], index: 8, kind: input, shape index: {}]
  %s9 = inlined_call_operand.vmem [shape: bf16[4,50,200], index: 9, kind: input, shape index: {}]
  %s10 = inlined_call_operand.vmem [shape: f32[4,1,200], index: 10, kind: input, shape index: {}]
  %s11 = inlined_call_operand.vmem [shape: bf16[4,200,50], index: 11, kind: input, shape index: {}]
  %s12 = inlined_call_operand.vmem [shape: f32[4,1,50], index: 12, kind: input, shape index: {}]
  %s13 = inlined_call_operand.vmem [shape: f32[1,50], index: 13, kind: input, shape index: {}]
  %s14 = inlined_call_operand.vmem [shape: f32[1,50], index: 14, kind: input, shape index: {}]
  %s15 = inlined_call_operand.vmem [shape: bf16[50,128], index: 15, kind: input, shape index: {}]
  %s16 = inlined_call_operand.vmem [shape: f32[1,128], index: 16, kind: input, shape index: {}]
  %s17 = inlined_call_operand.hbm [shape: f32[32,128], index: 17, kind: output, shape index: {}]
  %s18 = sld [smem:[#allocation0]]
  $region78: #{gpt_forward.1} parent=0
    _
  %s20 = ssub.s32 1, %s18
  %s21 = scalar_select 0, %s20, %s18
  $region1: #{gpt_forward.1} parent=0
    #allocation2 [shape = 'u8[16384]{0}', space=vmem, size = 0x4000, scoped, tag = 'output window, operand 0, single buffered']
    #allocation3 [shape = 's32[1]{0}', space=sflag, size = 0x4, scoped, tag = 'scoped memory for gpt_forward.1']
    %22 = vsyncpa [#allocation3], 0
    // Predicated region
    $region2: #{gpt_forward.1} parent=1 // pred_check
      _
    $region3: #{gpt_forward.1} parent=1 // pred_check_branch
      %24 = sbr.rel (0) target = $region5
    $region4: #{gpt_forward.1} parent=1 // pred_region
      _
    $region5: #{gpt_forward.1} parent=1 // pred_fallthru
      _
    // Predicated region
    $region6: #{gpt_forward.1} parent=1 // pred_check
      _
    $region7: #{gpt_forward.1} parent=1 // pred_check_branch
      %26 = sbr.rel (0) target = $region9
    $region8: #{gpt_forward.1} parent=1 // pred_region
      _
    $region9: #{gpt_forward.1} parent=1 // pred_fallthru
      _
    // Predicated region
    $region10: #{gpt_forward.1} parent=1 // pred_check
      _
    $region11: #{gpt_forward.1} parent=1 // pred_check_branch
      %28 = sbr.rel (0) target = $region13
    $region12: #{gpt_forward.1} parent=1 // pred_region
      _
    $region13: #{gpt_forward.1} parent=1 // pred_fallthru
      _
    // Predicated region
    $region14: #{gpt_forward.1} parent=1 // pred_check
      _
    $region15: #{gpt_forward.1} parent=1 // pred_check_branch
      %30 = sbr.rel (0) target = $region17
    $region16: #{gpt_forward.1} parent=1 // pred_region
      _
    $region17: #{gpt_forward.1} parent=1 // pred_fallthru
      _
    // Predicated region
    $region18: #{gpt_forward.1} parent=1 // pred_check
      _
    $region19: #{gpt_forward.1} parent=1 // pred_check_branch
      %32 = sbr.rel (0) target = $region21
    $region20: #{gpt_forward.1} parent=1 // pred_region
      _
    $region21: #{gpt_forward.1} parent=1 // pred_fallthru
      _
    // Predicated region
    $region22: #{gpt_forward.1} parent=1 // pred_check
      _
    $region23: #{gpt_forward.1} parent=1 // pred_check_branch
      %34 = sbr.rel (0) target = $region25
    $region24: #{gpt_forward.1} parent=1 // pred_region
      _
    $region25: #{gpt_forward.1} parent=1 // pred_fallthru
      _
    // Predicated region
    $region26: #{gpt_forward.1} parent=1 // pred_check
      _
    $region27: #{gpt_forward.1} parent=1 // pred_check_branch
      %36 = sbr.rel (0) target = $region29
    $region28: #{gpt_forward.1} parent=1 // pred_region
      _
    $region29: #{gpt_forward.1} parent=1 // pred_fallthru
      _
    // Predicated region
    $region30: #{gpt_forward.1} parent=1 // pred_check
      _
    $region31: #{gpt_forward.1} parent=1 // pred_check_branch
      %38 = sbr.rel (0) target = $region33
    $region32: #{gpt_forward.1} parent=1 // pred_region
      _
    $region33: #{gpt_forward.1} parent=1 // pred_fallthru
      _
    // Predicated region
    $region34: #{gpt_forward.1} parent=1 // pred_check
      _
    $region35: #{gpt_forward.1} parent=1 // pred_check_branch
      %40 = sbr.rel (0) target = $region37
    $region36: #{gpt_forward.1} parent=1 // pred_region
      _
    $region37: #{gpt_forward.1} parent=1 // pred_fallthru
      _
    // Predicated region
    $region38: #{gpt_forward.1} parent=1 // pred_check
      _
    $region39: #{gpt_forward.1} parent=1 // pred_check_branch
      %42 = sbr.rel (0) target = $region41
    $region40: #{gpt_forward.1} parent=1 // pred_region
      _
    $region41: #{gpt_forward.1} parent=1 // pred_fallthru
      _
    // Predicated region
    $region42: #{gpt_forward.1} parent=1 // pred_check
      _
    $region43: #{gpt_forward.1} parent=1 // pred_check_branch
      %44 = sbr.rel (0) target = $region45
    $region44: #{gpt_forward.1} parent=1 // pred_region
      _
    $region45: #{gpt_forward.1} parent=1 // pred_fallthru
      _
    // Predicated region
    $region46: #{gpt_forward.1} parent=1 // pred_check
      _
    $region47: #{gpt_forward.1} parent=1 // pred_check_branch
      %46 = sbr.rel (0) target = $region49
    $region48: #{gpt_forward.1} parent=1 // pred_region
      _
    $region49: #{gpt_forward.1} parent=1 // pred_fallthru
      _
    // Predicated region
    $region50: #{gpt_forward.1} parent=1 // pred_check
      _
    $region51: #{gpt_forward.1} parent=1 // pred_check_branch
      %48 = sbr.rel (0) target = $region53
    $region52: #{gpt_forward.1} parent=1 // pred_region
      _
    $region53: #{gpt_forward.1} parent=1 // pred_fallthru
      _
    // Predicated region
    $region54: #{gpt_forward.1} parent=1 // pred_check
      _
    $region55: #{gpt_forward.1} parent=1 // pred_check_branch
      %50 = sbr.rel (0) target = $region57
    $region56: #{gpt_forward.1} parent=1 // pred_region
      _
    $region57: #{gpt_forward.1} parent=1 // pred_fallthru
      _
    // Predicated region
    $region58: #{gpt_forward.1} parent=1 // pred_check
      _
    $region59: #{gpt_forward.1} parent=1 // pred_check_branch
      %52 = sbr.rel (0) target = $region61
    $region60: #{gpt_forward.1} parent=1 // pred_region
      _
    $region61: #{gpt_forward.1} parent=1 // pred_fallthru
      _
    // Predicated region
    $region62: #{gpt_forward.1} parent=1 // pred_check
      _
    $region63: #{gpt_forward.1} parent=1 // pred_check_branch
      %54 = sbr.rel (0) target = $region65
    $region64: #{gpt_forward.1} parent=1 // pred_region
      _
    $region65: #{gpt_forward.1} parent=1 // pred_fallthru
      _
    // Predicated region
    $region66: #{gpt_forward.1} parent=1 // pred_check
      _
    $region67: #{gpt_forward.1} parent=1 // pred_check_branch
      %56 = sbr.rel (0) target = $region69
    $region68: #{gpt_forward.1} parent=1 // pred_region
      _
    $region69: #{gpt_forward.1} parent=1 // pred_fallthru
      _
    %v58 = vld [vmem:[%s0] sm:$0xff]
    %v59 = vld [vmem:[%s0 + $0x8] sm:$0xff]
    %v60 = vld [vmem:[%s0 + $0x10] sm:$0xff]
    %v61 = vld [vmem:[%s0 + $0x18] sm:$0xff]
    %v62 = vld [vmem:[%s1] sm:$0x1]
    %v63 = vld [vmem:[%s1 + $0x1] sm:$0x1]
    %v64 = vld [vmem:[%s5] sm:$0x1]
    %v65 = vld [vmem:[%s6] sm:$0x1]
    %vm66 = vcmask 408576
    %v67 = vsel %vm66, %v58, 0.0
    %68 = vadd.xlane.f32.xlu0 %v67
    %v69 = vpop.xlane.xlu0 %68
    %v70 = vsel %vm66, %v59, 0.0
    %71 = vadd.xlane.f32.xlu0 %v70
    %v72 = vpop.xlane.xlu0 %71
    %v73 = vsel %vm66, %v60, 0.0
    %74 = vadd.xlane.f32.xlu0 %v73
    %v75 = vpop.xlane.xlu0 %74
    %v76 = vsel %vm66, %v61, 0.0
    %77 = vadd.xlane.f32.xlu0 %v76
    %v78 = vpop.xlane.xlu0 %77
    %v79 = vrcp.pop 50.0
    %v80 = vmul.f32 %v69, %v79
    %v81 = vmul.f32 %v72, %v79
    %v82 = vmul.f32 %v75, %v79
    %v83 = vmul.f32 %v78, %v79
    %v84 = vsub.f32 %v58, %v80
    %v85 = vsub.f32 %v59, %v81
    %v86 = vsub.f32 %v60, %v82
    %v87 = vsub.f32 %v61, %v83
    %v88 = vmul.f32 %v84, %v84
    %v89 = vmul.f32 %v85, %v85
    %v90 = vmul.f32 %v86, %v86
    %v91 = vmul.f32 %v87, %v87
    %v92 = vsel %vm66, %v88, 0.0
    %93 = vadd.xlane.f32.xlu0 %v92
    %v94 = vpop.xlane.xlu0 %93
    %v95 = vsel %vm66, %v89, 0.0
    %96 = vadd.xlane.f32.xlu0 %v95
    %v97 = vpop.xlane.xlu0 %96
    %v98 = vsel %vm66, %v90, 0.0
    %99 = vadd.xlane.f32.xlu0 %v98
    %v100 = vpop.xlane.xlu0 %99
    %v101 = vsel %vm66, %v91, 0.0
    %102 = vadd.xlane.f32.xlu0 %v101
    %v103 = vpop.xlane.xlu0 %102
    %v104 = vmul.f32 %v94, %v79
    %v105 = vmul.f32 %v97, %v79
    %v106 = vmul.f32 %v100, %v79
    %v107 = vmul.f32 %v103, %v79
    %v108 = vadd.f32 %v104, 1e-05
    %v109 = vadd.f32 %v105, 1e-05
    %v110 = vadd.f32 %v106, 1e-05
    %v111 = vadd.f32 %v107, 1e-05
    %v112 = vrsqrt.pop %v108
    %v113 = vrsqrt.pop %v109
    %v114 = vrsqrt.pop %v110
    %v115 = vrsqrt.pop %v111
    %v116 = vmul.f32 %v84, %v112
    %v117 = vmul.f32 %v85, %v113
    %v118 = vmul.f32 %v86, %v114
    %v119 = vmul.f32 %v87, %v115
    %v121 = vlaneseq
    %v122 = vshrl.u32 %v121, 7
    %v123 = vsub.s32 0, %v122
    %v124 = vrot.slane %v64, %v123
    %v126 = vmul.f32 %v116, %v124
    %v127 = vmul.f32 %v117, %v124
    %v128 = vmul.f32 %v118, %v124
    %v129 = vmul.f32 %v119, %v124
    %v131 = vlaneseq
    %v132 = vshrl.u32 %v131, 7
    %v133 = vsub.s32 0, %v132
    %v134 = vrot.slane %v65, %v133
    %v136 = vadd.f32 %v126, %v134
    %v137 = vadd.f32 %v127, %v134
    %v138 = vadd.f32 %v128, %v134
    %v139 = vadd.f32 %v129, %v134
    %v140 = vpack.c.bf16 %v137, %v136
    %v141 = vpack.c.bf16 %v139, %v138
    %v142 = vld [vmem:[%s2] sm:$0xff]
    %v143 = vld [vmem:[%s2 + $0x8] sm:$0xff]
    %v144 = vld [vmem:[%s2 + $0x10] sm:$0xff]
    %v145 = vld [vmem:[%s2 + $0x18] sm:$0xff]
    %v146 = vld [vmem:[%s2 + $0x20] sm:$0xff]
    %v147 = vld [vmem:[%s2 + $0x28] sm:$0xff]
    %v148 = vld [vmem:[%s2 + $0x30] sm:$0xff]
    %v149 = vld [vmem:[%s2 + $0x38] sm:$0xff]
    %v150 = vld [vmem:[%s2 + $0x40] sm:$0xff]
    %v151 = vld [vmem:[%s2 + $0x48] sm:$0xff]
    %v152 = vld [vmem:[%s2 + $0x50] sm:$0xff]
    %v153 = vld [vmem:[%s2 + $0x58] sm:$0xff]
    %v154 = vld [vmem:[%s2 + $0x60] sm:$0xff]
    %v155 = vld [vmem:[%s2 + $0x68] sm:$0xff]
    %v156 = vld [vmem:[%s2 + $0x70] sm:$0xff]
    %v157 = vld [vmem:[%s2 + $0x78] sm:$0xff]
    %v158 = vld [vmem:[%s2 + $0x80] sm:$0xff]
    %v159 = vld [vmem:[%s2 + $0x88] sm:$0xff]
    %v160 = vld [vmem:[%s2 + $0x90] sm:$0x11]
    %v161 = vld [vmem:[%s2 + $0x98] sm:$0x11]
    %v162 = vld [vmem:[%s2 + $0xa0] sm:$0x11]
    %v184 = vunpack.c.l.b16 %v142
    %v185 = vunpack.c.h.b16 %v142
    %v186 = vunpack.c.l.b16 %v143
    %v187 = vunpack.c.h.b16 %v143
    %v188 = vunpack.c.l.b16 %v144
    %v189 = vunpack.c.h.b16 %v144
    %v190 = vunpack.c.l.b16 %v145
    %v191 = vunpack.c.h.b16 %v145
    %v192 = vunpack.c.l.b16 %v146
    %v193 = vunpack.c.h.b16 %v146
    %v194 = vunpack.c.l.b16 %v147
    %v195 = vunpack.c.h.b16 %v147
    %v196 = vunpack.c.l.b16 %v148
    %v197 = vunpack.c.h.b16 %v148
    %v198 = vunpack.c.l.b16 %v149
    %v199 = vunpack.c.h.b16 %v149
    %v200 = vunpack.c.l.b16 %v150
    %v201 = vunpack.c.h.b16 %v150
    %v202 = vunpack.c.l.b16 %v151
    %v203 = vunpack.c.h.b16 %v151
    %v204 = vunpack.c.l.b16 %v152
    %v205 = vunpack.c.h.b16 %v152
    %v206 = vunpack.c.l.b16 %v153
    %v207 = vunpack.c.h.b16 %v153
    %v208 = vunpack.c.l.b16 %v154
    %v209 = vunpack.c.h.b16 %v154
    %v210 = vunpack.c.l.b16 %v155
    %v211 = vunpack.c.h.b16 %v155
    %v212 = vunpack.c.l.b16 %v156
    %v213 = vunpack.c.h.b16 %v156
    %v214 = vunpack.c.l.b16 %v157
    %v215 = vunpack.c.h.b16 %v157
    %v216 = vunpack.c.l.b16 %v158
    %v217 = vunpack.c.h.b16 %v158
    %v218 = vunpack.c.l.b16 %v159
    %v219 = vunpack.c.h.b16 %v159
    %v220 = vunpack.c.l.b16 %v160
    %v221 = vunpack.c.h.b16 %v160
    %v222 = vunpack.c.l.b16 %v161
    %v223 = vunpack.c.h.b16 %v161
    %v224 = vunpack.c.l.b16 %v162
    %v225 = vunpack.c.h.b16 %v162
    %v226 = vpack.c.b16 %v190, %v184
    %v227 = vpack.c.b16 %v191, %v185
    %v228 = vpack.c.b16 %v192, %v186
    %v229 = vpack.c.b16 %v193, %v187
    %v230 = vpack.c.b16 %v194, %v188
    %v231 = vpack.c.b16 %v195, %v189
    %v232 = vpack.c.b16 %v202, %v196
    %v233 = vpack.c.b16 %v203, %v197
    %v234 = vpack.c.b16 %v204, %v198
    %v235 = vpack.c.b16 %v205, %v199
    %v236 = vpack.c.b16 %v206, %v200
    %v237 = vpack.c.b16 %v207, %v201
    %v238 = vpack.c.b16 %v214, %v208
    %v239 = vpack.c.b16 %v215, %v209
    %v240 = vpack.c.b16 %v216, %v210
    %v241 = vpack.c.b16 %v217, %v211
    %v242 = vpack.c.b16 %v218, %v212
    %v243 = vpack.c.b16 %v219, %v213
    %v244 = vpack.c.b16 %v220, %v220
    %v245 = vpack.c.b16 %v221, %v221
    %v246 = vpack.c.b16 %v222, %v222
    %v247 = vpack.c.b16 %v223, %v223
    %v248 = vpack.c.b16 %v224, %v224
    %v249 = vpack.c.b16 %v225, %v225
    %v269 = vsel %vm66, %v140, 0
    %v272 = vsel %vm66, %v141, 0
    %vm274 = vcmask 1040384
    %v276 = vsel %vm274, %v244, 0
    %v279 = vsel %vm274, %v245, 0
    %v282 = vsel %vm274, %v246, 0
    %v285 = vsel %vm274, %v247, 0
    %v288 = vsel %vm274, %v248, 0
    %v291 = vsel %vm274, %v249, 0
    %293 = vmatprep.subr.bf16.mxu0 %v227
    %294 = vmatpush1.bf16.msra.mxu0 %v226
    %295 = vmatprep.subr.bf16.mxu0 %v233
    %296 = vmatpush1.bf16.msra.mxu0 %v232
    %297 = vmatprep.subr.bf16.mxu0 %v239
    %298 = vmatpush1.bf16.msra.mxu0 %v238
    %299 = vmatprep.subr.bf16.mxu0 %v279
    %300 = vmatpush1.bf16.msra.mxu0 %v276
    %301 = vmatprep.subr.bf16.mxu0 0
    %302 = vmatpush1.bf16.msra.mxu0 0
    %303 = vmatprep.subr.bf16.mxu0 0
    %304 = vmatpush1.bf16.msra.mxu0 0
    %305 = vmatprep.subr.bf16.mxu0 0
    %306 = vmatpush1.bf16.msra.mxu0 0
    %307 = vmatprep.subr.bf16.mxu0 0
    %308 = vmatpush1.bf16.msra.mxu0 0
    %309 = vmatprep.subr.bf16.mxu0 0
    %310 = vmatpush1.bf16.msra.mxu0 0
    %311 = vmatprep.subr.bf16.mxu0 0
    %312 = vmatpush1.bf16.msra.mxu0 0
    %313 = vmatprep.subr.bf16.mxu0 0
    %314 = vmatpush1.bf16.msra.mxu0 0
    %315 = vmatprep.subr.bf16.mxu0 0
    %316 = vmatpush1.bf16.msra.mxu0 0
    %317 = vmatprep.subr.bf16.mxu0 0
    %318 = vmatpush1.bf16.msra.mxu0 0
    %319 = vmatprep.subr.bf16.mxu0 0
    %320 = vmatpush1.bf16.msra.mxu0 0
    %321 = vmatprep.subr.bf16.mxu0 0
    %322 = vmatpush1.bf16.msra.mxu0 0
    %323 = vmatprep.subr.bf16.mxu0 0
    %324 = vmatpush1.bf16.msra.mxu0 0
    %325 = vmatprep.mubr.bf16.mxu0 0
    %326 = vmatmul.mubr.bf16.gmra.mrb[0].mxu0 %v269
    %v327 = vpop.f32.mrb[0].mxu0
    %v328 = vadd.f32 0.0, %v327
    %v329 = vpop.f32.mrb[0].mxu0
    %v330 = vadd.f32 0.0, %v329
    %v331 = vpop.f32.mrb[0].mxu0
    %v332 = vadd.f32 0.0, %v331
    %v333 = vpop.f32.mrb[0].mxu0
    %v334 = vadd.f32 0.0, %v333
    %335 = vmatprep.mubr.bf16.mxu0 0
    %336 = vmatmul.mubr.bf16.gmra.mrb[0].mxu0 %v272
    %v337 = vpop.f32.mrb[0].mxu0
    %v338 = vadd.f32 0.0, %v337
    %v339 = vpop.f32.mrb[0].mxu0
    %v340 = vadd.f32 0.0, %v339
    %v341 = vpop.f32.mrb[0].mxu0
    %v342 = vadd.f32 0.0, %v341
    %v343 = vpop.f32.mrb[0].mxu0
    %v344 = vadd.f32 0.0, %v343
    %345 = vdwg.mxu0
    %346 = vmatprep.subr.bf16.mxu0 %v229
    %347 = vmatpush1.bf16.msra.mxu0 %v228
    %348 = vmatprep.subr.bf16.mxu0 %v235
    %349 = vmatpush1.bf16.msra.mxu0 %v234
    %350 = vmatprep.subr.bf16.mxu0 %v241
    %351 = vmatpush1.bf16.msra.mxu0 %v240
    %352 = vmatprep.subr.bf16.mxu0 %v285
    %353 = vmatpush1.bf16.msra.mxu0 %v282
    %354 = vmatprep.subr.bf16.mxu0 0
    %355 = vmatpush1.bf16.msra.mxu0 0
    %356 = vmatprep.subr.bf16.mxu0 0
    %357 = vmatpush1.bf16.msra.mxu0 0
    %358 = vmatprep.subr.bf16.mxu0 0
    %359 = vmatpush1.bf16.msra.mxu0 0
    %360 = vmatprep.subr.bf16.mxu0 0
    %361 = vmatpush1.bf16.msra.mxu0 0
    %362 = vmatprep.subr.bf16.mxu0 0
    %363 = vmatpush1.bf16.msra.mxu0 0
    %364 = vmatprep.subr.bf16.mxu0 0
    %365 = vmatpush1.bf16.msra.mxu0 0
    %366 = vmatprep.subr.bf16.mxu0 0
    %367 = vmatpush1.bf16.msra.mxu0 0
    %368 = vmatprep.subr.bf16.mxu0 0
    %369 = vmatpush1.bf16.msra.mxu0 0
    %370 = vmatprep.subr.bf16.mxu0 0
    %371 = vmatpush1.bf16.msra.mxu0 0
    %372 = vmatprep.subr.bf16.mxu0 0
    %373 = vmatpush1.bf16.msra.mxu0 0
    %374 = vmatprep.subr.bf16.mxu0 0
    %375 = vmatpush1.bf16.msra.mxu0 0
    %376 = vmatprep.subr.bf16.mxu0 0
    %377 = vmatpush1.bf16.msra.mxu0 0
    %378 = vmatprep.mubr.bf16.mxu0 0
    %379 = vmatmul.mubr.bf16.gmra.mrb[0].mxu0 %v269
    %v380 = vpop.f32.mrb[0].mxu0
    %v381 = vadd.f32 0.0, %v380
    %v382 = vpop.f32.mrb[0].mxu0
    %v383 = vadd.f32 0.0, %v382
    %v384 = vpop.f32.mrb[0].mxu0
    %v385 = vadd.f32 0.0, %v384
    %v386 = vpop.f32.mrb[0].mxu0
    %v387 = vadd.f32 0.0, %v386
    %388 = vmatprep.mubr.bf16.mxu0 0
    %389 = vmatmul.mubr.bf16.gmra.mrb[0].mxu0 %v272
    %v390 = vpop.f32.mrb[0].mxu0
    %v391 = vadd.f32 0.0, %v390
    %v392 = vpop.f32.mrb[0].mxu0
    %v393 = vadd.f32 0.0, %v392
    %v394 = vpop.f32.mrb[0].mxu0
    %v395 = vadd.f32 0.0, %v394
    %v396 = vpop.f32.mrb[0].mxu0
    %v397 = vadd.f32 0.0, %v396
    %398 = vdwg.mxu0
    %399 = vmatprep.subr.bf16.mxu0 %v231
    %400 = vmatpush1.bf16.msra.mxu0 %v230
    %401 = vmatprep.subr.bf16.mxu0 %v237
    %402 = vmatpush1.bf16.msra.mxu0 %v236
    %403 = vmatprep.subr.bf16.mxu0 %v243
    %404 = vmatpush1.bf16.msra.mxu0 %v242
    %405 = vmatprep.subr.bf16.mxu0 %v291
    %406 = vmatpush1.bf16.msra.mxu0 %v288
    %407 = vmatprep.subr.bf16.mxu0 0
    %408 = vmatpush1.bf16.msra.mxu0 0
    %409 = vmatprep.subr.bf16.mxu0 0
    %410 = vmatpush1.bf16.msra.mxu0 0
    %411 = vmatprep.subr.bf16.mxu0 0
    %412 = vmatpush1.bf16.msra.mxu0 0
    %413 = vmatprep.subr.bf16.mxu0 0
    %414 = vmatpush1.bf16.msra.mxu0 0
    %415 = vmatprep.subr.bf16.mxu0 0
    %416 = vmatpush1.bf16.msra.mxu0 0
    %417 = vmatprep.subr.bf16.mxu0 0
    %418 = vmatpush1.bf16.msra.mxu0 0
    %419 = vmatprep.subr.bf16.mxu0 0
    %420 = vmatpush1.bf16.msra.mxu0 0
    %421 = vmatprep.subr.bf16.mxu0 0
    %422 = vmatpush1.bf16.msra.mxu0 0
    %423 = vmatprep.subr.bf16.mxu0 0
    %424 = vmatpush1.bf16.msra.mxu0 0
    %425 = vmatprep.subr.bf16.mxu0 0
    %426 = vmatpush1.bf16.msra.mxu0 0
    %427 = vmatprep.subr.bf16.mxu0 0
    %428 = vmatpush1.bf16.msra.mxu0 0
    %429 = vmatprep.subr.bf16.mxu0 0
    %430 = vmatpush1.bf16.msra.mxu0 0
    %431 = vmatprep.mubr.bf16.mxu0 0
    %432 = vmatmul.mubr.bf16.gmra.mrb[0].mxu0 %v269
    %v433 = vpop.f32.mrb[0].mxu0
    %v434 = vadd.f32 0.0, %v433
    %v435 = vpop.f32.mrb[0].mxu0
    %v436 = vadd.f32 0.0, %v435
    %v437 = vpop.f32.mrb[0].mxu0
    %v438 = vadd.f32 0.0, %v437
    %v439 = vpop.f32.mrb[0].mxu0
    %v440 = vadd.f32 0.0, %v439
    %441 = vmatprep.mubr.bf16.mxu0 0
    %442 = vmatmul.mubr.bf16.gmra.mrb[0].mxu0 %v272
    %v443 = vpop.f32.mrb[0].mxu0
    %v444 = vadd.f32 0.0, %v443
    %v445 = vpop.f32.mrb[0].mxu0
    %v446 = vadd.f32 0.0, %v445
    %v447 = vpop.f32.mrb[0].mxu0
    %v448 = vadd.f32 0.0, %v447
    %v449 = vpop.f32.mrb[0].mxu0
    %v450 = vadd.f32 0.0, %v449
    %451 = vdwg.mxu0
    %v452 = vpack.c.bf16 %v332, %v328
    %v453 = vpack.c.bf16 %v334, %v330
    %v454 = vpack.c.bf16 %v385, %v381
    %v455 = vpack.c.bf16 %v387, %v383
    %v456 = vpack.c.bf16 %v438, %v434
    %v457 = vpack.c.bf16 %v440, %v436
    %v458 = vpack.c.bf16 %v342, %v338
    %v459 = vpack.c.bf16 %v344, %v340
    %v460 = vpack.c.bf16 %v395, %v391
    %v461 = vpack.c.bf16 %v397, %v393
    %v462 = vpack.c.bf16 %v448, %v444
    %v463 = vpack.c.bf16 %v450, %v446
    %v465 = vlaneseq
    %v466 = vshrl.u32 %v465, 7
    %v467 = vsub.s32 0, %v466
    %v468 = vrot.slane %v62, %v467
    %470 = vmatprep.subr.bf16.mxu0 0
    %471 = vmatpush1.bf16.xpose.msra.mxu0 %v454
    %472 = vmatprep.subr.bf16.mxu0 0
    %473 = vmatpush1.bf16.xpose.msra.mxu0 0
    %474 = vmatprep.subr.bf16.mxu0 0
    %475 = vmatpush1.bf16.xpose.msra.mxu0 0
    %476 = vmatprep.subr.bf16.mxu0 0
    %477 = vmatpush1.bf16.xpose.msra.mxu0 0
    %478 = vmatprep.subr.bf16.mxu0 0
    %479 = vmatpush1.bf16.xpose.msra.mxu0 0
    %480 = vmatprep.subr.bf16.mxu0 0
    %481 = vmatpush1.bf16.xpose.msra.mxu0 0
    %482 = vmatprep.subr.bf16.mxu0 0
    %483 = vmatpush1.bf16.xpose.msra.mxu0 0
    %484 = vmatprep.subr.bf16.mxu0 0
    %485 = vmatpush1.bf16.xpose.msra.mxu0 0
    %486 = vmatprep.subr.bf16.mxu0 0
    %487 = vmatpush1.bf16.xpose.msra.mxu0 0
    %488 = vmatprep.subr.bf16.mxu0 0
    %489 = vmatpush1.bf16.xpose.msra.mxu0 0
    %490 = vmatprep.subr.bf16.mxu0 0
    %491 = vmatpush1.bf16.xpose.msra.mxu0 0
    %492 = vmatprep.subr.bf16.mxu0 0
    %493 = vmatpush1.bf16.xpose.msra.mxu0 0
    %494 = vmatprep.subr.bf16.mxu0 0
    %495 = vmatpush1.bf16.xpose.msra.mxu0 0
    %496 = vmatprep.subr.bf16.mxu0 0
    %497 = vmatpush1.bf16.xpose.msra.mxu0 0
    %498 = vmatprep.subr.bf16.mxu0 0
    %499 = vmatpush1.bf16.xpose.msra.mxu0 0
    %500 = vmatprep.subr.bf16.mxu0 0
    %501 = vmatpush1.bf16.xpose.msra.mxu0 0
    %502 = vmatprep.mubr.bf16.mxu0 0
    %503 = vmatmul.mubr.bf16.gmra.mrb[0].mxu0 %v452
    %v504 = vpop.f32.mrb[0].mxu0
    %v505 = vadd.f32 %v468, %v504
    %v506 = vpop.f32.mrb[0].mxu0
    %v507 = vpop.f32.mrb[0].mxu0
    %v508 = vadd.f32 %v468, %v507
    %v509 = vpop.f32.mrb[0].mxu0
    %510 = vdwg.mxu0
    %vm511 = vcmask 130048
    %v512 = vsel %vm511, %v505, -inf
    %513 = vmax.xlane.f32.xlu0 %v512
    %v514 = vpop.xlane.xlu0 %513
    %v515 = vsel %vm511, %v508, -inf
    %516 = vmax.xlane.f32.xlu0 %v515
    %v517 = vpop.xlane.xlu0 %516
    %v518 = vsub.f32 %v505, %v514
    %v519 = vsub.f32 %v508, %v517
    %v520 = vmul.f32 %v518, 1.442695
    %v521 = vpow.pop %v520
    %v522 = vmul.f32 %v519, 1.442695
    %v523 = vpow.pop %v522
    %v524 = vsel %vm511, %v521, 0.0
    %525 = vadd.xlane.f32.xlu0 %v524
    %v526 = vpop.xlane.xlu0 %525
    %v527 = vsel %vm511, %v523, 0.0
    %528 = vadd.xlane.f32.xlu0 %v527
    %v529 = vpop.xlane.xlu0 %528
    %v530 = vrcp.pop %v526
    %v531 = vrcp.pop %v529
    %v532 = vmul.f32 %v521, %v530
    %v533 = vmul.f32 %v523, %v531
    %v534 = vpack.c.bf16 %v533, %v532
    %v536 = vsel %vm511, %v534, 0
    %538 = vmatprep.subr.bf16.mxu0 0
    %539 = vmatpush1.bf16.msra.mxu0 %v456
    %540 = vmatprep.subr.bf16.mxu0 0
    %541 = vmatpush1.bf16.msra.mxu0 0
    %542 = vmatprep.subr.bf16.mxu0 0
    %543 = vmatpush1.bf16.msra.mxu0 0
    %544 = vmatprep.subr.bf16.mxu0 0
    %545 = vmatpush1.bf16.msra.mxu0 0
    %546 = vmatprep.subr.bf16.mxu0 0
    %547 = vmatpush1.bf16.msra.mxu0 0
    %548 = vmatprep.subr.bf16.mxu0 0
    %549 = vmatpush1.bf16.msra.mxu0 0
    %550 = vmatprep.subr.bf16.mxu0 0
    %551 = vmatpush1.bf16.msra.mxu0 0
    %552 = vmatprep.subr.bf16.mxu0 0
    %553 = vmatpush1.bf16.msra.mxu0 0
    %554 = vmatprep.subr.bf16.mxu0 0
    %555 = vmatpush1.bf16.msra.mxu0 0
    %556 = vmatprep.subr.bf16.mxu0 0
    %557 = vmatpush1.bf16.msra.mxu0 0
    %558 = vmatprep.subr.bf16.mxu0 0
    %559 = vmatpush1.bf16.msra.mxu0 0
    %560 = vmatprep.subr.bf16.mxu0 0
    %561 = vmatpush1.bf16.msra.mxu0 0
    %562 = vmatprep.subr.bf16.mxu0 0
    %563 = vmatpush1.bf16.msra.mxu0 0
    %564 = vmatprep.subr.bf16.mxu0 0
    %565 = vmatpush1.bf16.msra.mxu0 0
    %566 = vmatprep.subr.bf16.mxu0 0
    %567 = vmatpush1.bf16.msra.mxu0 0
    %568 = vmatprep.subr.bf16.mxu0 0
    %569 = vmatpush1.bf16.msra.mxu0 0
    %570 = vmatprep.mubr.bf16.mxu0 0
    %571 = vmatmul.mubr.bf16.gmra.mrb[0].mxu0 %v536
    %v572 = vpop.f32.mrb[0].mxu0
    %v573 = vadd.f32 0.0, %v572
    %v574 = vpop.f32.mrb[0].mxu0
    %v575 = vpop.f32.mrb[0].mxu0
    %v576 = vadd.f32 0.0, %v575
    %v577 = vpop.f32.mrb[0].mxu0
    %578 = vdwg.mxu0
    %v580 = vlaneseq
    %v581 = vshrl.u32 %v580, 7
    %v582 = vsub.s32 0, %v581
    %v583 = vrot.slane %v63, %v582
    %585 = vmatprep.subr.bf16.mxu0 0
    %586 = vmatpush1.bf16.xpose.msra.mxu0 %v460
    %587 = vmatprep.subr.bf16.mxu0 0
    %588 = vmatpush1.bf16.xpose.msra.mxu0 0
    %589 = vmatprep.subr.bf16.mxu0 0
    %590 = vmatpush1.bf16.xpose.msra.mxu0 0
    %591 = vmatprep.subr.bf16.mxu0 0
    %592 = vmatpush1.bf16.xpose.msra.mxu0 0
    %593 = vmatprep.subr.bf16.mxu0 0
    %594 = vmatpush1.bf16.xpose.msra.mxu0 0
    %595 = vmatprep.subr.bf16.mxu0 0
    %596 = vmatpush1.bf16.xpose.msra.mxu0 0
    %597 = vmatprep.subr.bf16.mxu0 0
    %598 = vmatpush1.bf16.xpose.msra.mxu0 0
    %599 = vmatprep.subr.bf16.mxu0 0
    %600 = vmatpush1.bf16.xpose.msra.mxu0 0
    %601 = vmatprep.subr.bf16.mxu0 0
    %602 = vmatpush1.bf16.xpose.msra.mxu0 0
    %603 = vmatprep.subr.bf16.mxu0 0
    %604 = vmatpush1.bf16.xpose.msra.mxu0 0
    %605 = vmatprep.subr.bf16.mxu0 0
    %606 = vmatpush1.bf16.xpose.msra.mxu0 0
    %607 = vmatprep.subr.bf16.mxu0 0
    %608 = vmatpush1.bf16.xpose.msra.mxu0 0
    %609 = vmatprep.subr.bf16.mxu0 0
    %610 = vmatpush1.bf16.xpose.msra.mxu0 0
    %611 = vmatprep.subr.bf16.mxu0 0
    %612 = vmatpush1.bf16.xpose.msra.mxu0 0
    %613 = vmatprep.subr.bf16.mxu0 0
    %614 = vmatpush1.bf16.xpose.msra.mxu0 0
    %615 = vmatprep.subr.bf16.mxu0 0
    %616 = vmatpush1.bf16.xpose.msra.mxu0 0
    %617 = vmatprep.mubr.bf16.mxu0 0
    %618 = vmatmul.mubr.bf16.gmra.mrb[0].mxu0 %v458
    %v619 = vpop.f32.mrb[0].mxu0
    %v620 = vadd.f32 %v583, %v619
    %v621 = vpop.f32.mrb[0].mxu0
    %v622 = vpop.f32.mrb[0].mxu0
    %v623 = vadd.f32 %v583, %v622
    %v624 = vpop.f32.mrb[0].mxu0
    %625 = vdwg.mxu0
    %v626 = vsel %vm511, %v620, -inf
    %627 = vmax.xlane.f32.xlu0 %v626
    %v628 = vpop.xlane.xlu0 %627
    %v629 = vsel %vm511, %v623, -inf
    %630 = vmax.xlane.f32.xlu0 %v629
    %v631 = vpop.xlane.xlu0 %630
    %v632 = vsub.f32 %v620, %v628
    %v633 = vsub.f32 %v623, %v631
    %v634 = vmul.f32 %v632, 1.442695
    %v635 = vpow.pop %v634
    %v636 = vmul.f32 %v633, 1.442695
    %v637 = vpow.pop %v636
    %v638 = vsel %vm511, %v635, 0.0
    %639 = vadd.xlane.f32.xlu0 %v638
    %v640 = vpop.xlane.xlu0 %639
    %v641 = vsel %vm511, %v637, 0.0
    %642 = vadd.xlane.f32.xlu0 %v641
    %v643 = vpop.xlane.xlu0 %642
    %v644 = vrcp.pop %v640
    %v645 = vrcp.pop %v643
    %v646 = vmul.f32 %v635, %v644
    %v647 = vmul.f32 %v637, %v645
    %v648 = vpack.c.bf16 %v647, %v646
    %v650 = vsel %vm511, %v648, 0
    %652 = vmatprep.subr.bf16.mxu0 0
    %653 = vmatpush1.bf16.msra.mxu0 %v462
    %654 = vmatprep.subr.bf16.mxu0 0
    %655 = vmatpush1.bf16.msra.mxu0 0
    %656 = vmatprep.subr.bf16.mxu0 0
    %657 = vmatpush1.bf16.msra.mxu0 0
    %658 = vmatprep.subr.bf16.mxu0 0
    %659 = vmatpush1.bf16.msra.mxu0 0
    %660 = vmatprep.subr.bf16.mxu0 0
    %661 = vmatpush1.bf16.msra.mxu0 0
    %662 = vmatprep.subr.bf16.mxu0 0
    %663 = vmatpush1.bf16.msra.mxu0 0
    %664 = vmatprep.subr.bf16.mxu0 0
    %665 = vmatpush1.bf16.msra.mxu0 0
    %666 = vmatprep.subr.bf16.mxu0 0
    %667 = vmatpush1.bf16.msra.mxu0 0
    %668 = vmatprep.subr.bf16.mxu0 0
    %669 = vmatpush1.bf16.msra.mxu0 0
    %670 = vmatprep.subr.bf16.mxu0 0
    %671 = vmatpush1.bf16.msra.mxu0 0
    %672 = vmatprep.subr.bf16.mxu0 0
    %673 = vmatpush1.bf16.msra.mxu0 0
    %674 = vmatprep.subr.bf16.mxu0 0
    %675 = vmatpush1.bf16.msra.mxu0 0
    %676 = vmatprep.subr.bf16.mxu0 0
    %677 = vmatpush1.bf16.msra.mxu0 0
    %678 = vmatprep.subr.bf16.mxu0 0
    %679 = vmatpush1.bf16.msra.mxu0 0
    %680 = vmatprep.subr.bf16.mxu0 0
    %681 = vmatpush1.bf16.msra.mxu0 0
    %682 = vmatprep.subr.bf16.mxu0 0
    %683 = vmatpush1.bf16.msra.mxu0 0
    %684 = vmatprep.mubr.bf16.mxu0 0
    %685 = vmatmul.mubr.bf16.gmra.mrb[0].mxu0 %v650
    %v686 = vpop.f32.mrb[0].mxu0
    %v687 = vadd.f32 0.0, %v686
    %v688 = vpop.f32.mrb[0].mxu0
    %v689 = vpop.f32.mrb[0].mxu0
    %v690 = vadd.f32 0.0, %v689
    %v691 = vpop.f32.mrb[0].mxu0
    %692 = vdwg.mxu0
    %v693 = vpack.c.bf16 %v576, %v573
    %v694 = vpack.c.bf16 %v690, %v687
    %v695 = vld [vmem:[%s3] sm:$0xf]
    %v696 = vld [vmem:[%s3 + $0x4] sm:$0xf]
    %v697 = vld [vmem:[%s3 + $0x8] sm:$0xf]
    %v698 = vld [vmem:[%s3 + $0xc] sm:$0xf]
    %v699 = vld [vmem:[%s3 + $0x10] sm:$0xf]
    %v700 = vld [vmem:[%s3 + $0x14] sm:$0xf]
    %v701 = vld [vmem:[%s3 + $0x18] sm:$0xf]
    %v702 = vld [vmem:[%s3 + $0x1c] sm:$0xf]
    %v703 = vld [vmem:[%s3 + $0x20] sm:$0xf]
    %v704 = vld [vmem:[%s3 + $0x24] sm:$0xf]
    %v705 = vld [vmem:[%s3 + $0x28] sm:$0xf]
    %v706 = vld [vmem:[%s3 + $0x2c] sm:$0xf]
    %v707 = vld [vmem:[%s3 + $0x30] sm:$0xf]
    %v708 = vld [vmem:[%s3 + $0x34] sm:$0xf]
    %v709 = vld [vmem:[%s3 + $0x38] sm:$0xf]
    %v710 = vld [vmem:[%s3 + $0x3c] sm:$0xf]
    %711 = vmatprep.subr.bf16.mxu0 0
    %712 = vmatpush1.bf16.xpose.msra.mxu0 %v455
    %713 = vmatprep.subr.bf16.mxu0 0
    %714 = vmatpush1.bf16.xpose.msra.mxu0 0
    %715 = vmatprep.subr.bf16.mxu0 0
    %716 = vmatpush1.bf16.xpose.msra.mxu0 0
    %717 = vmatprep.subr.bf16.mxu0 0
    %718 = vmatpush1.bf16.xpose.msra.mxu0 0
    %719 = vmatprep.subr.bf16.mxu0 0
    %720 = vmatpush1.bf16.xpose.msra.mxu0 0
    %721 = vmatprep.subr.bf16.mxu0 0
    %722 = vmatpush1.bf16.xpose.msra.mxu0 0
    %723 = vmatprep.subr.bf16.mxu0 0
    %724 = vmatpush1.bf16.xpose.msra.mxu0 0
    %725 = vmatprep.subr.bf16.mxu0 0
    %726 = vmatpush1.bf16.xpose.msra.mxu0 0
    %727 = vmatprep.subr.bf16.mxu0 0
    %728 = vmatpush1.bf16.xpose.msra.mxu0 0
    %729 = vmatprep.subr.bf16.mxu0 0
    %730 = vmatpush1.bf16.xpose.msra.mxu0 0
    %731 = vmatprep.subr.bf16.mxu0 0
    %732 = vmatpush1.bf16.xpose.msra.mxu0 0
    %733 = vmatprep.subr.bf16.mxu0 0
    %734 = vmatpush1.bf16.xpose.msra.mxu0 0
    %735 = vmatprep.subr.bf16.mxu0 0
    %736 = vmatpush1.bf16.xpose.msra.mxu0 0
    %737 = vmatprep.subr.bf16.mxu0 0
    %738 = vmatpush1.bf16.xpose.msra.mxu0 0
    %739 = vmatprep.subr.bf16.mxu0 0
    %740 = vmatpush1.bf16.xpose.msra.mxu0 0
    %741 = vmatprep.subr.bf16.mxu0 0
    %742 = vmatpush1.bf16.xpose.msra.mxu0 0
    %743 = vmatprep.mubr.bf16.mxu0 0
    %744 = vmatmul.mubr.bf16.gmra.mrb[0].mxu0 %v453
    %v745 = vpop.f32.mrb[0].mxu0
    %v746 = vadd.f32 %v468, %v745
    %v747 = vpop.f32.mrb[0].mxu0
    %v748 = vpop.f32.mrb[0].mxu0
    %v749 = vadd.f32 %v468, %v748
    %v750 = vpop.f32.mrb[0].mxu0
    %751 = vdwg.mxu0
    %v752 = vsel %vm511, %v746, -inf
    %753 = vmax.xlane.f32.xlu0 %v752
    %v754 = vpop.xlane.xlu0 %753
    %v755 = vsel %vm511, %v749, -inf
    %756 = vmax.xlane.f32.xlu0 %v755
    %v757 = vpop.xlane.xlu0 %756
    %v758 = vsub.f32 %v746, %v754
    %v759 = vsub.f32 %v749, %v757
    %v760 = vmul.f32 %v758, 1.442695
    %v761 = vpow.pop %v760
    %v762 = vmul.f32 %v759, 1.442695
    %v763 = vpow.pop %v762
    %v764 = vsel %vm511, %v761, 0.0
    %765 = vadd.xlane.f32.xlu0 %v764
    %v766 = vpop.xlane.xlu0 %765
    %v767 = vsel %vm511, %v763, 0.0
    %768 = vadd.xlane.f32.xlu0 %v767
    %v769 = vpop.xlane.xlu0 %768
    %v770 = vrcp.pop %v766
    %v771 = vrcp.pop %v769
    %v772 = vmul.f32 %v761, %v770
    %v773 = vmul.f32 %v763, %v771
    %v774 = vpack.c.bf16 %v773, %v772
    %v776 = vsel %vm511, %v774, 0
    %778 = vmatprep.subr.bf16.mxu0 0
    %779 = vmatpush1.bf16.msra.mxu0 %v457
    %780 = vmatprep.subr.bf16.mxu0 0
    %781 = vmatpush1.bf16.msra.mxu0 0
    %782 = vmatprep.subr.bf16.mxu0 0
    %783 = vmatpush1.bf16.msra.mxu0 0
    %784 = vmatprep.subr.bf16.mxu0 0
    %785 = vmatpush1.bf16.msra.mxu0 0
    %786 = vmatprep.subr.bf16.mxu0 0
    %787 = vmatpush1.bf16.msra.mxu0 0
    %788 = vmatprep.subr.bf16.mxu0 0
    %789 = vmatpush1.bf16.msra.mxu0 0
    %790 = vmatprep.subr.bf16.mxu0 0
    %791 = vmatpush1.bf16.msra.mxu0 0
    %792 = vmatprep.subr.bf16.mxu0 0
    %793 = vmatpush1.bf16.msra.mxu0 0
    %794 = vmatprep.subr.bf16.mxu0 0
    %795 = vmatpush1.bf16.msra.mxu0 0
    %796 = vmatprep.subr.bf16.mxu0 0
    %797 = vmatpush1.bf16.msra.mxu0 0
    %798 = vmatprep.subr.bf16.mxu0 0
    %799 = vmatpush1.bf16.msra.mxu0 0
    %800 = vmatprep.subr.bf16.mxu0 0
    %801 = vmatpush1.bf16.msra.mxu0 0
    %802 = vmatprep.subr.bf16.mxu0 0
    %803 = vmatpush1.bf16.msra.mxu0 0
    %804 = vmatprep.subr.bf16.mxu0 0
    %805 = vmatpush1.bf16.msra.mxu0 0
    %806 = vmatprep.subr.bf16.mxu0 0
    %807 = vmatpush1.bf16.msra.mxu0 0
    %808 = vmatprep.subr.bf16.mxu0 0
    %809 = vmatpush1.bf16.msra.mxu0 0
    %810 = vmatprep.mubr.bf16.mxu0 0
    %811 = vmatmul.mubr.bf16.gmra.mrb[0].mxu0 %v776
    %v812 = vpop.f32.mrb[0].mxu0
    %v813 = vadd.f32 0.0, %v812
    %v814 = vpop.f32.mrb[0].mxu0
    %v815 = vpop.f32.mrb[0].mxu0
    %v816 = vadd.f32 0.0, %v815
    %v817 = vpop.f32.mrb[0].mxu0
    %818 = vdwg.mxu0
    %819 = vmatprep.subr.bf16.mxu0 0
    %820 = vmatpush1.bf16.xpose.msra.mxu0 %v461
    %821 = vmatprep.subr.bf16.mxu0 0
    %822 = vmatpush1.bf16.xpose.msra.mxu0 0
    %823 = vmatprep.subr.bf16.mxu0 0
    %824 = vmatpush1.bf16.xpose.msra.mxu0 0
    %825 = vmatprep.subr.bf16.mxu0 0
    %826 = vmatpush1.bf16.xpose.msra.mxu0 0
    %827 = vmatprep.subr.bf16.mxu0 0
    %828 = vmatpush1.bf16.xpose.msra.mxu0 0
    %829 = vmatprep.subr.bf16.mxu0 0
    %830 = vmatpush1.bf16.xpose.msra.mxu0 0
    %831 = vmatprep.subr.bf16.mxu0 0
    %832 = vmatpush1.bf16.xpose.msra.mxu0 0
    %833 = vmatprep.subr.bf16.mxu0 0
    %834 = vmatpush1.bf16.xpose.msra.mxu0 0
    %835 = vmatprep.subr.bf16.mxu0 0
    %836 = vmatpush1.bf16.xpose.msra.mxu0 0
    %837 = vmatprep.subr.bf16.mxu0 0
    %838 = vmatpush1.bf16.xpose.msra.mxu0 0
    %839 = vmatprep.subr.bf16.mxu0 0
    %840 = vmatpush1.bf16.xpose.msra.mxu0 0
    %841 = vmatprep.subr.bf16.mxu0 0
    %842 = vmatpush1.bf16.xpose.msra.mxu0 0
    %843 = vmatprep.subr.bf16.mxu0 0
    %844 = vmatpush1.bf16.xpose.msra.mxu0 0
    %845 = vmatprep.subr.bf16.mxu0 0
    %846 = vmatpush1.bf16.xpose.msra.mxu0 0
    %847 = vmatprep.subr.bf16.mxu0 0
    %848 = vmatpush1.bf16.xpose.msra.mxu0 0
    %849 = vmatprep.subr.bf16.mxu0 0
    %850 = vmatpush1.bf16.xpose.msra.mxu0 0
    %851 = vmatprep.mubr.bf16.mxu0 0
    %852 = vmatmul.mubr.bf16.gmra.mrb[0].mxu0 %v459
    %v853 = vpop.f32.mrb[0].mxu0
    %v854 = vadd.f32 %v583, %v853
    %v855 = vpop.f32.mrb[0].mxu0
    %v856 = vpop.f32.mrb[0].mxu0
    %v857 = vadd.f32 %v583, %v856
    %v858 = vpop.f32.mrb[0].mxu0
    %859 = vdwg.mxu0
    %v860 = vsel %vm511, %v854, -inf
    %861 = vmax.xlane.f32.xlu0 %v860
    %v862 = vpop.xlane.xlu0 %861
    %v863 = vsel %vm511, %v857, -inf
    %864 = vmax.xlane.f32.xlu0 %v863
    %v865 = vpop.xlane.xlu0 %864
    %v866 = vsub.f32 %v854, %v862
    %v867 = vsub.f32 %v857, %v865
    %v868 = vmul.f32 %v866, 1.442695
    %v869 = vpow.pop %v868
    %v870 = vmul.f32 %v867, 1.442695
    %v871 = vpow.pop %v870
    %v872 = vsel %vm511, %v869, 0.0
    %873 = vadd.xlane.f32.xlu0 %v872
    %v874 = vpop.xlane.xlu0 %873
    %v875 = vsel %vm511, %v871, 0.0
    %876 = vadd.xlane.f32.xlu0 %v875
    %v877 = vpop.xlane.xlu0 %876
    %v878 = vrcp.pop %v874
    %v879 = vrcp.pop %v877
    %v880 = vmul.f32 %v869, %v878
    %v881 = vmul.f32 %v871, %v879
    %v882 = vpack.c.bf16 %v881, %v880
    %v884 = vsel %vm511, %v882, 0
    %886 = vmatprep.subr.bf16.mxu0 0
    %887 = vmatpush1.bf16.msra.mxu0 %v463
    %888 = vmatprep.subr.bf16.mxu0 0
    %889 = vmatpush1.bf16.msra.mxu0 0
    %890 = vmatprep.subr.bf16.mxu0 0
    %891 = vmatpush1.bf16.msra.mxu0 0
    %892 = vmatprep.subr.bf16.mxu0 0
    %893 = vmatpush1.bf16.msra.mxu0 0
    %894 = vmatprep.subr.bf16.mxu0 0
    %895 = vmatpush1.bf16.msra.mxu0 0
    %896 = vmatprep.subr.bf16.mxu0 0
    %897 = vmatpush1.bf16.msra.mxu0 0
    %898 = vmatprep.subr.bf16.mxu0 0
    %899 = vmatpush1.bf16.msra.mxu0 0
    %900 = vmatprep.subr.bf16.mxu0 0
    %901 = vmatpush1.bf16.msra.mxu0 0
    %902 = vmatprep.subr.bf16.mxu0 0
    %903 = vmatpush1.bf16.msra.mxu0 0
    %904 = vmatprep.subr.bf16.mxu0 0
    %905 = vmatpush1.bf16.msra.mxu0 0
    %906 = vmatprep.subr.bf16.mxu0 0
    %907 = vmatpush1.bf16.msra.mxu0 0
    %908 = vmatprep.subr.bf16.mxu0 0
    %909 = vmatpush1.bf16.msra.mxu0 0
    %910 = vmatprep.subr.bf16.mxu0 0
    %911 = vmatpush1.bf16.msra.mxu0 0
    %912 = vmatprep.subr.bf16.mxu0 0
    %913 = vmatpush1.bf16.msra.mxu0 0
    %914 = vmatprep.subr.bf16.mxu0 0
    %915 = vmatpush1.bf16.msra.mxu0 0
    %916 = vmatprep.subr.bf16.mxu0 0
    %917 = vmatpush1.bf16.msra.mxu0 0
    %918 = vmatprep.mubr.bf16.mxu0 0
    %919 = vmatmul.mubr.bf16.gmra.mrb[0].mxu0 %v884
    %v920 = vpop.f32.mrb[0].mxu0
    %v921 = vadd.f32 0.0, %v920
    %v922 = vpop.f32.mrb[0].mxu0
    %v923 = vpop.f32.mrb[0].mxu0
    %v924 = vadd.f32 0.0, %v923
    %v925 = vpop.f32.mrb[0].mxu0
    %926 = vdwg.mxu0
    %v927 = vpack.c.bf16 %v816, %v813
    %v928 = vpack.c.bf16 %v924, %v921
    %s929 = scalar_lea.vmem %s3, 64
    %v930 = vld [vmem:[%s929] sm:$0xf]
    %v931 = vld [vmem:[%s929 + $0x4] sm:$0xf]
    %v932 = vld [vmem:[%s929 + $0x8] sm:$0xf]
    %v933 = vld [vmem:[%s929 + $0xc] sm:$0xf]
    %v934 = vld [vmem:[%s929 + $0x10] sm:$0xf]
    %v935 = vld [vmem:[%s929 + $0x14] sm:$0xf]
    %v936 = vld [vmem:[%s929 + $0x18] sm:$0xf]
    %v937 = vld [vmem:[%s929 + $0x1c] sm:$0xf]
    %v938 = vld [vmem:[%s929 + $0x20] sm:$0xf]
    %v939 = vld [vmem:[%s929 + $0x24] sm:$0xf]
    %v940 = vld [vmem:[%s929 + $0x28] sm:$0xf]
    %v941 = vld [vmem:[%s929 + $0x2c] sm:$0xf]
    %v942 = vld [vmem:[%s929 + $0x30] sm:$0xf]
    %v943 = vld [vmem:[%s929 + $0x34] sm:$0xf]
    %v944 = vld [vmem:[%s929 + $0x38] sm:$0xf]
    %v945 = vld [vmem:[%s929 + $0x3c] sm:$0xf]
    %v962 = vunpack.c.l.b16 %v930
    %v963 = vunpack.c.l.b16 %v931
    %v964 = vunpack.c.l.b16 %v932
    %v965 = vunpack.c.l.b16 %v933
    %v966 = vunpack.c.l.b16 %v934
    %v967 = vunpack.c.l.b16 %v935
    %v968 = vunpack.c.l.b16 %v936
    %v969 = vunpack.c.l.b16 %v937
    %v970 = vunpack.c.l.b16 %v938
    %v971 = vunpack.c.l.b16 %v939
    %v972 = vunpack.c.l.b16 %v940
    %v973 = vunpack.c.l.b16 %v941
    %v974 = vunpack.c.l.b16 %v942
    %v975 = vunpack.c.l.b16 %v943
    %v976 = vunpack.c.l.b16 %v944
    %v977 = vunpack.c.l.b16 %v945
    %v978 = vpack.c.b16 %v963, %v962
    %v979 = vpack.c.b16 %v965, %v964
    %v980 = vpack.c.b16 %v967, %v966
    %v981 = vpack.c.b16 %v969, %v968
    %v982 = vpack.c.b16 %v971, %v970
    %v983 = vpack.c.b16 %v973, %v972
    %v984 = vpack.c.b16 %v975, %v974
    %v985 = vpack.c.b16 %v977, %v976
    %994 = vmatprep.subr.bf16.mxu0 0
    %995 = vmatpush1.bf16.msra.mxu0 %v978
    %996 = vmatprep.subr.bf16.mxu0 0
    %997 = vmatpush1.bf16.msra.mxu0 %v979
    %998 = vmatprep.subr.bf16.mxu0 0
    %999 = vmatpush1.bf16.msra.mxu0 %v980
    %1000 = vmatprep.subr.bf16.mxu0 0
    %1001 = vmatpush1.bf16.msra.mxu0 %v981
    %1002 = vmatprep.subr.bf16.mxu0 0
    %1003 = vmatpush1.bf16.msra.mxu0 %v982
    %1004 = vmatprep.subr.bf16.mxu0 0
    %1005 = vmatpush1.bf16.msra.mxu0 %v983
    %1006 = vmatprep.subr.bf16.mxu0 0
    %1007 = vmatpush1.bf16.msra.mxu0 %v984
    %1008 = vmatprep.subr.bf16.mxu0 0
    %1009 = vmatpush1.bf16.msra.mxu0 %v985
    %1010 = vmatprep.subr.bf16.mxu0 0
    %1011 = vmatpush1.bf16.msra.mxu0 0
    %1012 = vmatprep.subr.bf16.mxu0 0
    %1013 = vmatpush1.bf16.msra.mxu0 0
    %1014 = vmatprep.subr.bf16.mxu0 0
    %1015 = vmatpush1.bf16.msra.mxu0 0
    %1016 = vmatprep.subr.bf16.mxu0 0
    %1017 = vmatpush1.bf16.msra.mxu0 0
    %1018 = vmatprep.subr.bf16.mxu0 0
    %1019 = vmatpush1.bf16.msra.mxu0 0
    %1020 = vmatprep.subr.bf16.mxu0 0
    %1021 = vmatpush1.bf16.msra.mxu0 0
    %1022 = vmatprep.subr.bf16.mxu0 0
    %1023 = vmatpush1.bf16.msra.mxu0 0
    %1024 = vmatprep.subr.bf16.mxu0 0
    %1025 = vmatpush1.bf16.msra.mxu0 0
    %1026 = vmatprep.mubr.bf16.mxu0 0
    %1027 = vmatmul.mubr.bf16.gmra.mrb[0].mxu0 %v927
    %v1028 = vpop.f32.mrb[0].mxu0
    %v1029 = vadd.f32 0.0, %v1028
    %v1030 = vpop.f32.mrb[0].mxu0
    %v1031 = vpop.f32.mrb[0].mxu0
    %v1032 = vadd.f32 0.0, %v1031
    %v1033 = vpop.f32.mrb[0].mxu0
    %1034 = vmatprep.mubr.bf16.mxu0 0
    %1035 = vmatmul.mubr.bf16.gmra.mrb[0].mxu0 %v928
    %v1036 = vpop.f32.mrb[0].mxu0
    %v1037 = vadd.f32 0.0, %v1036
    %v1038 = vpop.f32.mrb[0].mxu0
    %v1039 = vpop.f32.mrb[0].mxu0
    %v1040 = vadd.f32 0.0, %v1039
    %v1041 = vpop.f32.mrb[0].mxu0
    %1042 = vdwg.mxu0
    %v1059 = vunpack.c.l.b16 %v695
    %v1060 = vunpack.c.l.b16 %v696
    %v1061 = vunpack.c.l.b16 %v697
    %v1062 = vunpack.c.l.b16 %v698
    %v1063 = vunpack.c.l.b16 %v699
    %v1064 = vunpack.c.l.b16 %v700
    %v1065 = vunpack.c.l.b16 %v701
    %v1066 = vunpack.c.l.b16 %v702
    %v1067 = vunpack.c.l.b16 %v703
    %v1068 = vunpack.c.l.b16 %v704
    %v1069 = vunpack.c.l.b16 %v705
    %v1070 = vunpack.c.l.b16 %v706
    %v1071 = vunpack.c.l.b16 %v707
    %v1072 = vunpack.c.l.b16 %v708
    %v1073 = vunpack.c.l.b16 %v709
    %v1074 = vunpack.c.l.b16 %v710
    %v1075 = vpack.c.b16 %v1060, %v1059
    %v1076 = vpack.c.b16 %v1062, %v1061
    %v1077 = vpack.c.b16 %v1064, %v1063
    %v1078 = vpack.c.b16 %v1066, %v1065
    %v1079 = vpack.c.b16 %v1068, %v1067
    %v1080 = vpack.c.b16 %v1070, %v1069
    %v1081 = vpack.c.b16 %v1072, %v1071
    %v1082 = vpack.c.b16 %v1074, %v1073
    %1091 = vmatprep.subr.bf16.mxu0 0
    %1092 = vmatpush1.bf16.msra.mxu0 %v1075
    %1093 = vmatprep.subr.bf16.mxu0 0
    %1094 = vmatpush1.bf16.msra.mxu0 %v1076
    %1095 = vmatprep.subr.bf16.mxu0 0
    %1096 = vmatpush1.bf16.msra.mxu0 %v1077
    %1097 = vmatprep.subr.bf16.mxu0 0
    %1098 = vmatpush1.bf16.msra.mxu0 %v1078
    %1099 = vmatprep.subr.bf16.mxu0 0
    %1100 = vmatpush1.bf16.msra.mxu0 %v1079
    %1101 = vmatprep.subr.bf16.mxu0 0
    %1102 = vmatpush1.bf16.msra.mxu0 %v1080
    %1103 = vmatprep.subr.bf16.mxu0 0
    %1104 = vmatpush1.bf16.msra.mxu0 %v1081
    %1105 = vmatprep.subr.bf16.mxu0 0
    %1106 = vmatpush1.bf16.msra.mxu0 %v1082
    %1107 = vmatprep.subr.bf16.mxu0 0
    %1108 = vmatpush1.bf16.msra.mxu0 0
    %1109 = vmatprep.subr.bf16.mxu0 0
    %1110 = vmatpush1.bf16.msra.mxu0 0
    %1111 = vmatprep.subr.bf16.mxu0 0
    %1112 = vmatpush1.bf16.msra.mxu0 0
    %1113 = vmatprep.subr.bf16.mxu0 0
    %1114 = vmatpush1.bf16.msra.mxu0 0
    %1115 = vmatprep.subr.bf16.mxu0 0
    %1116 = vmatpush1.bf16.msra.mxu0 0
    %1117 = vmatprep.subr.bf16.mxu0 0
    %1118 = vmatpush1.bf16.msra.mxu0 0
    %1119 = vmatprep.subr.bf16.mxu0 0
    %1120 = vmatpush1.bf16.msra.mxu0 0
    %1121 = vmatprep.subr.bf16.mxu0 0
    %1122 = vmatpush1.bf16.msra.mxu0 0
    %1123 = vmatprep.mubr.bf16.mxu0 0
    %1124 = vmatmul.mubr.bf16.gmra.mrb[0].mxu0 %v693
    %v1125 = vpop.f32.mrb[0].mxu0
    %v1126 = vadd.f32 %v1029, %v1125
    %v1127 = vpop.f32.mrb[0].mxu0
    %v1128 = vpop.f32.mrb[0].mxu0
    %v1129 = vadd.f32 %v1032, %v1128
    %v1130 = vpop.f32.mrb[0].mxu0
    %1131 = vmatprep.mubr.bf16.mxu0 0
    %1132 = vmatmul.mubr.bf16.gmra.mrb[0].mxu0 %v694
    %v1133 = vpop.f32.mrb[0].mxu0
    %v1134 = vadd.f32 %v1037, %v1133
    %v1135 = vpop.f32.mrb[0].mxu0
    %v1136 = vpop.f32.mrb[0].mxu0
    %v1137 = vadd.f32 %v1040, %v1136
    %v1138 = vpop.f32.mrb[0].mxu0
    %1139 = vdwg.mxu0
    %v1140 = vadd.f32 %v58, %v1126
    %v1141 = vadd.f32 %v59, %v1129
    %v1142 = vadd.f32 %v60, %v1134
    %v1143 = vadd.f32 %v61, %v1137
    %v1144 = vld [vmem:[%s4] sm:$0x1]
    %v1146 = vlaneseq
    %v1147 = vshrl.u32 %v1146, 7
    %v1148 = vsub.s32 0, %v1147
    %v1149 = vrot.slane %v1144, %v1148
    %v1151 = vadd.f32 %v1140, %v1149
    %v1152 = vadd.f32 %v1141, %v1149
    %v1153 = vadd.f32 %v1142, %v1149
    %v1154 = vadd.f32 %v1143, %v1149
    %v1155 = vld [vmem:[%s7] sm:$0x1]
    %v1156 = vld [vmem:[%s8] sm:$0x1]
    %v1157 = vsel %vm66, %v1151, 0.0
    %1158 = vadd.xlane.f32.xlu0 %v1157
    %v1159 = vpop.xlane.xlu0 %1158
    %v1160 = vsel %vm66, %v1152, 0.0
    %1161 = vadd.xlane.f32.xlu0 %v1160
    %v1162 = vpop.xlane.xlu0 %1161
    %v1163 = vsel %vm66, %v1153, 0.0
    %1164 = vadd.xlane.f32.xlu0 %v1163
    %v1165 = vpop.xlane.xlu0 %1164
    %v1166 = vsel %vm66, %v1154, 0.0
    %1167 = vadd.xlane.f32.xlu0 %v1166
    %v1168 = vpop.xlane.xlu0 %1167
    %v1169 = vmul.f32 %v1159, %v79
    %v1170 = vmul.f32 %v1162, %v79
    %v1171 = vmul.f32 %v1165, %v79
    %v1172 = vmul.f32 %v1168, %v79
    %v1173 = vsub.f32 %v1151, %v1169
    %v1174 = vsub.f32 %v1152, %v1170
    %v1175 = vsub.f32 %v1153, %v1171
    %v1176 = vsub.f32 %v1154, %v1172
    %v1177 = vmul.f32 %v1173, %v1173
    %v1178 = vmul.f32 %v1174, %v1174
    %v1179 = vmul.f32 %v1175, %v1175
    %v1180 = vmul.f32 %v1176, %v1176
    %v1181 = vsel %vm66, %v1177, 0.0
    %1182 = vadd.xlane.f32.xlu0 %v1181
    %v1183 = vpop.xlane.xlu0 %1182
    %v1184 = vsel %vm66, %v1178, 0.0
    %1185 = vadd.xlane.f32.xlu0 %v1184
    %v1186 = vpop.xlane.xlu0 %1185
    %v1187 = vsel %vm66, %v1179, 0.0
    %1188 = vadd.xlane.f32.xlu0 %v1187
    %v1189 = vpop.xlane.xlu0 %1188
    %v1190 = vsel %vm66, %v1180, 0.0
    %1191 = vadd.xlane.f32.xlu0 %v1190
    %v1192 = vpop.xlane.xlu0 %1191
    %v1193 = vmul.f32 %v1183, %v79
    %v1194 = vmul.f32 %v1186, %v79
    %v1195 = vmul.f32 %v1189, %v79
    %v1196 = vmul.f32 %v1192, %v79
    %v1197 = vadd.f32 %v1193, 1e-05
    %v1198 = vadd.f32 %v1194, 1e-05
    %v1199 = vadd.f32 %v1195, 1e-05
    %v1200 = vadd.f32 %v1196, 1e-05
    %v1201 = vrsqrt.pop %v1197
    %v1202 = vrsqrt.pop %v1198
    %v1203 = vrsqrt.pop %v1199
    %v1204 = vrsqrt.pop %v1200
    %v1205 = vmul.f32 %v1173, %v1201
    %v1206 = vmul.f32 %v1174, %v1202
    %v1207 = vmul.f32 %v1175, %v1203
    %v1208 = vmul.f32 %v1176, %v1204
    %v1210 = vlaneseq
    %v1211 = vshrl.u32 %v1210, 7
    %v1212 = vsub.s32 0, %v1211
    %v1213 = vrot.slane %v1155, %v1212
    %v1215 = vmul.f32 %v1205, %v1213
    %v1216 = vmul.f32 %v1206, %v1213
    %v1217 = vmul.f32 %v1207, %v1213
    %v1218 = vmul.f32 %v1208, %v1213
    %v1220 = vlaneseq
    %v1221 = vshrl.u32 %v1220, 7
    %v1222 = vsub.s32 0, %v1221
    %v1223 = vrot.slane %v1156, %v1222
    %v1225 = vadd.f32 %v1215, %v1223
    %v1226 = vadd.f32 %v1216, %v1223
    %v1227 = vadd.f32 %v1217, %v1223
    %v1228 = vadd.f32 %v1218, %v1223
    %v1229 = vpack.c.bf16 %v1226, %v1225
    %v1230 = vpack.c.bf16 %v1228, %v1227
    %v1231 = vld [vmem:[%s9] sm:$0xff]
    %v1232 = vld [vmem:[%s9 + $0x8] sm:$0xff]
    %v1233 = vld [vmem:[%s9 + $0x10] sm:$0xff]
    %v1234 = vld [vmem:[%s9 + $0x18] sm:$0xff]
    %v1235 = vld [vmem:[%s9 + $0x20] sm:$0xff]
    %v1236 = vld [vmem:[%s9 + $0x28] sm:$0xff]
    %v1237 = vld [vmem:[%s9 + $0x30] sm:$0x11]
    %v1238 = vld [vmem:[%s10] sm:$0x3]
    %v1240 = vlaneseq
    %v1241 = vshrl.u32 %v1240, 7
    %v1242 = vsub.s32 0, %v1241
    %v1243 = vrot.slane %v1238, %v1242
    %v1244 = vlaneseq
    %v1245 = vshrl.u32 %v1244, 7
    %v1246 = vsub.s32 1, %v1245
    %v1247 = vrot.slane %v1238, %v1246
    %v1257 = vunpack.c.l.b16 %v1231
    %v1258 = vunpack.c.h.b16 %v1231
    %v1259 = vunpack.c.l.b16 %v1232
    %v1260 = vunpack.c.h.b16 %v1232
    %v1261 = vunpack.c.l.b16 %v1233
    %v1262 = vunpack.c.h.b16 %v1233
    %v1263 = vunpack.c.l.b16 %v1234
    %v1264 = vunpack.c.h.b16 %v1234
    %v1265 = vunpack.c.l.b16 %v1235
    %v1266 = vunpack.c.h.b16 %v1235
    %v1267 = vunpack.c.l.b16 %v1236
    %v1268 = vunpack.c.h.b16 %v1236
    %v1269 = vunpack.c.l.b16 %v1237
    %v1270 = vunpack.c.h.b16 %v1237
    %v1271 = vpack.c.b16 %v1259, %v1257
    %v1272 = vpack.c.b16 %v1260, %v1258
    %v1273 = vpack.c.b16 %v1263, %v1261
    %v1274 = vpack.c.b16 %v1264, %v1262
    %v1275 = vpack.c.b16 %v1267, %v1265
    %v1276 = vpack.c.b16 %v1268, %v1266
    %v1277 = vpack.c.b16 %v1269, %v1269
    %v1278 = vpack.c.b16 %v1270, %v1270
    %v1286 = vsel %vm66, %v1229, 0
    %v1289 = vsel %vm66, %v1230, 0
    %v1292 = vsel %vm274, %v1277, 0
    %v1295 = vsel %vm274, %v1278, 0
    %1297 = vmatprep.subr.bf16.mxu0 %v1272
    %1298 = vmatpush1.bf16.msra.mxu0 %v1271
    %1299 = vmatprep.subr.bf16.mxu0 %v1274
    %1300 = vmatpush1.bf16.msra.mxu0 %v1273
    %1301 = vmatprep.subr.bf16.mxu0 %v1276
    %1302 = vmatpush1.bf16.msra.mxu0 %v1275
    %1303 = vmatprep.subr.bf16.mxu0 %v1295
    %1304 = vmatpush1.bf16.msra.mxu0 %v1292
    %1305 = vmatprep.subr.bf16.mxu0 0
    %1306 = vmatpush1.bf16.msra.mxu0 0
    %1307 = vmatprep.subr.bf16.mxu0 0
    %1308 = vmatpush1.bf16.msra.mxu0 0
    %1309 = vmatprep.subr.bf16.mxu0 0
    %1310 = vmatpush1.bf16.msra.mxu0 0
    %1311 = vmatprep.subr.bf16.mxu0 0
    %1312 = vmatpush1.bf16.msra.mxu0 0
    %1313 = vmatprep.subr.bf16.mxu0 0
    %1314 = vmatpush1.bf16.msra.mxu0 0
    %1315 = vmatprep.subr.bf16.mxu0 0
    %1316 = vmatpush1.bf16.msra.mxu0 0
    %1317 = vmatprep.subr.bf16.mxu0 0
    %1318 = vmatpush1.bf16.msra.mxu0 0
    %1319 = vmatprep.subr.bf16.mxu0 0
    %1320 = vmatpush1.bf16.msra.mxu0 0
    %1321 = vmatprep.subr.bf16.mxu0 0
    %1322 = vmatpush1.bf16.msra.mxu0 0
    %1323 = vmatprep.subr.bf16.mxu0 0
    %1324 = vmatpush1.bf16.msra.mxu0 0
    %1325 = vmatprep.subr.bf16.mxu0 0
    %1326 = vmatpush1.bf16.msra.mxu0 0
    %1327 = vmatprep.subr.bf16.mxu0 0
    %1328 = vmatpush1.bf16.msra.mxu0 0
    %1329 = vmatprep.mubr.bf16.mxu0 0
    %1330 = vmatmul.mubr.bf16.gmra.mrb[0].mxu0 %v1286
    %v1331 = vpop.f32.mrb[0].mxu0
    %v1332 = vadd.f32 %v1243, %v1331
    %v1333 = vpop.f32.mrb[0].mxu0
    %v1334 = vadd.f32 %v1247, %v1333
    %v1335 = vpop.f32.mrb[0].mxu0
    %v1336 = vadd.f32 %v1243, %v1335
    %v1337 = vpop.f32.mrb[0].mxu0
    %v1338 = vadd.f32 %v1247, %v1337
    %1339 = vmatprep.mubr.bf16.mxu0 0
    %1340 = vmatmul.mubr.bf16.gmra.mrb[0].mxu0 %v1289
    %v1341 = vpop.f32.mrb[0].mxu0
    %v1342 = vadd.f32 %v1243, %v1341
    %v1343 = vpop.f32.mrb[0].mxu0
    %v1344 = vadd.f32 %v1247, %v1343
    %v1345 = vpop.f32.mrb[0].mxu0
    %v1346 = vadd.f32 %v1243, %v1345
    %v1347 = vpop.f32.mrb[0].mxu0
    %v1348 = vadd.f32 %v1247, %v1347
    %1349 = vdwg.mxu0
    %v1350 = vmax.f32 %v1332, 0.0
    %v1351 = vmax.f32 %v1334, 0.0
    %v1352 = vmax.f32 %v1336, 0.0
    %v1353 = vmax.f32 %v1338, 0.0
    %v1354 = vmax.f32 %v1342, 0.0
    %v1355 = vmax.f32 %v1344, 0.0
    %v1356 = vmax.f32 %v1346, 0.0
    %v1357 = vmax.f32 %v1348, 0.0
    %v1358 = vpack.c.bf16 %v1352, %v1350
    %v1359 = vpack.c.bf16 %v1353, %v1351
    %v1360 = vpack.c.bf16 %v1356, %v1354
    %v1361 = vpack.c.bf16 %v1357, %v1355
    %v1362 = vld [vmem:[%s11] sm:$0xf]
    %v1363 = vld [vmem:[%s11 + $0x4] sm:$0xf]
    %v1364 = vld [vmem:[%s11 + $0x8] sm:$0xf]
    %v1365 = vld [vmem:[%s11 + $0xc] sm:$0xf]
    %v1366 = vld [vmem:[%s11 + $0x10] sm:$0xf]
    %v1367 = vld [vmem:[%s11 + $0x14] sm:$0xf]
    %v1368 = vld [vmem:[%s11 + $0x18] sm:$0xf]
    %v1369 = vld [vmem:[%s11 + $0x1c] sm:$0xf]
    %v1370 = vld [vmem:[%s11 + $0x20] sm:$0xf]
    %v1371 = vld [vmem:[%s11 + $0x24] sm:$0xf]
    %v1372 = vld [vmem:[%s11 + $0x28] sm:$0xf]
    %v1373 = vld [vmem:[%s11 + $0x2c] sm:$0xf]
    %v1374 = vld [vmem:[%s11 + $0x30] sm:$0xf]
    %v1375 = vld [vmem:[%s11 + $0x34] sm:$0xf]
    %v1376 = vld [vmem:[%s11 + $0x38] sm:$0xf]
    %v1377 = vld [vmem:[%s11 + $0x3c] sm:$0xf]
    %v1378 = vld [vmem:[%s11 + $0x40] sm:$0xf]
    %v1379 = vld [vmem:[%s11 + $0x44] sm:$0xf]
    %v1380 = vld [vmem:[%s11 + $0x48] sm:$0xf]
    %v1381 = vld [vmem:[%s11 + $0x4c] sm:$0xf]
    %v1382 = vld [vmem:[%s11 + $0x50] sm:$0xf]
    %v1383 = vld [vmem:[%s11 + $0x54] sm:$0xf]
    %v1384 = vld [vmem:[%s11 + $0x58] sm:$0xf]
    %v1385 = vld [vmem:[%s11 + $0x5c] sm:$0xf]
    %v1386 = vld [vmem:[%s11 + $0x60] sm:$0xf]
    %v1387 = vld [vmem:[%s12] sm:$0x1]
    %v1389 = vlaneseq
    %v1390 = vshrl.u32 %v1389, 7
    %v1391 = vsub.s32 0, %v1390
    %v1392 = vrot.slane %v1387, %v1391
    %v1419 = vunpack.c.l.b16 %v1362
    %v1420 = vunpack.c.l.b16 %v1363
    %v1421 = vunpack.c.l.b16 %v1364
    %v1422 = vunpack.c.l.b16 %v1365
    %v1423 = vunpack.c.l.b16 %v1366
    %v1424 = vunpack.c.l.b16 %v1367
    %v1425 = vunpack.c.l.b16 %v1368
    %v1426 = vunpack.c.l.b16 %v1369
    %v1427 = vunpack.c.l.b16 %v1370
    %v1428 = vunpack.c.l.b16 %v1371
    %v1429 = vunpack.c.l.b16 %v1372
    %v1430 = vunpack.c.l.b16 %v1373
    %v1431 = vunpack.c.l.b16 %v1374
    %v1432 = vunpack.c.l.b16 %v1375
    %v1433 = vunpack.c.l.b16 %v1376
    %v1434 = vunpack.c.l.b16 %v1377
    %v1435 = vunpack.c.l.b16 %v1378
    %v1436 = vunpack.c.l.b16 %v1379
    %v1437 = vunpack.c.l.b16 %v1380
    %v1438 = vunpack.c.l.b16 %v1381
    %v1439 = vunpack.c.l.b16 %v1382
    %v1440 = vunpack.c.l.b16 %v1383
    %v1441 = vunpack.c.l.b16 %v1384
    %v1442 = vunpack.c.l.b16 %v1385
    %v1443 = vunpack.c.l.b16 %v1386
    %v1444 = vpack.c.b16 %v1420, %v1419
    %v1445 = vpack.c.b16 %v1422, %v1421
    %v1446 = vpack.c.b16 %v1424, %v1423
    %v1447 = vpack.c.b16 %v1426, %v1425
    %v1448 = vpack.c.b16 %v1428, %v1427
    %v1449 = vpack.c.b16 %v1430, %v1429
    %v1450 = vpack.c.b16 %v1432, %v1431
    %v1451 = vpack.c.b16 %v1434, %v1433
    %v1452 = vpack.c.b16 %v1436, %v1435
    %v1453 = vpack.c.b16 %v1438, %v1437
    %v1454 = vpack.c.b16 %v1440, %v1439
    %v1455 = vpack.c.b16 %v1442, %v1441
    %v1456 = vpack.c.b16 %v1443, %v1443
    %vm1469 = vcmask 588800
    %v1471 = vsel %vm1469, %v1359, 0
    %v1474 = vsel %vm1469, %v1361, 0
    %vm1476 = vcmask 1043456
    %v1478 = vsel %vm1476, %v1456, 0
    %1480 = vmatprep.subr.bf16.mxu0 0
    %1481 = vmatpush1.bf16.msra.mxu0 %v1444
    %1482 = vmatprep.subr.bf16.mxu0 0
    %1483 = vmatpush1.bf16.msra.mxu0 %v1445
    %1484 = vmatprep.subr.bf16.mxu0 0
    %1485 = vmatpush1.bf16.msra.mxu0 %v1446
    %1486 = vmatprep.subr.bf16.mxu0 0
    %1487 = vmatpush1.bf16.msra.mxu0 %v1447
    %1488 = vmatprep.subr.bf16.mxu0 0
    %1489 = vmatpush1.bf16.msra.mxu0 %v1448
    %1490 = vmatprep.subr.bf16.mxu0 0
    %1491 = vmatpush1.bf16.msra.mxu0 %v1449
    %1492 = vmatprep.subr.bf16.mxu0 0
    %1493 = vmatpush1.bf16.msra.mxu0 %v1450
    %1494 = vmatprep.subr.bf16.mxu0 0
    %1495 = vmatpush1.bf16.msra.mxu0 %v1451
    %1496 = vmatprep.subr.bf16.mxu0 0
    %1497 = vmatpush1.bf16.msra.mxu0 %v1452
    %1498 = vmatprep.subr.bf16.mxu0 0
    %1499 = vmatpush1.bf16.msra.mxu0 %v1453
    %1500 = vmatprep.subr.bf16.mxu0 0
    %1501 = vmatpush1.bf16.msra.mxu0 %v1454
    %1502 = vmatprep.subr.bf16.mxu0 0
    %1503 = vmatpush1.bf16.msra.mxu0 %v1455
    %1504 = vmatprep.subr.bf16.mxu0 0
    %1505 = vmatpush1.bf16.msra.mxu0 %v1478
    %1506 = vmatprep.subr.bf16.mxu0 0
    %1507 = vmatpush1.bf16.msra.mxu0 0
    %1508 = vmatprep.subr.bf16.mxu0 0
    %1509 = vmatpush1.bf16.msra.mxu0 0
    %1510 = vmatprep.subr.bf16.mxu0 0
    %1511 = vmatpush1.bf16.msra.mxu0 0
    %1512 = vmatprep.mubr.bf16.mxu0 %v1471
    %1513 = vmatmul.mubr.bf16.gmra.mrb[0].mxu0 %v1358
    %v1514 = vpop.f32.mrb[0].mxu0
    %v1515 = vadd.f32 %v1392, %v1514
    %v1516 = vpop.f32.mrb[0].mxu0
    %v1517 = vpop.f32.mrb[0].mxu0
    %v1518 = vadd.f32 %v1392, %v1517
    %v1519 = vpop.f32.mrb[0].mxu0
    %1520 = vmatprep.mubr.bf16.mxu0 %v1474
    %1521 = vmatmul.mubr.bf16.gmra.mrb[0].mxu0 %v1360
    %v1522 = vpop.f32.mrb[0].mxu0
    %v1523 = vadd.f32 %v1392, %v1522
    %v1524 = vpop.f32.mrb[0].mxu0
    %v1525 = vpop.f32.mrb[0].mxu0
    %v1526 = vadd.f32 %v1392, %v1525
    %v1527 = vpop.f32.mrb[0].mxu0
    %1528 = vdwg.mxu0
    %v1529 = vadd.f32 %v1151, %v1515
    %v1530 = vadd.f32 %v1152, %v1518
    %v1531 = vadd.f32 %v1153, %v1523
    %v1532 = vadd.f32 %v1154, %v1526
    %s1533 = scalar_lea.vmem %s5, 1
    %v1534 = vld [vmem:[%s1533] sm:$0x1]
    %s1535 = scalar_lea.vmem %s6, 1
    %v1536 = vld [vmem:[%s1535] sm:$0x1]
    %v1537 = vsel %vm66, %v1529, 0.0
    %1538 = vadd.xlane.f32.xlu0 %v1537
    %v1539 = vpop.xlane.xlu0 %1538
    %v1540 = vsel %vm66, %v1530, 0.0
    %1541 = vadd.xlane.f32.xlu0 %v1540
    %v1542 = vpop.xlane.xlu0 %1541
    %v1543 = vsel %vm66, %v1531, 0.0
    %1544 = vadd.xlane.f32.xlu0 %v1543
    %v1545 = vpop.xlane.xlu0 %1544
    %v1546 = vsel %vm66, %v1532, 0.0
    %1547 = vadd.xlane.f32.xlu0 %v1546
    %v1548 = vpop.xlane.xlu0 %1547
    %v1549 = vmul.f32 %v1539, %v79
    %v1550 = vmul.f32 %v1542, %v79
    %v1551 = vmul.f32 %v1545, %v79
    %v1552 = vmul.f32 %v1548, %v79
    %v1553 = vsub.f32 %v1529, %v1549
    %v1554 = vsub.f32 %v1530, %v1550
    %v1555 = vsub.f32 %v1531, %v1551
    %v1556 = vsub.f32 %v1532, %v1552
    %v1557 = vmul.f32 %v1553, %v1553
    %v1558 = vmul.f32 %v1554, %v1554
    %v1559 = vmul.f32 %v1555, %v1555
    %v1560 = vmul.f32 %v1556, %v1556
    %v1561 = vsel %vm66, %v1557, 0.0
    %1562 = vadd.xlane.f32.xlu0 %v1561
    %v1563 = vpop.xlane.xlu0 %1562
    %v1564 = vsel %vm66, %v1558, 0.0
    %1565 = vadd.xlane.f32.xlu0 %v1564
    %v1566 = vpop.xlane.xlu0 %1565
    %v1567 = vsel %vm66, %v1559, 0.0
    %1568 = vadd.xlane.f32.xlu0 %v1567
    %v1569 = vpop.xlane.xlu0 %1568
    %v1570 = vsel %vm66, %v1560, 0.0
    %1571 = vadd.xlane.f32.xlu0 %v1570
    %v1572 = vpop.xlane.xlu0 %1571
    %v1573 = vmul.f32 %v1563, %v79
    %v1574 = vmul.f32 %v1566, %v79
    %v1575 = vmul.f32 %v1569, %v79
    %v1576 = vmul.f32 %v1572, %v79
    %v1577 = vadd.f32 %v1573, 1e-05
    %v1578 = vadd.f32 %v1574, 1e-05
    %v1579 = vadd.f32 %v1575, 1e-05
    %v1580 = vadd.f32 %v1576, 1e-05
    %v1581 = vrsqrt.pop %v1577
    %v1582 = vrsqrt.pop %v1578
    %v1583 = vrsqrt.pop %v1579
    %v1584 = vrsqrt.pop %v1580
    %v1585 = vmul.f32 %v1553, %v1581
    %v1586 = vmul.f32 %v1554, %v1582
    %v1587 = vmul.f32 %v1555, %v1583
    %v1588 = vmul.f32 %v1556, %v1584
    %v1590 = vlaneseq
    %v1591 = vshrl.u32 %v1590, 7
    %v1592 = vsub.s32 0, %v1591
    %v1593 = vrot.slane %v1534, %v1592
    %v1595 = vmul.f32 %v1585, %v1593
    %v1596 = vmul.f32 %v1586, %v1593
    %v1597 = vmul.f32 %v1587, %v1593
    %v1598 = vmul.f32 %v1588, %v1593
    %v1600 = vlaneseq
    %v1601 = vshrl.u32 %v1600, 7
    %v1602 = vsub.s32 0, %v1601
    %v1603 = vrot.slane %v1536, %v1602
    %v1605 = vadd.f32 %v1595, %v1603
    %v1606 = vadd.f32 %v1596, %v1603
    %v1607 = vadd.f32 %v1597, %v1603
    %v1608 = vadd.f32 %v1598, %v1603
    %v1609 = vpack.c.bf16 %v1606, %v1605
    %v1610 = vpack.c.bf16 %v1608, %v1607
    %s1611 = scalar_lea.vmem %s2, 168
    %v1612 = vld [vmem:[%s1611] sm:$0xff]
    %v1613 = vld [vmem:[%s1611 + $0x8] sm:$0xff]
    %v1614 = vld [vmem:[%s1611 + $0x10] sm:$0xff]
    %v1615 = vld [vmem:[%s1611 + $0x18] sm:$0xff]
    %v1616 = vld [vmem:[%s1611 + $0x20] sm:$0xff]
    %v1617 = vld [vmem:[%s1611 + $0x28] sm:$0xff]
    %v1618 = vld [vmem:[%s1611 + $0x30] sm:$0xff]
    %v1619 = vld [vmem:[%s1611 + $0x38] sm:$0xff]
    %v1620 = vld [vmem:[%s1611 + $0x40] sm:$0xff]
    %v1621 = vld [vmem:[%s1611 + $0x48] sm:$0xff]
    %v1622 = vld [vmem:[%s1611 + $0x50] sm:$0xff]
    %v1623 = vld [vmem:[%s1611 + $0x58] sm:$0xff]
    %v1624 = vld [vmem:[%s1611 + $0x60] sm:$0xff]
    %v1625 = vld [vmem:[%s1611 + $0x68] sm:$0xff]
    %v1626 = vld [vmem:[%s1611 + $0x70] sm:$0xff]
    %v1627 = vld [vmem:[%s1611 + $0x78] sm:$0xff]
    %v1628 = vld [vmem:[%s1611 + $0x80] sm:$0xff]
    %v1629 = vld [vmem:[%s1611 + $0x88] sm:$0xff]
    %v1630 = vld [vmem:[%s1611 + $0x90] sm:$0x11]
    %v1631 = vld [vmem:[%s1611 + $0x98] sm:$0x11]
    %v1632 = vld [vmem:[%s1611 + $0xa0] sm:$0x11]
    %v1654 = vunpack.c.l.b16 %v1612
    %v1655 = vunpack.c.h.b16 %v1612
    %v1656 = vunpack.c.l.b16 %v1613
    %v1657 = vunpack.c.h.b16 %v1613
    %v1658 = vunpack.c.l.b16 %v1614
    %v1659 = vunpack.c.h.b16 %v1614
    %v1660 = vunpack.c.l.b16 %v1615
    %v1661 = vunpack.c.h.b16 %v1615
    %v1662 = vunpack.c.l.b16 %v1616
    %v1663 = vunpack.c.h.b16 %v1616
    %v1664 = vunpack.c.l.b16 %v1617
    %v1665 = vunpack.c.h.b16 %v1617
    %v1666 = vunpack.c.l.b16 %v1618
    %v1667 = vunpack.c.h.b16 %v1618
    %v1668 = vunpack.c.l.b16 %v1619
    %v1669 = vunpack.c.h.b16 %v1619
    %v1670 = vunpack.c.l.b16 %v1620
    %v1671 = vunpack.c.h.b16 %v1620
    %v1672 = vunpack.c.l.b16 %v1621
    %v1673 = vunpack.c.h.b16 %v1621
    %v1674 = vunpack.c.l.b16 %v1622
    %v1675 = vunpack.c.h.b16 %v1622
    %v1676 = vunpack.c.l.b16 %v1623
    %v1677 = vunpack.c.h.b16 %v1623
    %v1678 = vunpack.c.l.b16 %v1624
    %v1679 = vunpack.c.h.b16 %v1624
    %v1680 = vunpack.c.l.b16 %v1625
    %v1681 = vunpack.c.h.b16 %v1625
    %v1682 = vunpack.c.l.b16 %v1626
    %v1683 = vunpack.c.h.b16 %v1626
    %v1684 = vunpack.c.l.b16 %v1627
    %v1685 = vunpack.c.h.b16 %v1627
    %v1686 = vunpack.c.l.b16 %v1628
    %v1687 = vunpack.c.h.b16 %v1628
    %v1688 = vunpack.c.l.b16 %v1629
    %v1689 = vunpack.c.h.b16 %v1629
    %v1690 = vunpack.c.l.b16 %v1630
    %v1691 = vunpack.c.h.b16 %v1630
    %v1692 = vunpack.c.l.b16 %v1631
    %v1693 = vunpack.c.h.b16 %v1631
    %v1694 = vunpack.c.l.b16 %v1632
    %v1695 = vunpack.c.h.b16 %v1632
    %v1696 = vpack.c.b16 %v1660, %v1654
    %v1697 = vpack.c.b16 %v1661, %v1655
    %v1698 = vpack.c.b16 %v1662, %v1656
    %v1699 = vpack.c.b16 %v1663, %v1657
    %v1700 = vpack.c.b16 %v1664, %v1658
    %v1701 = vpack.c.b16 %v1665, %v1659
    %v1702 = vpack.c.b16 %v1672, %v1666
    %v1703 = vpack.c.b16 %v1673, %v1667
    %v1704 = vpack.c.b16 %v1674, %v1668
    %v1705 = vpack.c.b16 %v1675, %v1669
    %v1706 = vpack.c.b16 %v1676, %v1670
    %v1707 = vpack.c.b16 %v1677, %v1671
    %v1708 = vpack.c.b16 %v1684, %v1678
    %v1709 = vpack.c.b16 %v1685, %v1679
    %v1710 = vpack.c.b16 %v1686, %v1680
    %v1711 = vpack.c.b16 %v1687, %v1681
    %v1712 = vpack.c.b16 %v1688, %v1682
    %v1713 = vpack.c.b16 %v1689, %v1683
    %v1714 = vpack.c.b16 %v1690, %v1690
    %v1715 = vpack.c.b16 %v1691, %v1691
    %v1716 = vpack.c.b16 %v1692, %v1692
    %v1717 = vpack.c.b16 %v1693, %v1693
    %v1718 = vpack.c.b16 %v1694, %v1694
    %v1719 = vpack.c.b16 %v1695, %v1695
    %v1739 = vsel %vm66, %v1609, 0
    %v1742 = vsel %vm66, %v1610, 0
    %v1745 = vsel %vm274, %v1714, 0
    %v1748 = vsel %vm274, %v1715, 0
    %v1751 = vsel %vm274, %v1716, 0
    %v1754 = vsel %vm274, %v1717, 0
    %v1757 = vsel %vm274, %v1718, 0
    %v1760 = vsel %vm274, %v1719, 0
    %1762 = vmatprep.subr.bf16.mxu0 %v1697
    %1763 = vmatpush1.bf16.msra.mxu0 %v1696
    %1764 = vmatprep.subr.bf16.mxu0 %v1703
    %1765 = vmatpush1.bf16.msra.mxu0 %v1702
    %1766 = vmatprep.subr.bf16.mxu0 %v1709
    %1767 = vmatpush1.bf16.msra.mxu0 %v1708
    %1768 = vmatprep.subr.bf16.mxu0 %v1748
    %1769 = vmatpush1.bf16.msra.mxu0 %v1745
    %1770 = vmatprep.subr.bf16.mxu0 0
    %1771 = vmatpush1.bf16.msra.mxu0 0
    %1772 = vmatprep.subr.bf16.mxu0 0
    %1773 = vmatpush1.bf16.msra.mxu0 0
    %1774 = vmatprep.subr.bf16.mxu0 0
    %1775 = vmatpush1.bf16.msra.mxu0 0
    %1776 = vmatprep.subr.bf16.mxu0 0
    %1777 = vmatpush1.bf16.msra.mxu0 0
    %1778 = vmatprep.subr.bf16.mxu0 0
    %1779 = vmatpush1.bf16.msra.mxu0 0
    %1780 = vmatprep.subr.bf16.mxu0 0
    %1781 = vmatpush1.bf16.msra.mxu0 0
    %1782 = vmatprep.subr.bf16.mxu0 0
    %1783 = vmatpush1.bf16.msra.mxu0 0
    %1784 = vmatprep.subr.bf16.mxu0 0
    %1785 = vmatpush1.bf16.msra.mxu0 0
    %1786 = vmatprep.subr.bf16.mxu0 0
    %1787 = vmatpush1.bf16.msra.mxu0 0
    %1788 = vmatprep.subr.bf16.mxu0 0
    %1789 = vmatpush1.bf16.msra.mxu0 0
    %1790 = vmatprep.subr.bf16.mxu0 0
    %1791 = vmatpush1.bf16.msra.mxu0 0
    %1792 = vmatprep.subr.bf16.mxu0 0
    %1793 = vmatpush1.bf16.msra.mxu0 0
    %1794 = vmatprep.mubr.bf16.mxu0 0
    %1795 = vmatmul.mubr.bf16.gmra.mrb[0].mxu0 %v1739
    %v1796 = vpop.f32.mrb[0].mxu0
    %v1797 = vadd.f32 0.0, %v1796
    %v1798 = vpop.f32.mrb[0].mxu0
    %v1799 = vadd.f32 0.0, %v1798
    %v1800 = vpop.f32.mrb[0].mxu0
    %v1801 = vadd.f32 0.0, %v1800
    %v1802 = vpop.f32.mrb[0].mxu0
    %v1803 = vadd.f32 0.0, %v1802
    %1804 = vmatprep.mubr.bf16.mxu0 0
    %1805 = vmatmul.mubr.bf16.gmra.mrb[0].mxu0 %v1742
    %v1806 = vpop.f32.mrb[0].mxu0
    %v1807 = vadd.f32 0.0, %v1806
    %v1808 = vpop.f32.mrb[0].mxu0
    %v1809 = vadd.f32 0.0, %v1808
    %v1810 = vpop.f32.mrb[0].mxu0
    %v1811 = vadd.f32 0.0, %v1810
    %v1812 = vpop.f32.mrb[0].mxu0
    %v1813 = vadd.f32 0.0, %v1812
    %1814 = vdwg.mxu0
    %1815 = vmatprep.subr.bf16.mxu0 %v1699
    %1816 = vmatpush1.bf16.msra.mxu0 %v1698
    %1817 = vmatprep.subr.bf16.mxu0 %v1705
    %1818 = vmatpush1.bf16.msra.mxu0 %v1704
    %1819 = vmatprep.subr.bf16.mxu0 %v1711
    %1820 = vmatpush1.bf16.msra.mxu0 %v1710
    %1821 = vmatprep.subr.bf16.mxu0 %v1754
    %1822 = vmatpush1.bf16.msra.mxu0 %v1751
    %1823 = vmatprep.subr.bf16.mxu0 0
    %1824 = vmatpush1.bf16.msra.mxu0 0
    %1825 = vmatprep.subr.bf16.mxu0 0
    %1826 = vmatpush1.bf16.msra.mxu0 0
    %1827 = vmatprep.subr.bf16.mxu0 0
    %1828 = vmatpush1.bf16.msra.mxu0 0
    %1829 = vmatprep.subr.bf16.mxu0 0
    %1830 = vmatpush1.bf16.msra.mxu0 0
    %1831 = vmatprep.subr.bf16.mxu0 0
    %1832 = vmatpush1.bf16.msra.mxu0 0
    %1833 = vmatprep.subr.bf16.mxu0 0
    %1834 = vmatpush1.bf16.msra.mxu0 0
    %1835 = vmatprep.subr.bf16.mxu0 0
    %1836 = vmatpush1.bf16.msra.mxu0 0
    %1837 = vmatprep.subr.bf16.mxu0 0
    %1838 = vmatpush1.bf16.msra.mxu0 0
    %1839 = vmatprep.subr.bf16.mxu0 0
    %1840 = vmatpush1.bf16.msra.mxu0 0
    %1841 = vmatprep.subr.bf16.mxu0 0
    %1842 = vmatpush1.bf16.msra.mxu0 0
    %1843 = vmatprep.subr.bf16.mxu0 0
    %1844 = vmatpush1.bf16.msra.mxu0 0
    %1845 = vmatprep.subr.bf16.mxu0 0
    %1846 = vmatpush1.bf16.msra.mxu0 0
    %1847 = vmatprep.mubr.bf16.mxu0 0
    %1848 = vmatmul.mubr.bf16.gmra.mrb[0].mxu0 %v1739
    %v1849 = vpop.f32.mrb[0].mxu0
    %v1850 = vadd.f32 0.0, %v1849
    %v1851 = vpop.f32.mrb[0].mxu0
    %v1852 = vadd.f32 0.0, %v1851
    %v1853 = vpop.f32.mrb[0].mxu0
    %v1854 = vadd.f32 0.0, %v1853
    %v1855 = vpop.f32.mrb[0].mxu0
    %v1856 = vadd.f32 0.0, %v1855
    %1857 = vmatprep.mubr.bf16.mxu0 0
    %1858 = vmatmul.mubr.bf16.gmra.mrb[0].mxu0 %v1742
    %v1859 = vpop.f32.mrb[0].mxu0
    %v1860 = vadd.f32 0.0, %v1859
    %v1861 = vpop.f32.mrb[0].mxu0
    %v1862 = vadd.f32 0.0, %v1861
    %v1863 = vpop.f32.mrb[0].mxu0
    %v1864 = vadd.f32 0.0, %v1863
    %v1865 = vpop.f32.mrb[0].mxu0
    %v1866 = vadd.f32 0.0, %v1865
    %1867 = vdwg.mxu0
    %1868 = vmatprep.subr.bf16.mxu0 %v1701
    %1869 = vmatpush1.bf16.msra.mxu0 %v1700
    %1870 = vmatprep.subr.bf16.mxu0 %v1707
    %1871 = vmatpush1.bf16.msra.mxu0 %v1706
    %1872 = vmatprep.subr.bf16.mxu0 %v1713
    %1873 = vmatpush1.bf16.msra.mxu0 %v1712
    %1874 = vmatprep.subr.bf16.mxu0 %v1760
    %1875 = vmatpush1.bf16.msra.mxu0 %v1757
    %1876 = vmatprep.subr.bf16.mxu0 0
    %1877 = vmatpush1.bf16.msra.mxu0 0
    %1878 = vmatprep.subr.bf16.mxu0 0
    %1879 = vmatpush1.bf16.msra.mxu0 0
    %1880 = vmatprep.subr.bf16.mxu0 0
    %1881 = vmatpush1.bf16.msra.mxu0 0
    %1882 = vmatprep.subr.bf16.mxu0 0
    %1883 = vmatpush1.bf16.msra.mxu0 0
    %1884 = vmatprep.subr.bf16.mxu0 0
    %1885 = vmatpush1.bf16.msra.mxu0 0
    %1886 = vmatprep.subr.bf16.mxu0 0
    %1887 = vmatpush1.bf16.msra.mxu0 0
    %1888 = vmatprep.subr.bf16.mxu0 0
    %1889 = vmatpush1.bf16.msra.mxu0 0
    %1890 = vmatprep.subr.bf16.mxu0 0
    %1891 = vmatpush1.bf16.msra.mxu0 0
    %1892 = vmatprep.subr.bf16.mxu0 0
    %1893 = vmatpush1.bf16.msra.mxu0 0
    %1894 = vmatprep.subr.bf16.mxu0 0
    %1895 = vmatpush1.bf16.msra.mxu0 0
    %1896 = vmatprep.subr.bf16.mxu0 0
    %1897 = vmatpush1.bf16.msra.mxu0 0
    %1898 = vmatprep.subr.bf16.mxu0 0
    %1899 = vmatpush1.bf16.msra.mxu0 0
    %1900 = vmatprep.mubr.bf16.mxu0 0
    %1901 = vmatmul.mubr.bf16.gmra.mrb[0].mxu0 %v1739
    %v1902 = vpop.f32.mrb[0].mxu0
    %v1903 = vadd.f32 0.0, %v1902
    %v1904 = vpop.f32.mrb[0].mxu0
    %v1905 = vadd.f32 0.0, %v1904
    %v1906 = vpop.f32.mrb[0].mxu0
    %v1907 = vadd.f32 0.0, %v1906
    %v1908 = vpop.f32.mrb[0].mxu0
    %v1909 = vadd.f32 0.0, %v1908
    %1910 = vmatprep.mubr.bf16.mxu0 0
    %1911 = vmatmul.mubr.bf16.gmra.mrb[0].mxu0 %v1742
    %v1912 = vpop.f32.mrb[0].mxu0
    %v1913 = vadd.f32 0.0, %v1912
    %v1914 = vpop.f32.mrb[0].mxu0
    %v1915 = vadd.f32 0.0, %v1914
    %v1916 = vpop.f32.mrb[0].mxu0
    %v1917 = vadd.f32 0.0, %v1916
    %v1918 = vpop.f32.mrb[0].mxu0
    %v1919 = vadd.f32 0.0, %v1918
    %1920 = vdwg.mxu0
    %v1921 = vpack.c.bf16 %v1801, %v1797
    %v1922 = vpack.c.bf16 %v1803, %v1799
    %v1923 = vpack.c.bf16 %v1854, %v1850
    %v1924 = vpack.c.bf16 %v1856, %v1852
    %v1925 = vpack.c.bf16 %v1907, %v1903
    %v1926 = vpack.c.bf16 %v1909, %v1905
    %v1927 = vpack.c.bf16 %v1811, %v1807
    %v1928 = vpack.c.bf16 %v1813, %v1809
    %v1929 = vpack.c.bf16 %v1864, %v1860
    %v1930 = vpack.c.bf16 %v1866, %v1862
    %v1931 = vpack.c.bf16 %v1917, %v1913
    %v1932 = vpack.c.bf16 %v1919, %v1915
    %1933 = vmatprep.subr.bf16.mxu0 0
    %1934 = vmatpush1.bf16.xpose.msra.mxu0 %v1923
    %1935 = vmatprep.subr.bf16.mxu0 0
    %1936 = vmatpush1.bf16.xpose.msra.mxu0 0
    %1937 = vmatprep.subr.bf16.mxu0 0
    %1938 = vmatpush1.bf16.xpose.msra.mxu0 0
    %1939 = vmatprep.subr.bf16.mxu0 0
    %1940 = vmatpush1.bf16.xpose.msra.mxu0 0
    %1941 = vmatprep.subr.bf16.mxu0 0
    %1942 = vmatpush1.bf16.xpose.msra.mxu0 0
    %1943 = vmatprep.subr.bf16.mxu0 0
    %1944 = vmatpush1.bf16.xpose.msra.mxu0 0
    %1945 = vmatprep.subr.bf16.mxu0 0
    %1946 = vmatpush1.bf16.xpose.msra.mxu0 0
    %1947 = vmatprep.subr.bf16.mxu0 0
    %1948 = vmatpush1.bf16.xpose.msra.mxu0 0
    %1949 = vmatprep.subr.bf16.mxu0 0
    %1950 = vmatpush1.bf16.xpose.msra.mxu0 0
    %1951 = vmatprep.subr.bf16.mxu0 0
    %1952 = vmatpush1.bf16.xpose.msra.mxu0 0
    %1953 = vmatprep.subr.bf16.mxu0 0
    %1954 = vmatpush1.bf16.xpose.msra.mxu0 0
    %1955 = vmatprep.subr.bf16.mxu0 0
    %1956 = vmatpush1.bf16.xpose.msra.mxu0 0
    %1957 = vmatprep.subr.bf16.mxu0 0
    %1958 = vmatpush1.bf16.xpose.msra.mxu0 0
    %1959 = vmatprep.subr.bf16.mxu0 0
    %1960 = vmatpush1.bf16.xpose.msra.mxu0 0
    %1961 = vmatprep.subr.bf16.mxu0 0
    %1962 = vmatpush1.bf16.xpose.msra.mxu0 0
    %1963 = vmatprep.subr.bf16.mxu0 0
    %1964 = vmatpush1.bf16.xpose.msra.mxu0 0
    %1965 = vmatprep.mubr.bf16.mxu0 0
    %1966 = vmatmul.mubr.bf16.gmra.mrb[0].mxu0 %v1921
    %v1967 = vpop.f32.mrb[0].mxu0
    %v1968 = vadd.f32 %v468, %v1967
    %v1969 = vpop.f32.mrb[0].mxu0
    %v1970 = vpop.f32.mrb[0].mxu0
    %v1971 = vadd.f32 %v468, %v1970
    %v1972 = vpop.f32.mrb[0].mxu0
    %1973 = vdwg.mxu0
    %v1974 = vsel %vm511, %v1968, -inf
    %1975 = vmax.xlane.f32.xlu0 %v1974
    %v1976 = vpop.xlane.xlu0 %1975
    %v1977 = vsel %vm511, %v1971, -inf
    %1978 = vmax.xlane.f32.xlu0 %v1977
    %v1979 = vpop.xlane.xlu0 %1978
    %v1980 = vsub.f32 %v1968, %v1976
    %v1981 = vsub.f32 %v1971, %v1979
    %v1982 = vmul.f32 %v1980, 1.442695
    %v1983 = vpow.pop %v1982
    %v1984 = vmul.f32 %v1981, 1.442695
    %v1985 = vpow.pop %v1984
    %v1986 = vsel %vm511, %v1983, 0.0
    %1987 = vadd.xlane.f32.xlu0 %v1986
    %v1988 = vpop.xlane.xlu0 %1987
    %v1989 = vsel %vm511, %v1985, 0.0
    %1990 = vadd.xlane.f32.xlu0 %v1989
    %v1991 = vpop.xlane.xlu0 %1990
    %v1992 = vrcp.pop %v1988
    %v1993 = vrcp.pop %v1991
    %v1994 = vmul.f32 %v1983, %v1992
    %v1995 = vmul.f32 %v1985, %v1993
    %v1996 = vpack.c.bf16 %v1995, %v1994
    %v1998 = vsel %vm511, %v1996, 0
    %2000 = vmatprep.subr.bf16.mxu0 0
    %2001 = vmatpush1.bf16.msra.mxu0 %v1925
    %2002 = vmatprep.subr.bf16.mxu0 0
    %2003 = vmatpush1.bf16.msra.mxu0 0
    %2004 = vmatprep.subr.bf16.mxu0 0
    %2005 = vmatpush1.bf16.msra.mxu0 0
    %2006 = vmatprep.subr.bf16.mxu0 0
    %2007 = vmatpush1.bf16.msra.mxu0 0
    %2008 = vmatprep.subr.bf16.mxu0 0
    %2009 = vmatpush1.bf16.msra.mxu0 0
    %2010 = vmatprep.subr.bf16.mxu0 0
    %2011 = vmatpush1.bf16.msra.mxu0 0
    %2012 = vmatprep.subr.bf16.mxu0 0
    %2013 = vmatpush1.bf16.msra.mxu0 0
    %2014 = vmatprep.subr.bf16.mxu0 0
    %2015 = vmatpush1.bf16.msra.mxu0 0
    %2016 = vmatprep.subr.bf16.mxu0 0
    %2017 = vmatpush1.bf16.msra.mxu0 0
    %2018 = vmatprep.subr.bf16.mxu0 0
    %2019 = vmatpush1.bf16.msra.mxu0 0
    %2020 = vmatprep.subr.bf16.mxu0 0
    %2021 = vmatpush1.bf16.msra.mxu0 0
    %2022 = vmatprep.subr.bf16.mxu0 0
    %2023 = vmatpush1.bf16.msra.mxu0 0
    %2024 = vmatprep.subr.bf16.mxu0 0
    %2025 = vmatpush1.bf16.msra.mxu0 0
    %2026 = vmatprep.subr.bf16.mxu0 0
    %2027 = vmatpush1.bf16.msra.mxu0 0
    %2028 = vmatprep.subr.bf16.mxu0 0
    %2029 = vmatpush1.bf16.msra.mxu0 0
    %2030 = vmatprep.subr.bf16.mxu0 0
    %2031 = vmatpush1.bf16.msra.mxu0 0
    %2032 = vmatprep.mubr.bf16.mxu0 0
    %2033 = vmatmul.mubr.bf16.gmra.mrb[0].mxu0 %v1998
    %v2034 = vpop.f32.mrb[0].mxu0
    %v2035 = vadd.f32 0.0, %v2034
    %v2036 = vpop.f32.mrb[0].mxu0
    %v2037 = vpop.f32.mrb[0].mxu0
    %v2038 = vadd.f32 0.0, %v2037
    %v2039 = vpop.f32.mrb[0].mxu0
    %2040 = vdwg.mxu0
    %2041 = vmatprep.subr.bf16.mxu0 0
    %2042 = vmatpush1.bf16.xpose.msra.mxu0 %v1929
    %2043 = vmatprep.subr.bf16.mxu0 0
    %2044 = vmatpush1.bf16.xpose.msra.mxu0 0
    %2045 = vmatprep.subr.bf16.mxu0 0
    %2046 = vmatpush1.bf16.xpose.msra.mxu0 0
    %2047 = vmatprep.subr.bf16.mxu0 0
    %2048 = vmatpush1.bf16.xpose.msra.mxu0 0
    %2049 = vmatprep.subr.bf16.mxu0 0
    %2050 = vmatpush1.bf16.xpose.msra.mxu0 0
    %2051 = vmatprep.subr.bf16.mxu0 0
    %2052 = vmatpush1.bf16.xpose.msra.mxu0 0
    %2053 = vmatprep.subr.bf16.mxu0 0
    %2054 = vmatpush1.bf16.xpose.msra.mxu0 0
    %2055 = vmatprep.subr.bf16.mxu0 0
    %2056 = vmatpush1.bf16.xpose.msra.mxu0 0
    %2057 = vmatprep.subr.bf16.mxu0 0
    %2058 = vmatpush1.bf16.xpose.msra.mxu0 0
    %2059 = vmatprep.subr.bf16.mxu0 0
    %2060 = vmatpush1.bf16.xpose.msra.mxu0 0
    %2061 = vmatprep.subr.bf16.mxu0 0
    %2062 = vmatpush1.bf16.xpose.msra.mxu0 0
    %2063 = vmatprep.subr.bf16.mxu0 0
    %2064 = vmatpush1.bf16.xpose.msra.mxu0 0
    %2065 = vmatprep.subr.bf16.mxu0 0
    %2066 = vmatpush1.bf16.xpose.msra.mxu0 0
    %2067 = vmatprep.subr.bf16.mxu0 0
    %2068 = vmatpush1.bf16.xpose.msra.mxu0 0
    %2069 = vmatprep.subr.bf16.mxu0 0
    %2070 = vmatpush1.bf16.xpose.msra.mxu0 0
    %2071 = vmatprep.subr.bf16.mxu0 0
    %2072 = vmatpush1.bf16.xpose.msra.mxu0 0
    %2073 = vmatprep.mubr.bf16.mxu0 0
    %2074 = vmatmul.mubr.bf16.gmra.mrb[0].mxu0 %v1927
    %v2075 = vpop.f32.mrb[0].mxu0
    %v2076 = vadd.f32 %v583, %v2075
    %v2077 = vpop.f32.mrb[0].mxu0
    %v2078 = vpop.f32.mrb[0].mxu0
    %v2079 = vadd.f32 %v583, %v2078
    %v2080 = vpop.f32.mrb[0].mxu0
    %2081 = vdwg.mxu0
    %v2082 = vsel %vm511, %v2076, -inf
    %2083 = vmax.xlane.f32.xlu0 %v2082
    %v2084 = vpop.xlane.xlu0 %2083
    %v2085 = vsel %vm511, %v2079, -inf
    %2086 = vmax.xlane.f32.xlu0 %v2085
    %v2087 = vpop.xlane.xlu0 %2086
    %v2088 = vsub.f32 %v2076, %v2084
    %v2089 = vsub.f32 %v2079, %v2087
    %v2090 = vmul.f32 %v2088, 1.442695
    %v2091 = vpow.pop %v2090
    %v2092 = vmul.f32 %v2089, 1.442695
    %v2093 = vpow.pop %v2092
    %v2094 = vsel %vm511, %v2091, 0.0
    %2095 = vadd.xlane.f32.xlu0 %v2094
    %v2096 = vpop.xlane.xlu0 %2095
    %v2097 = vsel %vm511, %v2093, 0.0
    %2098 = vadd.xlane.f32.xlu0 %v2097
    %v2099 = vpop.xlane.xlu0 %2098
    %v2100 = vrcp.pop %v2096
    %v2101 = vrcp.pop %v2099
    %v2102 = vmul.f32 %v2091, %v2100
    %v2103 = vmul.f32 %v2093, %v2101
    %v2104 = vpack.c.bf16 %v2103, %v2102
    %v2106 = vsel %vm511, %v2104, 0
    %2108 = vmatprep.subr.bf16.mxu0 0
    %2109 = vmatpush1.bf16.msra.mxu0 %v1931
    %2110 = vmatprep.subr.bf16.mxu0 0
    %2111 = vmatpush1.bf16.msra.mxu0 0
    %2112 = vmatprep.subr.bf16.mxu0 0
    %2113 = vmatpush1.bf16.msra.mxu0 0
    %2114 = vmatprep.subr.bf16.mxu0 0
    %2115 = vmatpush1.bf16.msra.mxu0 0
    %2116 = vmatprep.subr.bf16.mxu0 0
    %2117 = vmatpush1.bf16.msra.mxu0 0
    %2118 = vmatprep.subr.bf16.mxu0 0
    %2119 = vmatpush1.bf16.msra.mxu0 0
    %2120 = vmatprep.subr.bf16.mxu0 0
    %2121 = vmatpush1.bf16.msra.mxu0 0
    %2122 = vmatprep.subr.bf16.mxu0 0
    %2123 = vmatpush1.bf16.msra.mxu0 0
    %2124 = vmatprep.subr.bf16.mxu0 0
    %2125 = vmatpush1.bf16.msra.mxu0 0
    %2126 = vmatprep.subr.bf16.mxu0 0
    %2127 = vmatpush1.bf16.msra.mxu0 0
    %2128 = vmatprep.subr.bf16.mxu0 0
    %2129 = vmatpush1.bf16.msra.mxu0 0
    %2130 = vmatprep.subr.bf16.mxu0 0
    %2131 = vmatpush1.bf16.msra.mxu0 0
    %2132 = vmatprep.subr.bf16.mxu0 0
    %2133 = vmatpush1.bf16.msra.mxu0 0
    %2134 = vmatprep.subr.bf16.mxu0 0
    %2135 = vmatpush1.bf16.msra.mxu0 0
    %2136 = vmatprep.subr.bf16.mxu0 0
    %2137 = vmatpush1.bf16.msra.mxu0 0
    %2138 = vmatprep.subr.bf16.mxu0 0
    %2139 = vmatpush1.bf16.msra.mxu0 0
    %2140 = vmatprep.mubr.bf16.mxu0 0
    %2141 = vmatmul.mubr.bf16.gmra.mrb[0].mxu0 %v2106
    %v2142 = vpop.f32.mrb[0].mxu0
    %v2143 = vadd.f32 0.0, %v2142
    %v2144 = vpop.f32.mrb[0].mxu0
    %v2145 = vpop.f32.mrb[0].mxu0
    %v2146 = vadd.f32 0.0, %v2145
    %v2147 = vpop.f32.mrb[0].mxu0
    %2148 = vdwg.mxu0
    %v2149 = vpack.c.bf16 %v2038, %v2035
    %v2150 = vpack.c.bf16 %v2146, %v2143
    %s2151 = scalar_lea.vmem %s3, 128
    %v2152 = vld [vmem:[%s2151] sm:$0xf]
    %v2153 = vld [vmem:[%s2151 + $0x4] sm:$0xf]
    %v2154 = vld [vmem:[%s2151 + $0x8] sm:$0xf]
    %v2155 = vld [vmem:[%s2151 + $0xc] sm:$0xf]
    %v2156 = vld [vmem:[%s2151 + $0x10] sm:$0xf]
    %v2157 = vld [vmem:[%s2151 + $0x14] sm:$0xf]
    %v2158 = vld [vmem:[%s2151 + $0x18] sm:$0xf]
    %v2159 = vld [vmem:[%s2151 + $0x1c] sm:$0xf]
    %v2160 = vld [vmem:[%s2151 + $0x20] sm:$0xf]
    %v2161 = vld [vmem:[%s2151 + $0x24] sm:$0xf]
    %v2162 = vld [vmem:[%s2151 + $0x28] sm:$0xf]
    %v2163 = vld [vmem:[%s2151 + $0x2c] sm:$0xf]
    %v2164 = vld [vmem:[%s2151 + $0x30] sm:$0xf]
    %v2165 = vld [vmem:[%s2151 + $0x34] sm:$0xf]
    %v2166 = vld [vmem:[%s2151 + $0x38] sm:$0xf]
    %v2167 = vld [vmem:[%s2151 + $0x3c] sm:$0xf]
    %2168 = vmatprep.subr.bf16.mxu0 0
    %2169 = vmatpush1.bf16.xpose.msra.mxu0 %v1924
    %2170 = vmatprep.subr.bf16.mxu0 0
    %2171 = vmatpush1.bf16.xpose.msra.mxu0 0
    %2172 = vmatprep.subr.bf16.mxu0 0
    %2173 = vmatpush1.bf16.xpose.msra.mxu0 0
    %2174 = vmatprep.subr.bf16.mxu0 0
    %2175 = vmatpush1.bf16.xpose.msra.mxu0 0
    %2176 = vmatprep.subr.bf16.mxu0 0
    %2177 = vmatpush1.bf16.xpose.msra.mxu0 0
    %2178 = vmatprep.subr.bf16.mxu0 0
    %2179 = vmatpush1.bf16.xpose.msra.mxu0 0
    %2180 = vmatprep.subr.bf16.mxu0 0
    %2181 = vmatpush1.bf16.xpose.msra.mxu0 0
    %2182 = vmatprep.subr.bf16.mxu0 0
    %2183 = vmatpush1.bf16.xpose.msra.mxu0 0
    %2184 = vmatprep.subr.bf16.mxu0 0
    %2185 = vmatpush1.bf16.xpose.msra.mxu0 0
    %2186 = vmatprep.subr.bf16.mxu0 0
    %2187 = vmatpush1.bf16.xpose.msra.mxu0 0
    %2188 = vmatprep.subr.bf16.mxu0 0
    %2189 = vmatpush1.bf16.xpose.msra.mxu0 0
    %2190 = vmatprep.subr.bf16.mxu0 0
    %2191 = vmatpush1.bf16.xpose.msra.mxu0 0
    %2192 = vmatprep.subr.bf16.mxu0 0
    %2193 = vmatpush1.bf16.xpose.msra.mxu0 0
    %2194 = vmatprep.subr.bf16.mxu0 0
    %2195 = vmatpush1.bf16.xpose.msra.mxu0 0
    %2196 = vmatprep.subr.bf16.mxu0 0
    %2197 = vmatpush1.bf16.xpose.msra.mxu0 0
    %2198 = vmatprep.subr.bf16.mxu0 0
    %2199 = vmatpush1.bf16.xpose.msra.mxu0 0
    %2200 = vmatprep.mubr.bf16.mxu0 0
    %2201 = vmatmul.mubr.bf16.gmra.mrb[0].mxu0 %v1922
    %v2202 = vpop.f32.mrb[0].mxu0
    %v2203 = vadd.f32 %v468, %v2202
    %v2204 = vpop.f32.mrb[0].mxu0
    %v2205 = vpop.f32.mrb[0].mxu0
    %v2206 = vadd.f32 %v468, %v2205
    %v2207 = vpop.f32.mrb[0].mxu0
    %2208 = vdwg.mxu0
    %v2209 = vsel %vm511, %v2203, -inf
    %2210 = vmax.xlane.f32.xlu0 %v2209
    %v2211 = vpop.xlane.xlu0 %2210
    %v2212 = vsel %vm511, %v2206, -inf
    %2213 = vmax.xlane.f32.xlu0 %v2212
    %v2214 = vpop.xlane.xlu0 %2213
    %v2215 = vsub.f32 %v2203, %v2211
    %v2216 = vsub.f32 %v2206, %v2214
    %v2217 = vmul.f32 %v2215, 1.442695
    %v2218 = vpow.pop %v2217
    %v2219 = vmul.f32 %v2216, 1.442695
    %v2220 = vpow.pop %v2219
    %v2221 = vsel %vm511, %v2218, 0.0
    %2222 = vadd.xlane.f32.xlu0 %v2221
    %v2223 = vpop.xlane.xlu0 %2222
    %v2224 = vsel %vm511, %v2220, 0.0
    %2225 = vadd.xlane.f32.xlu0 %v2224
    %v2226 = vpop.xlane.xlu0 %2225
    %v2227 = vrcp.pop %v2223
    %v2228 = vrcp.pop %v2226
    %v2229 = vmul.f32 %v2218, %v2227
    %v2230 = vmul.f32 %v2220, %v2228
    %v2231 = vpack.c.bf16 %v2230, %v2229
    %v2233 = vsel %vm511, %v2231, 0
    %2235 = vmatprep.subr.bf16.mxu0 0
    %2236 = vmatpush1.bf16.msra.mxu0 %v1926
    %2237 = vmatprep.subr.bf16.mxu0 0
    %2238 = vmatpush1.bf16.msra.mxu0 0
    %2239 = vmatprep.subr.bf16.mxu0 0
    %2240 = vmatpush1.bf16.msra.mxu0 0
    %2241 = vmatprep.subr.bf16.mxu0 0
    %2242 = vmatpush1.bf16.msra.mxu0 0
    %2243 = vmatprep.subr.bf16.mxu0 0
    %2244 = vmatpush1.bf16.msra.mxu0 0
    %2245 = vmatprep.subr.bf16.mxu0 0
    %2246 = vmatpush1.bf16.msra.mxu0 0
    %2247 = vmatprep.subr.bf16.mxu0 0
    %2248 = vmatpush1.bf16.msra.mxu0 0
    %2249 = vmatprep.subr.bf16.mxu0 0
    %2250 = vmatpush1.bf16.msra.mxu0 0
    %2251 = vmatprep.subr.bf16.mxu0 0
    %2252 = vmatpush1.bf16.msra.mxu0 0
    %2253 = vmatprep.subr.bf16.mxu0 0
    %2254 = vmatpush1.bf16.msra.mxu0 0
    %2255 = vmatprep.subr.bf16.mxu0 0
    %2256 = vmatpush1.bf16.msra.mxu0 0
    %2257 = vmatprep.subr.bf16.mxu0 0
    %2258 = vmatpush1.bf16.msra.mxu0 0
    %2259 = vmatprep.subr.bf16.mxu0 0
    %2260 = vmatpush1.bf16.msra.mxu0 0
    %2261 = vmatprep.subr.bf16.mxu0 0
    %2262 = vmatpush1.bf16.msra.mxu0 0
    %2263 = vmatprep.subr.bf16.mxu0 0
    %2264 = vmatpush1.bf16.msra.mxu0 0
    %2265 = vmatprep.subr.bf16.mxu0 0
    %2266 = vmatpush1.bf16.msra.mxu0 0
    %2267 = vmatprep.mubr.bf16.mxu0 0
    %2268 = vmatmul.mubr.bf16.gmra.mrb[0].mxu0 %v2233
    %v2269 = vpop.f32.mrb[0].mxu0
    %v2270 = vadd.f32 0.0, %v2269
    %v2271 = vpop.f32.mrb[0].mxu0
    %v2272 = vpop.f32.mrb[0].mxu0
    %v2273 = vadd.f32 0.0, %v2272
    %v2274 = vpop.f32.mrb[0].mxu0
    %2275 = vdwg.mxu0
    %2276 = vmatprep.subr.bf16.mxu0 0
    %2277 = vmatpush1.bf16.xpose.msra.mxu0 %v1930
    %2278 = vmatprep.subr.bf16.mxu0 0
    %2279 = vmatpush1.bf16.xpose.msra.mxu0 0
    %2280 = vmatprep.subr.bf16.mxu0 0
    %2281 = vmatpush1.bf16.xpose.msra.mxu0 0
    %2282 = vmatprep.subr.bf16.mxu0 0
    %2283 = vmatpush1.bf16.xpose.msra.mxu0 0
    %2284 = vmatprep.subr.bf16.mxu0 0
    %2285 = vmatpush1.bf16.xpose.msra.mxu0 0
    %2286 = vmatprep.subr.bf16.mxu0 0
    %2287 = vmatpush1.bf16.xpose.msra.mxu0 0
    %2288 = vmatprep.subr.bf16.mxu0 0
    %2289 = vmatpush1.bf16.xpose.msra.mxu0 0
    %2290 = vmatprep.subr.bf16.mxu0 0
    %2291 = vmatpush1.bf16.xpose.msra.mxu0 0
    %2292 = vmatprep.subr.bf16.mxu0 0
    %2293 = vmatpush1.bf16.xpose.msra.mxu0 0
    %2294 = vmatprep.subr.bf16.mxu0 0
    %2295 = vmatpush1.bf16.xpose.msra.mxu0 0
    %2296 = vmatprep.subr.bf16.mxu0 0
    %2297 = vmatpush1.bf16.xpose.msra.mxu0 0
    %2298 = vmatprep.subr.bf16.mxu0 0
    %2299 = vmatpush1.bf16.xpose.msra.mxu0 0
    %2300 = vmatprep.subr.bf16.mxu0 0
    %2301 = vmatpush1.bf16.xpose.msra.mxu0 0
    %2302 = vmatprep.subr.bf16.mxu0 0
    %2303 = vmatpush1.bf16.xpose.msra.mxu0 0
    %2304 = vmatprep.subr.bf16.mxu0 0
    %2305 = vmatpush1.bf16.xpose.msra.mxu0 0
    %2306 = vmatprep.subr.bf16.mxu0 0
    %2307 = vmatpush1.bf16.xpose.msra.mxu0 0
    %2308 = vmatprep.mubr.bf16.mxu0 0
    %2309 = vmatmul.mubr.bf16.gmra.mrb[0].mxu0 %v1928
    %v2310 = vpop.f32.mrb[0].mxu0
    %v2311 = vadd.f32 %v583, %v2310
    %v2312 = vpop.f32.mrb[0].mxu0
    %v2313 = vpop.f32.mrb[0].mxu0
    %v2314 = vadd.f32 %v583, %v2313
    %v2315 = vpop.f32.mrb[0].mxu0
    %2316 = vdwg.mxu0
    %v2317 = vsel %vm511, %v2311, -inf
    %2318 = vmax.xlane.f32.xlu0 %v2317
    %v2319 = vpop.xlane.xlu0 %2318
    %v2320 = vsel %vm511, %v2314, -inf
    %2321 = vmax.xlane.f32.xlu0 %v2320
    %v2322 = vpop.xlane.xlu0 %2321
    %v2323 = vsub.f32 %v2311, %v2319
    %v2324 = vsub.f32 %v2314, %v2322
    %v2325 = vmul.f32 %v2323, 1.442695
    %v2326 = vpow.pop %v2325
    %v2327 = vmul.f32 %v2324, 1.442695
    %v2328 = vpow.pop %v2327
    %v2329 = vsel %vm511, %v2326, 0.0
    %2330 = vadd.xlane.f32.xlu0 %v2329
    %v2331 = vpop.xlane.xlu0 %2330
    %v2332 = vsel %vm511, %v2328, 0.0
    %2333 = vadd.xlane.f32.xlu0 %v2332
    %v2334 = vpop.xlane.xlu0 %2333
    %v2335 = vrcp.pop %v2331
    %v2336 = vrcp.pop %v2334
    %v2337 = vmul.f32 %v2326, %v2335
    %v2338 = vmul.f32 %v2328, %v2336
    %v2339 = vpack.c.bf16 %v2338, %v2337
    %v2341 = vsel %vm511, %v2339, 0
    %2343 = vmatprep.subr.bf16.mxu0 0
    %2344 = vmatpush1.bf16.msra.mxu0 %v1932
    %2345 = vmatprep.subr.bf16.mxu0 0
    %2346 = vmatpush1.bf16.msra.mxu0 0
    %2347 = vmatprep.subr.bf16.mxu0 0
    %2348 = vmatpush1.bf16.msra.mxu0 0
    %2349 = vmatprep.subr.bf16.mxu0 0
    %2350 = vmatpush1.bf16.msra.mxu0 0
    %2351 = vmatprep.subr.bf16.mxu0 0
    %2352 = vmatpush1.bf16.msra.mxu0 0
    %2353 = vmatprep.subr.bf16.mxu0 0
    %2354 = vmatpush1.bf16.msra.mxu0 0
    %2355 = vmatprep.subr.bf16.mxu0 0
    %2356 = vmatpush1.bf16.msra.mxu0 0
    %2357 = vmatprep.subr.bf16.mxu0 0
    %2358 = vmatpush1.bf16.msra.mxu0 0
    %2359 = vmatprep.subr.bf16.mxu0 0
    %2360 = vmatpush1.bf16.msra.mxu0 0
    %2361 = vmatprep.subr.bf16.mxu0 0
    %2362 = vmatpush1.bf16.msra.mxu0 0
    %2363 = vmatprep.subr.bf16.mxu0 0
    %2364 = vmatpush1.bf16.msra.mxu0 0
    %2365 = vmatprep.subr.bf16.mxu0 0
    %2366 = vmatpush1.bf16.msra.mxu0 0
    %2367 = vmatprep.subr.bf16.mxu0 0
    %2368 = vmatpush1.bf16.msra.mxu0 0
    %2369 = vmatprep.subr.bf16.mxu0 0
    %2370 = vmatpush1.bf16.msra.mxu0 0
    %2371 = vmatprep.subr.bf16.mxu0 0
    %2372 = vmatpush1.bf16.msra.mxu0 0
    %2373 = vmatprep.subr.bf16.mxu0 0
    %2374 = vmatpush1.bf16.msra.mxu0 0
    %2375 = vmatprep.mubr.bf16.mxu0 0
    %2376 = vmatmul.mubr.bf16.gmra.mrb[0].mxu0 %v2341
    %v2377 = vpop.f32.mrb[0].mxu0
    %v2378 = vadd.f32 0.0, %v2377
    %v2379 = vpop.f32.mrb[0].mxu0
    %v2380 = vpop.f32.mrb[0].mxu0
    %v2381 = vadd.f32 0.0, %v2380
    %v2382 = vpop.f32.mrb[0].mxu0
    %2383 = vdwg.mxu0
    %v2384 = vpack.c.bf16 %v2273, %v2270
    %v2385 = vpack.c.bf16 %v2381, %v2378
    %s2386 = scalar_lea.vmem %s3, 192
    %v2387 = vld [vmem:[%s2386] sm:$0xf]
    %v2388 = vld [vmem:[%s2386 + $0x4] sm:$0xf]
    %v2389 = vld [vmem:[%s2386 + $0x8] sm:$0xf]
    %v2390 = vld [vmem:[%s2386 + $0xc] sm:$0xf]
    %v2391 = vld [vmem:[%s2386 + $0x10] sm:$0xf]
    %v2392 = vld [vmem:[%s2386 + $0x14] sm:$0xf]
    %v2393 = vld [vmem:[%s2386 + $0x18] sm:$0xf]
    %v2394 = vld [vmem:[%s2386 + $0x1c] sm:$0xf]
    %v2395 = vld [vmem:[%s2386 + $0x20] sm:$0xf]
    %v2396 = vld [vmem:[%s2386 + $0x24] sm:$0xf]
    %v2397 = vld [vmem:[%s2386 + $0x28] sm:$0xf]
    %v2398 = vld [vmem:[%s2386 + $0x2c] sm:$0xf]
    %v2399 = vld [vmem:[%s2386 + $0x30] sm:$0xf]
    %v2400 = vld [vmem:[%s2386 + $0x34] sm:$0xf]
    %v2401 = vld [vmem:[%s2386 + $0x38] sm:$0xf]
    %v2402 = vld [vmem:[%s2386 + $0x3c] sm:$0xf]
    %v2419 = vunpack.c.l.b16 %v2387
    %v2420 = vunpack.c.l.b16 %v2388
    %v2421 = vunpack.c.l.b16 %v2389
    %v2422 = vunpack.c.l.b16 %v2390
    %v2423 = vunpack.c.l.b16 %v2391
    %v2424 = vunpack.c.l.b16 %v2392
    %v2425 = vunpack.c.l.b16 %v2393
    %v2426 = vunpack.c.l.b16 %v2394
    %v2427 = vunpack.c.l.b16 %v2395
    %v2428 = vunpack.c.l.b16 %v2396
    %v2429 = vunpack.c.l.b16 %v2397
    %v2430 = vunpack.c.l.b16 %v2398
    %v2431 = vunpack.c.l.b16 %v2399
    %v2432 = vunpack.c.l.b16 %v2400
    %v2433 = vunpack.c.l.b16 %v2401
    %v2434 = vunpack.c.l.b16 %v2402
    %v2435 = vpack.c.b16 %v2420, %v2419
    %v2436 = vpack.c.b16 %v2422, %v2421
    %v2437 = vpack.c.b16 %v2424, %v2423
    %v2438 = vpack.c.b16 %v2426, %v2425
    %v2439 = vpack.c.b16 %v2428, %v2427
    %v2440 = vpack.c.b16 %v2430, %v2429
    %v2441 = vpack.c.b16 %v2432, %v2431
    %v2442 = vpack.c.b16 %v2434, %v2433
    %2451 = vmatprep.subr.bf16.mxu0 0
    %2452 = vmatpush1.bf16.msra.mxu0 %v2435
    %2453 = vmatprep.subr.bf16.mxu0 0
    %2454 = vmatpush1.bf16.msra.mxu0 %v2436
    %2455 = vmatprep.subr.bf16.mxu0 0
    %2456 = vmatpush1.bf16.msra.mxu0 %v2437
    %2457 = vmatprep.subr.bf16.mxu0 0
    %2458 = vmatpush1.bf16.msra.mxu0 %v2438
    %2459 = vmatprep.subr.bf16.mxu0 0
    %2460 = vmatpush1.bf16.msra.mxu0 %v2439
    %2461 = vmatprep.subr.bf16.mxu0 0
    %2462 = vmatpush1.bf16.msra.mxu0 %v2440
    %2463 = vmatprep.subr.bf16.mxu0 0
    %2464 = vmatpush1.bf16.msra.mxu0 %v2441
    %2465 = vmatprep.subr.bf16.mxu0 0
    %2466 = vmatpush1.bf16.msra.mxu0 %v2442
    %2467 = vmatprep.subr.bf16.mxu0 0
    %2468 = vmatpush1.bf16.msra.mxu0 0
    %2469 = vmatprep.subr.bf16.mxu0 0
    %2470 = vmatpush1.bf16.msra.mxu0 0
    %2471 = vmatprep.subr.bf16.mxu0 0
    %2472 = vmatpush1.bf16.msra.mxu0 0
    %2473 = vmatprep.subr.bf16.mxu0 0
    %2474 = vmatpush1.bf16.msra.mxu0 0
    %2475 = vmatprep.subr.bf16.mxu0 0
    %2476 = vmatpush1.bf16.msra.mxu0 0
    %2477 = vmatprep.subr.bf16.mxu0 0
    %2478 = vmatpush1.bf16.msra.mxu0 0
    %2479 = vmatprep.subr.bf16.mxu0 0
    %2480 = vmatpush1.bf16.msra.mxu0 0
    %2481 = vmatprep.subr.bf16.mxu0 0
    %2482 = vmatpush1.bf16.msra.mxu0 0
    %2483 = vmatprep.mubr.bf16.mxu0 0
    %2484 = vmatmul.mubr.bf16.gmra.mrb[0].mxu0 %v2384
    %v2485 = vpop.f32.mrb[0].mxu0
    %v2486 = vadd.f32 0.0, %v2485
    %v2487 = vpop.f32.mrb[0].mxu0
    %v2488 = vpop.f32.mrb[0].mxu0
    %v2489 = vadd.f32 0.0, %v2488
    %v2490 = vpop.f32.mrb[0].mxu0
    %2491 = vmatprep.mubr.bf16.mxu0 0
    %2492 = vmatmul.mubr.bf16.gmra.mrb[0].mxu0 %v2385
    %v2493 = vpop.f32.mrb[0].mxu0
    %v2494 = vadd.f32 0.0, %v2493
    %v2495 = vpop.f32.mrb[0].mxu0
    %v2496 = vpop.f32.mrb[0].mxu0
    %v2497 = vadd.f32 0.0, %v2496
    %v2498 = vpop.f32.mrb[0].mxu0
    %2499 = vdwg.mxu0
    %v2516 = vunpack.c.l.b16 %v2152
    %v2517 = vunpack.c.l.b16 %v2153
    %v2518 = vunpack.c.l.b16 %v2154
    %v2519 = vunpack.c.l.b16 %v2155
    %v2520 = vunpack.c.l.b16 %v2156
    %v2521 = vunpack.c.l.b16 %v2157
    %v2522 = vunpack.c.l.b16 %v2158
    %v2523 = vunpack.c.l.b16 %v2159
    %v2524 = vunpack.c.l.b16 %v2160
    %v2525 = vunpack.c.l.b16 %v2161
    %v2526 = vunpack.c.l.b16 %v2162
    %v2527 = vunpack.c.l.b16 %v2163
    %v2528 = vunpack.c.l.b16 %v2164
    %v2529 = vunpack.c.l.b16 %v2165
    %v2530 = vunpack.c.l.b16 %v2166
    %v2531 = vunpack.c.l.b16 %v2167
    %v2532 = vpack.c.b16 %v2517, %v2516
    %v2533 = vpack.c.b16 %v2519, %v2518
    %v2534 = vpack.c.b16 %v2521, %v2520
    %v2535 = vpack.c.b16 %v2523, %v2522
    %v2536 = vpack.c.b16 %v2525, %v2524
    %v2537 = vpack.c.b16 %v2527, %v2526
    %v2538 = vpack.c.b16 %v2529, %v2528
    %v2539 = vpack.c.b16 %v2531, %v2530
    %2548 = vmatprep.subr.bf16.mxu0 0
    %2549 = vmatpush1.bf16.msra.mxu0 %v2532
    %2550 = vmatprep.subr.bf16.mxu0 0
    %2551 = vmatpush1.bf16.msra.mxu0 %v2533
    %2552 = vmatprep.subr.bf16.mxu0 0
    %2553 = vmatpush1.bf16.msra.mxu0 %v2534
    %2554 = vmatprep.subr.bf16.mxu0 0
    %2555 = vmatpush1.bf16.msra.mxu0 %v2535
    %2556 = vmatprep.subr.bf16.mxu0 0
    %2557 = vmatpush1.bf16.msra.mxu0 %v2536
    %2558 = vmatprep.subr.bf16.mxu0 0
    %2559 = vmatpush1.bf16.msra.mxu0 %v2537
    %2560 = vmatprep.subr.bf16.mxu0 0
    %2561 = vmatpush1.bf16.msra.mxu0 %v2538
    %2562 = vmatprep.subr.bf16.mxu0 0
    %2563 = vmatpush1.bf16.msra.mxu0 %v2539
    %2564 = vmatprep.subr.bf16.mxu0 0
    %2565 = vmatpush1.bf16.msra.mxu0 0
    %2566 = vmatprep.subr.bf16.mxu0 0
    %2567 = vmatpush1.bf16.msra.mxu0 0
    %2568 = vmatprep.subr.bf16.mxu0 0
    %2569 = vmatpush1.bf16.msra.mxu0 0
    %2570 = vmatprep.subr.bf16.mxu0 0
    %2571 = vmatpush1.bf16.msra.mxu0 0
    %2572 = vmatprep.subr.bf16.mxu0 0
    %2573 = vmatpush1.bf16.msra.mxu0 0
    %2574 = vmatprep.subr.bf16.mxu0 0
    %2575 = vmatpush1.bf16.msra.mxu0 0
    %2576 = vmatprep.subr.bf16.mxu0 0
    %2577 = vmatpush1.bf16.msra.mxu0 0
    %2578 = vmatprep.subr.bf16.mxu0 0
    %2579 = vmatpush1.bf16.msra.mxu0 0
    %2580 = vmatprep.mubr.bf16.mxu0 0
    %2581 = vmatmul.mubr.bf16.gmra.mrb[0].mxu0 %v2149
    %v2582 = vpop.f32.mrb[0].mxu0
    %v2583 = vadd.f32 %v2486, %v2582
    %v2584 = vpop.f32.mrb[0].mxu0
    %v2585 = vpop.f32.mrb[0].mxu0
    %v2586 = vadd.f32 %v2489, %v2585
    %v2587 = vpop.f32.mrb[0].mxu0
    %2588 = vmatprep.mubr.bf16.mxu0 0
    %2589 = vmatmul.mubr.bf16.gmra.mrb[0].mxu0 %v2150
    %v2590 = vpop.f32.mrb[0].mxu0
    %v2591 = vadd.f32 %v2494, %v2590
    %v2592 = vpop.f32.mrb[0].mxu0
    %v2593 = vpop.f32.mrb[0].mxu0
    %v2594 = vadd.f32 %v2497, %v2593
    %v2595 = vpop.f32.mrb[0].mxu0
    %2596 = vdwg.mxu0
    %v2597 = vadd.f32 %v1529, %v2583
    %v2598 = vadd.f32 %v1530, %v2586
    %v2599 = vadd.f32 %v1531, %v2591
    %v2600 = vadd.f32 %v1532, %v2594
    %s2601 = scalar_lea.vmem %s4, 1
    %v2602 = vld [vmem:[%s2601] sm:$0x1]
    %v2604 = vlaneseq
    %v2605 = vshrl.u32 %v2604, 7
    %v2606 = vsub.s32 0, %v2605
    %v2607 = vrot.slane %v2602, %v2606
    %v2609 = vadd.f32 %v2597, %v2607
    %v2610 = vadd.f32 %v2598, %v2607
    %v2611 = vadd.f32 %v2599, %v2607
    %v2612 = vadd.f32 %v2600, %v2607
    %s2613 = scalar_lea.vmem %s7, 1
    %v2614 = vld [vmem:[%s2613] sm:$0x1]
    %s2615 = scalar_lea.vmem %s8, 1
    %v2616 = vld [vmem:[%s2615] sm:$0x1]
    %v2617 = vsel %vm66, %v2609, 0.0
    %2618 = vadd.xlane.f32.xlu0 %v2617
    %v2619 = vpop.xlane.xlu0 %2618
    %v2620 = vsel %vm66, %v2610, 0.0
    %2621 = vadd.xlane.f32.xlu0 %v2620
    %v2622 = vpop.xlane.xlu0 %2621
    %v2623 = vsel %vm66, %v2611, 0.0
    %2624 = vadd.xlane.f32.xlu0 %v2623
    %v2625 = vpop.xlane.xlu0 %2624
    %v2626 = vsel %vm66, %v2612, 0.0
    %2627 = vadd.xlane.f32.xlu0 %v2626
    %v2628 = vpop.xlane.xlu0 %2627
    %v2629 = vmul.f32 %v2619, %v79
    %v2630 = vmul.f32 %v2622, %v79
    %v2631 = vmul.f32 %v2625, %v79
    %v2632 = vmul.f32 %v2628, %v79
    %v2633 = vsub.f32 %v2609, %v2629
    %v2634 = vsub.f32 %v2610, %v2630
    %v2635 = vsub.f32 %v2611, %v2631
    %v2636 = vsub.f32 %v2612, %v2632
    %v2637 = vmul.f32 %v2633, %v2633
    %v2638 = vmul.f32 %v2634, %v2634
    %v2639 = vmul.f32 %v2635, %v2635
    %v2640 = vmul.f32 %v2636, %v2636
    %v2641 = vsel %vm66, %v2637, 0.0
    %2642 = vadd.xlane.f32.xlu0 %v2641
    %v2643 = vpop.xlane.xlu0 %2642
    %v2644 = vsel %vm66, %v2638, 0.0
    %2645 = vadd.xlane.f32.xlu0 %v2644
    %v2646 = vpop.xlane.xlu0 %2645
    %v2647 = vsel %vm66, %v2639, 0.0
    %2648 = vadd.xlane.f32.xlu0 %v2647
    %v2649 = vpop.xlane.xlu0 %2648
    %v2650 = vsel %vm66, %v2640, 0.0
    %2651 = vadd.xlane.f32.xlu0 %v2650
    %v2652 = vpop.xlane.xlu0 %2651
    %v2653 = vmul.f32 %v2643, %v79
    %v2654 = vmul.f32 %v2646, %v79
    %v2655 = vmul.f32 %v2649, %v79
    %v2656 = vmul.f32 %v2652, %v79
    %v2657 = vadd.f32 %v2653, 1e-05
    %v2658 = vadd.f32 %v2654, 1e-05
    %v2659 = vadd.f32 %v2655, 1e-05
    %v2660 = vadd.f32 %v2656, 1e-05
    %v2661 = vrsqrt.pop %v2657
    %v2662 = vrsqrt.pop %v2658
    %v2663 = vrsqrt.pop %v2659
    %v2664 = vrsqrt.pop %v2660
    %v2665 = vmul.f32 %v2633, %v2661
    %v2666 = vmul.f32 %v2634, %v2662
    %v2667 = vmul.f32 %v2635, %v2663
    %v2668 = vmul.f32 %v2636, %v2664
    %v2670 = vlaneseq
    %v2671 = vshrl.u32 %v2670, 7
    %v2672 = vsub.s32 0, %v2671
    %v2673 = vrot.slane %v2614, %v2672
    %v2675 = vmul.f32 %v2665, %v2673
    %v2676 = vmul.f32 %v2666, %v2673
    %v2677 = vmul.f32 %v2667, %v2673
    %v2678 = vmul.f32 %v2668, %v2673
    %v2680 = vlaneseq
    %v2681 = vshrl.u32 %v2680, 7
    %v2682 = vsub.s32 0, %v2681
    %v2683 = vrot.slane %v2616, %v2682
    %v2685 = vadd.f32 %v2675, %v2683
    %v2686 = vadd.f32 %v2676, %v2683
    %v2687 = vadd.f32 %v2677, %v2683
    %v2688 = vadd.f32 %v2678, %v2683
    %v2689 = vpack.c.bf16 %v2686, %v2685
    %v2690 = vpack.c.bf16 %v2688, %v2687
    %s2691 = scalar_lea.vmem %s9, 56
    %v2692 = vld [vmem:[%s2691] sm:$0xff]
    %v2693 = vld [vmem:[%s2691 + $0x8] sm:$0xff]
    %v2694 = vld [vmem:[%s2691 + $0x10] sm:$0xff]
    %v2695 = vld [vmem:[%s2691 + $0x18] sm:$0xff]
    %v2696 = vld [vmem:[%s2691 + $0x20] sm:$0xff]
    %v2697 = vld [vmem:[%s2691 + $0x28] sm:$0xff]
    %v2698 = vld [vmem:[%s2691 + $0x30] sm:$0x11]
    %s2699 = scalar_lea.vmem %s10, 2
    %v2700 = vld [vmem:[%s2699] sm:$0x3]
    %v2702 = vlaneseq
    %v2703 = vshrl.u32 %v2702, 7
    %v2704 = vsub.s32 0, %v2703
    %v2705 = vrot.slane %v2700, %v2704
    %v2706 = vlaneseq
    %v2707 = vshrl.u32 %v2706, 7
    %v2708 = vsub.s32 1, %v2707
    %v2709 = vrot.slane %v2700, %v2708
    %v2719 = vunpack.c.l.b16 %v2692
    %v2720 = vunpack.c.h.b16 %v2692
    %v2721 = vunpack.c.l.b16 %v2693
    %v2722 = vunpack.c.h.b16 %v2693
    %v2723 = vunpack.c.l.b16 %v2694
    %v2724 = vunpack.c.h.b16 %v2694
    %v2725 = vunpack.c.l.b16 %v2695
    %v2726 = vunpack.c.h.b16 %v2695
    %v2727 = vunpack.c.l.b16 %v2696
    %v2728 = vunpack.c.h.b16 %v2696
    %v2729 = vunpack.c.l.b16 %v2697
    %v2730 = vunpack.c.h.b16 %v2697
    %v2731 = vunpack.c.l.b16 %v2698
    %v2732 = vunpack.c.h.b16 %v2698
    %v2733 = vpack.c.b16 %v2721, %v2719
    %v2734 = vpack.c.b16 %v2722, %v2720
    %v2735 = vpack.c.b16 %v2725, %v2723
    %v2736 = vpack.c.b16 %v2726, %v2724
    %v2737 = vpack.c.b16 %v2729, %v2727
    %v2738 = vpack.c.b16 %v2730, %v2728
    %v2739 = vpack.c.b16 %v2731, %v2731
    %v2740 = vpack.c.b16 %v2732, %v2732
    %v2748 = vsel %vm66, %v2689, 0
    %v2751 = vsel %vm66, %v2690, 0
    %v2754 = vsel %vm274, %v2739, 0
    %v2757 = vsel %vm274, %v2740, 0
    %2759 = vmatprep.subr.bf16.mxu0 %v2734
    %2760 = vmatpush1.bf16.msra.mxu0 %v2733
    %2761 = vmatprep.subr.bf16.mxu0 %v2736
    %2762 = vmatpush1.bf16.msra.mxu0 %v2735
    %2763 = vmatprep.subr.bf16.mxu0 %v2738
    %2764 = vmatpush1.bf16.msra.mxu0 %v2737
    %2765 = vmatprep.subr.bf16.mxu0 %v2757
    %2766 = vmatpush1.bf16.msra.mxu0 %v2754
    %2767 = vmatprep.subr.bf16.mxu0 0
    %2768 = vmatpush1.bf16.msra.mxu0 0
    %2769 = vmatprep.subr.bf16.mxu0 0
    %2770 = vmatpush1.bf16.msra.mxu0 0
    %2771 = vmatprep.subr.bf16.mxu0 0
    %2772 = vmatpush1.bf16.msra.mxu0 0
    %2773 = vmatprep.subr.bf16.mxu0 0
    %2774 = vmatpush1.bf16.msra.mxu0 0
    %2775 = vmatprep.subr.bf16.mxu0 0
    %2776 = vmatpush1.bf16.msra.mxu0 0
    %2777 = vmatprep.subr.bf16.mxu0 0
    %2778 = vmatpush1.bf16.msra.mxu0 0
    %2779 = vmatprep.subr.bf16.mxu0 0
    %2780 = vmatpush1.bf16.msra.mxu0 0
    %2781 = vmatprep.subr.bf16.mxu0 0
    %2782 = vmatpush1.bf16.msra.mxu0 0
    %2783 = vmatprep.subr.bf16.mxu0 0
    %2784 = vmatpush1.bf16.msra.mxu0 0
    %2785 = vmatprep.subr.bf16.mxu0 0
    %2786 = vmatpush1.bf16.msra.mxu0 0
    %2787 = vmatprep.subr.bf16.mxu0 0
    %2788 = vmatpush1.bf16.msra.mxu0 0
    %2789 = vmatprep.subr.bf16.mxu0 0
    %2790 = vmatpush1.bf16.msra.mxu0 0
    %2791 = vmatprep.mubr.bf16.mxu0 0
    %2792 = vmatmul.mubr.bf16.gmra.mrb[0].mxu0 %v2748
    %v2793 = vpop.f32.mrb[0].mxu0
    %v2794 = vadd.f32 %v2705, %v2793
    %v2795 = vpop.f32.mrb[0].mxu0
    %v2796 = vadd.f32 %v2709, %v2795
    %v2797 = vpop.f32.mrb[0].mxu0
    %v2798 = vadd.f32 %v2705, %v2797
    %v2799 = vpop.f32.mrb[0].mxu0
    %v2800 = vadd.f32 %v2709, %v2799
    %2801 = vmatprep.mubr.bf16.mxu0 0
    %2802 = vmatmul.mubr.bf16.gmra.mrb[0].mxu0 %v2751
    %v2803 = vpop.f32.mrb[0].mxu0
    %v2804 = vadd.f32 %v2705, %v2803
    %v2805 = vpop.f32.mrb[0].mxu0
    %v2806 = vadd.f32 %v2709, %v2805
    %v2807 = vpop.f32.mrb[0].mxu0
    %v2808 = vadd.f32 %v2705, %v2807
    %v2809 = vpop.f32.mrb[0].mxu0
    %v2810 = vadd.f32 %v2709, %v2809
    %2811 = vdwg.mxu0
    %v2812 = vmax.f32 %v2794, 0.0
    %v2813 = vmax.f32 %v2796, 0.0
    %v2814 = vmax.f32 %v2798, 0.0
    %v2815 = vmax.f32 %v2800, 0.0
    %v2816 = vmax.f32 %v2804, 0.0
    %v2817 = vmax.f32 %v2806, 0.0
    %v2818 = vmax.f32 %v2808, 0.0
    %v2819 = vmax.f32 %v2810, 0.0
    %v2820 = vpack.c.bf16 %v2814, %v2812
    %v2821 = vpack.c.bf16 %v2815, %v2813
    %v2822 = vpack.c.bf16 %v2818, %v2816
    %v2823 = vpack.c.bf16 %v2819, %v2817
    %s2824 = scalar_lea.vmem %s11, 100
    %v2825 = vld [vmem:[%s2824] sm:$0xf]
    %v2826 = vld [vmem:[%s2824 + $0x4] sm:$0xf]
    %v2827 = vld [vmem:[%s2824 + $0x8] sm:$0xf]
    %v2828 = vld [vmem:[%s2824 + $0xc] sm:$0xf]
    %v2829 = vld [vmem:[%s2824 + $0x10] sm:$0xf]
    %v2830 = vld [vmem:[%s2824 + $0x14] sm:$0xf]
    %v2831 = vld [vmem:[%s2824 + $0x18] sm:$0xf]
    %v2832 = vld [vmem:[%s2824 + $0x1c] sm:$0xf]
    %v2833 = vld [vmem:[%s2824 + $0x20] sm:$0xf]
    %v2834 = vld [vmem:[%s2824 + $0x24] sm:$0xf]
    %v2835 = vld [vmem:[%s2824 + $0x28] sm:$0xf]
    %v2836 = vld [vmem:[%s2824 + $0x2c] sm:$0xf]
    %v2837 = vld [vmem:[%s2824 + $0x30] sm:$0xf]
    %v2838 = vld [vmem:[%s2824 + $0x34] sm:$0xf]
    %v2839 = vld [vmem:[%s2824 + $0x38] sm:$0xf]
    %v2840 = vld [vmem:[%s2824 + $0x3c] sm:$0xf]
    %v2841 = vld [vmem:[%s2824 + $0x40] sm:$0xf]
    %v2842 = vld [vmem:[%s2824 + $0x44] sm:$0xf]
    %v2843 = vld [vmem:[%s2824 + $0x48] sm:$0xf]
    %v2844 = vld [vmem:[%s2824 + $0x4c] sm:$0xf]
    %v2845 = vld [vmem:[%s2824 + $0x50] sm:$0xf]
    %v2846 = vld [vmem:[%s2824 + $0x54] sm:$0xf]
    %v2847 = vld [vmem:[%s2824 + $0x58] sm:$0xf]
    %v2848 = vld [vmem:[%s2824 + $0x5c] sm:$0xf]
    %v2849 = vld [vmem:[%s2824 + $0x60] sm:$0xf]
    %s2850 = scalar_lea.vmem %s12, 1
    %v2851 = vld [vmem:[%s2850] sm:$0x1]
    %v2853 = vlaneseq
    %v2854 = vshrl.u32 %v2853, 7
    %v2855 = vsub.s32 0, %v2854
    %v2856 = vrot.slane %v2851, %v2855
    %v2883 = vunpack.c.l.b16 %v2825
    %v2884 = vunpack.c.l.b16 %v2826
    %v2885 = vunpack.c.l.b16 %v2827
    %v2886 = vunpack.c.l.b16 %v2828
    %v2887 = vunpack.c.l.b16 %v2829
    %v2888 = vunpack.c.l.b16 %v2830
    %v2889 = vunpack.c.l.b16 %v2831
    %v2890 = vunpack.c.l.b16 %v2832
    %v2891 = vunpack.c.l.b16 %v2833
    %v2892 = vunpack.c.l.b16 %v2834
    %v2893 = vunpack.c.l.b16 %v2835
    %v2894 = vunpack.c.l.b16 %v2836
    %v2895 = vunpack.c.l.b16 %v2837
    %v2896 = vunpack.c.l.b16 %v2838
    %v2897 = vunpack.c.l.b16 %v2839
    %v2898 = vunpack.c.l.b16 %v2840
    %v2899 = vunpack.c.l.b16 %v2841
    %v2900 = vunpack.c.l.b16 %v2842
    %v2901 = vunpack.c.l.b16 %v2843
    %v2902 = vunpack.c.l.b16 %v2844
    %v2903 = vunpack.c.l.b16 %v2845
    %v2904 = vunpack.c.l.b16 %v2846
    %v2905 = vunpack.c.l.b16 %v2847
    %v2906 = vunpack.c.l.b16 %v2848
    %v2907 = vunpack.c.l.b16 %v2849
    %v2908 = vpack.c.b16 %v2884, %v2883
    %v2909 = vpack.c.b16 %v2886, %v2885
    %v2910 = vpack.c.b16 %v2888, %v2887
    %v2911 = vpack.c.b16 %v2890, %v2889
    %v2912 = vpack.c.b16 %v2892, %v2891
    %v2913 = vpack.c.b16 %v2894, %v2893
    %v2914 = vpack.c.b16 %v2896, %v2895
    %v2915 = vpack.c.b16 %v2898, %v2897
    %v2916 = vpack.c.b16 %v2900, %v2899
    %v2917 = vpack.c.b16 %v2902, %v2901
    %v2918 = vpack.c.b16 %v2904, %v2903
    %v2919 = vpack.c.b16 %v2906, %v2905
    %v2920 = vpack.c.b16 %v2907, %v2907
    %v2934 = vsel %vm1469, %v2821, 0
    %v2937 = vsel %vm1469, %v2823, 0
    %v2940 = vsel %vm1476, %v2920, 0
    %2942 = vmatprep.subr.bf16.mxu0 0
    %2943 = vmatpush1.bf16.msra.mxu0 %v2908
    %2944 = vmatprep.subr.bf16.mxu0 0
    %2945 = vmatpush1.bf16.msra.mxu0 %v2909
    %2946 = vmatprep.subr.bf16.mxu0 0
    %2947 = vmatpush1.bf16.msra.mxu0 %v2910
    %2948 = vmatprep.subr.bf16.mxu0 0
    %2949 = vmatpush1.bf16.msra.mxu0 %v2911
    %2950 = vmatprep.subr.bf16.mxu0 0
    %2951 = vmatpush1.bf16.msra.mxu0 %v2912
    %2952 = vmatprep.subr.bf16.mxu0 0
    %2953 = vmatpush1.bf16.msra.mxu0 %v2913
    %2954 = vmatprep.subr.bf16.mxu0 0
    %2955 = vmatpush1.bf16.msra.mxu0 %v2914
    %2956 = vmatprep.subr.bf16.mxu0 0
    %2957 = vmatpush1.bf16.msra.mxu0 %v2915
    %2958 = vmatprep.subr.bf16.mxu0 0
    %2959 = vmatpush1.bf16.msra.mxu0 %v2916
    %2960 = vmatprep.subr.bf16.mxu0 0
    %2961 = vmatpush1.bf16.msra.mxu0 %v2917
    %2962 = vmatprep.subr.bf16.mxu0 0
    %2963 = vmatpush1.bf16.msra.mxu0 %v2918
    %2964 = vmatprep.subr.bf16.mxu0 0
    %2965 = vmatpush1.bf16.msra.mxu0 %v2919
    %2966 = vmatprep.subr.bf16.mxu0 0
    %2967 = vmatpush1.bf16.msra.mxu0 %v2940
    %2968 = vmatprep.subr.bf16.mxu0 0
    %2969 = vmatpush1.bf16.msra.mxu0 0
    %2970 = vmatprep.subr.bf16.mxu0 0
    %2971 = vmatpush1.bf16.msra.mxu0 0
    %2972 = vmatprep.subr.bf16.mxu0 0
    %2973 = vmatpush1.bf16.msra.mxu0 0
    %2974 = vmatprep.mubr.bf16.mxu0 %v2934
    %2975 = vmatmul.mubr.bf16.gmra.mrb[0].mxu0 %v2820
    %v2976 = vpop.f32.mrb[0].mxu0
    %v2977 = vadd.f32 %v2856, %v2976
    %v2978 = vpop.f32.mrb[0].mxu0
    %v2979 = vpop.f32.mrb[0].mxu0
    %v2980 = vadd.f32 %v2856, %v2979
    %v2981 = vpop.f32.mrb[0].mxu0
    %2982 = vmatprep.mubr.bf16.mxu0 %v2937
    %2983 = vmatmul.mubr.bf16.gmra.mrb[0].mxu0 %v2822
    %v2984 = vpop.f32.mrb[0].mxu0
    %v2985 = vadd.f32 %v2856, %v2984
    %v2986 = vpop.f32.mrb[0].mxu0
    %v2987 = vpop.f32.mrb[0].mxu0
    %v2988 = vadd.f32 %v2856, %v2987
    %v2989 = vpop.f32.mrb[0].mxu0
    %2990 = vdwg.mxu0
    %v2991 = vadd.f32 %v2609, %v2977
    %v2992 = vadd.f32 %v2610, %v2980
    %v2993 = vadd.f32 %v2611, %v2985
    %v2994 = vadd.f32 %v2612, %v2988
    %s2995 = scalar_lea.vmem %s5, 2
    %v2996 = vld [vmem:[%s2995] sm:$0x1]
    %s2997 = scalar_lea.vmem %s6, 2
    %v2998 = vld [vmem:[%s2997] sm:$0x1]
    %v2999 = vsel %vm66, %v2991, 0.0
    %3000 = vadd.xlane.f32.xlu0 %v2999
    %v3001 = vpop.xlane.xlu0 %3000
    %v3002 = vsel %vm66, %v2992, 0.0
    %3003 = vadd.xlane.f32.xlu0 %v3002
    %v3004 = vpop.xlane.xlu0 %3003
    %v3005 = vsel %vm66, %v2993, 0.0
    %3006 = vadd.xlane.f32.xlu0 %v3005
    %v3007 = vpop.xlane.xlu0 %3006
    %v3008 = vsel %vm66, %v2994, 0.0
    %3009 = vadd.xlane.f32.xlu0 %v3008
    %v3010 = vpop.xlane.xlu0 %3009
    %v3011 = vmul.f32 %v3001, %v79
    %v3012 = vmul.f32 %v3004, %v79
    %v3013 = vmul.f32 %v3007, %v79
    %v3014 = vmul.f32 %v3010, %v79
    %v3015 = vsub.f32 %v2991, %v3011
    %v3016 = vsub.f32 %v2992, %v3012
    %v3017 = vsub.f32 %v2993, %v3013
    %v3018 = vsub.f32 %v2994, %v3014
    %v3019 = vmul.f32 %v3015, %v3015
    %v3020 = vmul.f32 %v3016, %v3016
    %v3021 = vmul.f32 %v3017, %v3017
    %v3022 = vmul.f32 %v3018, %v3018
    %v3023 = vsel %vm66, %v3019, 0.0
    %3024 = vadd.xlane.f32.xlu0 %v3023
    %v3025 = vpop.xlane.xlu0 %3024
    %v3026 = vsel %vm66, %v3020, 0.0
    %3027 = vadd.xlane.f32.xlu0 %v3026
    %v3028 = vpop.xlane.xlu0 %3027
    %v3029 = vsel %vm66, %v3021, 0.0
    %3030 = vadd.xlane.f32.xlu0 %v3029
    %v3031 = vpop.xlane.xlu0 %3030
    %v3032 = vsel %vm66, %v3022, 0.0
    %3033 = vadd.xlane.f32.xlu0 %v3032
    %v3034 = vpop.xlane.xlu0 %3033
    %v3035 = vmul.f32 %v3025, %v79
    %v3036 = vmul.f32 %v3028, %v79
    %v3037 = vmul.f32 %v3031, %v79
    %v3038 = vmul.f32 %v3034, %v79
    %v3039 = vadd.f32 %v3035, 1e-05
    %v3040 = vadd.f32 %v3036, 1e-05
    %v3041 = vadd.f32 %v3037, 1e-05
    %v3042 = vadd.f32 %v3038, 1e-05
    %v3043 = vrsqrt.pop %v3039
    %v3044 = vrsqrt.pop %v3040
    %v3045 = vrsqrt.pop %v3041
    %v3046 = vrsqrt.pop %v3042
    %v3047 = vmul.f32 %v3015, %v3043
    %v3048 = vmul.f32 %v3016, %v3044
    %v3049 = vmul.f32 %v3017, %v3045
    %v3050 = vmul.f32 %v3018, %v3046
    %v3052 = vlaneseq
    %v3053 = vshrl.u32 %v3052, 7
    %v3054 = vsub.s32 0, %v3053
    %v3055 = vrot.slane %v2996, %v3054
    %v3057 = vmul.f32 %v3047, %v3055
    %v3058 = vmul.f32 %v3048, %v3055
    %v3059 = vmul.f32 %v3049, %v3055
    %v3060 = vmul.f32 %v3050, %v3055
    %v3062 = vlaneseq
    %v3063 = vshrl.u32 %v3062, 7
    %v3064 = vsub.s32 0, %v3063
    %v3065 = vrot.slane %v2998, %v3064
    %v3067 = vadd.f32 %v3057, %v3065
    %v3068 = vadd.f32 %v3058, %v3065
    %v3069 = vadd.f32 %v3059, %v3065
    %v3070 = vadd.f32 %v3060, %v3065
    %v3071 = vpack.c.bf16 %v3068, %v3067
    %v3072 = vpack.c.bf16 %v3070, %v3069
    %s3073 = scalar_lea.vmem %s2, 336
    %v3074 = vld [vmem:[%s3073] sm:$0xff]
    %v3075 = vld [vmem:[%s3073 + $0x8] sm:$0xff]
    %v3076 = vld [vmem:[%s3073 + $0x10] sm:$0xff]
    %v3077 = vld [vmem:[%s3073 + $0x18] sm:$0xff]
    %v3078 = vld [vmem:[%s3073 + $0x20] sm:$0xff]
    %v3079 = vld [vmem:[%s3073 + $0x28] sm:$0xff]
    %v3080 = vld [vmem:[%s3073 + $0x30] sm:$0xff]
    %v3081 = vld [vmem:[%s3073 + $0x38] sm:$0xff]
    %v3082 = vld [vmem:[%s3073 + $0x40] sm:$0xff]
    %v3083 = vld [vmem:[%s3073 + $0x48] sm:$0xff]
    %v3084 = vld [vmem:[%s3073 + $0x50] sm:$0xff]
    %v3085 = vld [vmem:[%s3073 + $0x58] sm:$0xff]
    %v3086 = vld [vmem:[%s3073 + $0x60] sm:$0xff]
    %v3087 = vld [vmem:[%s3073 + $0x68] sm:$0xff]
    %v3088 = vld [vmem:[%s3073 + $0x70] sm:$0xff]
    %v3089 = vld [vmem:[%s3073 + $0x78] sm:$0xff]
    %v3090 = vld [vmem:[%s3073 + $0x80] sm:$0xff]
    %v3091 = vld [vmem:[%s3073 + $0x88] sm:$0xff]
    %v3092 = vld [vmem:[%s3073 + $0x90] sm:$0x11]
    %v3093 = vld [vmem:[%s3073 + $0x98] sm:$0x11]
    %v3094 = vld [vmem:[%s3073 + $0xa0] sm:$0x11]
    %v3116 = vunpack.c.l.b16 %v3074
    %v3117 = vunpack.c.h.b16 %v3074
    %v3118 = vunpack.c.l.b16 %v3075
    %v3119 = vunpack.c.h.b16 %v3075
    %v3120 = vunpack.c.l.b16 %v3076
    %v3121 = vunpack.c.h.b16 %v3076
    %v3122 = vunpack.c.l.b16 %v3077
    %v3123 = vunpack.c.h.b16 %v3077
    %v3124 = vunpack.c.l.b16 %v3078
    %v3125 = vunpack.c.h.b16 %v3078
    %v3126 = vunpack.c.l.b16 %v3079
    %v3127 = vunpack.c.h.b16 %v3079
    %v3128 = vunpack.c.l.b16 %v3080
    %v3129 = vunpack.c.h.b16 %v3080
    %v3130 = vunpack.c.l.b16 %v3081
    %v3131 = vunpack.c.h.b16 %v3081
    %v3132 = vunpack.c.l.b16 %v3082
    %v3133 = vunpack.c.h.b16 %v3082
    %v3134 = vunpack.c.l.b16 %v3083
    %v3135 = vunpack.c.h.b16 %v3083
    %v3136 = vunpack.c.l.b16 %v3084
    %v3137 = vunpack.c.h.b16 %v3084
    %v3138 = vunpack.c.l.b16 %v3085
    %v3139 = vunpack.c.h.b16 %v3085
    %v3140 = vunpack.c.l.b16 %v3086
    %v3141 = vunpack.c.h.b16 %v3086
    %v3142 = vunpack.c.l.b16 %v3087
    %v3143 = vunpack.c.h.b16 %v3087
    %v3144 = vunpack.c.l.b16 %v3088
    %v3145 = vunpack.c.h.b16 %v3088
    %v3146 = vunpack.c.l.b16 %v3089
    %v3147 = vunpack.c.h.b16 %v3089
    %v3148 = vunpack.c.l.b16 %v3090
    %v3149 = vunpack.c.h.b16 %v3090
    %v3150 = vunpack.c.l.b16 %v3091
    %v3151 = vunpack.c.h.b16 %v3091
    %v3152 = vunpack.c.l.b16 %v3092
    %v3153 = vunpack.c.h.b16 %v3092
    %v3154 = vunpack.c.l.b16 %v3093
    %v3155 = vunpack.c.h.b16 %v3093
    %v3156 = vunpack.c.l.b16 %v3094
    %v3157 = vunpack.c.h.b16 %v3094
    %v3158 = vpack.c.b16 %v3122, %v3116
    %v3159 = vpack.c.b16 %v3123, %v3117
    %v3160 = vpack.c.b16 %v3124, %v3118
    %v3161 = vpack.c.b16 %v3125, %v3119
    %v3162 = vpack.c.b16 %v3126, %v3120
    %v3163 = vpack.c.b16 %v3127, %v3121
    %v3164 = vpack.c.b16 %v3134, %v3128
    %v3165 = vpack.c.b16 %v3135, %v3129
    %v3166 = vpack.c.b16 %v3136, %v3130
    %v3167 = vpack.c.b16 %v3137, %v3131
    %v3168 = vpack.c.b16 %v3138, %v3132
    %v3169 = vpack.c.b16 %v3139, %v3133
    %v3170 = vpack.c.b16 %v3146, %v3140
    %v3171 = vpack.c.b16 %v3147, %v3141
    %v3172 = vpack.c.b16 %v3148, %v3142
    %v3173 = vpack.c.b16 %v3149, %v3143
    %v3174 = vpack.c.b16 %v3150, %v3144
    %v3175 = vpack.c.b16 %v3151, %v3145
    %v3176 = vpack.c.b16 %v3152, %v3152
    %v3177 = vpack.c.b16 %v3153, %v3153
    %v3178 = vpack.c.b16 %v3154, %v3154
    %v3179 = vpack.c.b16 %v3155, %v3155
    %v3180 = vpack.c.b16 %v3156, %v3156
    %v3181 = vpack.c.b16 %v3157, %v3157
    %v3201 = vsel %vm66, %v3071, 0
    %v3204 = vsel %vm66, %v3072, 0
    %v3207 = vsel %vm274, %v3176, 0
    %v3210 = vsel %vm274, %v3177, 0
    %v3213 = vsel %vm274, %v3178, 0
    %v3216 = vsel %vm274, %v3179, 0
    %v3219 = vsel %vm274, %v3180, 0
    %v3222 = vsel %vm274, %v3181, 0
    %3224 = vmatprep.subr.bf16.mxu0 %v3159
    %3225 = vmatpush1.bf16.msra.mxu0 %v3158
    %3226 = vmatprep.subr.bf16.mxu0 %v3165
    %3227 = vmatpush1.bf16.msra.mxu0 %v3164
    %3228 = vmatprep.subr.bf16.mxu0 %v3171
    %3229 = vmatpush1.bf16.msra.mxu0 %v3170
    %3230 = vmatprep.subr.bf16.mxu0 %v3210
    %3231 = vmatpush1.bf16.msra.mxu0 %v3207
    %3232 = vmatprep.subr.bf16.mxu0 0
    %3233 = vmatpush1.bf16.msra.mxu0 0
    %3234 = vmatprep.subr.bf16.mxu0 0
    %3235 = vmatpush1.bf16.msra.mxu0 0
    %3236 = vmatprep.subr.bf16.mxu0 0
    %3237 = vmatpush1.bf16.msra.mxu0 0
    %3238 = vmatprep.subr.bf16.mxu0 0
    %3239 = vmatpush1.bf16.msra.mxu0 0
    %3240 = vmatprep.subr.bf16.mxu0 0
    %3241 = vmatpush1.bf16.msra.mxu0 0
    %3242 = vmatprep.subr.bf16.mxu0 0
    %3243 = vmatpush1.bf16.msra.mxu0 0
    %3244 = vmatprep.subr.bf16.mxu0 0
    %3245 = vmatpush1.bf16.msra.mxu0 0
    %3246 = vmatprep.subr.bf16.mxu0 0
    %3247 = vmatpush1.bf16.msra.mxu0 0
    %3248 = vmatprep.subr.bf16.mxu0 0
    %3249 = vmatpush1.bf16.msra.mxu0 0
    %3250 = vmatprep.subr.bf16.mxu0 0
    %3251 = vmatpush1.bf16.msra.mxu0 0
    %3252 = vmatprep.subr.bf16.mxu0 0
    %3253 = vmatpush1.bf16.msra.mxu0 0
    %3254 = vmatprep.subr.bf16.mxu0 0
    %3255 = vmatpush1.bf16.msra.mxu0 0
    %3256 = vmatprep.mubr.bf16.mxu0 0
    %3257 = vmatmul.mubr.bf16.gmra.mrb[0].mxu0 %v3201
    %v3258 = vpop.f32.mrb[0].mxu0
    %v3259 = vadd.f32 0.0, %v3258
    %v3260 = vpop.f32.mrb[0].mxu0
    %v3261 = vadd.f32 0.0, %v3260
    %v3262 = vpop.f32.mrb[0].mxu0
    %v3263 = vadd.f32 0.0, %v3262
    %v3264 = vpop.f32.mrb[0].mxu0
    %v3265 = vadd.f32 0.0, %v3264
    %3266 = vmatprep.mubr.bf16.mxu0 0
    %3267 = vmatmul.mubr.bf16.gmra.mrb[0].mxu0 %v3204
    %v3268 = vpop.f32.mrb[0].mxu0
    %v3269 = vadd.f32 0.0, %v3268
    %v3270 = vpop.f32.mrb[0].mxu0
    %v3271 = vadd.f32 0.0, %v3270
    %v3272 = vpop.f32.mrb[0].mxu0
    %v3273 = vadd.f32 0.0, %v3272
    %v3274 = vpop.f32.mrb[0].mxu0
    %v3275 = vadd.f32 0.0, %v3274
    %3276 = vdwg.mxu0
    %3277 = vmatprep.subr.bf16.mxu0 %v3161
    %3278 = vmatpush1.bf16.msra.mxu0 %v3160
    %3279 = vmatprep.subr.bf16.mxu0 %v3167
    %3280 = vmatpush1.bf16.msra.mxu0 %v3166
    %3281 = vmatprep.subr.bf16.mxu0 %v3173
    %3282 = vmatpush1.bf16.msra.mxu0 %v3172
    %3283 = vmatprep.subr.bf16.mxu0 %v3216
    %3284 = vmatpush1.bf16.msra.mxu0 %v3213
    %3285 = vmatprep.subr.bf16.mxu0 0
    %3286 = vmatpush1.bf16.msra.mxu0 0
    %3287 = vmatprep.subr.bf16.mxu0 0
    %3288 = vmatpush1.bf16.msra.mxu0 0
    %3289 = vmatprep.subr.bf16.mxu0 0
    %3290 = vmatpush1.bf16.msra.mxu0 0
    %3291 = vmatprep.subr.bf16.mxu0 0
    %3292 = vmatpush1.bf16.msra.mxu0 0
    %3293 = vmatprep.subr.bf16.mxu0 0
    %3294 = vmatpush1.bf16.msra.mxu0 0
    %3295 = vmatprep.subr.bf16.mxu0 0
    %3296 = vmatpush1.bf16.msra.mxu0 0
    %3297 = vmatprep.subr.bf16.mxu0 0
    %3298 = vmatpush1.bf16.msra.mxu0 0
    %3299 = vmatprep.subr.bf16.mxu0 0
    %3300 = vmatpush1.bf16.msra.mxu0 0
    %3301 = vmatprep.subr.bf16.mxu0 0
    %3302 = vmatpush1.bf16.msra.mxu0 0
    %3303 = vmatprep.subr.bf16.mxu0 0
    %3304 = vmatpush1.bf16.msra.mxu0 0
    %3305 = vmatprep.subr.bf16.mxu0 0
    %3306 = vmatpush1.bf16.msra.mxu0 0
    %3307 = vmatprep.subr.bf16.mxu0 0
    %3308 = vmatpush1.bf16.msra.mxu0 0
    %3309 = vmatprep.mubr.bf16.mxu0 0
    %3310 = vmatmul.mubr.bf16.gmra.mrb[0].mxu0 %v3201
    %v3311 = vpop.f32.mrb[0].mxu0
    %v3312 = vadd.f32 0.0, %v3311
    %v3313 = vpop.f32.mrb[0].mxu0
    %v3314 = vadd.f32 0.0, %v3313
    %v3315 = vpop.f32.mrb[0].mxu0
    %v3316 = vadd.f32 0.0, %v3315
    %v3317 = vpop.f32.mrb[0].mxu0
    %v3318 = vadd.f32 0.0, %v3317
    %3319 = vmatprep.mubr.bf16.mxu0 0
    %3320 = vmatmul.mubr.bf16.gmra.mrb[0].mxu0 %v3204
    %v3321 = vpop.f32.mrb[0].mxu0
    %v3322 = vadd.f32 0.0, %v3321
    %v3323 = vpop.f32.mrb[0].mxu0
    %v3324 = vadd.f32 0.0, %v3323
    %v3325 = vpop.f32.mrb[0].mxu0
    %v3326 = vadd.f32 0.0, %v3325
    %v3327 = vpop.f32.mrb[0].mxu0
    %v3328 = vadd.f32 0.0, %v3327
    %3329 = vdwg.mxu0
    %3330 = vmatprep.subr.bf16.mxu0 %v3163
    %3331 = vmatpush1.bf16.msra.mxu0 %v3162
    %3332 = vmatprep.subr.bf16.mxu0 %v3169
    %3333 = vmatpush1.bf16.msra.mxu0 %v3168
    %3334 = vmatprep.subr.bf16.mxu0 %v3175
    %3335 = vmatpush1.bf16.msra.mxu0 %v3174
    %3336 = vmatprep.subr.bf16.mxu0 %v3222
    %3337 = vmatpush1.bf16.msra.mxu0 %v3219
    %3338 = vmatprep.subr.bf16.mxu0 0
    %3339 = vmatpush1.bf16.msra.mxu0 0
    %3340 = vmatprep.subr.bf16.mxu0 0
    %3341 = vmatpush1.bf16.msra.mxu0 0
    %3342 = vmatprep.subr.bf16.mxu0 0
    %3343 = vmatpush1.bf16.msra.mxu0 0
    %3344 = vmatprep.subr.bf16.mxu0 0
    %3345 = vmatpush1.bf16.msra.mxu0 0
    %3346 = vmatprep.subr.bf16.mxu0 0
    %3347 = vmatpush1.bf16.msra.mxu0 0
    %3348 = vmatprep.subr.bf16.mxu0 0
    %3349 = vmatpush1.bf16.msra.mxu0 0
    %3350 = vmatprep.subr.bf16.mxu0 0
    %3351 = vmatpush1.bf16.msra.mxu0 0
    %3352 = vmatprep.subr.bf16.mxu0 0
    %3353 = vmatpush1.bf16.msra.mxu0 0
    %3354 = vmatprep.subr.bf16.mxu0 0
    %3355 = vmatpush1.bf16.msra.mxu0 0
    %3356 = vmatprep.subr.bf16.mxu0 0
    %3357 = vmatpush1.bf16.msra.mxu0 0
    %3358 = vmatprep.subr.bf16.mxu0 0
    %3359 = vmatpush1.bf16.msra.mxu0 0
    %3360 = vmatprep.subr.bf16.mxu0 0
    %3361 = vmatpush1.bf16.msra.mxu0 0
    %3362 = vmatprep.mubr.bf16.mxu0 0
    %3363 = vmatmul.mubr.bf16.gmra.mrb[0].mxu0 %v3201
    %v3364 = vpop.f32.mrb[0].mxu0
    %v3365 = vadd.f32 0.0, %v3364
    %v3366 = vpop.f32.mrb[0].mxu0
    %v3367 = vadd.f32 0.0, %v3366
    %v3368 = vpop.f32.mrb[0].mxu0
    %v3369 = vadd.f32 0.0, %v3368
    %v3370 = vpop.f32.mrb[0].mxu0
    %v3371 = vadd.f32 0.0, %v3370
    %3372 = vmatprep.mubr.bf16.mxu0 0
    %3373 = vmatmul.mubr.bf16.gmra.mrb[0].mxu0 %v3204
    %v3374 = vpop.f32.mrb[0].mxu0
    %v3375 = vadd.f32 0.0, %v3374
    %v3376 = vpop.f32.mrb[0].mxu0
    %v3377 = vadd.f32 0.0, %v3376
    %v3378 = vpop.f32.mrb[0].mxu0
    %v3379 = vadd.f32 0.0, %v3378
    %v3380 = vpop.f32.mrb[0].mxu0
    %v3381 = vadd.f32 0.0, %v3380
    %3382 = vdwg.mxu0
    %v3383 = vpack.c.bf16 %v3263, %v3259
    %v3384 = vpack.c.bf16 %v3265, %v3261
    %v3385 = vpack.c.bf16 %v3316, %v3312
    %v3386 = vpack.c.bf16 %v3318, %v3314
    %v3387 = vpack.c.bf16 %v3369, %v3365
    %v3388 = vpack.c.bf16 %v3371, %v3367
    %v3389 = vpack.c.bf16 %v3273, %v3269
    %v3390 = vpack.c.bf16 %v3275, %v3271
    %v3391 = vpack.c.bf16 %v3326, %v3322
    %v3392 = vpack.c.bf16 %v3328, %v3324
    %v3393 = vpack.c.bf16 %v3379, %v3375
    %v3394 = vpack.c.bf16 %v3381, %v3377
    %3395 = vmatprep.subr.bf16.mxu0 0
    %3396 = vmatpush1.bf16.xpose.msra.mxu0 %v3385
    %3397 = vmatprep.subr.bf16.mxu0 0
    %3398 = vmatpush1.bf16.xpose.msra.mxu0 0
    %3399 = vmatprep.subr.bf16.mxu0 0
    %3400 = vmatpush1.bf16.xpose.msra.mxu0 0
    %3401 = vmatprep.subr.bf16.mxu0 0
    %3402 = vmatpush1.bf16.xpose.msra.mxu0 0
    %3403 = vmatprep.subr.bf16.mxu0 0
    %3404 = vmatpush1.bf16.xpose.msra.mxu0 0
    %3405 = vmatprep.subr.bf16.mxu0 0
    %3406 = vmatpush1.bf16.xpose.msra.mxu0 0
    %3407 = vmatprep.subr.bf16.mxu0 0
    %3408 = vmatpush1.bf16.xpose.msra.mxu0 0
    %3409 = vmatprep.subr.bf16.mxu0 0
    %3410 = vmatpush1.bf16.xpose.msra.mxu0 0
    %3411 = vmatprep.subr.bf16.mxu0 0
    %3412 = vmatpush1.bf16.xpose.msra.mxu0 0
    %3413 = vmatprep.subr.bf16.mxu0 0
    %3414 = vmatpush1.bf16.xpose.msra.mxu0 0
    %3415 = vmatprep.subr.bf16.mxu0 0
    %3416 = vmatpush1.bf16.xpose.msra.mxu0 0
    %3417 = vmatprep.subr.bf16.mxu0 0
    %3418 = vmatpush1.bf16.xpose.msra.mxu0 0
    %3419 = vmatprep.subr.bf16.mxu0 0
    %3420 = vmatpush1.bf16.xpose.msra.mxu0 0
    %3421 = vmatprep.subr.bf16.mxu0 0
    %3422 = vmatpush1.bf16.xpose.msra.mxu0 0
    %3423 = vmatprep.subr.bf16.mxu0 0
    %3424 = vmatpush1.bf16.xpose.msra.mxu0 0
    %3425 = vmatprep.subr.bf16.mxu0 0
    %3426 = vmatpush1.bf16.xpose.msra.mxu0 0
    %3427 = vmatprep.mubr.bf16.mxu0 0
    %3428 = vmatmul.mubr.bf16.gmra.mrb[0].mxu0 %v3383
    %v3429 = vpop.f32.mrb[0].mxu0
    %v3430 = vadd.f32 %v468, %v3429
    %v3431 = vpop.f32.mrb[0].mxu0
    %v3432 = vpop.f32.mrb[0].mxu0
    %v3433 = vadd.f32 %v468, %v3432
    %v3434 = vpop.f32.mrb[0].mxu0
    %3435 = vdwg.mxu0
    %v3436 = vsel %vm511, %v3430, -inf
    %3437 = vmax.xlane.f32.xlu0 %v3436
    %v3438 = vpop.xlane.xlu0 %3437
    %v3439 = vsel %vm511, %v3433, -inf
    %3440 = vmax.xlane.f32.xlu0 %v3439
    %v3441 = vpop.xlane.xlu0 %3440
    %v3442 = vsub.f32 %v3430, %v3438
    %v3443 = vsub.f32 %v3433, %v3441
    %v3444 = vmul.f32 %v3442, 1.442695
    %v3445 = vpow.pop %v3444
    %v3446 = vmul.f32 %v3443, 1.442695
    %v3447 = vpow.pop %v3446
    %v3448 = vsel %vm511, %v3445, 0.0
    %3449 = vadd.xlane.f32.xlu0 %v3448
    %v3450 = vpop.xlane.xlu0 %3449
    %v3451 = vsel %vm511, %v3447, 0.0
    %3452 = vadd.xlane.f32.xlu0 %v3451
    %v3453 = vpop.xlane.xlu0 %3452
    %v3454 = vrcp.pop %v3450
    %v3455 = vrcp.pop %v3453
    %v3456 = vmul.f32 %v3445, %v3454
    %v3457 = vmul.f32 %v3447, %v3455
    %v3458 = vpack.c.bf16 %v3457, %v3456
    %v3460 = vsel %vm511, %v3458, 0
    %3462 = vmatprep.subr.bf16.mxu0 0
    %3463 = vmatpush1.bf16.msra.mxu0 %v3387
    %3464 = vmatprep.subr.bf16.mxu0 0
    %3465 = vmatpush1.bf16.msra.mxu0 0
    %3466 = vmatprep.subr.bf16.mxu0 0
    %3467 = vmatpush1.bf16.msra.mxu0 0
    %3468 = vmatprep.subr.bf16.mxu0 0
    %3469 = vmatpush1.bf16.msra.mxu0 0
    %3470 = vmatprep.subr.bf16.mxu0 0
    %3471 = vmatpush1.bf16.msra.mxu0 0
    %3472 = vmatprep.subr.bf16.mxu0 0
    %3473 = vmatpush1.bf16.msra.mxu0 0
    %3474 = vmatprep.subr.bf16.mxu0 0
    %3475 = vmatpush1.bf16.msra.mxu0 0
    %3476 = vmatprep.subr.bf16.mxu0 0
    %3477 = vmatpush1.bf16.msra.mxu0 0
    %3478 = vmatprep.subr.bf16.mxu0 0
    %3479 = vmatpush1.bf16.msra.mxu0 0
    %3480 = vmatprep.subr.bf16.mxu0 0
    %3481 = vmatpush1.bf16.msra.mxu0 0
    %3482 = vmatprep.subr.bf16.mxu0 0
    %3483 = vmatpush1.bf16.msra.mxu0 0
    %3484 = vmatprep.subr.bf16.mxu0 0
    %3485 = vmatpush1.bf16.msra.mxu0 0
    %3486 = vmatprep.subr.bf16.mxu0 0
    %3487 = vmatpush1.bf16.msra.mxu0 0
    %3488 = vmatprep.subr.bf16.mxu0 0
    %3489 = vmatpush1.bf16.msra.mxu0 0
    %3490 = vmatprep.subr.bf16.mxu0 0
    %3491 = vmatpush1.bf16.msra.mxu0 0
    %3492 = vmatprep.subr.bf16.mxu0 0
    %3493 = vmatpush1.bf16.msra.mxu0 0
    %3494 = vmatprep.mubr.bf16.mxu0 0
    %3495 = vmatmul.mubr.bf16.gmra.mrb[0].mxu0 %v3460
    %v3496 = vpop.f32.mrb[0].mxu0
    %v3497 = vadd.f32 0.0, %v3496
    %v3498 = vpop.f32.mrb[0].mxu0
    %v3499 = vpop.f32.mrb[0].mxu0
    %v3500 = vadd.f32 0.0, %v3499
    %v3501 = vpop.f32.mrb[0].mxu0
    %3502 = vdwg.mxu0
    %3503 = vmatprep.subr.bf16.mxu0 0
    %3504 = vmatpush1.bf16.xpose.msra.mxu0 %v3391
    %3505 = vmatprep.subr.bf16.mxu0 0
    %3506 = vmatpush1.bf16.xpose.msra.mxu0 0
    %3507 = vmatprep.subr.bf16.mxu0 0
    %3508 = vmatpush1.bf16.xpose.msra.mxu0 0
    %3509 = vmatprep.subr.bf16.mxu0 0
    %3510 = vmatpush1.bf16.xpose.msra.mxu0 0
    %3511 = vmatprep.subr.bf16.mxu0 0
    %3512 = vmatpush1.bf16.xpose.msra.mxu0 0
    %3513 = vmatprep.subr.bf16.mxu0 0
    %3514 = vmatpush1.bf16.xpose.msra.mxu0 0
    %3515 = vmatprep.subr.bf16.mxu0 0
    %3516 = vmatpush1.bf16.xpose.msra.mxu0 0
    %3517 = vmatprep.subr.bf16.mxu0 0
    %3518 = vmatpush1.bf16.xpose.msra.mxu0 0
    %3519 = vmatprep.subr.bf16.mxu0 0
    %3520 = vmatpush1.bf16.xpose.msra.mxu0 0
    %3521 = vmatprep.subr.bf16.mxu0 0
    %3522 = vmatpush1.bf16.xpose.msra.mxu0 0
    %3523 = vmatprep.subr.bf16.mxu0 0
    %3524 = vmatpush1.bf16.xpose.msra.mxu0 0
    %3525 = vmatprep.subr.bf16.mxu0 0
    %3526 = vmatpush1.bf16.xpose.msra.mxu0 0
    %3527 = vmatprep.subr.bf16.mxu0 0
    %3528 = vmatpush1.bf16.xpose.msra.mxu0 0
    %3529 = vmatprep.subr.bf16.mxu0 0
    %3530 = vmatpush1.bf16.xpose.msra.mxu0 0
    %3531 = vmatprep.subr.bf16.mxu0 0
    %3532 = vmatpush1.bf16.xpose.msra.mxu0 0
    %3533 = vmatprep.subr.bf16.mxu0 0
    %3534 = vmatpush1.bf16.xpose.msra.mxu0 0
    %3535 = vmatprep.mubr.bf16.mxu0 0
    %3536 = vmatmul.mubr.bf16.gmra.mrb[0].mxu0 %v3389
    %v3537 = vpop.f32.mrb[0].mxu0
    %v3538 = vadd.f32 %v583, %v3537
    %v3539 = vpop.f32.mrb[0].mxu0
    %v3540 = vpop.f32.mrb[0].mxu0
    %v3541 = vadd.f32 %v583, %v3540
    %v3542 = vpop.f32.mrb[0].mxu0
    %3543 = vdwg.mxu0
    %v3544 = vsel %vm511, %v3538, -inf
    %3545 = vmax.xlane.f32.xlu0 %v3544
    %v3546 = vpop.xlane.xlu0 %3545
    %v3547 = vsel %vm511, %v3541, -inf
    %3548 = vmax.xlane.f32.xlu0 %v3547
    %v3549 = vpop.xlane.xlu0 %3548
    %v3550 = vsub.f32 %v3538, %v3546
    %v3551 = vsub.f32 %v3541, %v3549
    %v3552 = vmul.f32 %v3550, 1.442695
    %v3553 = vpow.pop %v3552
    %v3554 = vmul.f32 %v3551, 1.442695
    %v3555 = vpow.pop %v3554
    %v3556 = vsel %vm511, %v3553, 0.0
    %3557 = vadd.xlane.f32.xlu0 %v3556
    %v3558 = vpop.xlane.xlu0 %3557
    %v3559 = vsel %vm511, %v3555, 0.0
    %3560 = vadd.xlane.f32.xlu0 %v3559
    %v3561 = vpop.xlane.xlu0 %3560
    %v3562 = vrcp.pop %v3558
    %v3563 = vrcp.pop %v3561
    %v3564 = vmul.f32 %v3553, %v3562
    %v3565 = vmul.f32 %v3555, %v3563
    %v3566 = vpack.c.bf16 %v3565, %v3564
    %v3568 = vsel %vm511, %v3566, 0
    %3570 = vmatprep.subr.bf16.mxu0 0
    %3571 = vmatpush1.bf16.msra.mxu0 %v3393
    %3572 = vmatprep.subr.bf16.mxu0 0
    %3573 = vmatpush1.bf16.msra.mxu0 0
    %3574 = vmatprep.subr.bf16.mxu0 0
    %3575 = vmatpush1.bf16.msra.mxu0 0
    %3576 = vmatprep.subr.bf16.mxu0 0
    %3577 = vmatpush1.bf16.msra.mxu0 0
    %3578 = vmatprep.subr.bf16.mxu0 0
    %3579 = vmatpush1.bf16.msra.mxu0 0
    %3580 = vmatprep.subr.bf16.mxu0 0
    %3581 = vmatpush1.bf16.msra.mxu0 0
    %3582 = vmatprep.subr.bf16.mxu0 0
    %3583 = vmatpush1.bf16.msra.mxu0 0
    %3584 = vmatprep.subr.bf16.mxu0 0
    %3585 = vmatpush1.bf16.msra.mxu0 0
    %3586 = vmatprep.subr.bf16.mxu0 0
    %3587 = vmatpush1.bf16.msra.mxu0 0
    %3588 = vmatprep.subr.bf16.mxu0 0
    %3589 = vmatpush1.bf16.msra.mxu0 0
    %3590 = vmatprep.subr.bf16.mxu0 0
    %3591 = vmatpush1.bf16.msra.mxu0 0
    %3592 = vmatprep.subr.bf16.mxu0 0
    %3593 = vmatpush1.bf16.msra.mxu0 0
    %3594 = vmatprep.subr.bf16.mxu0 0
    %3595 = vmatpush1.bf16.msra.mxu0 0
    %3596 = vmatprep.subr.bf16.mxu0 0
    %3597 = vmatpush1.bf16.msra.mxu0 0
    %3598 = vmatprep.subr.bf16.mxu0 0
    %3599 = vmatpush1.bf16.msra.mxu0 0
    %3600 = vmatprep.subr.bf16.mxu0 0
    %3601 = vmatpush1.bf16.msra.mxu0 0
    %3602 = vmatprep.mubr.bf16.mxu0 0
    %3603 = vmatmul.mubr.bf16.gmra.mrb[0].mxu0 %v3568
    %v3604 = vpop.f32.mrb[0].mxu0
    %v3605 = vadd.f32 0.0, %v3604
    %v3606 = vpop.f32.mrb[0].mxu0
    %v3607 = vpop.f32.mrb[0].mxu0
    %v3608 = vadd.f32 0.0, %v3607
    %v3609 = vpop.f32.mrb[0].mxu0
    %3610 = vdwg.mxu0
    %v3611 = vpack.c.bf16 %v3500, %v3497
    %v3612 = vpack.c.bf16 %v3608, %v3605
    %s3613 = scalar_lea.vmem %s3, 256
    %v3614 = vld [vmem:[%s3613] sm:$0xf]
    %v3615 = vld [vmem:[%s3613 + $0x4] sm:$0xf]
    %v3616 = vld [vmem:[%s3613 + $0x8] sm:$0xf]
    %v3617 = vld [vmem:[%s3613 + $0xc] sm:$0xf]
    %v3618 = vld [vmem:[%s3613 + $0x10] sm:$0xf]
    %v3619 = vld [vmem:[%s3613 + $0x14] sm:$0xf]
    %v3620 = vld [vmem:[%s3613 + $0x18] sm:$0xf]
    %v3621 = vld [vmem:[%s3613 + $0x1c] sm:$0xf]
    %v3622 = vld [vmem:[%s3613 + $0x20] sm:$0xf]
    %v3623 = vld [vmem:[%s3613 + $0x24] sm:$0xf]
    %v3624 = vld [vmem:[%s3613 + $0x28] sm:$0xf]
    %v3625 = vld [vmem:[%s3613 + $0x2c] sm:$0xf]
    %v3626 = vld [vmem:[%s3613 + $0x30] sm:$0xf]
    %v3627 = vld [vmem:[%s3613 + $0x34] sm:$0xf]
    %v3628 = vld [vmem:[%s3613 + $0x38] sm:$0xf]
    %v3629 = vld [vmem:[%s3613 + $0x3c] sm:$0xf]
    %3630 = vmatprep.subr.bf16.mxu0 0
    %3631 = vmatpush1.bf16.xpose.msra.mxu0 %v3386
    %3632 = vmatprep.subr.bf16.mxu0 0
    %3633 = vmatpush1.bf16.xpose.msra.mxu0 0
    %3634 = vmatprep.subr.bf16.mxu0 0
    %3635 = vmatpush1.bf16.xpose.msra.mxu0 0
    %3636 = vmatprep.subr.bf16.mxu0 0
    %3637 = vmatpush1.bf16.xpose.msra.mxu0 0
    %3638 = vmatprep.subr.bf16.mxu0 0
    %3639 = vmatpush1.bf16.xpose.msra.mxu0 0
    %3640 = vmatprep.subr.bf16.mxu0 0
    %3641 = vmatpush1.bf16.xpose.msra.mxu0 0
    %3642 = vmatprep.subr.bf16.mxu0 0
    %3643 = vmatpush1.bf16.xpose.msra.mxu0 0
    %3644 = vmatprep.subr.bf16.mxu0 0
    %3645 = vmatpush1.bf16.xpose.msra.mxu0 0
    %3646 = vmatprep.subr.bf16.mxu0 0
    %3647 = vmatpush1.bf16.xpose.msra.mxu0 0
    %3648 = vmatprep.subr.bf16.mxu0 0
    %3649 = vmatpush1.bf16.xpose.msra.mxu0 0
    %3650 = vmatprep.subr.bf16.mxu0 0
    %3651 = vmatpush1.bf16.xpose.msra.mxu0 0
    %3652 = vmatprep.subr.bf16.mxu0 0
    %3653 = vmatpush1.bf16.xpose.msra.mxu0 0
    %3654 = vmatprep.subr.bf16.mxu0 0
    %3655 = vmatpush1.bf16.xpose.msra.mxu0 0
    %3656 = vmatprep.subr.bf16.mxu0 0
    %3657 = vmatpush1.bf16.xpose.msra.mxu0 0
    %3658 = vmatprep.subr.bf16.mxu0 0
    %3659 = vmatpush1.bf16.xpose.msra.mxu0 0
    %3660 = vmatprep.subr.bf16.mxu0 0
    %3661 = vmatpush1.bf16.xpose.msra.mxu0 0
    %3662 = vmatprep.mubr.bf16.mxu0 0
    %3663 = vmatmul.mubr.bf16.gmra.mrb[0].mxu0 %v3384
    %v3664 = vpop.f32.mrb[0].mxu0
    %v3665 = vadd.f32 %v468, %v3664
    %v3666 = vpop.f32.mrb[0].mxu0
    %v3667 = vpop.f32.mrb[0].mxu0
    %v3668 = vadd.f32 %v468, %v3667
    %v3669 = vpop.f32.mrb[0].mxu0
    %3670 = vdwg.mxu0
    %v3671 = vsel %vm511, %v3665, -inf
    %3672 = vmax.xlane.f32.xlu0 %v3671
    %v3673 = vpop.xlane.xlu0 %3672
    %v3674 = vsel %vm511, %v3668, -inf
    %3675 = vmax.xlane.f32.xlu0 %v3674
    %v3676 = vpop.xlane.xlu0 %3675
    %v3677 = vsub.f32 %v3665, %v3673
    %v3678 = vsub.f32 %v3668, %v3676
    %v3679 = vmul.f32 %v3677, 1.442695
    %v3680 = vpow.pop %v3679
    %v3681 = vmul.f32 %v3678, 1.442695
    %v3682 = vpow.pop %v3681
    %v3683 = vsel %vm511, %v3680, 0.0
    %3684 = vadd.xlane.f32.xlu0 %v3683
    %v3685 = vpop.xlane.xlu0 %3684
    %v3686 = vsel %vm511, %v3682, 0.0
    %3687 = vadd.xlane.f32.xlu0 %v3686
    %v3688 = vpop.xlane.xlu0 %3687
    %v3689 = vrcp.pop %v3685
    %v3690 = vrcp.pop %v3688
    %v3691 = vmul.f32 %v3680, %v3689
    %v3692 = vmul.f32 %v3682, %v3690
    %v3693 = vpack.c.bf16 %v3692, %v3691
    %v3695 = vsel %vm511, %v3693, 0
    %3697 = vmatprep.subr.bf16.mxu0 0
    %3698 = vmatpush1.bf16.msra.mxu0 %v3388
    %3699 = vmatprep.subr.bf16.mxu0 0
    %3700 = vmatpush1.bf16.msra.mxu0 0
    %3701 = vmatprep.subr.bf16.mxu0 0
    %3702 = vmatpush1.bf16.msra.mxu0 0
    %3703 = vmatprep.subr.bf16.mxu0 0
    %3704 = vmatpush1.bf16.msra.mxu0 0
    %3705 = vmatprep.subr.bf16.mxu0 0
    %3706 = vmatpush1.bf16.msra.mxu0 0
    %3707 = vmatprep.subr.bf16.mxu0 0
    %3708 = vmatpush1.bf16.msra.mxu0 0
    %3709 = vmatprep.subr.bf16.mxu0 0
    %3710 = vmatpush1.bf16.msra.mxu0 0
    %3711 = vmatprep.subr.bf16.mxu0 0
    %3712 = vmatpush1.bf16.msra.mxu0 0
    %3713 = vmatprep.subr.bf16.mxu0 0
    %3714 = vmatpush1.bf16.msra.mxu0 0
    %3715 = vmatprep.subr.bf16.mxu0 0
    %3716 = vmatpush1.bf16.msra.mxu0 0
    %3717 = vmatprep.subr.bf16.mxu0 0
    %3718 = vmatpush1.bf16.msra.mxu0 0
    %3719 = vmatprep.subr.bf16.mxu0 0
    %3720 = vmatpush1.bf16.msra.mxu0 0
    %3721 = vmatprep.subr.bf16.mxu0 0
    %3722 = vmatpush1.bf16.msra.mxu0 0
    %3723 = vmatprep.subr.bf16.mxu0 0
    %3724 = vmatpush1.bf16.msra.mxu0 0
    %3725 = vmatprep.subr.bf16.mxu0 0
    %3726 = vmatpush1.bf16.msra.mxu0 0
    %3727 = vmatprep.subr.bf16.mxu0 0
    %3728 = vmatpush1.bf16.msra.mxu0 0
    %3729 = vmatprep.mubr.bf16.mxu0 0
    %3730 = vmatmul.mubr.bf16.gmra.mrb[0].mxu0 %v3695
    %v3731 = vpop.f32.mrb[0].mxu0
    %v3732 = vadd.f32 0.0, %v3731
    %v3733 = vpop.f32.mrb[0].mxu0
    %v3734 = vpop.f32.mrb[0].mxu0
    %v3735 = vadd.f32 0.0, %v3734
    %v3736 = vpop.f32.mrb[0].mxu0
    %3737 = vdwg.mxu0
    %3738 = vmatprep.subr.bf16.mxu0 0
    %3739 = vmatpush1.bf16.xpose.msra.mxu0 %v3392
    %3740 = vmatprep.subr.bf16.mxu0 0
    %3741 = vmatpush1.bf16.xpose.msra.mxu0 0
    %3742 = vmatprep.subr.bf16.mxu0 0
    %3743 = vmatpush1.bf16.xpose.msra.mxu0 0
    %3744 = vmatprep.subr.bf16.mxu0 0
    %3745 = vmatpush1.bf16.xpose.msra.mxu0 0
    %3746 = vmatprep.subr.bf16.mxu0 0
    %3747 = vmatpush1.bf16.xpose.msra.mxu0 0
    %3748 = vmatprep.subr.bf16.mxu0 0
    %3749 = vmatpush1.bf16.xpose.msra.mxu0 0
    %3750 = vmatprep.subr.bf16.mxu0 0
    %3751 = vmatpush1.bf16.xpose.msra.mxu0 0
    %3752 = vmatprep.subr.bf16.mxu0 0
    %3753 = vmatpush1.bf16.xpose.msra.mxu0 0
    %3754 = vmatprep.subr.bf16.mxu0 0
    %3755 = vmatpush1.bf16.xpose.msra.mxu0 0
    %3756 = vmatprep.subr.bf16.mxu0 0
    %3757 = vmatpush1.bf16.xpose.msra.mxu0 0
    %3758 = vmatprep.subr.bf16.mxu0 0
    %3759 = vmatpush1.bf16.xpose.msra.mxu0 0
    %3760 = vmatprep.subr.bf16.mxu0 0
    %3761 = vmatpush1.bf16.xpose.msra.mxu0 0
    %3762 = vmatprep.subr.bf16.mxu0 0
    %3763 = vmatpush1.bf16.xpose.msra.mxu0 0
    %3764 = vmatprep.subr.bf16.mxu0 0
    %3765 = vmatpush1.bf16.xpose.msra.mxu0 0
    %3766 = vmatprep.subr.bf16.mxu0 0
    %3767 = vmatpush1.bf16.xpose.msra.mxu0 0
    %3768 = vmatprep.subr.bf16.mxu0 0
    %3769 = vmatpush1.bf16.xpose.msra.mxu0 0
    %3770 = vmatprep.mubr.bf16.mxu0 0
    %3771 = vmatmul.mubr.bf16.gmra.mrb[0].mxu0 %v3390
    %v3772 = vpop.f32.mrb[0].mxu0
    %v3773 = vadd.f32 %v583, %v3772
    %v3774 = vpop.f32.mrb[0].mxu0
    %v3775 = vpop.f32.mrb[0].mxu0
    %v3776 = vadd.f32 %v583, %v3775
    %v3777 = vpop.f32.mrb[0].mxu0
    %3778 = vdwg.mxu0
    %v3779 = vsel %vm511, %v3773, -inf
    %3780 = vmax.xlane.f32.xlu0 %v3779
    %v3781 = vpop.xlane.xlu0 %3780
    %v3782 = vsel %vm511, %v3776, -inf
    %3783 = vmax.xlane.f32.xlu0 %v3782
    %v3784 = vpop.xlane.xlu0 %3783
    %v3785 = vsub.f32 %v3773, %v3781
    %v3786 = vsub.f32 %v3776, %v3784
    %v3787 = vmul.f32 %v3785, 1.442695
    %v3788 = vpow.pop %v3787
    %v3789 = vmul.f32 %v3786, 1.442695
    %v3790 = vpow.pop %v3789
    %v3791 = vsel %vm511, %v3788, 0.0
    %3792 = vadd.xlane.f32.xlu0 %v3791
    %v3793 = vpop.xlane.xlu0 %3792
    %v3794 = vsel %vm511, %v3790, 0.0
    %3795 = vadd.xlane.f32.xlu0 %v3794
    %v3796 = vpop.xlane.xlu0 %3795
    %v3797 = vrcp.pop %v3793
    %v3798 = vrcp.pop %v3796
    %v3799 = vmul.f32 %v3788, %v3797
    %v3800 = vmul.f32 %v3790, %v3798
    %v3801 = vpack.c.bf16 %v3800, %v3799
    %v3803 = vsel %vm511, %v3801, 0
    %3805 = vmatprep.subr.bf16.mxu0 0
    %3806 = vmatpush1.bf16.msra.mxu0 %v3394
    %3807 = vmatprep.subr.bf16.mxu0 0
    %3808 = vmatpush1.bf16.msra.mxu0 0
    %3809 = vmatprep.subr.bf16.mxu0 0
    %3810 = vmatpush1.bf16.msra.mxu0 0
    %3811 = vmatprep.subr.bf16.mxu0 0
    %3812 = vmatpush1.bf16.msra.mxu0 0
    %3813 = vmatprep.subr.bf16.mxu0 0
    %3814 = vmatpush1.bf16.msra.mxu0 0
    %3815 = vmatprep.subr.bf16.mxu0 0
    %3816 = vmatpush1.bf16.msra.mxu0 0
    %3817 = vmatprep.subr.bf16.mxu0 0
    %3818 = vmatpush1.bf16.msra.mxu0 0
    %3819 = vmatprep.subr.bf16.mxu0 0
    %3820 = vmatpush1.bf16.msra.mxu0 0
    %3821 = vmatprep.subr.bf16.mxu0 0
    %3822 = vmatpush1.bf16.msra.mxu0 0
    %3823 = vmatprep.subr.bf16.mxu0 0
    %3824 = vmatpush1.bf16.msra.mxu0 0
    %3825 = vmatprep.subr.bf16.mxu0 0
    %3826 = vmatpush1.bf16.msra.mxu0 0
    %3827 = vmatprep.subr.bf16.mxu0 0
    %3828 = vmatpush1.bf16.msra.mxu0 0
    %3829 = vmatprep.subr.bf16.mxu0 0
    %3830 = vmatpush1.bf16.msra.mxu0 0
    %3831 = vmatprep.subr.bf16.mxu0 0
    %3832 = vmatpush1.bf16.msra.mxu0 0
    %3833 = vmatprep.subr.bf16.mxu0 0
    %3834 = vmatpush1.bf16.msra.mxu0 0
    %3835 = vmatprep.subr.bf16.mxu0 0
    %3836 = vmatpush1.bf16.msra.mxu0 0
    %3837 = vmatprep.mubr.bf16.mxu0 0
    %3838 = vmatmul.mubr.bf16.gmra.mrb[0].mxu0 %v3803
    %v3839 = vpop.f32.mrb[0].mxu0
    %v3840 = vadd.f32 0.0, %v3839
    %v3841 = vpop.f32.mrb[0].mxu0
    %v3842 = vpop.f32.mrb[0].mxu0
    %v3843 = vadd.f32 0.0, %v3842
    %v3844 = vpop.f32.mrb[0].mxu0
    %3845 = vdwg.mxu0
    %v3846 = vpack.c.bf16 %v3735, %v3732
    %v3847 = vpack.c.bf16 %v3843, %v3840
    %s3848 = scalar_lea.vmem %s3, 320
    %v3849 = vld [vmem:[%s3848] sm:$0xf]
    %v3850 = vld [vmem:[%s3848 + $0x4] sm:$0xf]
    %v3851 = vld [vmem:[%s3848 + $0x8] sm:$0xf]
    %v3852 = vld [vmem:[%s3848 + $0xc] sm:$0xf]
    %v3853 = vld [vmem:[%s3848 + $0x10] sm:$0xf]
    %v3854 = vld [vmem:[%s3848 + $0x14] sm:$0xf]
    %v3855 = vld [vmem:[%s3848 + $0x18] sm:$0xf]
    %v3856 = vld [vmem:[%s3848 + $0x1c] sm:$0xf]
    %v3857 = vld [vmem:[%s3848 + $0x20] sm:$0xf]
    %v3858 = vld [vmem:[%s3848 + $0x24] sm:$0xf]
    %v3859 = vld [vmem:[%s3848 + $0x28] sm:$0xf]
    %v3860 = vld [vmem:[%s3848 + $0x2c] sm:$0xf]
    %v3861 = vld [vmem:[%s3848 + $0x30] sm:$0xf]
    %v3862 = vld [vmem:[%s3848 + $0x34] sm:$0xf]
    %v3863 = vld [vmem:[%s3848 + $0x38] sm:$0xf]
    %v3864 = vld [vmem:[%s3848 + $0x3c] sm:$0xf]
    %v3881 = vunpack.c.l.b16 %v3849
    %v3882 = vunpack.c.l.b16 %v3850
    %v3883 = vunpack.c.l.b16 %v3851
    %v3884 = vunpack.c.l.b16 %v3852
    %v3885 = vunpack.c.l.b16 %v3853
    %v3886 = vunpack.c.l.b16 %v3854
    %v3887 = vunpack.c.l.b16 %v3855
    %v3888 = vunpack.c.l.b16 %v3856
    %v3889 = vunpack.c.l.b16 %v3857
    %v3890 = vunpack.c.l.b16 %v3858
    %v3891 = vunpack.c.l.b16 %v3859
    %v3892 = vunpack.c.l.b16 %v3860
    %v3893 = vunpack.c.l.b16 %v3861
    %v3894 = vunpack.c.l.b16 %v3862
    %v3895 = vunpack.c.l.b16 %v3863
    %v3896 = vunpack.c.l.b16 %v3864
    %v3897 = vpack.c.b16 %v3882, %v3881
    %v3898 = vpack.c.b16 %v3884, %v3883
    %v3899 = vpack.c.b16 %v3886, %v3885
    %v3900 = vpack.c.b16 %v3888, %v3887
    %v3901 = vpack.c.b16 %v3890, %v3889
    %v3902 = vpack.c.b16 %v3892, %v3891
    %v3903 = vpack.c.b16 %v3894, %v3893
    %v3904 = vpack.c.b16 %v3896, %v3895
    %3913 = vmatprep.subr.bf16.mxu0 0
    %3914 = vmatpush1.bf16.msra.mxu0 %v3897
    %3915 = vmatprep.subr.bf16.mxu0 0
    %3916 = vmatpush1.bf16.msra.mxu0 %v3898
    %3917 = vmatprep.subr.bf16.mxu0 0
    %3918 = vmatpush1.bf16.msra.mxu0 %v3899
    %3919 = vmatprep.subr.bf16.mxu0 0
    %3920 = vmatpush1.bf16.msra.mxu0 %v3900
    %3921 = vmatprep.subr.bf16.mxu0 0
    %3922 = vmatpush1.bf16.msra.mxu0 %v3901
    %3923 = vmatprep.subr.bf16.mxu0 0
    %3924 = vmatpush1.bf16.msra.mxu0 %v3902
    %3925 = vmatprep.subr.bf16.mxu0 0
    %3926 = vmatpush1.bf16.msra.mxu0 %v3903
    %3927 = vmatprep.subr.bf16.mxu0 0
    %3928 = vmatpush1.bf16.msra.mxu0 %v3904
    %3929 = vmatprep.subr.bf16.mxu0 0
    %3930 = vmatpush1.bf16.msra.mxu0 0
    %3931 = vmatprep.subr.bf16.mxu0 0
    %3932 = vmatpush1.bf16.msra.mxu0 0
    %3933 = vmatprep.subr.bf16.mxu0 0
    %3934 = vmatpush1.bf16.msra.mxu0 0
    %3935 = vmatprep.subr.bf16.mxu0 0
    %3936 = vmatpush1.bf16.msra.mxu0 0
    %3937 = vmatprep.subr.bf16.mxu0 0
    %3938 = vmatpush1.bf16.msra.mxu0 0
    %3939 = vmatprep.subr.bf16.mxu0 0
    %3940 = vmatpush1.bf16.msra.mxu0 0
    %3941 = vmatprep.subr.bf16.mxu0 0
    %3942 = vmatpush1.bf16.msra.mxu0 0
    %3943 = vmatprep.subr.bf16.mxu0 0
    %3944 = vmatpush1.bf16.msra.mxu0 0
    %3945 = vmatprep.mubr.bf16.mxu0 0
    %3946 = vmatmul.mubr.bf16.gmra.mrb[0].mxu0 %v3846
    %v3947 = vpop.f32.mrb[0].mxu0
    %v3948 = vadd.f32 0.0, %v3947
    %v3949 = vpop.f32.mrb[0].mxu0
    %v3950 = vpop.f32.mrb[0].mxu0
    %v3951 = vadd.f32 0.0, %v3950
    %v3952 = vpop.f32.mrb[0].mxu0
    %3953 = vmatprep.mubr.bf16.mxu0 0
    %3954 = vmatmul.mubr.bf16.gmra.mrb[0].mxu0 %v3847
    %v3955 = vpop.f32.mrb[0].mxu0
    %v3956 = vadd.f32 0.0, %v3955
    %v3957 = vpop.f32.mrb[0].mxu0
    %v3958 = vpop.f32.mrb[0].mxu0
    %v3959 = vadd.f32 0.0, %v3958
    %v3960 = vpop.f32.mrb[0].mxu0
    %3961 = vdwg.mxu0
    %v3978 = vunpack.c.l.b16 %v3614
    %v3979 = vunpack.c.l.b16 %v3615
    %v3980 = vunpack.c.l.b16 %v3616
    %v3981 = vunpack.c.l.b16 %v3617
    %v3982 = vunpack.c.l.b16 %v3618
    %v3983 = vunpack.c.l.b16 %v3619
    %v3984 = vunpack.c.l.b16 %v3620
    %v3985 = vunpack.c.l.b16 %v3621
    %v3986 = vunpack.c.l.b16 %v3622
    %v3987 = vunpack.c.l.b16 %v3623
    %v3988 = vunpack.c.l.b16 %v3624
    %v3989 = vunpack.c.l.b16 %v3625
    %v3990 = vunpack.c.l.b16 %v3626
    %v3991 = vunpack.c.l.b16 %v3627
    %v3992 = vunpack.c.l.b16 %v3628
    %v3993 = vunpack.c.l.b16 %v3629
    %v3994 = vpack.c.b16 %v3979, %v3978
    %v3995 = vpack.c.b16 %v3981, %v3980
    %v3996 = vpack.c.b16 %v3983, %v3982
    %v3997 = vpack.c.b16 %v3985, %v3984
    %v3998 = vpack.c.b16 %v3987, %v3986
    %v3999 = vpack.c.b16 %v3989, %v3988
    %v4000 = vpack.c.b16 %v3991, %v3990
    %v4001 = vpack.c.b16 %v3993, %v3992
    %4010 = vmatprep.subr.bf16.mxu0 0
    %4011 = vmatpush1.bf16.msra.mxu0 %v3994
    %4012 = vmatprep.subr.bf16.mxu0 0
    %4013 = vmatpush1.bf16.msra.mxu0 %v3995
    %4014 = vmatprep.subr.bf16.mxu0 0
    %4015 = vmatpush1.bf16.msra.mxu0 %v3996
    %4016 = vmatprep.subr.bf16.mxu0 0
    %4017 = vmatpush1.bf16.msra.mxu0 %v3997
    %4018 = vmatprep.subr.bf16.mxu0 0
    %4019 = vmatpush1.bf16.msra.mxu0 %v3998
    %4020 = vmatprep.subr.bf16.mxu0 0
    %4021 = vmatpush1.bf16.msra.mxu0 %v3999
    %4022 = vmatprep.subr.bf16.mxu0 0
    %4023 = vmatpush1.bf16.msra.mxu0 %v4000
    %4024 = vmatprep.subr.bf16.mxu0 0
    %4025 = vmatpush1.bf16.msra.mxu0 %v4001
    %4026 = vmatprep.subr.bf16.mxu0 0
    %4027 = vmatpush1.bf16.msra.mxu0 0
    %4028 = vmatprep.subr.bf16.mxu0 0
    %4029 = vmatpush1.bf16.msra.mxu0 0
    %4030 = vmatprep.subr.bf16.mxu0 0
    %4031 = vmatpush1.bf16.msra.mxu0 0
    %4032 = vmatprep.subr.bf16.mxu0 0
    %4033 = vmatpush1.bf16.msra.mxu0 0
    %4034 = vmatprep.subr.bf16.mxu0 0
    %4035 = vmatpush1.bf16.msra.mxu0 0
    %4036 = vmatprep.subr.bf16.mxu0 0
    %4037 = vmatpush1.bf16.msra.mxu0 0
    %4038 = vmatprep.subr.bf16.mxu0 0
    %4039 = vmatpush1.bf16.msra.mxu0 0
    %4040 = vmatprep.subr.bf16.mxu0 0
    %4041 = vmatpush1.bf16.msra.mxu0 0
    %4042 = vmatprep.mubr.bf16.mxu0 0
    %4043 = vmatmul.mubr.bf16.gmra.mrb[0].mxu0 %v3611
    %v4044 = vpop.f32.mrb[0].mxu0
    %v4045 = vadd.f32 %v3948, %v4044
    %v4046 = vpop.f32.mrb[0].mxu0
    %v4047 = vpop.f32.mrb[0].mxu0
    %v4048 = vadd.f32 %v3951, %v4047
    %v4049 = vpop.f32.mrb[0].mxu0
    %4050 = vmatprep.mubr.bf16.mxu0 0
    %4051 = vmatmul.mubr.bf16.gmra.mrb[0].mxu0 %v3612
    %v4052 = vpop.f32.mrb[0].mxu0
    %v4053 = vadd.f32 %v3956, %v4052
    %v4054 = vpop.f32.mrb[0].mxu0
    %v4055 = vpop.f32.mrb[0].mxu0
    %v4056 = vadd.f32 %v3959, %v4055
    %v4057 = vpop.f32.mrb[0].mxu0
    %4058 = vdwg.mxu0
    %v4059 = vadd.f32 %v2991, %v4045
    %v4060 = vadd.f32 %v2992, %v4048
    %v4061 = vadd.f32 %v2993, %v4053
    %v4062 = vadd.f32 %v2994, %v4056
    %s4063 = scalar_lea.vmem %s4, 2
    %v4064 = vld [vmem:[%s4063] sm:$0x1]
    %v4066 = vlaneseq
    %v4067 = vshrl.u32 %v4066, 7
    %v4068 = vsub.s32 0, %v4067
    %v4069 = vrot.slane %v4064, %v4068
    %v4071 = vadd.f32 %v4059, %v4069
    %v4072 = vadd.f32 %v4060, %v4069
    %v4073 = vadd.f32 %v4061, %v4069
    %v4074 = vadd.f32 %v4062, %v4069
    %s4075 = scalar_lea.vmem %s7, 2
    %v4076 = vld [vmem:[%s4075] sm:$0x1]
    %s4077 = scalar_lea.vmem %s8, 2
    %v4078 = vld [vmem:[%s4077] sm:$0x1]
    %v4079 = vsel %vm66, %v4071, 0.0
    %4080 = vadd.xlane.f32.xlu0 %v4079
    %v4081 = vpop.xlane.xlu0 %4080
    %v4082 = vsel %vm66, %v4072, 0.0
    %4083 = vadd.xlane.f32.xlu0 %v4082
    %v4084 = vpop.xlane.xlu0 %4083
    %v4085 = vsel %vm66, %v4073, 0.0
    %4086 = vadd.xlane.f32.xlu0 %v4085
    %v4087 = vpop.xlane.xlu0 %4086
    %v4088 = vsel %vm66, %v4074, 0.0
    %4089 = vadd.xlane.f32.xlu0 %v4088
    %v4090 = vpop.xlane.xlu0 %4089
    %v4091 = vmul.f32 %v4081, %v79
    %v4092 = vmul.f32 %v4084, %v79
    %v4093 = vmul.f32 %v4087, %v79
    %v4094 = vmul.f32 %v4090, %v79
    %v4095 = vsub.f32 %v4071, %v4091
    %v4096 = vsub.f32 %v4072, %v4092
    %v4097 = vsub.f32 %v4073, %v4093
    %v4098 = vsub.f32 %v4074, %v4094
    %v4099 = vmul.f32 %v4095, %v4095
    %v4100 = vmul.f32 %v4096, %v4096
    %v4101 = vmul.f32 %v4097, %v4097
    %v4102 = vmul.f32 %v4098, %v4098
    %v4103 = vsel %vm66, %v4099, 0.0
    %4104 = vadd.xlane.f32.xlu0 %v4103
    %v4105 = vpop.xlane.xlu0 %4104
    %v4106 = vsel %vm66, %v4100, 0.0
    %4107 = vadd.xlane.f32.xlu0 %v4106
    %v4108 = vpop.xlane.xlu0 %4107
    %v4109 = vsel %vm66, %v4101, 0.0
    %4110 = vadd.xlane.f32.xlu0 %v4109
    %v4111 = vpop.xlane.xlu0 %4110
    %v4112 = vsel %vm66, %v4102, 0.0
    %4113 = vadd.xlane.f32.xlu0 %v4112
    %v4114 = vpop.xlane.xlu0 %4113
    %v4115 = vmul.f32 %v4105, %v79
    %v4116 = vmul.f32 %v4108, %v79
    %v4117 = vmul.f32 %v4111, %v79
    %v4118 = vmul.f32 %v4114, %v79
    %v4119 = vadd.f32 %v4115, 1e-05
    %v4120 = vadd.f32 %v4116, 1e-05
    %v4121 = vadd.f32 %v4117, 1e-05
    %v4122 = vadd.f32 %v4118, 1e-05
    %v4123 = vrsqrt.pop %v4119
    %v4124 = vrsqrt.pop %v4120
    %v4125 = vrsqrt.pop %v4121
    %v4126 = vrsqrt.pop %v4122
    %v4127 = vmul.f32 %v4095, %v4123
    %v4128 = vmul.f32 %v4096, %v4124
    %v4129 = vmul.f32 %v4097, %v4125
    %v4130 = vmul.f32 %v4098, %v4126
    %v4132 = vlaneseq
    %v4133 = vshrl.u32 %v4132, 7
    %v4134 = vsub.s32 0, %v4133
    %v4135 = vrot.slane %v4076, %v4134
    %v4137 = vmul.f32 %v4127, %v4135
    %v4138 = vmul.f32 %v4128, %v4135
    %v4139 = vmul.f32 %v4129, %v4135
    %v4140 = vmul.f32 %v4130, %v4135
    %v4142 = vlaneseq
    %v4143 = vshrl.u32 %v4142, 7
    %v4144 = vsub.s32 0, %v4143
    %v4145 = vrot.slane %v4078, %v4144
    %v4147 = vadd.f32 %v4137, %v4145
    %v4148 = vadd.f32 %v4138, %v4145
    %v4149 = vadd.f32 %v4139, %v4145
    %v4150 = vadd.f32 %v4140, %v4145
    %v4151 = vpack.c.bf16 %v4148, %v4147
    %v4152 = vpack.c.bf16 %v4150, %v4149
    %s4153 = scalar_lea.vmem %s9, 112
    %v4154 = vld [vmem:[%s4153] sm:$0xff]
    %v4155 = vld [vmem:[%s4153 + $0x8] sm:$0xff]
    %v4156 = vld [vmem:[%s4153 + $0x10] sm:$0xff]
    %v4157 = vld [vmem:[%s4153 + $0x18] sm:$0xff]
    %v4158 = vld [vmem:[%s4153 + $0x20] sm:$0xff]
    %v4159 = vld [vmem:[%s4153 + $0x28] sm:$0xff]
    %v4160 = vld [vmem:[%s4153 + $0x30] sm:$0x11]
    %s4161 = scalar_lea.vmem %s10, 4
    %v4162 = vld [vmem:[%s4161] sm:$0x3]
    %v4164 = vlaneseq
    %v4165 = vshrl.u32 %v4164, 7
    %v4166 = vsub.s32 0, %v4165
    %v4167 = vrot.slane %v4162, %v4166
    %v4168 = vlaneseq
    %v4169 = vshrl.u32 %v4168, 7
    %v4170 = vsub.s32 1, %v4169
    %v4171 = vrot.slane %v4162, %v4170
    %v4181 = vunpack.c.l.b16 %v4154
    %v4182 = vunpack.c.h.b16 %v4154
    %v4183 = vunpack.c.l.b16 %v4155
    %v4184 = vunpack.c.h.b16 %v4155
    %v4185 = vunpack.c.l.b16 %v4156
    %v4186 = vunpack.c.h.b16 %v4156
    %v4187 = vunpack.c.l.b16 %v4157
    %v4188 = vunpack.c.h.b16 %v4157
    %v4189 = vunpack.c.l.b16 %v4158
    %v4190 = vunpack.c.h.b16 %v4158
    %v4191 = vunpack.c.l.b16 %v4159
    %v4192 = vunpack.c.h.b16 %v4159
    %v4193 = vunpack.c.l.b16 %v4160
    %v4194 = vunpack.c.h.b16 %v4160
    %v4195 = vpack.c.b16 %v4183, %v4181
    %v4196 = vpack.c.b16 %v4184, %v4182
    %v4197 = vpack.c.b16 %v4187, %v4185
    %v4198 = vpack.c.b16 %v4188, %v4186
    %v4199 = vpack.c.b16 %v4191, %v4189
    %v4200 = vpack.c.b16 %v4192, %v4190
    %v4201 = vpack.c.b16 %v4193, %v4193
    %v4202 = vpack.c.b16 %v4194, %v4194
    %v4210 = vsel %vm66, %v4151, 0
    %v4213 = vsel %vm66, %v4152, 0
    %v4216 = vsel %vm274, %v4201, 0
    %v4219 = vsel %vm274, %v4202, 0
    %4221 = vmatprep.subr.bf16.mxu0 %v4196
    %4222 = vmatpush1.bf16.msra.mxu0 %v4195
    %4223 = vmatprep.subr.bf16.mxu0 %v4198
    %4224 = vmatpush1.bf16.msra.mxu0 %v4197
    %4225 = vmatprep.subr.bf16.mxu0 %v4200
    %4226 = vmatpush1.bf16.msra.mxu0 %v4199
    %4227 = vmatprep.subr.bf16.mxu0 %v4219
    %4228 = vmatpush1.bf16.msra.mxu0 %v4216
    %4229 = vmatprep.subr.bf16.mxu0 0
    %4230 = vmatpush1.bf16.msra.mxu0 0
    %4231 = vmatprep.subr.bf16.mxu0 0
    %4232 = vmatpush1.bf16.msra.mxu0 0
    %4233 = vmatprep.subr.bf16.mxu0 0
    %4234 = vmatpush1.bf16.msra.mxu0 0
    %4235 = vmatprep.subr.bf16.mxu0 0
    %4236 = vmatpush1.bf16.msra.mxu0 0
    %4237 = vmatprep.subr.bf16.mxu0 0
    %4238 = vmatpush1.bf16.msra.mxu0 0
    %4239 = vmatprep.subr.bf16.mxu0 0
    %4240 = vmatpush1.bf16.msra.mxu0 0
    %4241 = vmatprep.subr.bf16.mxu0 0
    %4242 = vmatpush1.bf16.msra.mxu0 0
    %4243 = vmatprep.subr.bf16.mxu0 0
    %4244 = vmatpush1.bf16.msra.mxu0 0
    %4245 = vmatprep.subr.bf16.mxu0 0
    %4246 = vmatpush1.bf16.msra.mxu0 0
    %4247 = vmatprep.subr.bf16.mxu0 0
    %4248 = vmatpush1.bf16.msra.mxu0 0
    %4249 = vmatprep.subr.bf16.mxu0 0
    %4250 = vmatpush1.bf16.msra.mxu0 0
    %4251 = vmatprep.subr.bf16.mxu0 0
    %4252 = vmatpush1.bf16.msra.mxu0 0
    %4253 = vmatprep.mubr.bf16.mxu0 0
    %4254 = vmatmul.mubr.bf16.gmra.mrb[0].mxu0 %v4210
    %v4255 = vpop.f32.mrb[0].mxu0
    %v4256 = vadd.f32 %v4167, %v4255
    %v4257 = vpop.f32.mrb[0].mxu0
    %v4258 = vadd.f32 %v4171, %v4257
    %v4259 = vpop.f32.mrb[0].mxu0
    %v4260 = vadd.f32 %v4167, %v4259
    %v4261 = vpop.f32.mrb[0].mxu0
    %v4262 = vadd.f32 %v4171, %v4261
    %4263 = vmatprep.mubr.bf16.mxu0 0
    %4264 = vmatmul.mubr.bf16.gmra.mrb[0].mxu0 %v4213
    %v4265 = vpop.f32.mrb[0].mxu0
    %v4266 = vadd.f32 %v4167, %v4265
    %v4267 = vpop.f32.mrb[0].mxu0
    %v4268 = vadd.f32 %v4171, %v4267
    %v4269 = vpop.f32.mrb[0].mxu0
    %v4270 = vadd.f32 %v4167, %v4269
    %v4271 = vpop.f32.mrb[0].mxu0
    %v4272 = vadd.f32 %v4171, %v4271
    %4273 = vdwg.mxu0
    %v4274 = vmax.f32 %v4256, 0.0
    %v4275 = vmax.f32 %v4258, 0.0
    %v4276 = vmax.f32 %v4260, 0.0
    %v4277 = vmax.f32 %v4262, 0.0
    %v4278 = vmax.f32 %v4266, 0.0
    %v4279 = vmax.f32 %v4268, 0.0
    %v4280 = vmax.f32 %v4270, 0.0
    %v4281 = vmax.f32 %v4272, 0.0
    %v4282 = vpack.c.bf16 %v4276, %v4274
    %v4283 = vpack.c.bf16 %v4277, %v4275
    %v4284 = vpack.c.bf16 %v4280, %v4278
    %v4285 = vpack.c.bf16 %v4281, %v4279
    %s4286 = scalar_lea.vmem %s11, 200
    %v4287 = vld [vmem:[%s4286] sm:$0xf]
    %v4288 = vld [vmem:[%s4286 + $0x4] sm:$0xf]
    %v4289 = vld [vmem:[%s4286 + $0x8] sm:$0xf]
    %v4290 = vld [vmem:[%s4286 + $0xc] sm:$0xf]
    %v4291 = vld [vmem:[%s4286 + $0x10] sm:$0xf]
    %v4292 = vld [vmem:[%s4286 + $0x14] sm:$0xf]
    %v4293 = vld [vmem:[%s4286 + $0x18] sm:$0xf]
    %v4294 = vld [vmem:[%s4286 + $0x1c] sm:$0xf]
    %v4295 = vld [vmem:[%s4286 + $0x20] sm:$0xf]
    %v4296 = vld [vmem:[%s4286 + $0x24] sm:$0xf]
    %v4297 = vld [vmem:[%s4286 + $0x28] sm:$0xf]
    %v4298 = vld [vmem:[%s4286 + $0x2c] sm:$0xf]
    %v4299 = vld [vmem:[%s4286 + $0x30] sm:$0xf]
    %v4300 = vld [vmem:[%s4286 + $0x34] sm:$0xf]
    %v4301 = vld [vmem:[%s4286 + $0x38] sm:$0xf]
    %v4302 = vld [vmem:[%s4286 + $0x3c] sm:$0xf]
    %v4303 = vld [vmem:[%s4286 + $0x40] sm:$0xf]
    %v4304 = vld [vmem:[%s4286 + $0x44] sm:$0xf]
    %v4305 = vld [vmem:[%s4286 + $0x48] sm:$0xf]
    %v4306 = vld [vmem:[%s4286 + $0x4c] sm:$0xf]
    %v4307 = vld [vmem:[%s4286 + $0x50] sm:$0xf]
    %v4308 = vld [vmem:[%s4286 + $0x54] sm:$0xf]
    %v4309 = vld [vmem:[%s4286 + $0x58] sm:$0xf]
    %v4310 = vld [vmem:[%s4286 + $0x5c] sm:$0xf]
    %v4311 = vld [vmem:[%s4286 + $0x60] sm:$0xf]
    %s4312 = scalar_lea.vmem %s12, 2
    %v4313 = vld [vmem:[%s4312] sm:$0x1]
    %v4315 = vlaneseq
    %v4316 = vshrl.u32 %v4315, 7
    %v4317 = vsub.s32 0, %v4316
    %v4318 = vrot.slane %v4313, %v4317
    %v4345 = vunpack.c.l.b16 %v4287
    %v4346 = vunpack.c.l.b16 %v4288
    %v4347 = vunpack.c.l.b16 %v4289
    %v4348 = vunpack.c.l.b16 %v4290
    %v4349 = vunpack.c.l.b16 %v4291
    %v4350 = vunpack.c.l.b16 %v4292
    %v4351 = vunpack.c.l.b16 %v4293
    %v4352 = vunpack.c.l.b16 %v4294
    %v4353 = vunpack.c.l.b16 %v4295
    %v4354 = vunpack.c.l.b16 %v4296
    %v4355 = vunpack.c.l.b16 %v4297
    %v4356 = vunpack.c.l.b16 %v4298
    %v4357 = vunpack.c.l.b16 %v4299
    %v4358 = vunpack.c.l.b16 %v4300
    %v4359 = vunpack.c.l.b16 %v4301
    %v4360 = vunpack.c.l.b16 %v4302
    %v4361 = vunpack.c.l.b16 %v4303
    %v4362 = vunpack.c.l.b16 %v4304
    %v4363 = vunpack.c.l.b16 %v4305
    %v4364 = vunpack.c.l.b16 %v4306
    %v4365 = vunpack.c.l.b16 %v4307
    %v4366 = vunpack.c.l.b16 %v4308
    %v4367 = vunpack.c.l.b16 %v4309
    %v4368 = vunpack.c.l.b16 %v4310
    %v4369 = vunpack.c.l.b16 %v4311
    %v4370 = vpack.c.b16 %v4346, %v4345
    %v4371 = vpack.c.b16 %v4348, %v4347
    %v4372 = vpack.c.b16 %v4350, %v4349
    %v4373 = vpack.c.b16 %v4352, %v4351
    %v4374 = vpack.c.b16 %v4354, %v4353
    %v4375 = vpack.c.b16 %v4356, %v4355
    %v4376 = vpack.c.b16 %v4358, %v4357
    %v4377 = vpack.c.b16 %v4360, %v4359
    %v4378 = vpack.c.b16 %v4362, %v4361
    %v4379 = vpack.c.b16 %v4364, %v4363
    %v4380 = vpack.c.b16 %v4366, %v4365
    %v4381 = vpack.c.b16 %v4368, %v4367
    %v4382 = vpack.c.b16 %v4369, %v4369
    %v4396 = vsel %vm1469, %v4283, 0
    %v4399 = vsel %vm1469, %v4285, 0
    %v4402 = vsel %vm1476, %v4382, 0
    %4404 = vmatprep.subr.bf16.mxu0 0
    %4405 = vmatpush1.bf16.msra.mxu0 %v4370
    %4406 = vmatprep.subr.bf16.mxu0 0
    %4407 = vmatpush1.bf16.msra.mxu0 %v4371
    %4408 = vmatprep.subr.bf16.mxu0 0
    %4409 = vmatpush1.bf16.msra.mxu0 %v4372
    %4410 = vmatprep.subr.bf16.mxu0 0
    %4411 = vmatpush1.bf16.msra.mxu0 %v4373
    %4412 = vmatprep.subr.bf16.mxu0 0
    %4413 = vmatpush1.bf16.msra.mxu0 %v4374
    %4414 = vmatprep.subr.bf16.mxu0 0
    %4415 = vmatpush1.bf16.msra.mxu0 %v4375
    %4416 = vmatprep.subr.bf16.mxu0 0
    %4417 = vmatpush1.bf16.msra.mxu0 %v4376
    %4418 = vmatprep.subr.bf16.mxu0 0
    %4419 = vmatpush1.bf16.msra.mxu0 %v4377
    %4420 = vmatprep.subr.bf16.mxu0 0
    %4421 = vmatpush1.bf16.msra.mxu0 %v4378
    %4422 = vmatprep.subr.bf16.mxu0 0
    %4423 = vmatpush1.bf16.msra.mxu0 %v4379
    %4424 = vmatprep.subr.bf16.mxu0 0
    %4425 = vmatpush1.bf16.msra.mxu0 %v4380
    %4426 = vmatprep.subr.bf16.mxu0 0
    %4427 = vmatpush1.bf16.msra.mxu0 %v4381
    %4428 = vmatprep.subr.bf16.mxu0 0
    %4429 = vmatpush1.bf16.msra.mxu0 %v4402
    %4430 = vmatprep.subr.bf16.mxu0 0
    %4431 = vmatpush1.bf16.msra.mxu0 0
    %4432 = vmatprep.subr.bf16.mxu0 0
    %4433 = vmatpush1.bf16.msra.mxu0 0
    %4434 = vmatprep.subr.bf16.mxu0 0
    %4435 = vmatpush1.bf16.msra.mxu0 0
    %4436 = vmatprep.mubr.bf16.mxu0 %v4396
    %4437 = vmatmul.mubr.bf16.gmra.mrb[0].mxu0 %v4282
    %v4438 = vpop.f32.mrb[0].mxu0
    %v4439 = vadd.f32 %v4318, %v4438
    %v4440 = vpop.f32.mrb[0].mxu0
    %v4441 = vpop.f32.mrb[0].mxu0
    %v4442 = vadd.f32 %v4318, %v4441
    %v4443 = vpop.f32.mrb[0].mxu0
    %4444 = vmatprep.mubr.bf16.mxu0 %v4399
    %4445 = vmatmul.mubr.bf16.gmra.mrb[0].mxu0 %v4284
    %v4446 = vpop.f32.mrb[0].mxu0
    %v4447 = vadd.f32 %v4318, %v4446
    %v4448 = vpop.f32.mrb[0].mxu0
    %v4449 = vpop.f32.mrb[0].mxu0
    %v4450 = vadd.f32 %v4318, %v4449
    %v4451 = vpop.f32.mrb[0].mxu0
    %4452 = vdwg.mxu0
    %v4453 = vadd.f32 %v4071, %v4439
    %v4454 = vadd.f32 %v4072, %v4442
    %v4455 = vadd.f32 %v4073, %v4447
    %v4456 = vadd.f32 %v4074, %v4450
    %s4457 = scalar_lea.vmem %s5, 3
    %v4458 = vld [vmem:[%s4457] sm:$0x1]
    %s4459 = scalar_lea.vmem %s6, 3
    %v4460 = vld [vmem:[%s4459] sm:$0x1]
    %v4461 = vsel %vm66, %v4453, 0.0
    %4462 = vadd.xlane.f32.xlu0 %v4461
    %v4463 = vpop.xlane.xlu0 %4462
    %v4464 = vsel %vm66, %v4454, 0.0
    %4465 = vadd.xlane.f32.xlu0 %v4464
    %v4466 = vpop.xlane.xlu0 %4465
    %v4467 = vsel %vm66, %v4455, 0.0
    %4468 = vadd.xlane.f32.xlu0 %v4467
    %v4469 = vpop.xlane.xlu0 %4468
    %v4470 = vsel %vm66, %v4456, 0.0
    %4471 = vadd.xlane.f32.xlu0 %v4470
    %v4472 = vpop.xlane.xlu0 %4471
    %v4473 = vmul.f32 %v4463, %v79
    %v4474 = vmul.f32 %v4466, %v79
    %v4475 = vmul.f32 %v4469, %v79
    %v4476 = vmul.f32 %v4472, %v79
    %v4477 = vsub.f32 %v4453, %v4473
    %v4478 = vsub.f32 %v4454, %v4474
    %v4479 = vsub.f32 %v4455, %v4475
    %v4480 = vsub.f32 %v4456, %v4476
    %v4481 = vmul.f32 %v4477, %v4477
    %v4482 = vmul.f32 %v4478, %v4478
    %v4483 = vmul.f32 %v4479, %v4479
    %v4484 = vmul.f32 %v4480, %v4480
    %v4485 = vsel %vm66, %v4481, 0.0
    %4486 = vadd.xlane.f32.xlu0 %v4485
    %v4487 = vpop.xlane.xlu0 %4486
    %v4488 = vsel %vm66, %v4482, 0.0
    %4489 = vadd.xlane.f32.xlu0 %v4488
    %v4490 = vpop.xlane.xlu0 %4489
    %v4491 = vsel %vm66, %v4483, 0.0
    %4492 = vadd.xlane.f32.xlu0 %v4491
    %v4493 = vpop.xlane.xlu0 %4492
    %v4494 = vsel %vm66, %v4484, 0.0
    %4495 = vadd.xlane.f32.xlu0 %v4494
    %v4496 = vpop.xlane.xlu0 %4495
    %v4497 = vmul.f32 %v4487, %v79
    %v4498 = vmul.f32 %v4490, %v79
    %v4499 = vmul.f32 %v4493, %v79
    %v4500 = vmul.f32 %v4496, %v79
    %v4501 = vadd.f32 %v4497, 1e-05
    %v4502 = vadd.f32 %v4498, 1e-05
    %v4503 = vadd.f32 %v4499, 1e-05
    %v4504 = vadd.f32 %v4500, 1e-05
    %v4505 = vrsqrt.pop %v4501
    %v4506 = vrsqrt.pop %v4502
    %v4507 = vrsqrt.pop %v4503
    %v4508 = vrsqrt.pop %v4504
    %v4509 = vmul.f32 %v4477, %v4505
    %v4510 = vmul.f32 %v4478, %v4506
    %v4511 = vmul.f32 %v4479, %v4507
    %v4512 = vmul.f32 %v4480, %v4508
    %v4514 = vlaneseq
    %v4515 = vshrl.u32 %v4514, 7
    %v4516 = vsub.s32 0, %v4515
    %v4517 = vrot.slane %v4458, %v4516
    %v4519 = vmul.f32 %v4509, %v4517
    %v4520 = vmul.f32 %v4510, %v4517
    %v4521 = vmul.f32 %v4511, %v4517
    %v4522 = vmul.f32 %v4512, %v4517
    %v4524 = vlaneseq
    %v4525 = vshrl.u32 %v4524, 7
    %v4526 = vsub.s32 0, %v4525
    %v4527 = vrot.slane %v4460, %v4526
    %v4529 = vadd.f32 %v4519, %v4527
    %v4530 = vadd.f32 %v4520, %v4527
    %v4531 = vadd.f32 %v4521, %v4527
    %v4532 = vadd.f32 %v4522, %v4527
    %v4533 = vpack.c.bf16 %v4530, %v4529
    %v4534 = vpack.c.bf16 %v4532, %v4531
    %s4535 = scalar_lea.vmem %s2, 504
    %v4536 = vld [vmem:[%s4535] sm:$0xff]
    %v4537 = vld [vmem:[%s4535 + $0x8] sm:$0xff]
    %v4538 = vld [vmem:[%s4535 + $0x10] sm:$0xff]
    %v4539 = vld [vmem:[%s4535 + $0x18] sm:$0xff]
    %v4540 = vld [vmem:[%s4535 + $0x20] sm:$0xff]
    %v4541 = vld [vmem:[%s4535 + $0x28] sm:$0xff]
    %v4542 = vld [vmem:[%s4535 + $0x30] sm:$0xff]
    %v4543 = vld [vmem:[%s4535 + $0x38] sm:$0xff]
    %v4544 = vld [vmem:[%s4535 + $0x40] sm:$0xff]
    %v4545 = vld [vmem:[%s4535 + $0x48] sm:$0xff]
    %v4546 = vld [vmem:[%s4535 + $0x50] sm:$0xff]
    %v4547 = vld [vmem:[%s4535 + $0x58] sm:$0xff]
    %v4548 = vld [vmem:[%s4535 + $0x60] sm:$0xff]
    %v4549 = vld [vmem:[%s4535 + $0x68] sm:$0xff]
    %v4550 = vld [vmem:[%s4535 + $0x70] sm:$0xff]
    %v4551 = vld [vmem:[%s4535 + $0x78] sm:$0xff]
    %v4552 = vld [vmem:[%s4535 + $0x80] sm:$0xff]
    %v4553 = vld [vmem:[%s4535 + $0x88] sm:$0xff]
    %v4554 = vld [vmem:[%s4535 + $0x90] sm:$0x11]
    %v4555 = vld [vmem:[%s4535 + $0x98] sm:$0x11]
    %v4556 = vld [vmem:[%s4535 + $0xa0] sm:$0x11]
    %v4578 = vunpack.c.l.b16 %v4536
    %v4579 = vunpack.c.h.b16 %v4536
    %v4580 = vunpack.c.l.b16 %v4537
    %v4581 = vunpack.c.h.b16 %v4537
    %v4582 = vunpack.c.l.b16 %v4538
    %v4583 = vunpack.c.h.b16 %v4538
    %v4584 = vunpack.c.l.b16 %v4539
    %v4585 = vunpack.c.h.b16 %v4539
    %v4586 = vunpack.c.l.b16 %v4540
    %v4587 = vunpack.c.h.b16 %v4540
    %v4588 = vunpack.c.l.b16 %v4541
    %v4589 = vunpack.c.h.b16 %v4541
    %v4590 = vunpack.c.l.b16 %v4542
    %v4591 = vunpack.c.h.b16 %v4542
    %v4592 = vunpack.c.l.b16 %v4543
    %v4593 = vunpack.c.h.b16 %v4543
    %v4594 = vunpack.c.l.b16 %v4544
    %v4595 = vunpack.c.h.b16 %v4544
    %v4596 = vunpack.c.l.b16 %v4545
    %v4597 = vunpack.c.h.b16 %v4545
    %v4598 = vunpack.c.l.b16 %v4546
    %v4599 = vunpack.c.h.b16 %v4546
    %v4600 = vunpack.c.l.b16 %v4547
    %v4601 = vunpack.c.h.b16 %v4547
    %v4602 = vunpack.c.l.b16 %v4548
    %v4603 = vunpack.c.h.b16 %v4548
    %v4604 = vunpack.c.l.b16 %v4549
    %v4605 = vunpack.c.h.b16 %v4549
    %v4606 = vunpack.c.l.b16 %v4550
    %v4607 = vunpack.c.h.b16 %v4550
    %v4608 = vunpack.c.l.b16 %v4551
    %v4609 = vunpack.c.h.b16 %v4551
    %v4610 = vunpack.c.l.b16 %v4552
    %v4611 = vunpack.c.h.b16 %v4552
    %v4612 = vunpack.c.l.b16 %v4553
    %v4613 = vunpack.c.h.b16 %v4553
    %v4614 = vunpack.c.l.b16 %v4554
    %v4615 = vunpack.c.h.b16 %v4554
    %v4616 = vunpack.c.l.b16 %v4555
    %v4617 = vunpack.c.h.b16 %v4555
    %v4618 = vunpack.c.l.b16 %v4556
    %v4619 = vunpack.c.h.b16 %v4556
    %v4620 = vpack.c.b16 %v4584, %v4578
    %v4621 = vpack.c.b16 %v4585, %v4579
    %v4622 = vpack.c.b16 %v4586, %v4580
    %v4623 = vpack.c.b16 %v4587, %v4581
    %v4624 = vpack.c.b16 %v4588, %v4582
    %v4625 = vpack.c.b16 %v4589, %v4583
    %v4626 = vpack.c.b16 %v4596, %v4590
    %v4627 = vpack.c.b16 %v4597, %v4591
    %v4628 = vpack.c.b16 %v4598, %v4592
    %v4629 = vpack.c.b16 %v4599, %v4593
    %v4630 = vpack.c.b16 %v4600, %v4594
    %v4631 = vpack.c.b16 %v4601, %v4595
    %v4632 = vpack.c.b16 %v4608, %v4602
    %v4633 = vpack.c.b16 %v4609, %v4603
    %v4634 = vpack.c.b16 %v4610, %v4604
    %v4635 = vpack.c.b16 %v4611, %v4605
    %v4636 = vpack.c.b16 %v4612, %v4606
    %v4637 = vpack.c.b16 %v4613, %v4607
    %v4638 = vpack.c.b16 %v4614, %v4614
    %v4639 = vpack.c.b16 %v4615, %v4615
    %v4640 = vpack.c.b16 %v4616, %v4616
    %v4641 = vpack.c.b16 %v4617, %v4617
    %v4642 = vpack.c.b16 %v4618, %v4618
    %v4643 = vpack.c.b16 %v4619, %v4619
    %v4663 = vsel %vm66, %v4533, 0
    %v4666 = vsel %vm66, %v4534, 0
    %v4669 = vsel %vm274, %v4638, 0
    %v4672 = vsel %vm274, %v4639, 0
    %v4675 = vsel %vm274, %v4640, 0
    %v4678 = vsel %vm274, %v4641, 0
    %v4681 = vsel %vm274, %v4642, 0
    %v4684 = vsel %vm274, %v4643, 0
    %4686 = vmatprep.subr.bf16.mxu0 %v4621
    %4687 = vmatpush1.bf16.msra.mxu0 %v4620
    %4688 = vmatprep.subr.bf16.mxu0 %v4627
    %4689 = vmatpush1.bf16.msra.mxu0 %v4626
    %4690 = vmatprep.subr.bf16.mxu0 %v4633
    %4691 = vmatpush1.bf16.msra.mxu0 %v4632
    %4692 = vmatprep.subr.bf16.mxu0 %v4672
    %4693 = vmatpush1.bf16.msra.mxu0 %v4669
    %4694 = vmatprep.subr.bf16.mxu0 0
    %4695 = vmatpush1.bf16.msra.mxu0 0
    %4696 = vmatprep.subr.bf16.mxu0 0
    %4697 = vmatpush1.bf16.msra.mxu0 0
    %4698 = vmatprep.subr.bf16.mxu0 0
    %4699 = vmatpush1.bf16.msra.mxu0 0
    %4700 = vmatprep.subr.bf16.mxu0 0
    %4701 = vmatpush1.bf16.msra.mxu0 0
    %4702 = vmatprep.subr.bf16.mxu0 0
    %4703 = vmatpush1.bf16.msra.mxu0 0
    %4704 = vmatprep.subr.bf16.mxu0 0
    %4705 = vmatpush1.bf16.msra.mxu0 0
    %4706 = vmatprep.subr.bf16.mxu0 0
    %4707 = vmatpush1.bf16.msra.mxu0 0
    %4708 = vmatprep.subr.bf16.mxu0 0
    %4709 = vmatpush1.bf16.msra.mxu0 0
    %4710 = vmatprep.subr.bf16.mxu0 0
    %4711 = vmatpush1.bf16.msra.mxu0 0
    %4712 = vmatprep.subr.bf16.mxu0 0
    %4713 = vmatpush1.bf16.msra.mxu0 0
    %4714 = vmatprep.subr.bf16.mxu0 0
    %4715 = vmatpush1.bf16.msra.mxu0 0
    %4716 = vmatprep.subr.bf16.mxu0 0
    %4717 = vmatpush1.bf16.msra.mxu0 0
    %4718 = vmatprep.mubr.bf16.mxu0 0
    %4719 = vmatmul.mubr.bf16.gmra.mrb[0].mxu0 %v4663
    %v4720 = vpop.f32.mrb[0].mxu0
    %v4721 = vadd.f32 0.0, %v4720
    %v4722 = vpop.f32.mrb[0].mxu0
    %v4723 = vadd.f32 0.0, %v4722
    %v4724 = vpop.f32.mrb[0].mxu0
    %v4725 = vadd.f32 0.0, %v4724
    %v4726 = vpop.f32.mrb[0].mxu0
    %v4727 = vadd.f32 0.0, %v4726
    %4728 = vmatprep.mubr.bf16.mxu0 0
    %4729 = vmatmul.mubr.bf16.gmra.mrb[0].mxu0 %v4666
    %v4730 = vpop.f32.mrb[0].mxu0
    %v4731 = vadd.f32 0.0, %v4730
    %v4732 = vpop.f32.mrb[0].mxu0
    %v4733 = vadd.f32 0.0, %v4732
    %v4734 = vpop.f32.mrb[0].mxu0
    %v4735 = vadd.f32 0.0, %v4734
    %v4736 = vpop.f32.mrb[0].mxu0
    %v4737 = vadd.f32 0.0, %v4736
    %4738 = vdwg.mxu0
    %4739 = vmatprep.subr.bf16.mxu0 %v4623
    %4740 = vmatpush1.bf16.msra.mxu0 %v4622
    %4741 = vmatprep.subr.bf16.mxu0 %v4629
    %4742 = vmatpush1.bf16.msra.mxu0 %v4628
    %4743 = vmatprep.subr.bf16.mxu0 %v4635
    %4744 = vmatpush1.bf16.msra.mxu0 %v4634
    %4745 = vmatprep.subr.bf16.mxu0 %v4678
    %4746 = vmatpush1.bf16.msra.mxu0 %v4675
    %4747 = vmatprep.subr.bf16.mxu0 0
    %4748 = vmatpush1.bf16.msra.mxu0 0
    %4749 = vmatprep.subr.bf16.mxu0 0
    %4750 = vmatpush1.bf16.msra.mxu0 0
    %4751 = vmatprep.subr.bf16.mxu0 0
    %4752 = vmatpush1.bf16.msra.mxu0 0
    %4753 = vmatprep.subr.bf16.mxu0 0
    %4754 = vmatpush1.bf16.msra.mxu0 0
    %4755 = vmatprep.subr.bf16.mxu0 0
    %4756 = vmatpush1.bf16.msra.mxu0 0
    %4757 = vmatprep.subr.bf16.mxu0 0
    %4758 = vmatpush1.bf16.msra.mxu0 0
    %4759 = vmatprep.subr.bf16.mxu0 0
    %4760 = vmatpush1.bf16.msra.mxu0 0
    %4761 = vmatprep.subr.bf16.mxu0 0
    %4762 = vmatpush1.bf16.msra.mxu0 0
    %4763 = vmatprep.subr.bf16.mxu0 0
    %4764 = vmatpush1.bf16.msra.mxu0 0
    %4765 = vmatprep.subr.bf16.mxu0 0
    %4766 = vmatpush1.bf16.msra.mxu0 0
    %4767 = vmatprep.subr.bf16.mxu0 0
    %4768 = vmatpush1.bf16.msra.mxu0 0
    %4769 = vmatprep.subr.bf16.mxu0 0
    %4770 = vmatpush1.bf16.msra.mxu0 0
    %4771 = vmatprep.mubr.bf16.mxu0 0
    %4772 = vmatmul.mubr.bf16.gmra.mrb[0].mxu0 %v4663
    %v4773 = vpop.f32.mrb[0].mxu0
    %v4774 = vadd.f32 0.0, %v4773
    %v4775 = vpop.f32.mrb[0].mxu0
    %v4776 = vadd.f32 0.0, %v4775
    %v4777 = vpop.f32.mrb[0].mxu0
    %v4778 = vadd.f32 0.0, %v4777
    %v4779 = vpop.f32.mrb[0].mxu0
    %v4780 = vadd.f32 0.0, %v4779
    %4781 = vmatprep.mubr.bf16.mxu0 0
    %4782 = vmatmul.mubr.bf16.gmra.mrb[0].mxu0 %v4666
    %v4783 = vpop.f32.mrb[0].mxu0
    %v4784 = vadd.f32 0.0, %v4783
    %v4785 = vpop.f32.mrb[0].mxu0
    %v4786 = vadd.f32 0.0, %v4785
    %v4787 = vpop.f32.mrb[0].mxu0
    %v4788 = vadd.f32 0.0, %v4787
    %v4789 = vpop.f32.mrb[0].mxu0
    %v4790 = vadd.f32 0.0, %v4789
    %4791 = vdwg.mxu0
    %4792 = vmatprep.subr.bf16.mxu0 %v4625
    %4793 = vmatpush1.bf16.msra.mxu0 %v4624
    %4794 = vmatprep.subr.bf16.mxu0 %v4631
    %4795 = vmatpush1.bf16.msra.mxu0 %v4630
    %4796 = vmatprep.subr.bf16.mxu0 %v4637
    %4797 = vmatpush1.bf16.msra.mxu0 %v4636
    %4798 = vmatprep.subr.bf16.mxu0 %v4684
    %4799 = vmatpush1.bf16.msra.mxu0 %v4681
    %4800 = vmatprep.subr.bf16.mxu0 0
    %4801 = vmatpush1.bf16.msra.mxu0 0
    %4802 = vmatprep.subr.bf16.mxu0 0
    %4803 = vmatpush1.bf16.msra.mxu0 0
    %4804 = vmatprep.subr.bf16.mxu0 0
    %4805 = vmatpush1.bf16.msra.mxu0 0
    %4806 = vmatprep.subr.bf16.mxu0 0
    %4807 = vmatpush1.bf16.msra.mxu0 0
    %4808 = vmatprep.subr.bf16.mxu0 0
    %4809 = vmatpush1.bf16.msra.mxu0 0
    %4810 = vmatprep.subr.bf16.mxu0 0
    %4811 = vmatpush1.bf16.msra.mxu0 0
    %4812 = vmatprep.subr.bf16.mxu0 0
    %4813 = vmatpush1.bf16.msra.mxu0 0
    %4814 = vmatprep.subr.bf16.mxu0 0
    %4815 = vmatpush1.bf16.msra.mxu0 0
    %4816 = vmatprep.subr.bf16.mxu0 0
    %4817 = vmatpush1.bf16.msra.mxu0 0
    %4818 = vmatprep.subr.bf16.mxu0 0
    %4819 = vmatpush1.bf16.msra.mxu0 0
    %4820 = vmatprep.subr.bf16.mxu0 0
    %4821 = vmatpush1.bf16.msra.mxu0 0
    %4822 = vmatprep.subr.bf16.mxu0 0
    %4823 = vmatpush1.bf16.msra.mxu0 0
    %4824 = vmatprep.mubr.bf16.mxu0 0
    %4825 = vmatmul.mubr.bf16.gmra.mrb[0].mxu0 %v4663
    %v4826 = vpop.f32.mrb[0].mxu0
    %v4827 = vadd.f32 0.0, %v4826
    %v4828 = vpop.f32.mrb[0].mxu0
    %v4829 = vadd.f32 0.0, %v4828
    %v4830 = vpop.f32.mrb[0].mxu0
    %v4831 = vadd.f32 0.0, %v4830
    %v4832 = vpop.f32.mrb[0].mxu0
    %v4833 = vadd.f32 0.0, %v4832
    %4834 = vmatprep.mubr.bf16.mxu0 0
    %4835 = vmatmul.mubr.bf16.gmra.mrb[0].mxu0 %v4666
    %v4836 = vpop.f32.mrb[0].mxu0
    %v4837 = vadd.f32 0.0, %v4836
    %v4838 = vpop.f32.mrb[0].mxu0
    %v4839 = vadd.f32 0.0, %v4838
    %v4840 = vpop.f32.mrb[0].mxu0
    %v4841 = vadd.f32 0.0, %v4840
    %v4842 = vpop.f32.mrb[0].mxu0
    %v4843 = vadd.f32 0.0, %v4842
    %4844 = vdwg.mxu0
    %v4845 = vpack.c.bf16 %v4725, %v4721
    %v4846 = vpack.c.bf16 %v4727, %v4723
    %v4847 = vpack.c.bf16 %v4778, %v4774
    %v4848 = vpack.c.bf16 %v4780, %v4776
    %v4849 = vpack.c.bf16 %v4831, %v4827
    %v4850 = vpack.c.bf16 %v4833, %v4829
    %v4851 = vpack.c.bf16 %v4735, %v4731
    %v4852 = vpack.c.bf16 %v4737, %v4733
    %v4853 = vpack.c.bf16 %v4788, %v4784
    %v4854 = vpack.c.bf16 %v4790, %v4786
    %v4855 = vpack.c.bf16 %v4841, %v4837
    %v4856 = vpack.c.bf16 %v4843, %v4839
    %4857 = vmatprep.subr.bf16.mxu0 0
    %4858 = vmatpush1.bf16.xpose.msra.mxu0 %v4847
    %4859 = vmatprep.subr.bf16.mxu0 0
    %4860 = vmatpush1.bf16.xpose.msra.mxu0 0
    %4861 = vmatprep.subr.bf16.mxu0 0
    %4862 = vmatpush1.bf16.xpose.msra.mxu0 0
    %4863 = vmatprep.subr.bf16.mxu0 0
    %4864 = vmatpush1.bf16.xpose.msra.mxu0 0
    %4865 = vmatprep.subr.bf16.mxu0 0
    %4866 = vmatpush1.bf16.xpose.msra.mxu0 0
    %4867 = vmatprep.subr.bf16.mxu0 0
    %4868 = vmatpush1.bf16.xpose.msra.mxu0 0
    %4869 = vmatprep.subr.bf16.mxu0 0
    %4870 = vmatpush1.bf16.xpose.msra.mxu0 0
    %4871 = vmatprep.subr.bf16.mxu0 0
    %4872 = vmatpush1.bf16.xpose.msra.mxu0 0
    %4873 = vmatprep.subr.bf16.mxu0 0
    %4874 = vmatpush1.bf16.xpose.msra.mxu0 0
    %4875 = vmatprep.subr.bf16.mxu0 0
    %4876 = vmatpush1.bf16.xpose.msra.mxu0 0
    %4877 = vmatprep.subr.bf16.mxu0 0
    %4878 = vmatpush1.bf16.xpose.msra.mxu0 0
    %4879 = vmatprep.subr.bf16.mxu0 0
    %4880 = vmatpush1.bf16.xpose.msra.mxu0 0
    %4881 = vmatprep.subr.bf16.mxu0 0
    %4882 = vmatpush1.bf16.xpose.msra.mxu0 0
    %4883 = vmatprep.subr.bf16.mxu0 0
    %4884 = vmatpush1.bf16.xpose.msra.mxu0 0
    %4885 = vmatprep.subr.bf16.mxu0 0
    %4886 = vmatpush1.bf16.xpose.msra.mxu0 0
    %4887 = vmatprep.subr.bf16.mxu0 0
    %4888 = vmatpush1.bf16.xpose.msra.mxu0 0
    %4889 = vmatprep.mubr.bf16.mxu0 0
    %4890 = vmatmul.mubr.bf16.gmra.mrb[0].mxu0 %v4845
    %v4891 = vpop.f32.mrb[0].mxu0
    %v4892 = vadd.f32 %v468, %v4891
    %v4893 = vpop.f32.mrb[0].mxu0
    %v4894 = vpop.f32.mrb[0].mxu0
    %v4895 = vadd.f32 %v468, %v4894
    %v4896 = vpop.f32.mrb[0].mxu0
    %4897 = vdwg.mxu0
    %v4898 = vsel %vm511, %v4892, -inf
    %4899 = vmax.xlane.f32.xlu0 %v4898
    %v4900 = vpop.xlane.xlu0 %4899
    %v4901 = vsel %vm511, %v4895, -inf
    %4902 = vmax.xlane.f32.xlu0 %v4901
    %v4903 = vpop.xlane.xlu0 %4902
    %v4904 = vsub.f32 %v4892, %v4900
    %v4905 = vsub.f32 %v4895, %v4903
    %v4906 = vmul.f32 %v4904, 1.442695
    %v4907 = vpow.pop %v4906
    %v4908 = vmul.f32 %v4905, 1.442695
    %v4909 = vpow.pop %v4908
    %v4910 = vsel %vm511, %v4907, 0.0
    %4911 = vadd.xlane.f32.xlu0 %v4910
    %v4912 = vpop.xlane.xlu0 %4911
    %v4913 = vsel %vm511, %v4909, 0.0
    %4914 = vadd.xlane.f32.xlu0 %v4913
    %v4915 = vpop.xlane.xlu0 %4914
    %v4916 = vrcp.pop %v4912
    %v4917 = vrcp.pop %v4915
    %v4918 = vmul.f32 %v4907, %v4916
    %v4919 = vmul.f32 %v4909, %v4917
    %v4920 = vpack.c.bf16 %v4919, %v4918
    %v4922 = vsel %vm511, %v4920, 0
    %4924 = vmatprep.subr.bf16.mxu0 0
    %4925 = vmatpush1.bf16.msra.mxu0 %v4849
    %4926 = vmatprep.subr.bf16.mxu0 0
    %4927 = vmatpush1.bf16.msra.mxu0 0
    %4928 = vmatprep.subr.bf16.mxu0 0
    %4929 = vmatpush1.bf16.msra.mxu0 0
    %4930 = vmatprep.subr.bf16.mxu0 0
    %4931 = vmatpush1.bf16.msra.mxu0 0
    %4932 = vmatprep.subr.bf16.mxu0 0
    %4933 = vmatpush1.bf16.msra.mxu0 0
    %4934 = vmatprep.subr.bf16.mxu0 0
    %4935 = vmatpush1.bf16.msra.mxu0 0
    %4936 = vmatprep.subr.bf16.mxu0 0
    %4937 = vmatpush1.bf16.msra.mxu0 0
    %4938 = vmatprep.subr.bf16.mxu0 0
    %4939 = vmatpush1.bf16.msra.mxu0 0
    %4940 = vmatprep.subr.bf16.mxu0 0
    %4941 = vmatpush1.bf16.msra.mxu0 0
    %4942 = vmatprep.subr.bf16.mxu0 0
    %4943 = vmatpush1.bf16.msra.mxu0 0
    %4944 = vmatprep.subr.bf16.mxu0 0
    %4945 = vmatpush1.bf16.msra.mxu0 0
    %4946 = vmatprep.subr.bf16.mxu0 0
    %4947 = vmatpush1.bf16.msra.mxu0 0
    %4948 = vmatprep.subr.bf16.mxu0 0
    %4949 = vmatpush1.bf16.msra.mxu0 0
    %4950 = vmatprep.subr.bf16.mxu0 0
    %4951 = vmatpush1.bf16.msra.mxu0 0
    %4952 = vmatprep.subr.bf16.mxu0 0
    %4953 = vmatpush1.bf16.msra.mxu0 0
    %4954 = vmatprep.subr.bf16.mxu0 0
    %4955 = vmatpush1.bf16.msra.mxu0 0
    %4956 = vmatprep.mubr.bf16.mxu0 0
    %4957 = vmatmul.mubr.bf16.gmra.mrb[0].mxu0 %v4922
    %v4958 = vpop.f32.mrb[0].mxu0
    %v4959 = vadd.f32 0.0, %v4958
    %v4960 = vpop.f32.mrb[0].mxu0
    %v4961 = vpop.f32.mrb[0].mxu0
    %v4962 = vadd.f32 0.0, %v4961
    %v4963 = vpop.f32.mrb[0].mxu0
    %4964 = vdwg.mxu0
    %4965 = vmatprep.subr.bf16.mxu0 0
    %4966 = vmatpush1.bf16.xpose.msra.mxu0 %v4853
    %4967 = vmatprep.subr.bf16.mxu0 0
    %4968 = vmatpush1.bf16.xpose.msra.mxu0 0
    %4969 = vmatprep.subr.bf16.mxu0 0
    %4970 = vmatpush1.bf16.xpose.msra.mxu0 0
    %4971 = vmatprep.subr.bf16.mxu0 0
    %4972 = vmatpush1.bf16.xpose.msra.mxu0 0
    %4973 = vmatprep.subr.bf16.mxu0 0
    %4974 = vmatpush1.bf16.xpose.msra.mxu0 0
    %4975 = vmatprep.subr.bf16.mxu0 0
    %4976 = vmatpush1.bf16.xpose.msra.mxu0 0
    %4977 = vmatprep.subr.bf16.mxu0 0
    %4978 = vmatpush1.bf16.xpose.msra.mxu0 0
    %4979 = vmatprep.subr.bf16.mxu0 0
    %4980 = vmatpush1.bf16.xpose.msra.mxu0 0
    %4981 = vmatprep.subr.bf16.mxu0 0
    %4982 = vmatpush1.bf16.xpose.msra.mxu0 0
    %4983 = vmatprep.subr.bf16.mxu0 0
    %4984 = vmatpush1.bf16.xpose.msra.mxu0 0
    %4985 = vmatprep.subr.bf16.mxu0 0
    %4986 = vmatpush1.bf16.xpose.msra.mxu0 0
    %4987 = vmatprep.subr.bf16.mxu0 0
    %4988 = vmatpush1.bf16.xpose.msra.mxu0 0
    %4989 = vmatprep.subr.bf16.mxu0 0
    %4990 = vmatpush1.bf16.xpose.msra.mxu0 0
    %4991 = vmatprep.subr.bf16.mxu0 0
    %4992 = vmatpush1.bf16.xpose.msra.mxu0 0
    %4993 = vmatprep.subr.bf16.mxu0 0
    %4994 = vmatpush1.bf16.xpose.msra.mxu0 0
    %4995 = vmatprep.subr.bf16.mxu0 0
    %4996 = vmatpush1.bf16.xpose.msra.mxu0 0
    %4997 = vmatprep.mubr.bf16.mxu0 0
    %4998 = vmatmul.mubr.bf16.gmra.mrb[0].mxu0 %v4851
    %v4999 = vpop.f32.mrb[0].mxu0
    %v5000 = vadd.f32 %v583, %v4999
    %v5001 = vpop.f32.mrb[0].mxu0
    %v5002 = vpop.f32.mrb[0].mxu0
    %v5003 = vadd.f32 %v583, %v5002
    %v5004 = vpop.f32.mrb[0].mxu0
    %5005 = vdwg.mxu0
    %v5006 = vsel %vm511, %v5000, -inf
    %5007 = vmax.xlane.f32.xlu0 %v5006
    %v5008 = vpop.xlane.xlu0 %5007
    %v5009 = vsel %vm511, %v5003, -inf
    %5010 = vmax.xlane.f32.xlu0 %v5009
    %v5011 = vpop.xlane.xlu0 %5010
    %v5012 = vsub.f32 %v5000, %v5008
    %v5013 = vsub.f32 %v5003, %v5011
    %v5014 = vmul.f32 %v5012, 1.442695
    %v5015 = vpow.pop %v5014
    %v5016 = vmul.f32 %v5013, 1.442695
    %v5017 = vpow.pop %v5016
    %v5018 = vsel %vm511, %v5015, 0.0
    %5019 = vadd.xlane.f32.xlu0 %v5018
    %v5020 = vpop.xlane.xlu0 %5019
    %v5021 = vsel %vm511, %v5017, 0.0
    %5022 = vadd.xlane.f32.xlu0 %v5021
    %v5023 = vpop.xlane.xlu0 %5022
    %v5024 = vrcp.pop %v5020
    %v5025 = vrcp.pop %v5023
    %v5026 = vmul.f32 %v5015, %v5024
    %v5027 = vmul.f32 %v5017, %v5025
    %v5028 = vpack.c.bf16 %v5027, %v5026
    %v5030 = vsel %vm511, %v5028, 0
    %5032 = vmatprep.subr.bf16.mxu0 0
    %5033 = vmatpush1.bf16.msra.mxu0 %v4855
    %5034 = vmatprep.subr.bf16.mxu0 0
    %5035 = vmatpush1.bf16.msra.mxu0 0
    %5036 = vmatprep.subr.bf16.mxu0 0
    %5037 = vmatpush1.bf16.msra.mxu0 0
    %5038 = vmatprep.subr.bf16.mxu0 0
    %5039 = vmatpush1.bf16.msra.mxu0 0
    %5040 = vmatprep.subr.bf16.mxu0 0
    %5041 = vmatpush1.bf16.msra.mxu0 0
    %5042 = vmatprep.subr.bf16.mxu0 0
    %5043 = vmatpush1.bf16.msra.mxu0 0
    %5044 = vmatprep.subr.bf16.mxu0 0
    %5045 = vmatpush1.bf16.msra.mxu0 0
    %5046 = vmatprep.subr.bf16.mxu0 0
    %5047 = vmatpush1.bf16.msra.mxu0 0
    %5048 = vmatprep.subr.bf16.mxu0 0
    %5049 = vmatpush1.bf16.msra.mxu0 0
    %5050 = vmatprep.subr.bf16.mxu0 0
    %5051 = vmatpush1.bf16.msra.mxu0 0
    %5052 = vmatprep.subr.bf16.mxu0 0
    %5053 = vmatpush1.bf16.msra.mxu0 0
    %5054 = vmatprep.subr.bf16.mxu0 0
    %5055 = vmatpush1.bf16.msra.mxu0 0
    %5056 = vmatprep.subr.bf16.mxu0 0
    %5057 = vmatpush1.bf16.msra.mxu0 0
    %5058 = vmatprep.subr.bf16.mxu0 0
    %5059 = vmatpush1.bf16.msra.mxu0 0
    %5060 = vmatprep.subr.bf16.mxu0 0
    %5061 = vmatpush1.bf16.msra.mxu0 0
    %5062 = vmatprep.subr.bf16.mxu0 0
    %5063 = vmatpush1.bf16.msra.mxu0 0
    %5064 = vmatprep.mubr.bf16.mxu0 0
    %5065 = vmatmul.mubr.bf16.gmra.mrb[0].mxu0 %v5030
    %v5066 = vpop.f32.mrb[0].mxu0
    %v5067 = vadd.f32 0.0, %v5066
    %v5068 = vpop.f32.mrb[0].mxu0
    %v5069 = vpop.f32.mrb[0].mxu0
    %v5070 = vadd.f32 0.0, %v5069
    %v5071 = vpop.f32.mrb[0].mxu0
    %5072 = vdwg.mxu0
    %v5073 = vpack.c.bf16 %v4962, %v4959
    %v5074 = vpack.c.bf16 %v5070, %v5067
    %s5075 = scalar_lea.vmem %s3, 384
    %v5076 = vld [vmem:[%s5075] sm:$0xf]
    %v5077 = vld [vmem:[%s5075 + $0x4] sm:$0xf]
    %v5078 = vld [vmem:[%s5075 + $0x8] sm:$0xf]
    %v5079 = vld [vmem:[%s5075 + $0xc] sm:$0xf]
    %v5080 = vld [vmem:[%s5075 + $0x10] sm:$0xf]
    %v5081 = vld [vmem:[%s5075 + $0x14] sm:$0xf]
    %v5082 = vld [vmem:[%s5075 + $0x18] sm:$0xf]
    %v5083 = vld [vmem:[%s5075 + $0x1c] sm:$0xf]
    %v5084 = vld [vmem:[%s5075 + $0x20] sm:$0xf]
    %v5085 = vld [vmem:[%s5075 + $0x24] sm:$0xf]
    %v5086 = vld [vmem:[%s5075 + $0x28] sm:$0xf]
    %v5087 = vld [vmem:[%s5075 + $0x2c] sm:$0xf]
    %v5088 = vld [vmem:[%s5075 + $0x30] sm:$0xf]
    %v5089 = vld [vmem:[%s5075 + $0x34] sm:$0xf]
    %v5090 = vld [vmem:[%s5075 + $0x38] sm:$0xf]
    %v5091 = vld [vmem:[%s5075 + $0x3c] sm:$0xf]
    %5092 = vmatprep.subr.bf16.mxu0 0
    %5093 = vmatpush1.bf16.xpose.msra.mxu0 %v4848
    %5094 = vmatprep.subr.bf16.mxu0 0
    %5095 = vmatpush1.bf16.xpose.msra.mxu0 0
    %5096 = vmatprep.subr.bf16.mxu0 0
    %5097 = vmatpush1.bf16.xpose.msra.mxu0 0
    %5098 = vmatprep.subr.bf16.mxu0 0
    %5099 = vmatpush1.bf16.xpose.msra.mxu0 0
    %5100 = vmatprep.subr.bf16.mxu0 0
    %5101 = vmatpush1.bf16.xpose.msra.mxu0 0
    %5102 = vmatprep.subr.bf16.mxu0 0
    %5103 = vmatpush1.bf16.xpose.msra.mxu0 0
    %5104 = vmatprep.subr.bf16.mxu0 0
    %5105 = vmatpush1.bf16.xpose.msra.mxu0 0
    %5106 = vmatprep.subr.bf16.mxu0 0
    %5107 = vmatpush1.bf16.xpose.msra.mxu0 0
    %5108 = vmatprep.subr.bf16.mxu0 0
    %5109 = vmatpush1.bf16.xpose.msra.mxu0 0
    %5110 = vmatprep.subr.bf16.mxu0 0
    %5111 = vmatpush1.bf16.xpose.msra.mxu0 0
    %5112 = vmatprep.subr.bf16.mxu0 0
    %5113 = vmatpush1.bf16.xpose.msra.mxu0 0
    %5114 = vmatprep.subr.bf16.mxu0 0
    %5115 = vmatpush1.bf16.xpose.msra.mxu0 0
    %5116 = vmatprep.subr.bf16.mxu0 0
    %5117 = vmatpush1.bf16.xpose.msra.mxu0 0
    %5118 = vmatprep.subr.bf16.mxu0 0
    %5119 = vmatpush1.bf16.xpose.msra.mxu0 0
    %5120 = vmatprep.subr.bf16.mxu0 0
    %5121 = vmatpush1.bf16.xpose.msra.mxu0 0
    %5122 = vmatprep.subr.bf16.mxu0 0
    %5123 = vmatpush1.bf16.xpose.msra.mxu0 0
    %5124 = vmatprep.mubr.bf16.mxu0 0
    %5125 = vmatmul.mubr.bf16.gmra.mrb[0].mxu0 %v4846
    %v5126 = vpop.f32.mrb[0].mxu0
    %v5127 = vadd.f32 %v468, %v5126
    %v5128 = vpop.f32.mrb[0].mxu0
    %v5129 = vpop.f32.mrb[0].mxu0
    %v5130 = vadd.f32 %v468, %v5129
    %v5131 = vpop.f32.mrb[0].mxu0
    %5132 = vdwg.mxu0
    %v5133 = vsel %vm511, %v5127, -inf
    %5134 = vmax.xlane.f32.xlu0 %v5133
    %v5135 = vpop.xlane.xlu0 %5134
    %v5136 = vsel %vm511, %v5130, -inf
    %5137 = vmax.xlane.f32.xlu0 %v5136
    %v5138 = vpop.xlane.xlu0 %5137
    %v5139 = vsub.f32 %v5127, %v5135
    %v5140 = vsub.f32 %v5130, %v5138
    %v5141 = vmul.f32 %v5139, 1.442695
    %v5142 = vpow.pop %v5141
    %v5143 = vmul.f32 %v5140, 1.442695
    %v5144 = vpow.pop %v5143
    %v5145 = vsel %vm511, %v5142, 0.0
    %5146 = vadd.xlane.f32.xlu0 %v5145
    %v5147 = vpop.xlane.xlu0 %5146
    %v5148 = vsel %vm511, %v5144, 0.0
    %5149 = vadd.xlane.f32.xlu0 %v5148
    %v5150 = vpop.xlane.xlu0 %5149
    %v5151 = vrcp.pop %v5147
    %v5152 = vrcp.pop %v5150
    %v5153 = vmul.f32 %v5142, %v5151
    %v5154 = vmul.f32 %v5144, %v5152
    %v5155 = vpack.c.bf16 %v5154, %v5153
    %v5157 = vsel %vm511, %v5155, 0
    %5159 = vmatprep.subr.bf16.mxu0 0
    %5160 = vmatpush1.bf16.msra.mxu0 %v4850
    %5161 = vmatprep.subr.bf16.mxu0 0
    %5162 = vmatpush1.bf16.msra.mxu0 0
    %5163 = vmatprep.subr.bf16.mxu0 0
    %5164 = vmatpush1.bf16.msra.mxu0 0
    %5165 = vmatprep.subr.bf16.mxu0 0
    %5166 = vmatpush1.bf16.msra.mxu0 0
    %5167 = vmatprep.subr.bf16.mxu0 0
    %5168 = vmatpush1.bf16.msra.mxu0 0
    %5169 = vmatprep.subr.bf16.mxu0 0
    %5170 = vmatpush1.bf16.msra.mxu0 0
    %5171 = vmatprep.subr.bf16.mxu0 0
    %5172 = vmatpush1.bf16.msra.mxu0 0
    %5173 = vmatprep.subr.bf16.mxu0 0
    %5174 = vmatpush1.bf16.msra.mxu0 0
    %5175 = vmatprep.subr.bf16.mxu0 0
    %5176 = vmatpush1.bf16.msra.mxu0 0
    %5177 = vmatprep.subr.bf16.mxu0 0
    %5178 = vmatpush1.bf16.msra.mxu0 0
    %5179 = vmatprep.subr.bf16.mxu0 0
    %5180 = vmatpush1.bf16.msra.mxu0 0
    %5181 = vmatprep.subr.bf16.mxu0 0
    %5182 = vmatpush1.bf16.msra.mxu0 0
    %5183 = vmatprep.subr.bf16.mxu0 0
    %5184 = vmatpush1.bf16.msra.mxu0 0
    %5185 = vmatprep.subr.bf16.mxu0 0
    %5186 = vmatpush1.bf16.msra.mxu0 0
    %5187 = vmatprep.subr.bf16.mxu0 0
    %5188 = vmatpush1.bf16.msra.mxu0 0
    %5189 = vmatprep.subr.bf16.mxu0 0
    %5190 = vmatpush1.bf16.msra.mxu0 0
    %5191 = vmatprep.mubr.bf16.mxu0 0
    %5192 = vmatmul.mubr.bf16.gmra.mrb[0].mxu0 %v5157
    %v5193 = vpop.f32.mrb[0].mxu0
    %v5194 = vadd.f32 0.0, %v5193
    %v5195 = vpop.f32.mrb[0].mxu0
    %v5196 = vpop.f32.mrb[0].mxu0
    %v5197 = vadd.f32 0.0, %v5196
    %v5198 = vpop.f32.mrb[0].mxu0
    %5199 = vdwg.mxu0
    %5200 = vmatprep.subr.bf16.mxu0 0
    %5201 = vmatpush1.bf16.xpose.msra.mxu0 %v4854
    %5202 = vmatprep.subr.bf16.mxu0 0
    %5203 = vmatpush1.bf16.xpose.msra.mxu0 0
    %5204 = vmatprep.subr.bf16.mxu0 0
    %5205 = vmatpush1.bf16.xpose.msra.mxu0 0
    %5206 = vmatprep.subr.bf16.mxu0 0
    %5207 = vmatpush1.bf16.xpose.msra.mxu0 0
    %5208 = vmatprep.subr.bf16.mxu0 0
    %5209 = vmatpush1.bf16.xpose.msra.mxu0 0
    %5210 = vmatprep.subr.bf16.mxu0 0
    %5211 = vmatpush1.bf16.xpose.msra.mxu0 0
    %5212 = vmatprep.subr.bf16.mxu0 0
    %5213 = vmatpush1.bf16.xpose.msra.mxu0 0
    %5214 = vmatprep.subr.bf16.mxu0 0
    %5215 = vmatpush1.bf16.xpose.msra.mxu0 0
    %5216 = vmatprep.subr.bf16.mxu0 0
    %5217 = vmatpush1.bf16.xpose.msra.mxu0 0
    %5218 = vmatprep.subr.bf16.mxu0 0
    %5219 = vmatpush1.bf16.xpose.msra.mxu0 0
    %5220 = vmatprep.subr.bf16.mxu0 0
    %5221 = vmatpush1.bf16.xpose.msra.mxu0 0
    %5222 = vmatprep.subr.bf16.mxu0 0
    %5223 = vmatpush1.bf16.xpose.msra.mxu0 0
    %5224 = vmatprep.subr.bf16.mxu0 0
    %5225 = vmatpush1.bf16.xpose.msra.mxu0 0
    %5226 = vmatprep.subr.bf16.mxu0 0
    %5227 = vmatpush1.bf16.xpose.msra.mxu0 0
    %5228 = vmatprep.subr.bf16.mxu0 0
    %5229 = vmatpush1.bf16.xpose.msra.mxu0 0
    %5230 = vmatprep.subr.bf16.mxu0 0
    %5231 = vmatpush1.bf16.xpose.msra.mxu0 0
    %5232 = vmatprep.mubr.bf16.mxu0 0
    %5233 = vmatmul.mubr.bf16.gmra.mrb[0].mxu0 %v4852
    %v5234 = vpop.f32.mrb[0].mxu0
    %v5235 = vadd.f32 %v583, %v5234
    %v5236 = vpop.f32.mrb[0].mxu0
    %v5237 = vpop.f32.mrb[0].mxu0
    %v5238 = vadd.f32 %v583, %v5237
    %v5239 = vpop.f32.mrb[0].mxu0
    %5240 = vdwg.mxu0
    %v5241 = vsel %vm511, %v5235, -inf
    %5242 = vmax.xlane.f32.xlu0 %v5241
    %v5243 = vpop.xlane.xlu0 %5242
    %v5244 = vsel %vm511, %v5238, -inf
    %5245 = vmax.xlane.f32.xlu0 %v5244
    %v5246 = vpop.xlane.xlu0 %5245
    %v5247 = vsub.f32 %v5235, %v5243
    %v5248 = vsub.f32 %v5238, %v5246
    %v5249 = vmul.f32 %v5247, 1.442695
    %v5250 = vpow.pop %v5249
    %v5251 = vmul.f32 %v5248, 1.442695
    %v5252 = vpow.pop %v5251
    %v5253 = vsel %vm511, %v5250, 0.0
    %5254 = vadd.xlane.f32.xlu0 %v5253
    %v5255 = vpop.xlane.xlu0 %5254
    %v5256 = vsel %vm511, %v5252, 0.0
    %5257 = vadd.xlane.f32.xlu0 %v5256
    %v5258 = vpop.xlane.xlu0 %5257
    %v5259 = vrcp.pop %v5255
    %v5260 = vrcp.pop %v5258
    %v5261 = vmul.f32 %v5250, %v5259
    %v5262 = vmul.f32 %v5252, %v5260
    %v5263 = vpack.c.bf16 %v5262, %v5261
    %v5265 = vsel %vm511, %v5263, 0
    %5267 = vmatprep.subr.bf16.mxu0 0
    %5268 = vmatpush1.bf16.msra.mxu0 %v4856
    %5269 = vmatprep.subr.bf16.mxu0 0
    %5270 = vmatpush1.bf16.msra.mxu0 0
    %5271 = vmatprep.subr.bf16.mxu0 0
    %5272 = vmatpush1.bf16.msra.mxu0 0
    %5273 = vmatprep.subr.bf16.mxu0 0
    %5274 = vmatpush1.bf16.msra.mxu0 0
    %5275 = vmatprep.subr.bf16.mxu0 0
    %5276 = vmatpush1.bf16.msra.mxu0 0
    %5277 = vmatprep.subr.bf16.mxu0 0
    %5278 = vmatpush1.bf16.msra.mxu0 0
    %5279 = vmatprep.subr.bf16.mxu0 0
    %5280 = vmatpush1.bf16.msra.mxu0 0
    %5281 = vmatprep.subr.bf16.mxu0 0
    %5282 = vmatpush1.bf16.msra.mxu0 0
    %5283 = vmatprep.subr.bf16.mxu0 0
    %5284 = vmatpush1.bf16.msra.mxu0 0
    %5285 = vmatprep.subr.bf16.mxu0 0
    %5286 = vmatpush1.bf16.msra.mxu0 0
    %5287 = vmatprep.subr.bf16.mxu0 0
    %5288 = vmatpush1.bf16.msra.mxu0 0
    %5289 = vmatprep.subr.bf16.mxu0 0
    %5290 = vmatpush1.bf16.msra.mxu0 0
    %5291 = vmatprep.subr.bf16.mxu0 0
    %5292 = vmatpush1.bf16.msra.mxu0 0
    %5293 = vmatprep.subr.bf16.mxu0 0
    %5294 = vmatpush1.bf16.msra.mxu0 0
    %5295 = vmatprep.subr.bf16.mxu0 0
    %5296 = vmatpush1.bf16.msra.mxu0 0
    %5297 = vmatprep.subr.bf16.mxu0 0
    %5298 = vmatpush1.bf16.msra.mxu0 0
    %5299 = vmatprep.mubr.bf16.mxu0 0
    %5300 = vmatmul.mubr.bf16.gmra.mrb[0].mxu0 %v5265
    %v5301 = vpop.f32.mrb[0].mxu0
    %v5302 = vadd.f32 0.0, %v5301
    %v5303 = vpop.f32.mrb[0].mxu0
    %v5304 = vpop.f32.mrb[0].mxu0
    %v5305 = vadd.f32 0.0, %v5304
    %v5306 = vpop.f32.mrb[0].mxu0
    %5307 = vdwg.mxu0
    %v5308 = vpack.c.bf16 %v5197, %v5194
    %v5309 = vpack.c.bf16 %v5305, %v5302
    %s5310 = scalar_lea.vmem %s3, 448
    %v5311 = vld [vmem:[%s5310] sm:$0xf]
    %v5312 = vld [vmem:[%s5310 + $0x4] sm:$0xf]
    %v5313 = vld [vmem:[%s5310 + $0x8] sm:$0xf]
    %v5314 = vld [vmem:[%s5310 + $0xc] sm:$0xf]
    %v5315 = vld [vmem:[%s5310 + $0x10] sm:$0xf]
    %v5316 = vld [vmem:[%s5310 + $0x14] sm:$0xf]
    %v5317 = vld [vmem:[%s5310 + $0x18] sm:$0xf]
    %v5318 = vld [vmem:[%s5310 + $0x1c] sm:$0xf]
    %v5319 = vld [vmem:[%s5310 + $0x20] sm:$0xf]
    %v5320 = vld [vmem:[%s5310 + $0x24] sm:$0xf]
    %v5321 = vld [vmem:[%s5310 + $0x28] sm:$0xf]
    %v5322 = vld [vmem:[%s5310 + $0x2c] sm:$0xf]
    %v5323 = vld [vmem:[%s5310 + $0x30] sm:$0xf]
    %v5324 = vld [vmem:[%s5310 + $0x34] sm:$0xf]
    %v5325 = vld [vmem:[%s5310 + $0x38] sm:$0xf]
    %v5326 = vld [vmem:[%s5310 + $0x3c] sm:$0xf]
    %v5343 = vunpack.c.l.b16 %v5311
    %v5344 = vunpack.c.l.b16 %v5312
    %v5345 = vunpack.c.l.b16 %v5313
    %v5346 = vunpack.c.l.b16 %v5314
    %v5347 = vunpack.c.l.b16 %v5315
    %v5348 = vunpack.c.l.b16 %v5316
    %v5349 = vunpack.c.l.b16 %v5317
    %v5350 = vunpack.c.l.b16 %v5318
    %v5351 = vunpack.c.l.b16 %v5319
    %v5352 = vunpack.c.l.b16 %v5320
    %v5353 = vunpack.c.l.b16 %v5321
    %v5354 = vunpack.c.l.b16 %v5322
    %v5355 = vunpack.c.l.b16 %v5323
    %v5356 = vunpack.c.l.b16 %v5324
    %v5357 = vunpack.c.l.b16 %v5325
    %v5358 = vunpack.c.l.b16 %v5326
    %v5359 = vpack.c.b16 %v5344, %v5343
    %v5360 = vpack.c.b16 %v5346, %v5345
    %v5361 = vpack.c.b16 %v5348, %v5347
    %v5362 = vpack.c.b16 %v5350, %v5349
    %v5363 = vpack.c.b16 %v5352, %v5351
    %v5364 = vpack.c.b16 %v5354, %v5353
    %v5365 = vpack.c.b16 %v5356, %v5355
    %v5366 = vpack.c.b16 %v5358, %v5357
    %5375 = vmatprep.subr.bf16.mxu0 0
    %5376 = vmatpush1.bf16.msra.mxu0 %v5359
    %5377 = vmatprep.subr.bf16.mxu0 0
    %5378 = vmatpush1.bf16.msra.mxu0 %v5360
    %5379 = vmatprep.subr.bf16.mxu0 0
    %5380 = vmatpush1.bf16.msra.mxu0 %v5361
    %5381 = vmatprep.subr.bf16.mxu0 0
    %5382 = vmatpush1.bf16.msra.mxu0 %v5362
    %5383 = vmatprep.subr.bf16.mxu0 0
    %5384 = vmatpush1.bf16.msra.mxu0 %v5363
    %5385 = vmatprep.subr.bf16.mxu0 0
    %5386 = vmatpush1.bf16.msra.mxu0 %v5364
    %5387 = vmatprep.subr.bf16.mxu0 0
    %5388 = vmatpush1.bf16.msra.mxu0 %v5365
    %5389 = vmatprep.subr.bf16.mxu0 0
    %5390 = vmatpush1.bf16.msra.mxu0 %v5366
    %5391 = vmatprep.subr.bf16.mxu0 0
    %5392 = vmatpush1.bf16.msra.mxu0 0
    %5393 = vmatprep.subr.bf16.mxu0 0
    %5394 = vmatpush1.bf16.msra.mxu0 0
    %5395 = vmatprep.subr.bf16.mxu0 0
    %5396 = vmatpush1.bf16.msra.mxu0 0
    %5397 = vmatprep.subr.bf16.mxu0 0
    %5398 = vmatpush1.bf16.msra.mxu0 0
    %5399 = vmatprep.subr.bf16.mxu0 0
    %5400 = vmatpush1.bf16.msra.mxu0 0
    %5401 = vmatprep.subr.bf16.mxu0 0
    %5402 = vmatpush1.bf16.msra.mxu0 0
    %5403 = vmatprep.subr.bf16.mxu0 0
    %5404 = vmatpush1.bf16.msra.mxu0 0
    %5405 = vmatprep.subr.bf16.mxu0 0
    %5406 = vmatpush1.bf16.msra.mxu0 0
    %5407 = vmatprep.mubr.bf16.mxu0 0
    %5408 = vmatmul.mubr.bf16.gmra.mrb[0].mxu0 %v5308
    %v5409 = vpop.f32.mrb[0].mxu0
    %v5410 = vadd.f32 0.0, %v5409
    %v5411 = vpop.f32.mrb[0].mxu0
    %v5412 = vpop.f32.mrb[0].mxu0
    %v5413 = vadd.f32 0.0, %v5412
    %v5414 = vpop.f32.mrb[0].mxu0
    %5415 = vmatprep.mubr.bf16.mxu0 0
    %5416 = vmatmul.mubr.bf16.gmra.mrb[0].mxu0 %v5309
    %v5417 = vpop.f32.mrb[0].mxu0
    %v5418 = vadd.f32 0.0, %v5417
    %v5419 = vpop.f32.mrb[0].mxu0
    %v5420 = vpop.f32.mrb[0].mxu0
    %v5421 = vadd.f32 0.0, %v5420
    %v5422 = vpop.f32.mrb[0].mxu0
    %5423 = vdwg.mxu0
    %v5440 = vunpack.c.l.b16 %v5076
    %v5441 = vunpack.c.l.b16 %v5077
    %v5442 = vunpack.c.l.b16 %v5078
    %v5443 = vunpack.c.l.b16 %v5079
    %v5444 = vunpack.c.l.b16 %v5080
    %v5445 = vunpack.c.l.b16 %v5081
    %v5446 = vunpack.c.l.b16 %v5082
    %v5447 = vunpack.c.l.b16 %v5083
    %v5448 = vunpack.c.l.b16 %v5084
    %v5449 = vunpack.c.l.b16 %v5085
    %v5450 = vunpack.c.l.b16 %v5086
    %v5451 = vunpack.c.l.b16 %v5087
    %v5452 = vunpack.c.l.b16 %v5088
    %v5453 = vunpack.c.l.b16 %v5089
    %v5454 = vunpack.c.l.b16 %v5090
    %v5455 = vunpack.c.l.b16 %v5091
    %v5456 = vpack.c.b16 %v5441, %v5440
    %v5457 = vpack.c.b16 %v5443, %v5442
    %v5458 = vpack.c.b16 %v5445, %v5444
    %v5459 = vpack.c.b16 %v5447, %v5446
    %v5460 = vpack.c.b16 %v5449, %v5448
    %v5461 = vpack.c.b16 %v5451, %v5450
    %v5462 = vpack.c.b16 %v5453, %v5452
    %v5463 = vpack.c.b16 %v5455, %v5454
    %5472 = vmatprep.subr.bf16.mxu0 0
    %5473 = vmatpush1.bf16.msra.mxu0 %v5456
    %5474 = vmatprep.subr.bf16.mxu0 0
    %5475 = vmatpush1.bf16.msra.mxu0 %v5457
    %5476 = vmatprep.subr.bf16.mxu0 0
    %5477 = vmatpush1.bf16.msra.mxu0 %v5458
    %5478 = vmatprep.subr.bf16.mxu0 0
    %5479 = vmatpush1.bf16.msra.mxu0 %v5459
    %5480 = vmatprep.subr.bf16.mxu0 0
    %5481 = vmatpush1.bf16.msra.mxu0 %v5460
    %5482 = vmatprep.subr.bf16.mxu0 0
    %5483 = vmatpush1.bf16.msra.mxu0 %v5461
    %5484 = vmatprep.subr.bf16.mxu0 0
    %5485 = vmatpush1.bf16.msra.mxu0 %v5462
    %5486 = vmatprep.subr.bf16.mxu0 0
    %5487 = vmatpush1.bf16.msra.mxu0 %v5463
    %5488 = vmatprep.subr.bf16.mxu0 0
    %5489 = vmatpush1.bf16.msra.mxu0 0
    %5490 = vmatprep.subr.bf16.mxu0 0
    %5491 = vmatpush1.bf16.msra.mxu0 0
    %5492 = vmatprep.subr.bf16.mxu0 0
    %5493 = vmatpush1.bf16.msra.mxu0 0
    %5494 = vmatprep.subr.bf16.mxu0 0
    %5495 = vmatpush1.bf16.msra.mxu0 0
    %5496 = vmatprep.subr.bf16.mxu0 0
    %5497 = vmatpush1.bf16.msra.mxu0 0
    %5498 = vmatprep.subr.bf16.mxu0 0
    %5499 = vmatpush1.bf16.msra.mxu0 0
    %5500 = vmatprep.subr.bf16.mxu0 0
    %5501 = vmatpush1.bf16.msra.mxu0 0
    %5502 = vmatprep.subr.bf16.mxu0 0
    %5503 = vmatpush1.bf16.msra.mxu0 0
    %5504 = vmatprep.mubr.bf16.mxu0 0
    %5505 = vmatmul.mubr.bf16.gmra.mrb[0].mxu0 %v5073
    %v5506 = vpop.f32.mrb[0].mxu0
    %v5507 = vadd.f32 %v5410, %v5506
    %v5508 = vpop.f32.mrb[0].mxu0
    %v5509 = vpop.f32.mrb[0].mxu0
    %v5510 = vadd.f32 %v5413, %v5509
    %v5511 = vpop.f32.mrb[0].mxu0
    %5512 = vmatprep.mubr.bf16.mxu0 0
    %5513 = vmatmul.mubr.bf16.gmra.mrb[0].mxu0 %v5074
    %v5514 = vpop.f32.mrb[0].mxu0
    %v5515 = vadd.f32 %v5418, %v5514
    %v5516 = vpop.f32.mrb[0].mxu0
    %v5517 = vpop.f32.mrb[0].mxu0
    %v5518 = vadd.f32 %v5421, %v5517
    %v5519 = vpop.f32.mrb[0].mxu0
    %5520 = vdwg.mxu0
    %v5521 = vadd.f32 %v4453, %v5507
    %v5522 = vadd.f32 %v4454, %v5510
    %v5523 = vadd.f32 %v4455, %v5515
    %v5524 = vadd.f32 %v4456, %v5518
    %s5525 = scalar_lea.vmem %s4, 3
    %v5526 = vld [vmem:[%s5525] sm:$0x1]
    %v5528 = vlaneseq
    %v5529 = vshrl.u32 %v5528, 7
    %v5530 = vsub.s32 0, %v5529
    %v5531 = vrot.slane %v5526, %v5530
    %v5533 = vadd.f32 %v5521, %v5531
    %v5534 = vadd.f32 %v5522, %v5531
    %v5535 = vadd.f32 %v5523, %v5531
    %v5536 = vadd.f32 %v5524, %v5531
    %s5537 = scalar_lea.vmem %s7, 3
    %v5538 = vld [vmem:[%s5537] sm:$0x1]
    %s5539 = scalar_lea.vmem %s8, 3
    %v5540 = vld [vmem:[%s5539] sm:$0x1]
    %v5541 = vsel %vm66, %v5533, 0.0
    %5542 = vadd.xlane.f32.xlu0 %v5541
    %v5543 = vpop.xlane.xlu0 %5542
    %v5544 = vsel %vm66, %v5534, 0.0
    %5545 = vadd.xlane.f32.xlu0 %v5544
    %v5546 = vpop.xlane.xlu0 %5545
    %v5547 = vsel %vm66, %v5535, 0.0
    %5548 = vadd.xlane.f32.xlu0 %v5547
    %v5549 = vpop.xlane.xlu0 %5548
    %v5550 = vsel %vm66, %v5536, 0.0
    %5551 = vadd.xlane.f32.xlu0 %v5550
    %v5552 = vpop.xlane.xlu0 %5551
    %v5553 = vmul.f32 %v5543, %v79
    %v5554 = vmul.f32 %v5546, %v79
    %v5555 = vmul.f32 %v5549, %v79
    %v5556 = vmul.f32 %v5552, %v79
    %v5557 = vsub.f32 %v5533, %v5553
    %v5558 = vsub.f32 %v5534, %v5554
    %v5559 = vsub.f32 %v5535, %v5555
    %v5560 = vsub.f32 %v5536, %v5556
    %v5561 = vmul.f32 %v5557, %v5557
    %v5562 = vmul.f32 %v5558, %v5558
    %v5563 = vmul.f32 %v5559, %v5559
    %v5564 = vmul.f32 %v5560, %v5560
    %v5565 = vsel %vm66, %v5561, 0.0
    %5566 = vadd.xlane.f32.xlu0 %v5565
    %v5567 = vpop.xlane.xlu0 %5566
    %v5568 = vsel %vm66, %v5562, 0.0
    %5569 = vadd.xlane.f32.xlu0 %v5568
    %v5570 = vpop.xlane.xlu0 %5569
    %v5571 = vsel %vm66, %v5563, 0.0
    %5572 = vadd.xlane.f32.xlu0 %v5571
    %v5573 = vpop.xlane.xlu0 %5572
    %v5574 = vsel %vm66, %v5564, 0.0
    %5575 = vadd.xlane.f32.xlu0 %v5574
    %v5576 = vpop.xlane.xlu0 %5575
    %v5577 = vmul.f32 %v5567, %v79
    %v5578 = vmul.f32 %v5570, %v79
    %v5579 = vmul.f32 %v5573, %v79
    %v5580 = vmul.f32 %v5576, %v79
    %v5581 = vadd.f32 %v5577, 1e-05
    %v5582 = vadd.f32 %v5578, 1e-05
    %v5583 = vadd.f32 %v5579, 1e-05
    %v5584 = vadd.f32 %v5580, 1e-05
    %v5585 = vrsqrt.pop %v5581
    %v5586 = vrsqrt.pop %v5582
    %v5587 = vrsqrt.pop %v5583
    %v5588 = vrsqrt.pop %v5584
    %v5589 = vmul.f32 %v5557, %v5585
    %v5590 = vmul.f32 %v5558, %v5586
    %v5591 = vmul.f32 %v5559, %v5587
    %v5592 = vmul.f32 %v5560, %v5588
    %v5594 = vlaneseq
    %v5595 = vshrl.u32 %v5594, 7
    %v5596 = vsub.s32 0, %v5595
    %v5597 = vrot.slane %v5538, %v5596
    %v5599 = vmul.f32 %v5589, %v5597
    %v5600 = vmul.f32 %v5590, %v5597
    %v5601 = vmul.f32 %v5591, %v5597
    %v5602 = vmul.f32 %v5592, %v5597
    %v5604 = vlaneseq
    %v5605 = vshrl.u32 %v5604, 7
    %v5606 = vsub.s32 0, %v5605
    %v5607 = vrot.slane %v5540, %v5606
    %v5609 = vadd.f32 %v5599, %v5607
    %v5610 = vadd.f32 %v5600, %v5607
    %v5611 = vadd.f32 %v5601, %v5607
    %v5612 = vadd.f32 %v5602, %v5607
    %v5613 = vpack.c.bf16 %v5610, %v5609
    %v5614 = vpack.c.bf16 %v5612, %v5611
    %s5615 = scalar_lea.vmem %s9, 168
    %v5616 = vld [vmem:[%s5615] sm:$0xff]
    %v5617 = vld [vmem:[%s5615 + $0x8] sm:$0xff]
    %v5618 = vld [vmem:[%s5615 + $0x10] sm:$0xff]
    %v5619 = vld [vmem:[%s5615 + $0x18] sm:$0xff]
    %v5620 = vld [vmem:[%s5615 + $0x20] sm:$0xff]
    %v5621 = vld [vmem:[%s5615 + $0x28] sm:$0xff]
    %v5622 = vld [vmem:[%s5615 + $0x30] sm:$0x11]
    %s5623 = scalar_lea.vmem %s10, 6
    %v5624 = vld [vmem:[%s5623] sm:$0x3]
    %v5626 = vlaneseq
    %v5627 = vshrl.u32 %v5626, 7
    %v5628 = vsub.s32 0, %v5627
    %v5629 = vrot.slane %v5624, %v5628
    %v5630 = vlaneseq
    %v5631 = vshrl.u32 %v5630, 7
    %v5632 = vsub.s32 1, %v5631
    %v5633 = vrot.slane %v5624, %v5632
    %v5643 = vunpack.c.l.b16 %v5616
    %v5644 = vunpack.c.h.b16 %v5616
    %v5645 = vunpack.c.l.b16 %v5617
    %v5646 = vunpack.c.h.b16 %v5617
    %v5647 = vunpack.c.l.b16 %v5618
    %v5648 = vunpack.c.h.b16 %v5618
    %v5649 = vunpack.c.l.b16 %v5619
    %v5650 = vunpack.c.h.b16 %v5619
    %v5651 = vunpack.c.l.b16 %v5620
    %v5652 = vunpack.c.h.b16 %v5620
    %v5653 = vunpack.c.l.b16 %v5621
    %v5654 = vunpack.c.h.b16 %v5621
    %v5655 = vunpack.c.l.b16 %v5622
    %v5656 = vunpack.c.h.b16 %v5622
    %v5657 = vpack.c.b16 %v5645, %v5643
    %v5658 = vpack.c.b16 %v5646, %v5644
    %v5659 = vpack.c.b16 %v5649, %v5647
    %v5660 = vpack.c.b16 %v5650, %v5648
    %v5661 = vpack.c.b16 %v5653, %v5651
    %v5662 = vpack.c.b16 %v5654, %v5652
    %v5663 = vpack.c.b16 %v5655, %v5655
    %v5664 = vpack.c.b16 %v5656, %v5656
    %v5672 = vsel %vm66, %v5613, 0
    %v5675 = vsel %vm66, %v5614, 0
    %v5678 = vsel %vm274, %v5663, 0
    %v5681 = vsel %vm274, %v5664, 0
    %5683 = vmatprep.subr.bf16.mxu0 %v5658
    %5684 = vmatpush1.bf16.msra.mxu0 %v5657
    %5685 = vmatprep.subr.bf16.mxu0 %v5660
    %5686 = vmatpush1.bf16.msra.mxu0 %v5659
    %5687 = vmatprep.subr.bf16.mxu0 %v5662
    %5688 = vmatpush1.bf16.msra.mxu0 %v5661
    %5689 = vmatprep.subr.bf16.mxu0 %v5681
    %5690 = vmatpush1.bf16.msra.mxu0 %v5678
    %5691 = vmatprep.subr.bf16.mxu0 0
    %5692 = vmatpush1.bf16.msra.mxu0 0
    %5693 = vmatprep.subr.bf16.mxu0 0
    %5694 = vmatpush1.bf16.msra.mxu0 0
    %5695 = vmatprep.subr.bf16.mxu0 0
    %5696 = vmatpush1.bf16.msra.mxu0 0
    %5697 = vmatprep.subr.bf16.mxu0 0
    %5698 = vmatpush1.bf16.msra.mxu0 0
    %5699 = vmatprep.subr.bf16.mxu0 0
    %5700 = vmatpush1.bf16.msra.mxu0 0
    %5701 = vmatprep.subr.bf16.mxu0 0
    %5702 = vmatpush1.bf16.msra.mxu0 0
    %5703 = vmatprep.subr.bf16.mxu0 0
    %5704 = vmatpush1.bf16.msra.mxu0 0
    %5705 = vmatprep.subr.bf16.mxu0 0
    %5706 = vmatpush1.bf16.msra.mxu0 0
    %5707 = vmatprep.subr.bf16.mxu0 0
    %5708 = vmatpush1.bf16.msra.mxu0 0
    %5709 = vmatprep.subr.bf16.mxu0 0
    %5710 = vmatpush1.bf16.msra.mxu0 0
    %5711 = vmatprep.subr.bf16.mxu0 0
    %5712 = vmatpush1.bf16.msra.mxu0 0
    %5713 = vmatprep.subr.bf16.mxu0 0
    %5714 = vmatpush1.bf16.msra.mxu0 0
    %5715 = vmatprep.mubr.bf16.mxu0 0
    %5716 = vmatmul.mubr.bf16.gmra.mrb[0].mxu0 %v5672
    %v5717 = vpop.f32.mrb[0].mxu0
    %v5718 = vadd.f32 %v5629, %v5717
    %v5719 = vpop.f32.mrb[0].mxu0
    %v5720 = vadd.f32 %v5633, %v5719
    %v5721 = vpop.f32.mrb[0].mxu0
    %v5722 = vadd.f32 %v5629, %v5721
    %v5723 = vpop.f32.mrb[0].mxu0
    %v5724 = vadd.f32 %v5633, %v5723
    %5725 = vmatprep.mubr.bf16.mxu0 0
    %5726 = vmatmul.mubr.bf16.gmra.mrb[0].mxu0 %v5675
    %v5727 = vpop.f32.mrb[0].mxu0
    %v5728 = vadd.f32 %v5629, %v5727
    %v5729 = vpop.f32.mrb[0].mxu0
    %v5730 = vadd.f32 %v5633, %v5729
    %v5731 = vpop.f32.mrb[0].mxu0
    %v5732 = vadd.f32 %v5629, %v5731
    %v5733 = vpop.f32.mrb[0].mxu0
    %v5734 = vadd.f32 %v5633, %v5733
    %5735 = vdwg.mxu0
    %v5736 = vmax.f32 %v5718, 0.0
    %v5737 = vmax.f32 %v5720, 0.0
    %v5738 = vmax.f32 %v5722, 0.0
    %v5739 = vmax.f32 %v5724, 0.0
    %v5740 = vmax.f32 %v5728, 0.0
    %v5741 = vmax.f32 %v5730, 0.0
    %v5742 = vmax.f32 %v5732, 0.0
    %v5743 = vmax.f32 %v5734, 0.0
    %v5744 = vpack.c.bf16 %v5738, %v5736
    %v5745 = vpack.c.bf16 %v5739, %v5737
    %v5746 = vpack.c.bf16 %v5742, %v5740
    %v5747 = vpack.c.bf16 %v5743, %v5741
    %s5748 = scalar_lea.vmem %s11, 300
    %v5749 = vld [vmem:[%s5748] sm:$0xf]
    %v5750 = vld [vmem:[%s5748 + $0x4] sm:$0xf]
    %v5751 = vld [vmem:[%s5748 + $0x8] sm:$0xf]
    %v5752 = vld [vmem:[%s5748 + $0xc] sm:$0xf]
    %v5753 = vld [vmem:[%s5748 + $0x10] sm:$0xf]
    %v5754 = vld [vmem:[%s5748 + $0x14] sm:$0xf]
    %v5755 = vld [vmem:[%s5748 + $0x18] sm:$0xf]
    %v5756 = vld [vmem:[%s5748 + $0x1c] sm:$0xf]
    %v5757 = vld [vmem:[%s5748 + $0x20] sm:$0xf]
    %v5758 = vld [vmem:[%s5748 + $0x24] sm:$0xf]
    %v5759 = vld [vmem:[%s5748 + $0x28] sm:$0xf]
    %v5760 = vld [vmem:[%s5748 + $0x2c] sm:$0xf]
    %v5761 = vld [vmem:[%s5748 + $0x30] sm:$0xf]
    %v5762 = vld [vmem:[%s5748 + $0x34] sm:$0xf]
    %v5763 = vld [vmem:[%s5748 + $0x38] sm:$0xf]
    %v5764 = vld [vmem:[%s5748 + $0x3c] sm:$0xf]
    %v5765 = vld [vmem:[%s5748 + $0x40] sm:$0xf]
    %v5766 = vld [vmem:[%s5748 + $0x44] sm:$0xf]
    %v5767 = vld [vmem:[%s5748 + $0x48] sm:$0xf]
    %v5768 = vld [vmem:[%s5748 + $0x4c] sm:$0xf]
    %v5769 = vld [vmem:[%s5748 + $0x50] sm:$0xf]
    %v5770 = vld [vmem:[%s5748 + $0x54] sm:$0xf]
    %v5771 = vld [vmem:[%s5748 + $0x58] sm:$0xf]
    %v5772 = vld [vmem:[%s5748 + $0x5c] sm:$0xf]
    %v5773 = vld [vmem:[%s5748 + $0x60] sm:$0xf]
    %s5774 = scalar_lea.vmem %s12, 3
    %v5775 = vld [vmem:[%s5774] sm:$0x1]
    %v5777 = vlaneseq
    %v5778 = vshrl.u32 %v5777, 7
    %v5779 = vsub.s32 0, %v5778
    %v5780 = vrot.slane %v5775, %v5779
    %v5807 = vunpack.c.l.b16 %v5749
    %v5808 = vunpack.c.l.b16 %v5750
    %v5809 = vunpack.c.l.b16 %v5751
    %v5810 = vunpack.c.l.b16 %v5752
    %v5811 = vunpack.c.l.b16 %v5753
    %v5812 = vunpack.c.l.b16 %v5754
    %v5813 = vunpack.c.l.b16 %v5755
    %v5814 = vunpack.c.l.b16 %v5756
    %v5815 = vunpack.c.l.b16 %v5757
    %v5816 = vunpack.c.l.b16 %v5758
    %v5817 = vunpack.c.l.b16 %v5759
    %v5818 = vunpack.c.l.b16 %v5760
    %v5819 = vunpack.c.l.b16 %v5761
    %v5820 = vunpack.c.l.b16 %v5762
    %v5821 = vunpack.c.l.b16 %v5763
    %v5822 = vunpack.c.l.b16 %v5764
    %v5823 = vunpack.c.l.b16 %v5765
    %v5824 = vunpack.c.l.b16 %v5766
    %v5825 = vunpack.c.l.b16 %v5767
    %v5826 = vunpack.c.l.b16 %v5768
    %v5827 = vunpack.c.l.b16 %v5769
    %v5828 = vunpack.c.l.b16 %v5770
    %v5829 = vunpack.c.l.b16 %v5771
    %v5830 = vunpack.c.l.b16 %v5772
    %v5831 = vunpack.c.l.b16 %v5773
    %v5832 = vpack.c.b16 %v5808, %v5807
    %v5833 = vpack.c.b16 %v5810, %v5809
    %v5834 = vpack.c.b16 %v5812, %v5811
    %v5835 = vpack.c.b16 %v5814, %v5813
    %v5836 = vpack.c.b16 %v5816, %v5815
    %v5837 = vpack.c.b16 %v5818, %v5817
    %v5838 = vpack.c.b16 %v5820, %v5819
    %v5839 = vpack.c.b16 %v5822, %v5821
    %v5840 = vpack.c.b16 %v5824, %v5823
    %v5841 = vpack.c.b16 %v5826, %v5825
    %v5842 = vpack.c.b16 %v5828, %v5827
    %v5843 = vpack.c.b16 %v5830, %v5829
    %v5844 = vpack.c.b16 %v5831, %v5831
    %v5858 = vsel %vm1469, %v5745, 0
    %v5861 = vsel %vm1469, %v5747, 0
    %v5864 = vsel %vm1476, %v5844, 0
    %5866 = vmatprep.subr.bf16.mxu0 0
    %5867 = vmatpush1.bf16.msra.mxu0 %v5832
    %5868 = vmatprep.subr.bf16.mxu0 0
    %5869 = vmatpush1.bf16.msra.mxu0 %v5833
    %5870 = vmatprep.subr.bf16.mxu0 0
    %5871 = vmatpush1.bf16.msra.mxu0 %v5834
    %5872 = vmatprep.subr.bf16.mxu0 0
    %5873 = vmatpush1.bf16.msra.mxu0 %v5835
    %5874 = vmatprep.subr.bf16.mxu0 0
    %5875 = vmatpush1.bf16.msra.mxu0 %v5836
    %5876 = vmatprep.subr.bf16.mxu0 0
    %5877 = vmatpush1.bf16.msra.mxu0 %v5837
    %5878 = vmatprep.subr.bf16.mxu0 0
    %5879 = vmatpush1.bf16.msra.mxu0 %v5838
    %5880 = vmatprep.subr.bf16.mxu0 0
    %5881 = vmatpush1.bf16.msra.mxu0 %v5839
    %5882 = vmatprep.subr.bf16.mxu0 0
    %5883 = vmatpush1.bf16.msra.mxu0 %v5840
    %5884 = vmatprep.subr.bf16.mxu0 0
    %5885 = vmatpush1.bf16.msra.mxu0 %v5841
    %5886 = vmatprep.subr.bf16.mxu0 0
    %5887 = vmatpush1.bf16.msra.mxu0 %v5842
    %5888 = vmatprep.subr.bf16.mxu0 0
    %5889 = vmatpush1.bf16.msra.mxu0 %v5843
    %5890 = vmatprep.subr.bf16.mxu0 0
    %5891 = vmatpush1.bf16.msra.mxu0 %v5864
    %5892 = vmatprep.subr.bf16.mxu0 0
    %5893 = vmatpush1.bf16.msra.mxu0 0
    %5894 = vmatprep.subr.bf16.mxu0 0
    %5895 = vmatpush1.bf16.msra.mxu0 0
    %5896 = vmatprep.subr.bf16.mxu0 0
    %5897 = vmatpush1.bf16.msra.mxu0 0
    %5898 = vmatprep.mubr.bf16.mxu0 %v5858
    %5899 = vmatmul.mubr.bf16.gmra.mrb[0].mxu0 %v5744
    %v5900 = vpop.f32.mrb[0].mxu0
    %v5901 = vadd.f32 %v5780, %v5900
    %v5902 = vpop.f32.mrb[0].mxu0
    %v5903 = vpop.f32.mrb[0].mxu0
    %v5904 = vadd.f32 %v5780, %v5903
    %v5905 = vpop.f32.mrb[0].mxu0
    %5906 = vmatprep.mubr.bf16.mxu0 %v5861
    %5907 = vmatmul.mubr.bf16.gmra.mrb[0].mxu0 %v5746
    %v5908 = vpop.f32.mrb[0].mxu0
    %v5909 = vadd.f32 %v5780, %v5908
    %v5910 = vpop.f32.mrb[0].mxu0
    %v5911 = vpop.f32.mrb[0].mxu0
    %v5912 = vadd.f32 %v5780, %v5911
    %v5913 = vpop.f32.mrb[0].mxu0
    %5914 = vdwg.mxu0
    %v5915 = vadd.f32 %v5533, %v5901
    %v5916 = vadd.f32 %v5534, %v5904
    %v5917 = vadd.f32 %v5535, %v5909
    %v5918 = vadd.f32 %v5536, %v5912
    %v5919 = vld [vmem:[%s13] sm:$0x1]
    %v5920 = vld [vmem:[%s14] sm:$0x1]
    %v5921 = vsel %vm66, %v5915, 0.0
    %5922 = vadd.xlane.f32.xlu0 %v5921
    %v5923 = vpop.xlane.xlu0 %5922
    %v5924 = vsel %vm66, %v5916, 0.0
    %5925 = vadd.xlane.f32.xlu0 %v5924
    %v5926 = vpop.xlane.xlu0 %5925
    %v5927 = vsel %vm66, %v5917, 0.0
    %5928 = vadd.xlane.f32.xlu0 %v5927
    %v5929 = vpop.xlane.xlu0 %5928
    %v5930 = vsel %vm66, %v5918, 0.0
    %5931 = vadd.xlane.f32.xlu0 %v5930
    %v5932 = vpop.xlane.xlu0 %5931
    %v5933 = vmul.f32 %v5923, %v79
    %v5934 = vmul.f32 %v5926, %v79
    %v5935 = vmul.f32 %v5929, %v79
    %v5936 = vmul.f32 %v5932, %v79
    %v5937 = vsub.f32 %v5915, %v5933
    %v5938 = vsub.f32 %v5916, %v5934
    %v5939 = vsub.f32 %v5917, %v5935
    %v5940 = vsub.f32 %v5918, %v5936
    %v5941 = vmul.f32 %v5937, %v5937
    %v5942 = vmul.f32 %v5938, %v5938
    %v5943 = vmul.f32 %v5939, %v5939
    %v5944 = vmul.f32 %v5940, %v5940
    %v5945 = vsel %vm66, %v5941, 0.0
    %5946 = vadd.xlane.f32.xlu0 %v5945
    %v5947 = vpop.xlane.xlu0 %5946
    %v5948 = vsel %vm66, %v5942, 0.0
    %5949 = vadd.xlane.f32.xlu0 %v5948
    %v5950 = vpop.xlane.xlu0 %5949
    %v5951 = vsel %vm66, %v5943, 0.0
    %5952 = vadd.xlane.f32.xlu0 %v5951
    %v5953 = vpop.xlane.xlu0 %5952
    %v5954 = vsel %vm66, %v5944, 0.0
    %5955 = vadd.xlane.f32.xlu0 %v5954
    %v5956 = vpop.xlane.xlu0 %5955
    %v5957 = vmul.f32 %v5947, %v79
    %v5958 = vmul.f32 %v5950, %v79
    %v5959 = vmul.f32 %v5953, %v79
    %v5960 = vmul.f32 %v5956, %v79
    %v5961 = vadd.f32 %v5957, 1e-05
    %v5962 = vadd.f32 %v5958, 1e-05
    %v5963 = vadd.f32 %v5959, 1e-05
    %v5964 = vadd.f32 %v5960, 1e-05
    %v5965 = vrsqrt.pop %v5961
    %v5966 = vrsqrt.pop %v5962
    %v5967 = vrsqrt.pop %v5963
    %v5968 = vrsqrt.pop %v5964
    %v5969 = vmul.f32 %v5937, %v5965
    %v5970 = vmul.f32 %v5938, %v5966
    %v5971 = vmul.f32 %v5939, %v5967
    %v5972 = vmul.f32 %v5940, %v5968
    %v5974 = vlaneseq
    %v5975 = vshrl.u32 %v5974, 7
    %v5976 = vsub.s32 0, %v5975
    %v5977 = vrot.slane %v5919, %v5976
    %v5979 = vmul.f32 %v5969, %v5977
    %v5980 = vmul.f32 %v5970, %v5977
    %v5981 = vmul.f32 %v5971, %v5977
    %v5982 = vmul.f32 %v5972, %v5977
    %v5984 = vlaneseq
    %v5985 = vshrl.u32 %v5984, 7
    %v5986 = vsub.s32 0, %v5985
    %v5987 = vrot.slane %v5920, %v5986
    %v5989 = vadd.f32 %v5979, %v5987
    %v5990 = vadd.f32 %v5980, %v5987
    %v5991 = vadd.f32 %v5981, %v5987
    %v5992 = vadd.f32 %v5982, %v5987
    %v5993 = vpack.c.bf16 %v5990, %v5989
    %v5994 = vpack.c.bf16 %v5992, %v5991
    %v5995 = vld [vmem:[%s15] sm:$0xf]
    %v5996 = vld [vmem:[%s15 + $0x4] sm:$0xf]
    %v5997 = vld [vmem:[%s15 + $0x8] sm:$0xf]
    %v5998 = vld [vmem:[%s15 + $0xc] sm:$0xf]
    %v5999 = vld [vmem:[%s15 + $0x10] sm:$0xf]
    %v6000 = vld [vmem:[%s15 + $0x14] sm:$0xf]
    %v6001 = vld [vmem:[%s15 + $0x18] sm:$0x1]
    %v6002 = vld [vmem:[%s16] sm:$0x1]
    %v6004 = vlaneseq
    %v6005 = vshrl.u32 %v6004, 7
    %v6006 = vsub.s32 0, %v6005
    %v6007 = vrot.slane %v6002, %v6006
    %v6016 = vunpack.c.l.b16 %v5995
    %v6017 = vunpack.c.l.b16 %v5996
    %v6018 = vunpack.c.l.b16 %v5997
    %v6019 = vunpack.c.l.b16 %v5998
    %v6020 = vunpack.c.l.b16 %v5999
    %v6021 = vunpack.c.l.b16 %v6000
    %v6022 = vunpack.c.l.b16 %v6001
    %v6023 = vpack.c.b16 %v6017, %v6016
    %v6024 = vpack.c.b16 %v6019, %v6018
    %v6025 = vpack.c.b16 %v6021, %v6020
    %v6026 = vpack.c.b16 %v6022, %v6022
    %v6031 = vsel %vm66, %v5993, 0
    %v6034 = vsel %vm66, %v5994, 0
    %v6037 = vsel %vm274, %v6026, 0
    %6039 = vmatprep.subr.bf16.mxu0 0
    %6040 = vmatpush1.bf16.msra.mxu0 %v6023
    %6041 = vmatprep.subr.bf16.mxu0 0
    %6042 = vmatpush1.bf16.msra.mxu0 %v6024
    %6043 = vmatprep.subr.bf16.mxu0 0
    %6044 = vmatpush1.bf16.msra.mxu0 %v6025
    %6045 = vmatprep.subr.bf16.mxu0 0
    %6046 = vmatpush1.bf16.msra.mxu0 %v6037
    %6047 = vmatprep.subr.bf16.mxu0 0
    %6048 = vmatpush1.bf16.msra.mxu0 0
    %6049 = vmatprep.subr.bf16.mxu0 0
    %6050 = vmatpush1.bf16.msra.mxu0 0
    %6051 = vmatprep.subr.bf16.mxu0 0
    %6052 = vmatpush1.bf16.msra.mxu0 0
    %6053 = vmatprep.subr.bf16.mxu0 0
    %6054 = vmatpush1.bf16.msra.mxu0 0
    %6055 = vmatprep.subr.bf16.mxu0 0
    %6056 = vmatpush1.bf16.msra.mxu0 0
    %6057 = vmatprep.subr.bf16.mxu0 0
    %6058 = vmatpush1.bf16.msra.mxu0 0
    %6059 = vmatprep.subr.bf16.mxu0 0
    %6060 = vmatpush1.bf16.msra.mxu0 0
    %6061 = vmatprep.subr.bf16.mxu0 0
    %6062 = vmatpush1.bf16.msra.mxu0 0
    %6063 = vmatprep.subr.bf16.mxu0 0
    %6064 = vmatpush1.bf16.msra.mxu0 0
    %6065 = vmatprep.subr.bf16.mxu0 0
    %6066 = vmatpush1.bf16.msra.mxu0 0
    %6067 = vmatprep.subr.bf16.mxu0 0
    %6068 = vmatpush1.bf16.msra.mxu0 0
    %6069 = vmatprep.subr.bf16.mxu0 0
    %6070 = vmatpush1.bf16.msra.mxu0 0
    %6071 = vmatprep.mubr.bf16.mxu0 0
    %6072 = vmatmul.mubr.bf16.gmra.mrb[0].mxu0 %v6031
    %v6073 = vpop.f32.mrb[0].mxu0
    %v6074 = vadd.f32 %v6007, %v6073
    %v6075 = vpop.f32.mrb[0].mxu0
    %v6076 = vpop.f32.mrb[0].mxu0
    %v6077 = vadd.f32 %v6007, %v6076
    %v6078 = vpop.f32.mrb[0].mxu0
    %6079 = vmatprep.mubr.bf16.mxu0 0
    %6080 = vmatmul.mubr.bf16.gmra.mrb[0].mxu0 %v6034
    %v6081 = vpop.f32.mrb[0].mxu0
    %v6082 = vadd.f32 %v6007, %v6081
    %v6083 = vpop.f32.mrb[0].mxu0
    %v6084 = vpop.f32.mrb[0].mxu0
    %v6085 = vadd.f32 %v6007, %v6084
    %v6086 = vpop.f32.mrb[0].mxu0
    %6087 = vdwg.mxu0
    %6088 = vst [vmem:[#allocation2] sm:$0xff] %v6074
    %6089 = vst [vmem:[#allocation2 + $0x8] sm:$0xff] %v6077
    %6090 = vst [vmem:[#allocation2 + $0x10] sm:$0xff] %v6082
    %6091 = vst [vmem:[#allocation2 + $0x18] sm:$0xff] %v6085
    // Predicated region
    $region70: #{gpt_forward.1} parent=1 // pred_check
      _
    $region71: #{gpt_forward.1} parent=1 // pred_check_branch
      %6093 = sbr.rel (0) target = $region73
    $region72: #{gpt_forward.1} parent=1 // pred_region
      %s6095 = ssub.s32 512, 512
      %6096 = vsyncadd [#allocation3], %s6095
      %s6097 = sshll.u32 [#allocation2], 4
      %s6098 = int_to_ptr.vmem [resolvable:$true] %s6097
      %6103 = dma.vmem_to_hbm [thread:$0]  %s6098, 512, %s17, [#allocation3], 128, 128, 8
    $region73: #{gpt_forward.1} parent=1 // pred_fallthru
      _
    // Predicated region
    $region74: #{gpt_forward.1} parent=1 // pred_check
      _
    $region75: #{gpt_forward.1} parent=1 // pred_check_branch
      %6105 = sbr.rel (0) target = $region77
    $region76: #{gpt_forward.1} parent=1 // pred_region
      %6106 = dma.done [#allocation3], 512
    $region77: #{gpt_forward.1} parent=1 // pred_fallthru
      _
    %6107 = vsyncpa [#allocation3], 1

</llo_original>
